<compile_context>
chip_gen: v5e
topology: v5e:2x2
jax: 0.10.0
libtpu: 0.0.40
codegen_flags: <defaults>
</compile_context>

<pallas_src>
import jax
import jax.numpy as jnp
from jax.experimental import pallas as pl
from jax.experimental.pallas import tpu as pltpu


# ---------------------------------------------------------------------------
# Fused forward kernel
# ---------------------------------------------------------------------------
def _cnn_kernel(x_ref, w1_ref, b1_ref, w2_ref, b2_ref, w3_ref, b3_ref,
                w4_ref, b4_ref, wft_ref, bf_ref, o_ref):
    """All refs: x (N,30,30) VMEM; conv weights/biases flattened f32 in SMEM;
    wft (12,10) / bf (1,10) VMEM; output (N,1,10) VMEM."""

    def conv_relu(planes, w_ref, b_ref, c_in, c_out, s):
        # planes: list of c_in arrays, each (N, P, P); valid 3x3 conv with tap
        # stride s (deferred-decimation trick), fused bias + ReLU epilogue.
        p = planes[0].shape[1]
        po = p - 2 * s
        outs = []
        for co in range(c_out):
            acc = None
            for ci in range(c_in):
                for di in range(3):
                    for dj in range(3):
                        w = w_ref[((co * c_in + ci) * 3 + di) * 3 + dj]  # SMEM scalar
                        tap = planes[ci][:, di * s:di * s + po, dj * s:dj * s + po]
                        acc = w * tap if acc is None else acc + w * tap
            outs.append(jnp.maximum(acc + b_ref[co], 0.0))
        return outs

    def maxpool2x2(planes, s):
        # 2x2/stride-2 pool fused as 4-way max; decimation deferred (output
        # logical stride becomes 2*s on a canvas shrunk by s).
        outs = []
        for t in planes:
            p = t.shape[1]
            po = p - s
            a = jnp.maximum(t[:, :po, :po], t[:, :po, s:s + po])
            b = jnp.maximum(t[:, s:s + po, :po], t[:, s:s + po, s:s + po])
            outs.append(jnp.maximum(a, b))
        return outs

    x = [x_ref[...]]                                   # (N,30,30)  stride 1
    a1 = conv_relu(x, w1_ref, b1_ref, 1, 3, 1)         # (N,28,28)  stride 1
    p1 = maxpool2x2(a1, 1)                             # (N,27,27)  stride 2
    a2 = conv_relu(p1, w2_ref, b2_ref, 3, 3, 2)        # (N,23,23)  stride 2
    p2 = maxpool2x2(a2, 2)                             # (N,21,21)  stride 4
    a3 = conv_relu(p2, w3_ref, b3_ref, 3, 3, 4)        # (N,13,13)  stride 4
    a4 = conv_relu(a3, w4_ref, b4_ref, 3, 3, 4)        # (N,5,5)    stride 4

    # Classifier: Flatten (torch NCHW order: k = c*4 + i*2 + j) + Linear(12,10),
    # computed as 12 rank-1 VPU FMAs.  Logical (i,j) lives at phys (4i,4j).
    wft = wft_ref[...]                                 # (12, 10) == wf.T
    acc = None
    for c in range(3):
        for i in range(2):
            for j in range(2):
                k = c * 4 + i * 2 + j
                v = a4[c][:, 4 * i:4 * i + 1, 4 * j:4 * j + 1]   # (N,1,1)
                term = v * wft[k:k + 1, :]                        # -> (N,1,10)
                acc = term if acc is None else acc + term
    o_ref[...] = acc + bf_ref[...]                     # (N,1,10)


# ---------------------------------------------------------------------------
# Wrapper
# ---------------------------------------------------------------------------
def sample_cnn_forward(x, params):
    """x: (N, 1, 28, 28) f32; params follow PyTorch shapes. Returns (N, 10)."""
    n = x.shape[0]
    # conv1 padding=1 applied once, outside the kernel (tiny one-time op).
    xpad = jnp.pad(x[:, 0], ((0, 0), (1, 1), (1, 1)))  # (N, 30, 30)

    flat = lambda w: w.reshape(-1).astype(jnp.float32)
    vmem = pl.BlockSpec(memory_space=pltpu.MemorySpace.VMEM)
    smem = pl.BlockSpec(memory_space=pltpu.MemorySpace.SMEM)

    out = pl.pallas_call(
        _cnn_kernel,
        out_shape=jax.ShapeDtypeStruct((n, 1, 10), jnp.float32),
        in_specs=[vmem,                       # padded input
                  smem, smem, smem, smem,     # w1,b1,w2,b2
                  smem, smem, smem, smem,     # w3,b3,w4,b4
                  vmem, vmem],                # wf.T, bf
        out_specs=vmem,
    )(xpad,
      flat(params['w1']), params['b1'],
      flat(params['w2']), params['b2'],
      flat(params['w3']), params['b3'],
      flat(params['w4']), params['b4'],
      params['wf'].T, params['bf'].reshape(1, 10))
    return out[:, 0, :]


# ---------------------------------------------------------------------------
# Pure-JAX reference (for correctness check only)
# ---------------------------------------------------------------------------
def _reference_forward(x, params):
    hi = jax.lax.Precision.HIGHEST

    def conv(x, w, b, pad):
        y = jax.lax.conv_general_dilated(
            x, w, (1, 1), ((pad, pad), (pad, pad)),
            dimension_numbers=('NCHW', 'OIHW', 'NCHW'), precision=hi)
        return jax.nn.relu(y + b[None, :, None, None])

    def pool(x):
        return jax.lax.reduce_window(x, -jnp.inf, jax.lax.max,
                                     (1, 1, 2, 2), (1, 1, 2, 2), 'VALID')

    x = pool(conv(x, params['w1'], params['b1'], 1))
    x = pool(conv(x, params['w2'], params['b2'], 0))
    x = conv(x, params['w3'], params['b3'], 0)
    x = conv(x, params['w4'], params['b4'], 0)
    flat = x.reshape(x.shape[0], -1)
    return jnp.dot(flat, params['wf'].T, precision=hi) + params['bf']


if __name__ == "__main__":
    key = jax.random.PRNGKey(0)
    ks = jax.random.split(key, 11)

    def init(k, shape, fan_in):
        bound = 1.0 / (fan_in ** 0.5)
        return jax.random.uniform(k, shape, jnp.float32, -bound, bound)

    params = {
        'w1': init(ks[0], (3, 1, 3, 3), 9),   'b1': init(ks[1], (3,), 9),
        'w2': init(ks[2], (3, 3, 3, 3), 27),  'b2': init(ks[3], (3,), 27),
        'w3': init(ks[4], (3, 3, 3, 3), 27),  'b3': init(ks[5], (3,), 27),
        'w4': init(ks[6], (3, 3, 3, 3), 27),  'b4': init(ks[7], (3,), 27),
        'wf': init(ks[8], (10, 12), 12),      'bf': init(ks[9], (10,), 12),
    }

    # 28x28 input is implied by Linear(12,10): 3ch * 2 * 2 after the conv stack.
    x = jax.random.normal(ks[10], (2, 1, 28, 28), jnp.float32)

    out = jax.jit(sample_cnn_forward)(x, params)
    jax.block_until_ready(out)
    assert out.shape == (2, 10) and out.dtype == jnp.float32

    ref = jax.jit(_reference_forward)(x, params)
    assert jnp.allclose(out, ref, atol=1e-3, rtol=1e-3), (out, ref)
    print("KERNEL_OK")
</pallas_src>

<mosaic_0001>
module attributes {stable_mosaic.version = 11 : i64} {
  func.func @_cnn_kernel(%arg0: memref<2x30x30xf32, #tpu.memory_space<vmem>>, %arg1: memref<27xf32, #tpu.memory_space<smem>>, %arg2: memref<3xf32, #tpu.memory_space<smem>>, %arg3: memref<81xf32, #tpu.memory_space<smem>>, %arg4: memref<3xf32, #tpu.memory_space<smem>>, %arg5: memref<81xf32, #tpu.memory_space<smem>>, %arg6: memref<3xf32, #tpu.memory_space<smem>>, %arg7: memref<81xf32, #tpu.memory_space<smem>>, %arg8: memref<3xf32, #tpu.memory_space<smem>>, %arg9: memref<12x10xf32, #tpu.memory_space<vmem>>, %arg10: memref<1x10xf32, #tpu.memory_space<vmem>>, %arg11: memref<2x1x10xf32, #tpu.memory_space<vmem>>) attributes {dimension_semantics = [], scalar_prefetch = 0 : i64, scratch_operands = 0 : i64, tpu.core_type = #tpu.core_type<tc>} {
    %c0 = arith.constant 0 : index
    %c0_0 = arith.constant 0 : index
    %c0_1 = arith.constant 0 : index
    %0 = vector.load %arg0[%c0, %c0_0, %c0_1] : memref<2x30x30xf32, #tpu.memory_space<vmem>>, vector<2x30x30xf32>
    %c0_2 = arith.constant 0 : index
    %1 = memref.load %arg1[%c0_2] : memref<27xf32, #tpu.memory_space<smem>>
    %2 = vector.extract_strided_slice %0 {offsets = [0, 0, 0], sizes = [2, 28, 28], strides = [1, 1, 1]} : vector<2x30x30xf32> to vector<2x28x28xf32>
    %3 = vector.broadcast %1 : f32 to vector<2x28x28xf32>
    %4 = arith.mulf %3, %2 : vector<2x28x28xf32>
    %c1 = arith.constant 1 : index
    %5 = memref.load %arg1[%c1] : memref<27xf32, #tpu.memory_space<smem>>
    %6 = vector.extract_strided_slice %0 {offsets = [0, 0, 1], sizes = [2, 28, 28], strides = [1, 1, 1]} : vector<2x30x30xf32> to vector<2x28x28xf32>
    %7 = vector.broadcast %5 : f32 to vector<2x28x28xf32>
    %8 = arith.mulf %7, %6 : vector<2x28x28xf32>
    %9 = arith.addf %4, %8 : vector<2x28x28xf32>
    %c2 = arith.constant 2 : index
    %10 = memref.load %arg1[%c2] : memref<27xf32, #tpu.memory_space<smem>>
    %11 = vector.extract_strided_slice %0 {offsets = [0, 0, 2], sizes = [2, 28, 28], strides = [1, 1, 1]} : vector<2x30x30xf32> to vector<2x28x28xf32>
    %12 = vector.broadcast %10 : f32 to vector<2x28x28xf32>
    %13 = arith.mulf %12, %11 : vector<2x28x28xf32>
    %14 = arith.addf %9, %13 : vector<2x28x28xf32>
    %c3 = arith.constant 3 : index
    %15 = memref.load %arg1[%c3] : memref<27xf32, #tpu.memory_space<smem>>
    %16 = vector.extract_strided_slice %0 {offsets = [0, 1, 0], sizes = [2, 28, 28], strides = [1, 1, 1]} : vector<2x30x30xf32> to vector<2x28x28xf32>
    %17 = vector.broadcast %15 : f32 to vector<2x28x28xf32>
    %18 = arith.mulf %17, %16 : vector<2x28x28xf32>
    %19 = arith.addf %14, %18 : vector<2x28x28xf32>
    %c4 = arith.constant 4 : index
    %20 = memref.load %arg1[%c4] : memref<27xf32, #tpu.memory_space<smem>>
    %21 = vector.extract_strided_slice %0 {offsets = [0, 1, 1], sizes = [2, 28, 28], strides = [1, 1, 1]} : vector<2x30x30xf32> to vector<2x28x28xf32>
    %22 = vector.broadcast %20 : f32 to vector<2x28x28xf32>
    %23 = arith.mulf %22, %21 : vector<2x28x28xf32>
    %24 = arith.addf %19, %23 : vector<2x28x28xf32>
    %c5 = arith.constant 5 : index
    %25 = memref.load %arg1[%c5] : memref<27xf32, #tpu.memory_space<smem>>
    %26 = vector.extract_strided_slice %0 {offsets = [0, 1, 2], sizes = [2, 28, 28], strides = [1, 1, 1]} : vector<2x30x30xf32> to vector<2x28x28xf32>
    %27 = vector.broadcast %25 : f32 to vector<2x28x28xf32>
    %28 = arith.mulf %27, %26 : vector<2x28x28xf32>
    %29 = arith.addf %24, %28 : vector<2x28x28xf32>
    %c6 = arith.constant 6 : index
    %30 = memref.load %arg1[%c6] : memref<27xf32, #tpu.memory_space<smem>>
    %31 = vector.extract_strided_slice %0 {offsets = [0, 2, 0], sizes = [2, 28, 28], strides = [1, 1, 1]} : vector<2x30x30xf32> to vector<2x28x28xf32>
    %32 = vector.broadcast %30 : f32 to vector<2x28x28xf32>
    %33 = arith.mulf %32, %31 : vector<2x28x28xf32>
    %34 = arith.addf %29, %33 : vector<2x28x28xf32>
    %c7 = arith.constant 7 : index
    %35 = memref.load %arg1[%c7] : memref<27xf32, #tpu.memory_space<smem>>
    %36 = vector.extract_strided_slice %0 {offsets = [0, 2, 1], sizes = [2, 28, 28], strides = [1, 1, 1]} : vector<2x30x30xf32> to vector<2x28x28xf32>
    %37 = vector.broadcast %35 : f32 to vector<2x28x28xf32>
    %38 = arith.mulf %37, %36 : vector<2x28x28xf32>
    %39 = arith.addf %34, %38 : vector<2x28x28xf32>
    %c8 = arith.constant 8 : index
    %40 = memref.load %arg1[%c8] : memref<27xf32, #tpu.memory_space<smem>>
    %41 = vector.extract_strided_slice %0 {offsets = [0, 2, 2], sizes = [2, 28, 28], strides = [1, 1, 1]} : vector<2x30x30xf32> to vector<2x28x28xf32>
    %42 = vector.broadcast %40 : f32 to vector<2x28x28xf32>
    %43 = arith.mulf %42, %41 : vector<2x28x28xf32>
    %44 = arith.addf %39, %43 : vector<2x28x28xf32>
    %c0_3 = arith.constant 0 : index
    %45 = memref.load %arg2[%c0_3] : memref<3xf32, #tpu.memory_space<smem>>
    %46 = vector.broadcast %45 : f32 to vector<2x28x28xf32>
    %47 = arith.addf %44, %46 : vector<2x28x28xf32>
    %cst = arith.constant 0.000000e+00 : f32
    %48 = vector.broadcast %cst : f32 to vector<2x28x28xf32>
    %49 = arith.maximumf %47, %48 : vector<2x28x28xf32>
    %c9 = arith.constant 9 : index
    %50 = memref.load %arg1[%c9] : memref<27xf32, #tpu.memory_space<smem>>
    %51 = vector.extract_strided_slice %0 {offsets = [0, 0, 0], sizes = [2, 28, 28], strides = [1, 1, 1]} : vector<2x30x30xf32> to vector<2x28x28xf32>
    %52 = vector.broadcast %50 : f32 to vector<2x28x28xf32>
    %53 = arith.mulf %52, %51 : vector<2x28x28xf32>
    %c10 = arith.constant 10 : index
    %54 = memref.load %arg1[%c10] : memref<27xf32, #tpu.memory_space<smem>>
    %55 = vector.extract_strided_slice %0 {offsets = [0, 0, 1], sizes = [2, 28, 28], strides = [1, 1, 1]} : vector<2x30x30xf32> to vector<2x28x28xf32>
    %56 = vector.broadcast %54 : f32 to vector<2x28x28xf32>
    %57 = arith.mulf %56, %55 : vector<2x28x28xf32>
    %58 = arith.addf %53, %57 : vector<2x28x28xf32>
    %c11 = arith.constant 11 : index
    %59 = memref.load %arg1[%c11] : memref<27xf32, #tpu.memory_space<smem>>
    %60 = vector.extract_strided_slice %0 {offsets = [0, 0, 2], sizes = [2, 28, 28], strides = [1, 1, 1]} : vector<2x30x30xf32> to vector<2x28x28xf32>
    %61 = vector.broadcast %59 : f32 to vector<2x28x28xf32>
    %62 = arith.mulf %61, %60 : vector<2x28x28xf32>
    %63 = arith.addf %58, %62 : vector<2x28x28xf32>
    %c12 = arith.constant 12 : index
    %64 = memref.load %arg1[%c12] : memref<27xf32, #tpu.memory_space<smem>>
    %65 = vector.extract_strided_slice %0 {offsets = [0, 1, 0], sizes = [2, 28, 28], strides = [1, 1, 1]} : vector<2x30x30xf32> to vector<2x28x28xf32>
    %66 = vector.broadcast %64 : f32 to vector<2x28x28xf32>
    %67 = arith.mulf %66, %65 : vector<2x28x28xf32>
    %68 = arith.addf %63, %67 : vector<2x28x28xf32>
    %c13 = arith.constant 13 : index
    %69 = memref.load %arg1[%c13] : memref<27xf32, #tpu.memory_space<smem>>
    %70 = vector.extract_strided_slice %0 {offsets = [0, 1, 1], sizes = [2, 28, 28], strides = [1, 1, 1]} : vector<2x30x30xf32> to vector<2x28x28xf32>
    %71 = vector.broadcast %69 : f32 to vector<2x28x28xf32>
    %72 = arith.mulf %71, %70 : vector<2x28x28xf32>
    %73 = arith.addf %68, %72 : vector<2x28x28xf32>
    %c14 = arith.constant 14 : index
    %74 = memref.load %arg1[%c14] : memref<27xf32, #tpu.memory_space<smem>>
    %75 = vector.extract_strided_slice %0 {offsets = [0, 1, 2], sizes = [2, 28, 28], strides = [1, 1, 1]} : vector<2x30x30xf32> to vector<2x28x28xf32>
    %76 = vector.broadcast %74 : f32 to vector<2x28x28xf32>
    %77 = arith.mulf %76, %75 : vector<2x28x28xf32>
    %78 = arith.addf %73, %77 : vector<2x28x28xf32>
    %c15 = arith.constant 15 : index
    %79 = memref.load %arg1[%c15] : memref<27xf32, #tpu.memory_space<smem>>
    %80 = vector.extract_strided_slice %0 {offsets = [0, 2, 0], sizes = [2, 28, 28], strides = [1, 1, 1]} : vector<2x30x30xf32> to vector<2x28x28xf32>
    %81 = vector.broadcast %79 : f32 to vector<2x28x28xf32>
    %82 = arith.mulf %81, %80 : vector<2x28x28xf32>
    %83 = arith.addf %78, %82 : vector<2x28x28xf32>
    %c16 = arith.constant 16 : index
    %84 = memref.load %arg1[%c16] : memref<27xf32, #tpu.memory_space<smem>>
    %85 = vector.extract_strided_slice %0 {offsets = [0, 2, 1], sizes = [2, 28, 28], strides = [1, 1, 1]} : vector<2x30x30xf32> to vector<2x28x28xf32>
    %86 = vector.broadcast %84 : f32 to vector<2x28x28xf32>
    %87 = arith.mulf %86, %85 : vector<2x28x28xf32>
    %88 = arith.addf %83, %87 : vector<2x28x28xf32>
    %c17 = arith.constant 17 : index
    %89 = memref.load %arg1[%c17] : memref<27xf32, #tpu.memory_space<smem>>
    %90 = vector.extract_strided_slice %0 {offsets = [0, 2, 2], sizes = [2, 28, 28], strides = [1, 1, 1]} : vector<2x30x30xf32> to vector<2x28x28xf32>
    %91 = vector.broadcast %89 : f32 to vector<2x28x28xf32>
    %92 = arith.mulf %91, %90 : vector<2x28x28xf32>
    %93 = arith.addf %88, %92 : vector<2x28x28xf32>
    %c1_4 = arith.constant 1 : index
    %94 = memref.load %arg2[%c1_4] : memref<3xf32, #tpu.memory_space<smem>>
    %95 = vector.broadcast %94 : f32 to vector<2x28x28xf32>
    %96 = arith.addf %93, %95 : vector<2x28x28xf32>
    %cst_5 = arith.constant 0.000000e+00 : f32
    %97 = vector.broadcast %cst_5 : f32 to vector<2x28x28xf32>
    %98 = arith.maximumf %96, %97 : vector<2x28x28xf32>
    %c18 = arith.constant 18 : index
    %99 = memref.load %arg1[%c18] : memref<27xf32, #tpu.memory_space<smem>>
    %100 = vector.extract_strided_slice %0 {offsets = [0, 0, 0], sizes = [2, 28, 28], strides = [1, 1, 1]} : vector<2x30x30xf32> to vector<2x28x28xf32>
    %101 = vector.broadcast %99 : f32 to vector<2x28x28xf32>
    %102 = arith.mulf %101, %100 : vector<2x28x28xf32>
    %c19 = arith.constant 19 : index
    %103 = memref.load %arg1[%c19] : memref<27xf32, #tpu.memory_space<smem>>
    %104 = vector.extract_strided_slice %0 {offsets = [0, 0, 1], sizes = [2, 28, 28], strides = [1, 1, 1]} : vector<2x30x30xf32> to vector<2x28x28xf32>
    %105 = vector.broadcast %103 : f32 to vector<2x28x28xf32>
    %106 = arith.mulf %105, %104 : vector<2x28x28xf32>
    %107 = arith.addf %102, %106 : vector<2x28x28xf32>
    %c20 = arith.constant 20 : index
    %108 = memref.load %arg1[%c20] : memref<27xf32, #tpu.memory_space<smem>>
    %109 = vector.extract_strided_slice %0 {offsets = [0, 0, 2], sizes = [2, 28, 28], strides = [1, 1, 1]} : vector<2x30x30xf32> to vector<2x28x28xf32>
    %110 = vector.broadcast %108 : f32 to vector<2x28x28xf32>
    %111 = arith.mulf %110, %109 : vector<2x28x28xf32>
    %112 = arith.addf %107, %111 : vector<2x28x28xf32>
    %c21 = arith.constant 21 : index
    %113 = memref.load %arg1[%c21] : memref<27xf32, #tpu.memory_space<smem>>
    %114 = vector.extract_strided_slice %0 {offsets = [0, 1, 0], sizes = [2, 28, 28], strides = [1, 1, 1]} : vector<2x30x30xf32> to vector<2x28x28xf32>
    %115 = vector.broadcast %113 : f32 to vector<2x28x28xf32>
    %116 = arith.mulf %115, %114 : vector<2x28x28xf32>
    %117 = arith.addf %112, %116 : vector<2x28x28xf32>
    %c22 = arith.constant 22 : index
    %118 = memref.load %arg1[%c22] : memref<27xf32, #tpu.memory_space<smem>>
    %119 = vector.extract_strided_slice %0 {offsets = [0, 1, 1], sizes = [2, 28, 28], strides = [1, 1, 1]} : vector<2x30x30xf32> to vector<2x28x28xf32>
    %120 = vector.broadcast %118 : f32 to vector<2x28x28xf32>
    %121 = arith.mulf %120, %119 : vector<2x28x28xf32>
    %122 = arith.addf %117, %121 : vector<2x28x28xf32>
    %c23 = arith.constant 23 : index
    %123 = memref.load %arg1[%c23] : memref<27xf32, #tpu.memory_space<smem>>
    %124 = vector.extract_strided_slice %0 {offsets = [0, 1, 2], sizes = [2, 28, 28], strides = [1, 1, 1]} : vector<2x30x30xf32> to vector<2x28x28xf32>
    %125 = vector.broadcast %123 : f32 to vector<2x28x28xf32>
    %126 = arith.mulf %125, %124 : vector<2x28x28xf32>
    %127 = arith.addf %122, %126 : vector<2x28x28xf32>
    %c24 = arith.constant 24 : index
    %128 = memref.load %arg1[%c24] : memref<27xf32, #tpu.memory_space<smem>>
    %129 = vector.extract_strided_slice %0 {offsets = [0, 2, 0], sizes = [2, 28, 28], strides = [1, 1, 1]} : vector<2x30x30xf32> to vector<2x28x28xf32>
    %130 = vector.broadcast %128 : f32 to vector<2x28x28xf32>
    %131 = arith.mulf %130, %129 : vector<2x28x28xf32>
    %132 = arith.addf %127, %131 : vector<2x28x28xf32>
    %c25 = arith.constant 25 : index
    %133 = memref.load %arg1[%c25] : memref<27xf32, #tpu.memory_space<smem>>
    %134 = vector.extract_strided_slice %0 {offsets = [0, 2, 1], sizes = [2, 28, 28], strides = [1, 1, 1]} : vector<2x30x30xf32> to vector<2x28x28xf32>
    %135 = vector.broadcast %133 : f32 to vector<2x28x28xf32>
    %136 = arith.mulf %135, %134 : vector<2x28x28xf32>
    %137 = arith.addf %132, %136 : vector<2x28x28xf32>
    %c26 = arith.constant 26 : index
    %138 = memref.load %arg1[%c26] : memref<27xf32, #tpu.memory_space<smem>>
    %139 = vector.extract_strided_slice %0 {offsets = [0, 2, 2], sizes = [2, 28, 28], strides = [1, 1, 1]} : vector<2x30x30xf32> to vector<2x28x28xf32>
    %140 = vector.broadcast %138 : f32 to vector<2x28x28xf32>
    %141 = arith.mulf %140, %139 : vector<2x28x28xf32>
    %142 = arith.addf %137, %141 : vector<2x28x28xf32>
    %c2_6 = arith.constant 2 : index
    %143 = memref.load %arg2[%c2_6] : memref<3xf32, #tpu.memory_space<smem>>
    %144 = vector.broadcast %143 : f32 to vector<2x28x28xf32>
    %145 = arith.addf %142, %144 : vector<2x28x28xf32>
    %cst_7 = arith.constant 0.000000e+00 : f32
    %146 = vector.broadcast %cst_7 : f32 to vector<2x28x28xf32>
    %147 = arith.maximumf %145, %146 : vector<2x28x28xf32>
    %148 = vector.extract_strided_slice %49 {offsets = [0, 0, 0], sizes = [2, 27, 27], strides = [1, 1, 1]} : vector<2x28x28xf32> to vector<2x27x27xf32>
    %149 = vector.extract_strided_slice %49 {offsets = [0, 0, 1], sizes = [2, 27, 27], strides = [1, 1, 1]} : vector<2x28x28xf32> to vector<2x27x27xf32>
    %150 = arith.maximumf %148, %149 : vector<2x27x27xf32>
    %151 = vector.extract_strided_slice %49 {offsets = [0, 1, 0], sizes = [2, 27, 27], strides = [1, 1, 1]} : vector<2x28x28xf32> to vector<2x27x27xf32>
    %152 = vector.extract_strided_slice %49 {offsets = [0, 1, 1], sizes = [2, 27, 27], strides = [1, 1, 1]} : vector<2x28x28xf32> to vector<2x27x27xf32>
    %153 = arith.maximumf %151, %152 : vector<2x27x27xf32>
    %154 = arith.maximumf %150, %153 : vector<2x27x27xf32>
    %155 = vector.extract_strided_slice %98 {offsets = [0, 0, 0], sizes = [2, 27, 27], strides = [1, 1, 1]} : vector<2x28x28xf32> to vector<2x27x27xf32>
    %156 = vector.extract_strided_slice %98 {offsets = [0, 0, 1], sizes = [2, 27, 27], strides = [1, 1, 1]} : vector<2x28x28xf32> to vector<2x27x27xf32>
    %157 = arith.maximumf %155, %156 : vector<2x27x27xf32>
    %158 = vector.extract_strided_slice %98 {offsets = [0, 1, 0], sizes = [2, 27, 27], strides = [1, 1, 1]} : vector<2x28x28xf32> to vector<2x27x27xf32>
    %159 = vector.extract_strided_slice %98 {offsets = [0, 1, 1], sizes = [2, 27, 27], strides = [1, 1, 1]} : vector<2x28x28xf32> to vector<2x27x27xf32>
    %160 = arith.maximumf %158, %159 : vector<2x27x27xf32>
    %161 = arith.maximumf %157, %160 : vector<2x27x27xf32>
    %162 = vector.extract_strided_slice %147 {offsets = [0, 0, 0], sizes = [2, 27, 27], strides = [1, 1, 1]} : vector<2x28x28xf32> to vector<2x27x27xf32>
    %163 = vector.extract_strided_slice %147 {offsets = [0, 0, 1], sizes = [2, 27, 27], strides = [1, 1, 1]} : vector<2x28x28xf32> to vector<2x27x27xf32>
    %164 = arith.maximumf %162, %163 : vector<2x27x27xf32>
    %165 = vector.extract_strided_slice %147 {offsets = [0, 1, 0], sizes = [2, 27, 27], strides = [1, 1, 1]} : vector<2x28x28xf32> to vector<2x27x27xf32>
    %166 = vector.extract_strided_slice %147 {offsets = [0, 1, 1], sizes = [2, 27, 27], strides = [1, 1, 1]} : vector<2x28x28xf32> to vector<2x27x27xf32>
    %167 = arith.maximumf %165, %166 : vector<2x27x27xf32>
    %168 = arith.maximumf %164, %167 : vector<2x27x27xf32>
    %c0_8 = arith.constant 0 : index
    %169 = memref.load %arg3[%c0_8] : memref<81xf32, #tpu.memory_space<smem>>
    %170 = vector.extract_strided_slice %154 {offsets = [0, 0, 0], sizes = [2, 23, 23], strides = [1, 1, 1]} : vector<2x27x27xf32> to vector<2x23x23xf32>
    %171 = vector.broadcast %169 : f32 to vector<2x23x23xf32>
    %172 = arith.mulf %171, %170 : vector<2x23x23xf32>
    %c1_9 = arith.constant 1 : index
    %173 = memref.load %arg3[%c1_9] : memref<81xf32, #tpu.memory_space<smem>>
    %174 = vector.extract_strided_slice %154 {offsets = [0, 0, 2], sizes = [2, 23, 23], strides = [1, 1, 1]} : vector<2x27x27xf32> to vector<2x23x23xf32>
    %175 = vector.broadcast %173 : f32 to vector<2x23x23xf32>
    %176 = arith.mulf %175, %174 : vector<2x23x23xf32>
    %177 = arith.addf %172, %176 : vector<2x23x23xf32>
    %c2_10 = arith.constant 2 : index
    %178 = memref.load %arg3[%c2_10] : memref<81xf32, #tpu.memory_space<smem>>
    %179 = vector.extract_strided_slice %154 {offsets = [0, 0, 4], sizes = [2, 23, 23], strides = [1, 1, 1]} : vector<2x27x27xf32> to vector<2x23x23xf32>
    %180 = vector.broadcast %178 : f32 to vector<2x23x23xf32>
    %181 = arith.mulf %180, %179 : vector<2x23x23xf32>
    %182 = arith.addf %177, %181 : vector<2x23x23xf32>
    %c3_11 = arith.constant 3 : index
    %183 = memref.load %arg3[%c3_11] : memref<81xf32, #tpu.memory_space<smem>>
    %184 = vector.extract_strided_slice %154 {offsets = [0, 2, 0], sizes = [2, 23, 23], strides = [1, 1, 1]} : vector<2x27x27xf32> to vector<2x23x23xf32>
    %185 = vector.broadcast %183 : f32 to vector<2x23x23xf32>
    %186 = arith.mulf %185, %184 : vector<2x23x23xf32>
    %187 = arith.addf %182, %186 : vector<2x23x23xf32>
    %c4_12 = arith.constant 4 : index
    %188 = memref.load %arg3[%c4_12] : memref<81xf32, #tpu.memory_space<smem>>
    %189 = vector.extract_strided_slice %154 {offsets = [0, 2, 2], sizes = [2, 23, 23], strides = [1, 1, 1]} : vector<2x27x27xf32> to vector<2x23x23xf32>
    %190 = vector.broadcast %188 : f32 to vector<2x23x23xf32>
    %191 = arith.mulf %190, %189 : vector<2x23x23xf32>
    %192 = arith.addf %187, %191 : vector<2x23x23xf32>
    %c5_13 = arith.constant 5 : index
    %193 = memref.load %arg3[%c5_13] : memref<81xf32, #tpu.memory_space<smem>>
    %194 = vector.extract_strided_slice %154 {offsets = [0, 2, 4], sizes = [2, 23, 23], strides = [1, 1, 1]} : vector<2x27x27xf32> to vector<2x23x23xf32>
    %195 = vector.broadcast %193 : f32 to vector<2x23x23xf32>
    %196 = arith.mulf %195, %194 : vector<2x23x23xf32>
    %197 = arith.addf %192, %196 : vector<2x23x23xf32>
    %c6_14 = arith.constant 6 : index
    %198 = memref.load %arg3[%c6_14] : memref<81xf32, #tpu.memory_space<smem>>
    %199 = vector.extract_strided_slice %154 {offsets = [0, 4, 0], sizes = [2, 23, 23], strides = [1, 1, 1]} : vector<2x27x27xf32> to vector<2x23x23xf32>
    %200 = vector.broadcast %198 : f32 to vector<2x23x23xf32>
    %201 = arith.mulf %200, %199 : vector<2x23x23xf32>
    %202 = arith.addf %197, %201 : vector<2x23x23xf32>
    %c7_15 = arith.constant 7 : index
    %203 = memref.load %arg3[%c7_15] : memref<81xf32, #tpu.memory_space<smem>>
    %204 = vector.extract_strided_slice %154 {offsets = [0, 4, 2], sizes = [2, 23, 23], strides = [1, 1, 1]} : vector<2x27x27xf32> to vector<2x23x23xf32>
    %205 = vector.broadcast %203 : f32 to vector<2x23x23xf32>
    %206 = arith.mulf %205, %204 : vector<2x23x23xf32>
    %207 = arith.addf %202, %206 : vector<2x23x23xf32>
    %c8_16 = arith.constant 8 : index
    %208 = memref.load %arg3[%c8_16] : memref<81xf32, #tpu.memory_space<smem>>
    %209 = vector.extract_strided_slice %154 {offsets = [0, 4, 4], sizes = [2, 23, 23], strides = [1, 1, 1]} : vector<2x27x27xf32> to vector<2x23x23xf32>
    %210 = vector.broadcast %208 : f32 to vector<2x23x23xf32>
    %211 = arith.mulf %210, %209 : vector<2x23x23xf32>
    %212 = arith.addf %207, %211 : vector<2x23x23xf32>
    %c9_17 = arith.constant 9 : index
    %213 = memref.load %arg3[%c9_17] : memref<81xf32, #tpu.memory_space<smem>>
    %214 = vector.extract_strided_slice %161 {offsets = [0, 0, 0], sizes = [2, 23, 23], strides = [1, 1, 1]} : vector<2x27x27xf32> to vector<2x23x23xf32>
    %215 = vector.broadcast %213 : f32 to vector<2x23x23xf32>
    %216 = arith.mulf %215, %214 : vector<2x23x23xf32>
    %217 = arith.addf %212, %216 : vector<2x23x23xf32>
    %c10_18 = arith.constant 10 : index
    %218 = memref.load %arg3[%c10_18] : memref<81xf32, #tpu.memory_space<smem>>
    %219 = vector.extract_strided_slice %161 {offsets = [0, 0, 2], sizes = [2, 23, 23], strides = [1, 1, 1]} : vector<2x27x27xf32> to vector<2x23x23xf32>
    %220 = vector.broadcast %218 : f32 to vector<2x23x23xf32>
    %221 = arith.mulf %220, %219 : vector<2x23x23xf32>
    %222 = arith.addf %217, %221 : vector<2x23x23xf32>
    %c11_19 = arith.constant 11 : index
    %223 = memref.load %arg3[%c11_19] : memref<81xf32, #tpu.memory_space<smem>>
    %224 = vector.extract_strided_slice %161 {offsets = [0, 0, 4], sizes = [2, 23, 23], strides = [1, 1, 1]} : vector<2x27x27xf32> to vector<2x23x23xf32>
    %225 = vector.broadcast %223 : f32 to vector<2x23x23xf32>
    %226 = arith.mulf %225, %224 : vector<2x23x23xf32>
    %227 = arith.addf %222, %226 : vector<2x23x23xf32>
    %c12_20 = arith.constant 12 : index
    %228 = memref.load %arg3[%c12_20] : memref<81xf32, #tpu.memory_space<smem>>
    %229 = vector.extract_strided_slice %161 {offsets = [0, 2, 0], sizes = [2, 23, 23], strides = [1, 1, 1]} : vector<2x27x27xf32> to vector<2x23x23xf32>
    %230 = vector.broadcast %228 : f32 to vector<2x23x23xf32>
    %231 = arith.mulf %230, %229 : vector<2x23x23xf32>
    %232 = arith.addf %227, %231 : vector<2x23x23xf32>
    %c13_21 = arith.constant 13 : index
    %233 = memref.load %arg3[%c13_21] : memref<81xf32, #tpu.memory_space<smem>>
    %234 = vector.extract_strided_slice %161 {offsets = [0, 2, 2], sizes = [2, 23, 23], strides = [1, 1, 1]} : vector<2x27x27xf32> to vector<2x23x23xf32>
    %235 = vector.broadcast %233 : f32 to vector<2x23x23xf32>
    %236 = arith.mulf %235, %234 : vector<2x23x23xf32>
    %237 = arith.addf %232, %236 : vector<2x23x23xf32>
    %c14_22 = arith.constant 14 : index
    %238 = memref.load %arg3[%c14_22] : memref<81xf32, #tpu.memory_space<smem>>
    %239 = vector.extract_strided_slice %161 {offsets = [0, 2, 4], sizes = [2, 23, 23], strides = [1, 1, 1]} : vector<2x27x27xf32> to vector<2x23x23xf32>
    %240 = vector.broadcast %238 : f32 to vector<2x23x23xf32>
    %241 = arith.mulf %240, %239 : vector<2x23x23xf32>
    %242 = arith.addf %237, %241 : vector<2x23x23xf32>
    %c15_23 = arith.constant 15 : index
    %243 = memref.load %arg3[%c15_23] : memref<81xf32, #tpu.memory_space<smem>>
    %244 = vector.extract_strided_slice %161 {offsets = [0, 4, 0], sizes = [2, 23, 23], strides = [1, 1, 1]} : vector<2x27x27xf32> to vector<2x23x23xf32>
    %245 = vector.broadcast %243 : f32 to vector<2x23x23xf32>
    %246 = arith.mulf %245, %244 : vector<2x23x23xf32>
    %247 = arith.addf %242, %246 : vector<2x23x23xf32>
    %c16_24 = arith.constant 16 : index
    %248 = memref.load %arg3[%c16_24] : memref<81xf32, #tpu.memory_space<smem>>
    %249 = vector.extract_strided_slice %161 {offsets = [0, 4, 2], sizes = [2, 23, 23], strides = [1, 1, 1]} : vector<2x27x27xf32> to vector<2x23x23xf32>
    %250 = vector.broadcast %248 : f32 to vector<2x23x23xf32>
    %251 = arith.mulf %250, %249 : vector<2x23x23xf32>
    %252 = arith.addf %247, %251 : vector<2x23x23xf32>
    %c17_25 = arith.constant 17 : index
    %253 = memref.load %arg3[%c17_25] : memref<81xf32, #tpu.memory_space<smem>>
    %254 = vector.extract_strided_slice %161 {offsets = [0, 4, 4], sizes = [2, 23, 23], strides = [1, 1, 1]} : vector<2x27x27xf32> to vector<2x23x23xf32>
    %255 = vector.broadcast %253 : f32 to vector<2x23x23xf32>
    %256 = arith.mulf %255, %254 : vector<2x23x23xf32>
    %257 = arith.addf %252, %256 : vector<2x23x23xf32>
    %c18_26 = arith.constant 18 : index
    %258 = memref.load %arg3[%c18_26] : memref<81xf32, #tpu.memory_space<smem>>
    %259 = vector.extract_strided_slice %168 {offsets = [0, 0, 0], sizes = [2, 23, 23], strides = [1, 1, 1]} : vector<2x27x27xf32> to vector<2x23x23xf32>
    %260 = vector.broadcast %258 : f32 to vector<2x23x23xf32>
    %261 = arith.mulf %260, %259 : vector<2x23x23xf32>
    %262 = arith.addf %257, %261 : vector<2x23x23xf32>
    %c19_27 = arith.constant 19 : index
    %263 = memref.load %arg3[%c19_27] : memref<81xf32, #tpu.memory_space<smem>>
    %264 = vector.extract_strided_slice %168 {offsets = [0, 0, 2], sizes = [2, 23, 23], strides = [1, 1, 1]} : vector<2x27x27xf32> to vector<2x23x23xf32>
    %265 = vector.broadcast %263 : f32 to vector<2x23x23xf32>
    %266 = arith.mulf %265, %264 : vector<2x23x23xf32>
    %267 = arith.addf %262, %266 : vector<2x23x23xf32>
    %c20_28 = arith.constant 20 : index
    %268 = memref.load %arg3[%c20_28] : memref<81xf32, #tpu.memory_space<smem>>
    %269 = vector.extract_strided_slice %168 {offsets = [0, 0, 4], sizes = [2, 23, 23], strides = [1, 1, 1]} : vector<2x27x27xf32> to vector<2x23x23xf32>
    %270 = vector.broadcast %268 : f32 to vector<2x23x23xf32>
    %271 = arith.mulf %270, %269 : vector<2x23x23xf32>
    %272 = arith.addf %267, %271 : vector<2x23x23xf32>
    %c21_29 = arith.constant 21 : index
    %273 = memref.load %arg3[%c21_29] : memref<81xf32, #tpu.memory_space<smem>>
    %274 = vector.extract_strided_slice %168 {offsets = [0, 2, 0], sizes = [2, 23, 23], strides = [1, 1, 1]} : vector<2x27x27xf32> to vector<2x23x23xf32>
    %275 = vector.broadcast %273 : f32 to vector<2x23x23xf32>
    %276 = arith.mulf %275, %274 : vector<2x23x23xf32>
    %277 = arith.addf %272, %276 : vector<2x23x23xf32>
    %c22_30 = arith.constant 22 : index
    %278 = memref.load %arg3[%c22_30] : memref<81xf32, #tpu.memory_space<smem>>
    %279 = vector.extract_strided_slice %168 {offsets = [0, 2, 2], sizes = [2, 23, 23], strides = [1, 1, 1]} : vector<2x27x27xf32> to vector<2x23x23xf32>
    %280 = vector.broadcast %278 : f32 to vector<2x23x23xf32>
    %281 = arith.mulf %280, %279 : vector<2x23x23xf32>
    %282 = arith.addf %277, %281 : vector<2x23x23xf32>
    %c23_31 = arith.constant 23 : index
    %283 = memref.load %arg3[%c23_31] : memref<81xf32, #tpu.memory_space<smem>>
    %284 = vector.extract_strided_slice %168 {offsets = [0, 2, 4], sizes = [2, 23, 23], strides = [1, 1, 1]} : vector<2x27x27xf32> to vector<2x23x23xf32>
    %285 = vector.broadcast %283 : f32 to vector<2x23x23xf32>
    %286 = arith.mulf %285, %284 : vector<2x23x23xf32>
    %287 = arith.addf %282, %286 : vector<2x23x23xf32>
    %c24_32 = arith.constant 24 : index
    %288 = memref.load %arg3[%c24_32] : memref<81xf32, #tpu.memory_space<smem>>
    %289 = vector.extract_strided_slice %168 {offsets = [0, 4, 0], sizes = [2, 23, 23], strides = [1, 1, 1]} : vector<2x27x27xf32> to vector<2x23x23xf32>
    %290 = vector.broadcast %288 : f32 to vector<2x23x23xf32>
    %291 = arith.mulf %290, %289 : vector<2x23x23xf32>
    %292 = arith.addf %287, %291 : vector<2x23x23xf32>
    %c25_33 = arith.constant 25 : index
    %293 = memref.load %arg3[%c25_33] : memref<81xf32, #tpu.memory_space<smem>>
    %294 = vector.extract_strided_slice %168 {offsets = [0, 4, 2], sizes = [2, 23, 23], strides = [1, 1, 1]} : vector<2x27x27xf32> to vector<2x23x23xf32>
    %295 = vector.broadcast %293 : f32 to vector<2x23x23xf32>
    %296 = arith.mulf %295, %294 : vector<2x23x23xf32>
    %297 = arith.addf %292, %296 : vector<2x23x23xf32>
    %c26_34 = arith.constant 26 : index
    %298 = memref.load %arg3[%c26_34] : memref<81xf32, #tpu.memory_space<smem>>
    %299 = vector.extract_strided_slice %168 {offsets = [0, 4, 4], sizes = [2, 23, 23], strides = [1, 1, 1]} : vector<2x27x27xf32> to vector<2x23x23xf32>
    %300 = vector.broadcast %298 : f32 to vector<2x23x23xf32>
    %301 = arith.mulf %300, %299 : vector<2x23x23xf32>
    %302 = arith.addf %297, %301 : vector<2x23x23xf32>
    %c0_35 = arith.constant 0 : index
    %303 = memref.load %arg4[%c0_35] : memref<3xf32, #tpu.memory_space<smem>>
    %304 = vector.broadcast %303 : f32 to vector<2x23x23xf32>
    %305 = arith.addf %302, %304 : vector<2x23x23xf32>
    %cst_36 = arith.constant 0.000000e+00 : f32
    %306 = vector.broadcast %cst_36 : f32 to vector<2x23x23xf32>
    %307 = arith.maximumf %305, %306 : vector<2x23x23xf32>
    %c27 = arith.constant 27 : index
    %308 = memref.load %arg3[%c27] : memref<81xf32, #tpu.memory_space<smem>>
    %309 = vector.extract_strided_slice %154 {offsets = [0, 0, 0], sizes = [2, 23, 23], strides = [1, 1, 1]} : vector<2x27x27xf32> to vector<2x23x23xf32>
    %310 = vector.broadcast %308 : f32 to vector<2x23x23xf32>
    %311 = arith.mulf %310, %309 : vector<2x23x23xf32>
    %c28 = arith.constant 28 : index
    %312 = memref.load %arg3[%c28] : memref<81xf32, #tpu.memory_space<smem>>
    %313 = vector.extract_strided_slice %154 {offsets = [0, 0, 2], sizes = [2, 23, 23], strides = [1, 1, 1]} : vector<2x27x27xf32> to vector<2x23x23xf32>
    %314 = vector.broadcast %312 : f32 to vector<2x23x23xf32>
    %315 = arith.mulf %314, %313 : vector<2x23x23xf32>
    %316 = arith.addf %311, %315 : vector<2x23x23xf32>
    %c29 = arith.constant 29 : index
    %317 = memref.load %arg3[%c29] : memref<81xf32, #tpu.memory_space<smem>>
    %318 = vector.extract_strided_slice %154 {offsets = [0, 0, 4], sizes = [2, 23, 23], strides = [1, 1, 1]} : vector<2x27x27xf32> to vector<2x23x23xf32>
    %319 = vector.broadcast %317 : f32 to vector<2x23x23xf32>
    %320 = arith.mulf %319, %318 : vector<2x23x23xf32>
    %321 = arith.addf %316, %320 : vector<2x23x23xf32>
    %c30 = arith.constant 30 : index
    %322 = memref.load %arg3[%c30] : memref<81xf32, #tpu.memory_space<smem>>
    %323 = vector.extract_strided_slice %154 {offsets = [0, 2, 0], sizes = [2, 23, 23], strides = [1, 1, 1]} : vector<2x27x27xf32> to vector<2x23x23xf32>
    %324 = vector.broadcast %322 : f32 to vector<2x23x23xf32>
    %325 = arith.mulf %324, %323 : vector<2x23x23xf32>
    %326 = arith.addf %321, %325 : vector<2x23x23xf32>
    %c31 = arith.constant 31 : index
    %327 = memref.load %arg3[%c31] : memref<81xf32, #tpu.memory_space<smem>>
    %328 = vector.extract_strided_slice %154 {offsets = [0, 2, 2], sizes = [2, 23, 23], strides = [1, 1, 1]} : vector<2x27x27xf32> to vector<2x23x23xf32>
    %329 = vector.broadcast %327 : f32 to vector<2x23x23xf32>
    %330 = arith.mulf %329, %328 : vector<2x23x23xf32>
    %331 = arith.addf %326, %330 : vector<2x23x23xf32>
    %c32 = arith.constant 32 : index
    %332 = memref.load %arg3[%c32] : memref<81xf32, #tpu.memory_space<smem>>
    %333 = vector.extract_strided_slice %154 {offsets = [0, 2, 4], sizes = [2, 23, 23], strides = [1, 1, 1]} : vector<2x27x27xf32> to vector<2x23x23xf32>
    %334 = vector.broadcast %332 : f32 to vector<2x23x23xf32>
    %335 = arith.mulf %334, %333 : vector<2x23x23xf32>
    %336 = arith.addf %331, %335 : vector<2x23x23xf32>
    %c33 = arith.constant 33 : index
    %337 = memref.load %arg3[%c33] : memref<81xf32, #tpu.memory_space<smem>>
    %338 = vector.extract_strided_slice %154 {offsets = [0, 4, 0], sizes = [2, 23, 23], strides = [1, 1, 1]} : vector<2x27x27xf32> to vector<2x23x23xf32>
    %339 = vector.broadcast %337 : f32 to vector<2x23x23xf32>
    %340 = arith.mulf %339, %338 : vector<2x23x23xf32>
    %341 = arith.addf %336, %340 : vector<2x23x23xf32>
    %c34 = arith.constant 34 : index
    %342 = memref.load %arg3[%c34] : memref<81xf32, #tpu.memory_space<smem>>
    %343 = vector.extract_strided_slice %154 {offsets = [0, 4, 2], sizes = [2, 23, 23], strides = [1, 1, 1]} : vector<2x27x27xf32> to vector<2x23x23xf32>
    %344 = vector.broadcast %342 : f32 to vector<2x23x23xf32>
    %345 = arith.mulf %344, %343 : vector<2x23x23xf32>
    %346 = arith.addf %341, %345 : vector<2x23x23xf32>
    %c35 = arith.constant 35 : index
    %347 = memref.load %arg3[%c35] : memref<81xf32, #tpu.memory_space<smem>>
    %348 = vector.extract_strided_slice %154 {offsets = [0, 4, 4], sizes = [2, 23, 23], strides = [1, 1, 1]} : vector<2x27x27xf32> to vector<2x23x23xf32>
    %349 = vector.broadcast %347 : f32 to vector<2x23x23xf32>
    %350 = arith.mulf %349, %348 : vector<2x23x23xf32>
    %351 = arith.addf %346, %350 : vector<2x23x23xf32>
    %c36 = arith.constant 36 : index
    %352 = memref.load %arg3[%c36] : memref<81xf32, #tpu.memory_space<smem>>
    %353 = vector.extract_strided_slice %161 {offsets = [0, 0, 0], sizes = [2, 23, 23], strides = [1, 1, 1]} : vector<2x27x27xf32> to vector<2x23x23xf32>
    %354 = vector.broadcast %352 : f32 to vector<2x23x23xf32>
    %355 = arith.mulf %354, %353 : vector<2x23x23xf32>
    %356 = arith.addf %351, %355 : vector<2x23x23xf32>
    %c37 = arith.constant 37 : index
    %357 = memref.load %arg3[%c37] : memref<81xf32, #tpu.memory_space<smem>>
    %358 = vector.extract_strided_slice %161 {offsets = [0, 0, 2], sizes = [2, 23, 23], strides = [1, 1, 1]} : vector<2x27x27xf32> to vector<2x23x23xf32>
    %359 = vector.broadcast %357 : f32 to vector<2x23x23xf32>
    %360 = arith.mulf %359, %358 : vector<2x23x23xf32>
    %361 = arith.addf %356, %360 : vector<2x23x23xf32>
    %c38 = arith.constant 38 : index
    %362 = memref.load %arg3[%c38] : memref<81xf32, #tpu.memory_space<smem>>
    %363 = vector.extract_strided_slice %161 {offsets = [0, 0, 4], sizes = [2, 23, 23], strides = [1, 1, 1]} : vector<2x27x27xf32> to vector<2x23x23xf32>
    %364 = vector.broadcast %362 : f32 to vector<2x23x23xf32>
    %365 = arith.mulf %364, %363 : vector<2x23x23xf32>
    %366 = arith.addf %361, %365 : vector<2x23x23xf32>
    %c39 = arith.constant 39 : index
    %367 = memref.load %arg3[%c39] : memref<81xf32, #tpu.memory_space<smem>>
    %368 = vector.extract_strided_slice %161 {offsets = [0, 2, 0], sizes = [2, 23, 23], strides = [1, 1, 1]} : vector<2x27x27xf32> to vector<2x23x23xf32>
    %369 = vector.broadcast %367 : f32 to vector<2x23x23xf32>
    %370 = arith.mulf %369, %368 : vector<2x23x23xf32>
    %371 = arith.addf %366, %370 : vector<2x23x23xf32>
    %c40 = arith.constant 40 : index
    %372 = memref.load %arg3[%c40] : memref<81xf32, #tpu.memory_space<smem>>
    %373 = vector.extract_strided_slice %161 {offsets = [0, 2, 2], sizes = [2, 23, 23], strides = [1, 1, 1]} : vector<2x27x27xf32> to vector<2x23x23xf32>
    %374 = vector.broadcast %372 : f32 to vector<2x23x23xf32>
    %375 = arith.mulf %374, %373 : vector<2x23x23xf32>
    %376 = arith.addf %371, %375 : vector<2x23x23xf32>
    %c41 = arith.constant 41 : index
    %377 = memref.load %arg3[%c41] : memref<81xf32, #tpu.memory_space<smem>>
    %378 = vector.extract_strided_slice %161 {offsets = [0, 2, 4], sizes = [2, 23, 23], strides = [1, 1, 1]} : vector<2x27x27xf32> to vector<2x23x23xf32>
    %379 = vector.broadcast %377 : f32 to vector<2x23x23xf32>
    %380 = arith.mulf %379, %378 : vector<2x23x23xf32>
    %381 = arith.addf %376, %380 : vector<2x23x23xf32>
    %c42 = arith.constant 42 : index
    %382 = memref.load %arg3[%c42] : memref<81xf32, #tpu.memory_space<smem>>
    %383 = vector.extract_strided_slice %161 {offsets = [0, 4, 0], sizes = [2, 23, 23], strides = [1, 1, 1]} : vector<2x27x27xf32> to vector<2x23x23xf32>
    %384 = vector.broadcast %382 : f32 to vector<2x23x23xf32>
    %385 = arith.mulf %384, %383 : vector<2x23x23xf32>
    %386 = arith.addf %381, %385 : vector<2x23x23xf32>
    %c43 = arith.constant 43 : index
    %387 = memref.load %arg3[%c43] : memref<81xf32, #tpu.memory_space<smem>>
    %388 = vector.extract_strided_slice %161 {offsets = [0, 4, 2], sizes = [2, 23, 23], strides = [1, 1, 1]} : vector<2x27x27xf32> to vector<2x23x23xf32>
    %389 = vector.broadcast %387 : f32 to vector<2x23x23xf32>
    %390 = arith.mulf %389, %388 : vector<2x23x23xf32>
    %391 = arith.addf %386, %390 : vector<2x23x23xf32>
    %c44 = arith.constant 44 : index
    %392 = memref.load %arg3[%c44] : memref<81xf32, #tpu.memory_space<smem>>
    %393 = vector.extract_strided_slice %161 {offsets = [0, 4, 4], sizes = [2, 23, 23], strides = [1, 1, 1]} : vector<2x27x27xf32> to vector<2x23x23xf32>
    %394 = vector.broadcast %392 : f32 to vector<2x23x23xf32>
    %395 = arith.mulf %394, %393 : vector<2x23x23xf32>
    %396 = arith.addf %391, %395 : vector<2x23x23xf32>
    %c45 = arith.constant 45 : index
    %397 = memref.load %arg3[%c45] : memref<81xf32, #tpu.memory_space<smem>>
    %398 = vector.extract_strided_slice %168 {offsets = [0, 0, 0], sizes = [2, 23, 23], strides = [1, 1, 1]} : vector<2x27x27xf32> to vector<2x23x23xf32>
    %399 = vector.broadcast %397 : f32 to vector<2x23x23xf32>
    %400 = arith.mulf %399, %398 : vector<2x23x23xf32>
    %401 = arith.addf %396, %400 : vector<2x23x23xf32>
    %c46 = arith.constant 46 : index
    %402 = memref.load %arg3[%c46] : memref<81xf32, #tpu.memory_space<smem>>
    %403 = vector.extract_strided_slice %168 {offsets = [0, 0, 2], sizes = [2, 23, 23], strides = [1, 1, 1]} : vector<2x27x27xf32> to vector<2x23x23xf32>
    %404 = vector.broadcast %402 : f32 to vector<2x23x23xf32>
    %405 = arith.mulf %404, %403 : vector<2x23x23xf32>
    %406 = arith.addf %401, %405 : vector<2x23x23xf32>
    %c47 = arith.constant 47 : index
    %407 = memref.load %arg3[%c47] : memref<81xf32, #tpu.memory_space<smem>>
    %408 = vector.extract_strided_slice %168 {offsets = [0, 0, 4], sizes = [2, 23, 23], strides = [1, 1, 1]} : vector<2x27x27xf32> to vector<2x23x23xf32>
    %409 = vector.broadcast %407 : f32 to vector<2x23x23xf32>
    %410 = arith.mulf %409, %408 : vector<2x23x23xf32>
    %411 = arith.addf %406, %410 : vector<2x23x23xf32>
    %c48 = arith.constant 48 : index
    %412 = memref.load %arg3[%c48] : memref<81xf32, #tpu.memory_space<smem>>
    %413 = vector.extract_strided_slice %168 {offsets = [0, 2, 0], sizes = [2, 23, 23], strides = [1, 1, 1]} : vector<2x27x27xf32> to vector<2x23x23xf32>
    %414 = vector.broadcast %412 : f32 to vector<2x23x23xf32>
    %415 = arith.mulf %414, %413 : vector<2x23x23xf32>
    %416 = arith.addf %411, %415 : vector<2x23x23xf32>
    %c49 = arith.constant 49 : index
    %417 = memref.load %arg3[%c49] : memref<81xf32, #tpu.memory_space<smem>>
    %418 = vector.extract_strided_slice %168 {offsets = [0, 2, 2], sizes = [2, 23, 23], strides = [1, 1, 1]} : vector<2x27x27xf32> to vector<2x23x23xf32>
    %419 = vector.broadcast %417 : f32 to vector<2x23x23xf32>
    %420 = arith.mulf %419, %418 : vector<2x23x23xf32>
    %421 = arith.addf %416, %420 : vector<2x23x23xf32>
    %c50 = arith.constant 50 : index
    %422 = memref.load %arg3[%c50] : memref<81xf32, #tpu.memory_space<smem>>
    %423 = vector.extract_strided_slice %168 {offsets = [0, 2, 4], sizes = [2, 23, 23], strides = [1, 1, 1]} : vector<2x27x27xf32> to vector<2x23x23xf32>
    %424 = vector.broadcast %422 : f32 to vector<2x23x23xf32>
    %425 = arith.mulf %424, %423 : vector<2x23x23xf32>
    %426 = arith.addf %421, %425 : vector<2x23x23xf32>
    %c51 = arith.constant 51 : index
    %427 = memref.load %arg3[%c51] : memref<81xf32, #tpu.memory_space<smem>>
    %428 = vector.extract_strided_slice %168 {offsets = [0, 4, 0], sizes = [2, 23, 23], strides = [1, 1, 1]} : vector<2x27x27xf32> to vector<2x23x23xf32>
    %429 = vector.broadcast %427 : f32 to vector<2x23x23xf32>
    %430 = arith.mulf %429, %428 : vector<2x23x23xf32>
    %431 = arith.addf %426, %430 : vector<2x23x23xf32>
    %c52 = arith.constant 52 : index
    %432 = memref.load %arg3[%c52] : memref<81xf32, #tpu.memory_space<smem>>
    %433 = vector.extract_strided_slice %168 {offsets = [0, 4, 2], sizes = [2, 23, 23], strides = [1, 1, 1]} : vector<2x27x27xf32> to vector<2x23x23xf32>
    %434 = vector.broadcast %432 : f32 to vector<2x23x23xf32>
    %435 = arith.mulf %434, %433 : vector<2x23x23xf32>
    %436 = arith.addf %431, %435 : vector<2x23x23xf32>
    %c53 = arith.constant 53 : index
    %437 = memref.load %arg3[%c53] : memref<81xf32, #tpu.memory_space<smem>>
    %438 = vector.extract_strided_slice %168 {offsets = [0, 4, 4], sizes = [2, 23, 23], strides = [1, 1, 1]} : vector<2x27x27xf32> to vector<2x23x23xf32>
    %439 = vector.broadcast %437 : f32 to vector<2x23x23xf32>
    %440 = arith.mulf %439, %438 : vector<2x23x23xf32>
    %441 = arith.addf %436, %440 : vector<2x23x23xf32>
    %c1_37 = arith.constant 1 : index
    %442 = memref.load %arg4[%c1_37] : memref<3xf32, #tpu.memory_space<smem>>
    %443 = vector.broadcast %442 : f32 to vector<2x23x23xf32>
    %444 = arith.addf %441, %443 : vector<2x23x23xf32>
    %cst_38 = arith.constant 0.000000e+00 : f32
    %445 = vector.broadcast %cst_38 : f32 to vector<2x23x23xf32>
    %446 = arith.maximumf %444, %445 : vector<2x23x23xf32>
    %c54 = arith.constant 54 : index
    %447 = memref.load %arg3[%c54] : memref<81xf32, #tpu.memory_space<smem>>
    %448 = vector.extract_strided_slice %154 {offsets = [0, 0, 0], sizes = [2, 23, 23], strides = [1, 1, 1]} : vector<2x27x27xf32> to vector<2x23x23xf32>
    %449 = vector.broadcast %447 : f32 to vector<2x23x23xf32>
    %450 = arith.mulf %449, %448 : vector<2x23x23xf32>
    %c55 = arith.constant 55 : index
    %451 = memref.load %arg3[%c55] : memref<81xf32, #tpu.memory_space<smem>>
    %452 = vector.extract_strided_slice %154 {offsets = [0, 0, 2], sizes = [2, 23, 23], strides = [1, 1, 1]} : vector<2x27x27xf32> to vector<2x23x23xf32>
    %453 = vector.broadcast %451 : f32 to vector<2x23x23xf32>
    %454 = arith.mulf %453, %452 : vector<2x23x23xf32>
    %455 = arith.addf %450, %454 : vector<2x23x23xf32>
    %c56 = arith.constant 56 : index
    %456 = memref.load %arg3[%c56] : memref<81xf32, #tpu.memory_space<smem>>
    %457 = vector.extract_strided_slice %154 {offsets = [0, 0, 4], sizes = [2, 23, 23], strides = [1, 1, 1]} : vector<2x27x27xf32> to vector<2x23x23xf32>
    %458 = vector.broadcast %456 : f32 to vector<2x23x23xf32>
    %459 = arith.mulf %458, %457 : vector<2x23x23xf32>
    %460 = arith.addf %455, %459 : vector<2x23x23xf32>
    %c57 = arith.constant 57 : index
    %461 = memref.load %arg3[%c57] : memref<81xf32, #tpu.memory_space<smem>>
    %462 = vector.extract_strided_slice %154 {offsets = [0, 2, 0], sizes = [2, 23, 23], strides = [1, 1, 1]} : vector<2x27x27xf32> to vector<2x23x23xf32>
    %463 = vector.broadcast %461 : f32 to vector<2x23x23xf32>
    %464 = arith.mulf %463, %462 : vector<2x23x23xf32>
    %465 = arith.addf %460, %464 : vector<2x23x23xf32>
    %c58 = arith.constant 58 : index
    %466 = memref.load %arg3[%c58] : memref<81xf32, #tpu.memory_space<smem>>
    %467 = vector.extract_strided_slice %154 {offsets = [0, 2, 2], sizes = [2, 23, 23], strides = [1, 1, 1]} : vector<2x27x27xf32> to vector<2x23x23xf32>
    %468 = vector.broadcast %466 : f32 to vector<2x23x23xf32>
    %469 = arith.mulf %468, %467 : vector<2x23x23xf32>
    %470 = arith.addf %465, %469 : vector<2x23x23xf32>
    %c59 = arith.constant 59 : index
    %471 = memref.load %arg3[%c59] : memref<81xf32, #tpu.memory_space<smem>>
    %472 = vector.extract_strided_slice %154 {offsets = [0, 2, 4], sizes = [2, 23, 23], strides = [1, 1, 1]} : vector<2x27x27xf32> to vector<2x23x23xf32>
    %473 = vector.broadcast %471 : f32 to vector<2x23x23xf32>
    %474 = arith.mulf %473, %472 : vector<2x23x23xf32>
    %475 = arith.addf %470, %474 : vector<2x23x23xf32>
    %c60 = arith.constant 60 : index
    %476 = memref.load %arg3[%c60] : memref<81xf32, #tpu.memory_space<smem>>
    %477 = vector.extract_strided_slice %154 {offsets = [0, 4, 0], sizes = [2, 23, 23], strides = [1, 1, 1]} : vector<2x27x27xf32> to vector<2x23x23xf32>
    %478 = vector.broadcast %476 : f32 to vector<2x23x23xf32>
    %479 = arith.mulf %478, %477 : vector<2x23x23xf32>
    %480 = arith.addf %475, %479 : vector<2x23x23xf32>
    %c61 = arith.constant 61 : index
    %481 = memref.load %arg3[%c61] : memref<81xf32, #tpu.memory_space<smem>>
    %482 = vector.extract_strided_slice %154 {offsets = [0, 4, 2], sizes = [2, 23, 23], strides = [1, 1, 1]} : vector<2x27x27xf32> to vector<2x23x23xf32>
    %483 = vector.broadcast %481 : f32 to vector<2x23x23xf32>
    %484 = arith.mulf %483, %482 : vector<2x23x23xf32>
    %485 = arith.addf %480, %484 : vector<2x23x23xf32>
    %c62 = arith.constant 62 : index
    %486 = memref.load %arg3[%c62] : memref<81xf32, #tpu.memory_space<smem>>
    %487 = vector.extract_strided_slice %154 {offsets = [0, 4, 4], sizes = [2, 23, 23], strides = [1, 1, 1]} : vector<2x27x27xf32> to vector<2x23x23xf32>
    %488 = vector.broadcast %486 : f32 to vector<2x23x23xf32>
    %489 = arith.mulf %488, %487 : vector<2x23x23xf32>
    %490 = arith.addf %485, %489 : vector<2x23x23xf32>
    %c63 = arith.constant 63 : index
    %491 = memref.load %arg3[%c63] : memref<81xf32, #tpu.memory_space<smem>>
    %492 = vector.extract_strided_slice %161 {offsets = [0, 0, 0], sizes = [2, 23, 23], strides = [1, 1, 1]} : vector<2x27x27xf32> to vector<2x23x23xf32>
    %493 = vector.broadcast %491 : f32 to vector<2x23x23xf32>
    %494 = arith.mulf %493, %492 : vector<2x23x23xf32>
    %495 = arith.addf %490, %494 : vector<2x23x23xf32>
    %c64 = arith.constant 64 : index
    %496 = memref.load %arg3[%c64] : memref<81xf32, #tpu.memory_space<smem>>
    %497 = vector.extract_strided_slice %161 {offsets = [0, 0, 2], sizes = [2, 23, 23], strides = [1, 1, 1]} : vector<2x27x27xf32> to vector<2x23x23xf32>
    %498 = vector.broadcast %496 : f32 to vector<2x23x23xf32>
    %499 = arith.mulf %498, %497 : vector<2x23x23xf32>
    %500 = arith.addf %495, %499 : vector<2x23x23xf32>
    %c65 = arith.constant 65 : index
    %501 = memref.load %arg3[%c65] : memref<81xf32, #tpu.memory_space<smem>>
    %502 = vector.extract_strided_slice %161 {offsets = [0, 0, 4], sizes = [2, 23, 23], strides = [1, 1, 1]} : vector<2x27x27xf32> to vector<2x23x23xf32>
    %503 = vector.broadcast %501 : f32 to vector<2x23x23xf32>
    %504 = arith.mulf %503, %502 : vector<2x23x23xf32>
    %505 = arith.addf %500, %504 : vector<2x23x23xf32>
    %c66 = arith.constant 66 : index
    %506 = memref.load %arg3[%c66] : memref<81xf32, #tpu.memory_space<smem>>
    %507 = vector.extract_strided_slice %161 {offsets = [0, 2, 0], sizes = [2, 23, 23], strides = [1, 1, 1]} : vector<2x27x27xf32> to vector<2x23x23xf32>
    %508 = vector.broadcast %506 : f32 to vector<2x23x23xf32>
    %509 = arith.mulf %508, %507 : vector<2x23x23xf32>
    %510 = arith.addf %505, %509 : vector<2x23x23xf32>
    %c67 = arith.constant 67 : index
    %511 = memref.load %arg3[%c67] : memref<81xf32, #tpu.memory_space<smem>>
    %512 = vector.extract_strided_slice %161 {offsets = [0, 2, 2], sizes = [2, 23, 23], strides = [1, 1, 1]} : vector<2x27x27xf32> to vector<2x23x23xf32>
    %513 = vector.broadcast %511 : f32 to vector<2x23x23xf32>
    %514 = arith.mulf %513, %512 : vector<2x23x23xf32>
    %515 = arith.addf %510, %514 : vector<2x23x23xf32>
    %c68 = arith.constant 68 : index
    %516 = memref.load %arg3[%c68] : memref<81xf32, #tpu.memory_space<smem>>
    %517 = vector.extract_strided_slice %161 {offsets = [0, 2, 4], sizes = [2, 23, 23], strides = [1, 1, 1]} : vector<2x27x27xf32> to vector<2x23x23xf32>
    %518 = vector.broadcast %516 : f32 to vector<2x23x23xf32>
    %519 = arith.mulf %518, %517 : vector<2x23x23xf32>
    %520 = arith.addf %515, %519 : vector<2x23x23xf32>
    %c69 = arith.constant 69 : index
    %521 = memref.load %arg3[%c69] : memref<81xf32, #tpu.memory_space<smem>>
    %522 = vector.extract_strided_slice %161 {offsets = [0, 4, 0], sizes = [2, 23, 23], strides = [1, 1, 1]} : vector<2x27x27xf32> to vector<2x23x23xf32>
    %523 = vector.broadcast %521 : f32 to vector<2x23x23xf32>
    %524 = arith.mulf %523, %522 : vector<2x23x23xf32>
    %525 = arith.addf %520, %524 : vector<2x23x23xf32>
    %c70 = arith.constant 70 : index
    %526 = memref.load %arg3[%c70] : memref<81xf32, #tpu.memory_space<smem>>
    %527 = vector.extract_strided_slice %161 {offsets = [0, 4, 2], sizes = [2, 23, 23], strides = [1, 1, 1]} : vector<2x27x27xf32> to vector<2x23x23xf32>
    %528 = vector.broadcast %526 : f32 to vector<2x23x23xf32>
    %529 = arith.mulf %528, %527 : vector<2x23x23xf32>
    %530 = arith.addf %525, %529 : vector<2x23x23xf32>
    %c71 = arith.constant 71 : index
    %531 = memref.load %arg3[%c71] : memref<81xf32, #tpu.memory_space<smem>>
    %532 = vector.extract_strided_slice %161 {offsets = [0, 4, 4], sizes = [2, 23, 23], strides = [1, 1, 1]} : vector<2x27x27xf32> to vector<2x23x23xf32>
    %533 = vector.broadcast %531 : f32 to vector<2x23x23xf32>
    %534 = arith.mulf %533, %532 : vector<2x23x23xf32>
    %535 = arith.addf %530, %534 : vector<2x23x23xf32>
    %c72 = arith.constant 72 : index
    %536 = memref.load %arg3[%c72] : memref<81xf32, #tpu.memory_space<smem>>
    %537 = vector.extract_strided_slice %168 {offsets = [0, 0, 0], sizes = [2, 23, 23], strides = [1, 1, 1]} : vector<2x27x27xf32> to vector<2x23x23xf32>
    %538 = vector.broadcast %536 : f32 to vector<2x23x23xf32>
    %539 = arith.mulf %538, %537 : vector<2x23x23xf32>
    %540 = arith.addf %535, %539 : vector<2x23x23xf32>
    %c73 = arith.constant 73 : index
    %541 = memref.load %arg3[%c73] : memref<81xf32, #tpu.memory_space<smem>>
    %542 = vector.extract_strided_slice %168 {offsets = [0, 0, 2], sizes = [2, 23, 23], strides = [1, 1, 1]} : vector<2x27x27xf32> to vector<2x23x23xf32>
    %543 = vector.broadcast %541 : f32 to vector<2x23x23xf32>
    %544 = arith.mulf %543, %542 : vector<2x23x23xf32>
    %545 = arith.addf %540, %544 : vector<2x23x23xf32>
    %c74 = arith.constant 74 : index
    %546 = memref.load %arg3[%c74] : memref<81xf32, #tpu.memory_space<smem>>
    %547 = vector.extract_strided_slice %168 {offsets = [0, 0, 4], sizes = [2, 23, 23], strides = [1, 1, 1]} : vector<2x27x27xf32> to vector<2x23x23xf32>
    %548 = vector.broadcast %546 : f32 to vector<2x23x23xf32>
    %549 = arith.mulf %548, %547 : vector<2x23x23xf32>
    %550 = arith.addf %545, %549 : vector<2x23x23xf32>
    %c75 = arith.constant 75 : index
    %551 = memref.load %arg3[%c75] : memref<81xf32, #tpu.memory_space<smem>>
    %552 = vector.extract_strided_slice %168 {offsets = [0, 2, 0], sizes = [2, 23, 23], strides = [1, 1, 1]} : vector<2x27x27xf32> to vector<2x23x23xf32>
    %553 = vector.broadcast %551 : f32 to vector<2x23x23xf32>
    %554 = arith.mulf %553, %552 : vector<2x23x23xf32>
    %555 = arith.addf %550, %554 : vector<2x23x23xf32>
    %c76 = arith.constant 76 : index
    %556 = memref.load %arg3[%c76] : memref<81xf32, #tpu.memory_space<smem>>
    %557 = vector.extract_strided_slice %168 {offsets = [0, 2, 2], sizes = [2, 23, 23], strides = [1, 1, 1]} : vector<2x27x27xf32> to vector<2x23x23xf32>
    %558 = vector.broadcast %556 : f32 to vector<2x23x23xf32>
    %559 = arith.mulf %558, %557 : vector<2x23x23xf32>
    %560 = arith.addf %555, %559 : vector<2x23x23xf32>
    %c77 = arith.constant 77 : index
    %561 = memref.load %arg3[%c77] : memref<81xf32, #tpu.memory_space<smem>>
    %562 = vector.extract_strided_slice %168 {offsets = [0, 2, 4], sizes = [2, 23, 23], strides = [1, 1, 1]} : vector<2x27x27xf32> to vector<2x23x23xf32>
    %563 = vector.broadcast %561 : f32 to vector<2x23x23xf32>
    %564 = arith.mulf %563, %562 : vector<2x23x23xf32>
    %565 = arith.addf %560, %564 : vector<2x23x23xf32>
    %c78 = arith.constant 78 : index
    %566 = memref.load %arg3[%c78] : memref<81xf32, #tpu.memory_space<smem>>
    %567 = vector.extract_strided_slice %168 {offsets = [0, 4, 0], sizes = [2, 23, 23], strides = [1, 1, 1]} : vector<2x27x27xf32> to vector<2x23x23xf32>
    %568 = vector.broadcast %566 : f32 to vector<2x23x23xf32>
    %569 = arith.mulf %568, %567 : vector<2x23x23xf32>
    %570 = arith.addf %565, %569 : vector<2x23x23xf32>
    %c79 = arith.constant 79 : index
    %571 = memref.load %arg3[%c79] : memref<81xf32, #tpu.memory_space<smem>>
    %572 = vector.extract_strided_slice %168 {offsets = [0, 4, 2], sizes = [2, 23, 23], strides = [1, 1, 1]} : vector<2x27x27xf32> to vector<2x23x23xf32>
    %573 = vector.broadcast %571 : f32 to vector<2x23x23xf32>
    %574 = arith.mulf %573, %572 : vector<2x23x23xf32>
    %575 = arith.addf %570, %574 : vector<2x23x23xf32>
    %c80 = arith.constant 80 : index
    %576 = memref.load %arg3[%c80] : memref<81xf32, #tpu.memory_space<smem>>
    %577 = vector.extract_strided_slice %168 {offsets = [0, 4, 4], sizes = [2, 23, 23], strides = [1, 1, 1]} : vector<2x27x27xf32> to vector<2x23x23xf32>
    %578 = vector.broadcast %576 : f32 to vector<2x23x23xf32>
    %579 = arith.mulf %578, %577 : vector<2x23x23xf32>
    %580 = arith.addf %575, %579 : vector<2x23x23xf32>
    %c2_39 = arith.constant 2 : index
    %581 = memref.load %arg4[%c2_39] : memref<3xf32, #tpu.memory_space<smem>>
    %582 = vector.broadcast %581 : f32 to vector<2x23x23xf32>
    %583 = arith.addf %580, %582 : vector<2x23x23xf32>
    %cst_40 = arith.constant 0.000000e+00 : f32
    %584 = vector.broadcast %cst_40 : f32 to vector<2x23x23xf32>
    %585 = arith.maximumf %583, %584 : vector<2x23x23xf32>
    %586 = vector.extract_strided_slice %307 {offsets = [0, 0, 0], sizes = [2, 21, 21], strides = [1, 1, 1]} : vector<2x23x23xf32> to vector<2x21x21xf32>
    %587 = vector.extract_strided_slice %307 {offsets = [0, 0, 2], sizes = [2, 21, 21], strides = [1, 1, 1]} : vector<2x23x23xf32> to vector<2x21x21xf32>
    %588 = arith.maximumf %586, %587 : vector<2x21x21xf32>
    %589 = vector.extract_strided_slice %307 {offsets = [0, 2, 0], sizes = [2, 21, 21], strides = [1, 1, 1]} : vector<2x23x23xf32> to vector<2x21x21xf32>
    %590 = vector.extract_strided_slice %307 {offsets = [0, 2, 2], sizes = [2, 21, 21], strides = [1, 1, 1]} : vector<2x23x23xf32> to vector<2x21x21xf32>
    %591 = arith.maximumf %589, %590 : vector<2x21x21xf32>
    %592 = arith.maximumf %588, %591 : vector<2x21x21xf32>
    %593 = vector.extract_strided_slice %446 {offsets = [0, 0, 0], sizes = [2, 21, 21], strides = [1, 1, 1]} : vector<2x23x23xf32> to vector<2x21x21xf32>
    %594 = vector.extract_strided_slice %446 {offsets = [0, 0, 2], sizes = [2, 21, 21], strides = [1, 1, 1]} : vector<2x23x23xf32> to vector<2x21x21xf32>
    %595 = arith.maximumf %593, %594 : vector<2x21x21xf32>
    %596 = vector.extract_strided_slice %446 {offsets = [0, 2, 0], sizes = [2, 21, 21], strides = [1, 1, 1]} : vector<2x23x23xf32> to vector<2x21x21xf32>
    %597 = vector.extract_strided_slice %446 {offsets = [0, 2, 2], sizes = [2, 21, 21], strides = [1, 1, 1]} : vector<2x23x23xf32> to vector<2x21x21xf32>
    %598 = arith.maximumf %596, %597 : vector<2x21x21xf32>
    %599 = arith.maximumf %595, %598 : vector<2x21x21xf32>
    %600 = vector.extract_strided_slice %585 {offsets = [0, 0, 0], sizes = [2, 21, 21], strides = [1, 1, 1]} : vector<2x23x23xf32> to vector<2x21x21xf32>
    %601 = vector.extract_strided_slice %585 {offsets = [0, 0, 2], sizes = [2, 21, 21], strides = [1, 1, 1]} : vector<2x23x23xf32> to vector<2x21x21xf32>
    %602 = arith.maximumf %600, %601 : vector<2x21x21xf32>
    %603 = vector.extract_strided_slice %585 {offsets = [0, 2, 0], sizes = [2, 21, 21], strides = [1, 1, 1]} : vector<2x23x23xf32> to vector<2x21x21xf32>
    %604 = vector.extract_strided_slice %585 {offsets = [0, 2, 2], sizes = [2, 21, 21], strides = [1, 1, 1]} : vector<2x23x23xf32> to vector<2x21x21xf32>
    %605 = arith.maximumf %603, %604 : vector<2x21x21xf32>
    %606 = arith.maximumf %602, %605 : vector<2x21x21xf32>
    %c0_41 = arith.constant 0 : index
    %607 = memref.load %arg5[%c0_41] : memref<81xf32, #tpu.memory_space<smem>>
    %608 = vector.extract_strided_slice %592 {offsets = [0, 0, 0], sizes = [2, 13, 13], strides = [1, 1, 1]} : vector<2x21x21xf32> to vector<2x13x13xf32>
    %609 = vector.broadcast %607 : f32 to vector<2x13x13xf32>
    %610 = arith.mulf %609, %608 : vector<2x13x13xf32>
    %c1_42 = arith.constant 1 : index
    %611 = memref.load %arg5[%c1_42] : memref<81xf32, #tpu.memory_space<smem>>
    %612 = vector.extract_strided_slice %592 {offsets = [0, 0, 4], sizes = [2, 13, 13], strides = [1, 1, 1]} : vector<2x21x21xf32> to vector<2x13x13xf32>
    %613 = vector.broadcast %611 : f32 to vector<2x13x13xf32>
    %614 = arith.mulf %613, %612 : vector<2x13x13xf32>
    %615 = arith.addf %610, %614 : vector<2x13x13xf32>
    %c2_43 = arith.constant 2 : index
    %616 = memref.load %arg5[%c2_43] : memref<81xf32, #tpu.memory_space<smem>>
    %617 = vector.extract_strided_slice %592 {offsets = [0, 0, 8], sizes = [2, 13, 13], strides = [1, 1, 1]} : vector<2x21x21xf32> to vector<2x13x13xf32>
    %618 = vector.broadcast %616 : f32 to vector<2x13x13xf32>
    %619 = arith.mulf %618, %617 : vector<2x13x13xf32>
    %620 = arith.addf %615, %619 : vector<2x13x13xf32>
    %c3_44 = arith.constant 3 : index
    %621 = memref.load %arg5[%c3_44] : memref<81xf32, #tpu.memory_space<smem>>
    %622 = vector.extract_strided_slice %592 {offsets = [0, 4, 0], sizes = [2, 13, 13], strides = [1, 1, 1]} : vector<2x21x21xf32> to vector<2x13x13xf32>
    %623 = vector.broadcast %621 : f32 to vector<2x13x13xf32>
    %624 = arith.mulf %623, %622 : vector<2x13x13xf32>
    %625 = arith.addf %620, %624 : vector<2x13x13xf32>
    %c4_45 = arith.constant 4 : index
    %626 = memref.load %arg5[%c4_45] : memref<81xf32, #tpu.memory_space<smem>>
    %627 = vector.extract_strided_slice %592 {offsets = [0, 4, 4], sizes = [2, 13, 13], strides = [1, 1, 1]} : vector<2x21x21xf32> to vector<2x13x13xf32>
    %628 = vector.broadcast %626 : f32 to vector<2x13x13xf32>
    %629 = arith.mulf %628, %627 : vector<2x13x13xf32>
    %630 = arith.addf %625, %629 : vector<2x13x13xf32>
    %c5_46 = arith.constant 5 : index
    %631 = memref.load %arg5[%c5_46] : memref<81xf32, #tpu.memory_space<smem>>
    %632 = vector.extract_strided_slice %592 {offsets = [0, 4, 8], sizes = [2, 13, 13], strides = [1, 1, 1]} : vector<2x21x21xf32> to vector<2x13x13xf32>
    %633 = vector.broadcast %631 : f32 to vector<2x13x13xf32>
    %634 = arith.mulf %633, %632 : vector<2x13x13xf32>
    %635 = arith.addf %630, %634 : vector<2x13x13xf32>
    %c6_47 = arith.constant 6 : index
    %636 = memref.load %arg5[%c6_47] : memref<81xf32, #tpu.memory_space<smem>>
    %637 = vector.extract_strided_slice %592 {offsets = [0, 8, 0], sizes = [2, 13, 13], strides = [1, 1, 1]} : vector<2x21x21xf32> to vector<2x13x13xf32>
    %638 = vector.broadcast %636 : f32 to vector<2x13x13xf32>
    %639 = arith.mulf %638, %637 : vector<2x13x13xf32>
    %640 = arith.addf %635, %639 : vector<2x13x13xf32>
    %c7_48 = arith.constant 7 : index
    %641 = memref.load %arg5[%c7_48] : memref<81xf32, #tpu.memory_space<smem>>
    %642 = vector.extract_strided_slice %592 {offsets = [0, 8, 4], sizes = [2, 13, 13], strides = [1, 1, 1]} : vector<2x21x21xf32> to vector<2x13x13xf32>
    %643 = vector.broadcast %641 : f32 to vector<2x13x13xf32>
    %644 = arith.mulf %643, %642 : vector<2x13x13xf32>
    %645 = arith.addf %640, %644 : vector<2x13x13xf32>
    %c8_49 = arith.constant 8 : index
    %646 = memref.load %arg5[%c8_49] : memref<81xf32, #tpu.memory_space<smem>>
    %647 = vector.extract_strided_slice %592 {offsets = [0, 8, 8], sizes = [2, 13, 13], strides = [1, 1, 1]} : vector<2x21x21xf32> to vector<2x13x13xf32>
    %648 = vector.broadcast %646 : f32 to vector<2x13x13xf32>
    %649 = arith.mulf %648, %647 : vector<2x13x13xf32>
    %650 = arith.addf %645, %649 : vector<2x13x13xf32>
    %c9_50 = arith.constant 9 : index
    %651 = memref.load %arg5[%c9_50] : memref<81xf32, #tpu.memory_space<smem>>
    %652 = vector.extract_strided_slice %599 {offsets = [0, 0, 0], sizes = [2, 13, 13], strides = [1, 1, 1]} : vector<2x21x21xf32> to vector<2x13x13xf32>
    %653 = vector.broadcast %651 : f32 to vector<2x13x13xf32>
    %654 = arith.mulf %653, %652 : vector<2x13x13xf32>
    %655 = arith.addf %650, %654 : vector<2x13x13xf32>
    %c10_51 = arith.constant 10 : index
    %656 = memref.load %arg5[%c10_51] : memref<81xf32, #tpu.memory_space<smem>>
    %657 = vector.extract_strided_slice %599 {offsets = [0, 0, 4], sizes = [2, 13, 13], strides = [1, 1, 1]} : vector<2x21x21xf32> to vector<2x13x13xf32>
    %658 = vector.broadcast %656 : f32 to vector<2x13x13xf32>
    %659 = arith.mulf %658, %657 : vector<2x13x13xf32>
    %660 = arith.addf %655, %659 : vector<2x13x13xf32>
    %c11_52 = arith.constant 11 : index
    %661 = memref.load %arg5[%c11_52] : memref<81xf32, #tpu.memory_space<smem>>
    %662 = vector.extract_strided_slice %599 {offsets = [0, 0, 8], sizes = [2, 13, 13], strides = [1, 1, 1]} : vector<2x21x21xf32> to vector<2x13x13xf32>
    %663 = vector.broadcast %661 : f32 to vector<2x13x13xf32>
    %664 = arith.mulf %663, %662 : vector<2x13x13xf32>
    %665 = arith.addf %660, %664 : vector<2x13x13xf32>
    %c12_53 = arith.constant 12 : index
    %666 = memref.load %arg5[%c12_53] : memref<81xf32, #tpu.memory_space<smem>>
    %667 = vector.extract_strided_slice %599 {offsets = [0, 4, 0], sizes = [2, 13, 13], strides = [1, 1, 1]} : vector<2x21x21xf32> to vector<2x13x13xf32>
    %668 = vector.broadcast %666 : f32 to vector<2x13x13xf32>
    %669 = arith.mulf %668, %667 : vector<2x13x13xf32>
    %670 = arith.addf %665, %669 : vector<2x13x13xf32>
    %c13_54 = arith.constant 13 : index
    %671 = memref.load %arg5[%c13_54] : memref<81xf32, #tpu.memory_space<smem>>
    %672 = vector.extract_strided_slice %599 {offsets = [0, 4, 4], sizes = [2, 13, 13], strides = [1, 1, 1]} : vector<2x21x21xf32> to vector<2x13x13xf32>
    %673 = vector.broadcast %671 : f32 to vector<2x13x13xf32>
    %674 = arith.mulf %673, %672 : vector<2x13x13xf32>
    %675 = arith.addf %670, %674 : vector<2x13x13xf32>
    %c14_55 = arith.constant 14 : index
    %676 = memref.load %arg5[%c14_55] : memref<81xf32, #tpu.memory_space<smem>>
    %677 = vector.extract_strided_slice %599 {offsets = [0, 4, 8], sizes = [2, 13, 13], strides = [1, 1, 1]} : vector<2x21x21xf32> to vector<2x13x13xf32>
    %678 = vector.broadcast %676 : f32 to vector<2x13x13xf32>
    %679 = arith.mulf %678, %677 : vector<2x13x13xf32>
    %680 = arith.addf %675, %679 : vector<2x13x13xf32>
    %c15_56 = arith.constant 15 : index
    %681 = memref.load %arg5[%c15_56] : memref<81xf32, #tpu.memory_space<smem>>
    %682 = vector.extract_strided_slice %599 {offsets = [0, 8, 0], sizes = [2, 13, 13], strides = [1, 1, 1]} : vector<2x21x21xf32> to vector<2x13x13xf32>
    %683 = vector.broadcast %681 : f32 to vector<2x13x13xf32>
    %684 = arith.mulf %683, %682 : vector<2x13x13xf32>
    %685 = arith.addf %680, %684 : vector<2x13x13xf32>
    %c16_57 = arith.constant 16 : index
    %686 = memref.load %arg5[%c16_57] : memref<81xf32, #tpu.memory_space<smem>>
    %687 = vector.extract_strided_slice %599 {offsets = [0, 8, 4], sizes = [2, 13, 13], strides = [1, 1, 1]} : vector<2x21x21xf32> to vector<2x13x13xf32>
    %688 = vector.broadcast %686 : f32 to vector<2x13x13xf32>
    %689 = arith.mulf %688, %687 : vector<2x13x13xf32>
    %690 = arith.addf %685, %689 : vector<2x13x13xf32>
    %c17_58 = arith.constant 17 : index
    %691 = memref.load %arg5[%c17_58] : memref<81xf32, #tpu.memory_space<smem>>
    %692 = vector.extract_strided_slice %599 {offsets = [0, 8, 8], sizes = [2, 13, 13], strides = [1, 1, 1]} : vector<2x21x21xf32> to vector<2x13x13xf32>
    %693 = vector.broadcast %691 : f32 to vector<2x13x13xf32>
    %694 = arith.mulf %693, %692 : vector<2x13x13xf32>
    %695 = arith.addf %690, %694 : vector<2x13x13xf32>
    %c18_59 = arith.constant 18 : index
    %696 = memref.load %arg5[%c18_59] : memref<81xf32, #tpu.memory_space<smem>>
    %697 = vector.extract_strided_slice %606 {offsets = [0, 0, 0], sizes = [2, 13, 13], strides = [1, 1, 1]} : vector<2x21x21xf32> to vector<2x13x13xf32>
    %698 = vector.broadcast %696 : f32 to vector<2x13x13xf32>
    %699 = arith.mulf %698, %697 : vector<2x13x13xf32>
    %700 = arith.addf %695, %699 : vector<2x13x13xf32>
    %c19_60 = arith.constant 19 : index
    %701 = memref.load %arg5[%c19_60] : memref<81xf32, #tpu.memory_space<smem>>
    %702 = vector.extract_strided_slice %606 {offsets = [0, 0, 4], sizes = [2, 13, 13], strides = [1, 1, 1]} : vector<2x21x21xf32> to vector<2x13x13xf32>
    %703 = vector.broadcast %701 : f32 to vector<2x13x13xf32>
    %704 = arith.mulf %703, %702 : vector<2x13x13xf32>
    %705 = arith.addf %700, %704 : vector<2x13x13xf32>
    %c20_61 = arith.constant 20 : index
    %706 = memref.load %arg5[%c20_61] : memref<81xf32, #tpu.memory_space<smem>>
    %707 = vector.extract_strided_slice %606 {offsets = [0, 0, 8], sizes = [2, 13, 13], strides = [1, 1, 1]} : vector<2x21x21xf32> to vector<2x13x13xf32>
    %708 = vector.broadcast %706 : f32 to vector<2x13x13xf32>
    %709 = arith.mulf %708, %707 : vector<2x13x13xf32>
    %710 = arith.addf %705, %709 : vector<2x13x13xf32>
    %c21_62 = arith.constant 21 : index
    %711 = memref.load %arg5[%c21_62] : memref<81xf32, #tpu.memory_space<smem>>
    %712 = vector.extract_strided_slice %606 {offsets = [0, 4, 0], sizes = [2, 13, 13], strides = [1, 1, 1]} : vector<2x21x21xf32> to vector<2x13x13xf32>
    %713 = vector.broadcast %711 : f32 to vector<2x13x13xf32>
    %714 = arith.mulf %713, %712 : vector<2x13x13xf32>
    %715 = arith.addf %710, %714 : vector<2x13x13xf32>
    %c22_63 = arith.constant 22 : index
    %716 = memref.load %arg5[%c22_63] : memref<81xf32, #tpu.memory_space<smem>>
    %717 = vector.extract_strided_slice %606 {offsets = [0, 4, 4], sizes = [2, 13, 13], strides = [1, 1, 1]} : vector<2x21x21xf32> to vector<2x13x13xf32>
    %718 = vector.broadcast %716 : f32 to vector<2x13x13xf32>
    %719 = arith.mulf %718, %717 : vector<2x13x13xf32>
    %720 = arith.addf %715, %719 : vector<2x13x13xf32>
    %c23_64 = arith.constant 23 : index
    %721 = memref.load %arg5[%c23_64] : memref<81xf32, #tpu.memory_space<smem>>
    %722 = vector.extract_strided_slice %606 {offsets = [0, 4, 8], sizes = [2, 13, 13], strides = [1, 1, 1]} : vector<2x21x21xf32> to vector<2x13x13xf32>
    %723 = vector.broadcast %721 : f32 to vector<2x13x13xf32>
    %724 = arith.mulf %723, %722 : vector<2x13x13xf32>
    %725 = arith.addf %720, %724 : vector<2x13x13xf32>
    %c24_65 = arith.constant 24 : index
    %726 = memref.load %arg5[%c24_65] : memref<81xf32, #tpu.memory_space<smem>>
    %727 = vector.extract_strided_slice %606 {offsets = [0, 8, 0], sizes = [2, 13, 13], strides = [1, 1, 1]} : vector<2x21x21xf32> to vector<2x13x13xf32>
    %728 = vector.broadcast %726 : f32 to vector<2x13x13xf32>
    %729 = arith.mulf %728, %727 : vector<2x13x13xf32>
    %730 = arith.addf %725, %729 : vector<2x13x13xf32>
    %c25_66 = arith.constant 25 : index
    %731 = memref.load %arg5[%c25_66] : memref<81xf32, #tpu.memory_space<smem>>
    %732 = vector.extract_strided_slice %606 {offsets = [0, 8, 4], sizes = [2, 13, 13], strides = [1, 1, 1]} : vector<2x21x21xf32> to vector<2x13x13xf32>
    %733 = vector.broadcast %731 : f32 to vector<2x13x13xf32>
    %734 = arith.mulf %733, %732 : vector<2x13x13xf32>
    %735 = arith.addf %730, %734 : vector<2x13x13xf32>
    %c26_67 = arith.constant 26 : index
    %736 = memref.load %arg5[%c26_67] : memref<81xf32, #tpu.memory_space<smem>>
    %737 = vector.extract_strided_slice %606 {offsets = [0, 8, 8], sizes = [2, 13, 13], strides = [1, 1, 1]} : vector<2x21x21xf32> to vector<2x13x13xf32>
    %738 = vector.broadcast %736 : f32 to vector<2x13x13xf32>
    %739 = arith.mulf %738, %737 : vector<2x13x13xf32>
    %740 = arith.addf %735, %739 : vector<2x13x13xf32>
    %c0_68 = arith.constant 0 : index
    %741 = memref.load %arg6[%c0_68] : memref<3xf32, #tpu.memory_space<smem>>
    %742 = vector.broadcast %741 : f32 to vector<2x13x13xf32>
    %743 = arith.addf %740, %742 : vector<2x13x13xf32>
    %cst_69 = arith.constant 0.000000e+00 : f32
    %744 = vector.broadcast %cst_69 : f32 to vector<2x13x13xf32>
    %745 = arith.maximumf %743, %744 : vector<2x13x13xf32>
    %c27_70 = arith.constant 27 : index
    %746 = memref.load %arg5[%c27_70] : memref<81xf32, #tpu.memory_space<smem>>
    %747 = vector.extract_strided_slice %592 {offsets = [0, 0, 0], sizes = [2, 13, 13], strides = [1, 1, 1]} : vector<2x21x21xf32> to vector<2x13x13xf32>
    %748 = vector.broadcast %746 : f32 to vector<2x13x13xf32>
    %749 = arith.mulf %748, %747 : vector<2x13x13xf32>
    %c28_71 = arith.constant 28 : index
    %750 = memref.load %arg5[%c28_71] : memref<81xf32, #tpu.memory_space<smem>>
    %751 = vector.extract_strided_slice %592 {offsets = [0, 0, 4], sizes = [2, 13, 13], strides = [1, 1, 1]} : vector<2x21x21xf32> to vector<2x13x13xf32>
    %752 = vector.broadcast %750 : f32 to vector<2x13x13xf32>
    %753 = arith.mulf %752, %751 : vector<2x13x13xf32>
    %754 = arith.addf %749, %753 : vector<2x13x13xf32>
    %c29_72 = arith.constant 29 : index
    %755 = memref.load %arg5[%c29_72] : memref<81xf32, #tpu.memory_space<smem>>
    %756 = vector.extract_strided_slice %592 {offsets = [0, 0, 8], sizes = [2, 13, 13], strides = [1, 1, 1]} : vector<2x21x21xf32> to vector<2x13x13xf32>
    %757 = vector.broadcast %755 : f32 to vector<2x13x13xf32>
    %758 = arith.mulf %757, %756 : vector<2x13x13xf32>
    %759 = arith.addf %754, %758 : vector<2x13x13xf32>
    %c30_73 = arith.constant 30 : index
    %760 = memref.load %arg5[%c30_73] : memref<81xf32, #tpu.memory_space<smem>>
    %761 = vector.extract_strided_slice %592 {offsets = [0, 4, 0], sizes = [2, 13, 13], strides = [1, 1, 1]} : vector<2x21x21xf32> to vector<2x13x13xf32>
    %762 = vector.broadcast %760 : f32 to vector<2x13x13xf32>
    %763 = arith.mulf %762, %761 : vector<2x13x13xf32>
    %764 = arith.addf %759, %763 : vector<2x13x13xf32>
    %c31_74 = arith.constant 31 : index
    %765 = memref.load %arg5[%c31_74] : memref<81xf32, #tpu.memory_space<smem>>
    %766 = vector.extract_strided_slice %592 {offsets = [0, 4, 4], sizes = [2, 13, 13], strides = [1, 1, 1]} : vector<2x21x21xf32> to vector<2x13x13xf32>
    %767 = vector.broadcast %765 : f32 to vector<2x13x13xf32>
    %768 = arith.mulf %767, %766 : vector<2x13x13xf32>
    %769 = arith.addf %764, %768 : vector<2x13x13xf32>
    %c32_75 = arith.constant 32 : index
    %770 = memref.load %arg5[%c32_75] : memref<81xf32, #tpu.memory_space<smem>>
    %771 = vector.extract_strided_slice %592 {offsets = [0, 4, 8], sizes = [2, 13, 13], strides = [1, 1, 1]} : vector<2x21x21xf32> to vector<2x13x13xf32>
    %772 = vector.broadcast %770 : f32 to vector<2x13x13xf32>
    %773 = arith.mulf %772, %771 : vector<2x13x13xf32>
    %774 = arith.addf %769, %773 : vector<2x13x13xf32>
    %c33_76 = arith.constant 33 : index
    %775 = memref.load %arg5[%c33_76] : memref<81xf32, #tpu.memory_space<smem>>
    %776 = vector.extract_strided_slice %592 {offsets = [0, 8, 0], sizes = [2, 13, 13], strides = [1, 1, 1]} : vector<2x21x21xf32> to vector<2x13x13xf32>
    %777 = vector.broadcast %775 : f32 to vector<2x13x13xf32>
    %778 = arith.mulf %777, %776 : vector<2x13x13xf32>
    %779 = arith.addf %774, %778 : vector<2x13x13xf32>
    %c34_77 = arith.constant 34 : index
    %780 = memref.load %arg5[%c34_77] : memref<81xf32, #tpu.memory_space<smem>>
    %781 = vector.extract_strided_slice %592 {offsets = [0, 8, 4], sizes = [2, 13, 13], strides = [1, 1, 1]} : vector<2x21x21xf32> to vector<2x13x13xf32>
    %782 = vector.broadcast %780 : f32 to vector<2x13x13xf32>
    %783 = arith.mulf %782, %781 : vector<2x13x13xf32>
    %784 = arith.addf %779, %783 : vector<2x13x13xf32>
    %c35_78 = arith.constant 35 : index
    %785 = memref.load %arg5[%c35_78] : memref<81xf32, #tpu.memory_space<smem>>
    %786 = vector.extract_strided_slice %592 {offsets = [0, 8, 8], sizes = [2, 13, 13], strides = [1, 1, 1]} : vector<2x21x21xf32> to vector<2x13x13xf32>
    %787 = vector.broadcast %785 : f32 to vector<2x13x13xf32>
    %788 = arith.mulf %787, %786 : vector<2x13x13xf32>
    %789 = arith.addf %784, %788 : vector<2x13x13xf32>
    %c36_79 = arith.constant 36 : index
    %790 = memref.load %arg5[%c36_79] : memref<81xf32, #tpu.memory_space<smem>>
    %791 = vector.extract_strided_slice %599 {offsets = [0, 0, 0], sizes = [2, 13, 13], strides = [1, 1, 1]} : vector<2x21x21xf32> to vector<2x13x13xf32>
    %792 = vector.broadcast %790 : f32 to vector<2x13x13xf32>
    %793 = arith.mulf %792, %791 : vector<2x13x13xf32>
    %794 = arith.addf %789, %793 : vector<2x13x13xf32>
    %c37_80 = arith.constant 37 : index
    %795 = memref.load %arg5[%c37_80] : memref<81xf32, #tpu.memory_space<smem>>
    %796 = vector.extract_strided_slice %599 {offsets = [0, 0, 4], sizes = [2, 13, 13], strides = [1, 1, 1]} : vector<2x21x21xf32> to vector<2x13x13xf32>
    %797 = vector.broadcast %795 : f32 to vector<2x13x13xf32>
    %798 = arith.mulf %797, %796 : vector<2x13x13xf32>
    %799 = arith.addf %794, %798 : vector<2x13x13xf32>
    %c38_81 = arith.constant 38 : index
    %800 = memref.load %arg5[%c38_81] : memref<81xf32, #tpu.memory_space<smem>>
    %801 = vector.extract_strided_slice %599 {offsets = [0, 0, 8], sizes = [2, 13, 13], strides = [1, 1, 1]} : vector<2x21x21xf32> to vector<2x13x13xf32>
    %802 = vector.broadcast %800 : f32 to vector<2x13x13xf32>
    %803 = arith.mulf %802, %801 : vector<2x13x13xf32>
    %804 = arith.addf %799, %803 : vector<2x13x13xf32>
    %c39_82 = arith.constant 39 : index
    %805 = memref.load %arg5[%c39_82] : memref<81xf32, #tpu.memory_space<smem>>
    %806 = vector.extract_strided_slice %599 {offsets = [0, 4, 0], sizes = [2, 13, 13], strides = [1, 1, 1]} : vector<2x21x21xf32> to vector<2x13x13xf32>
    %807 = vector.broadcast %805 : f32 to vector<2x13x13xf32>
    %808 = arith.mulf %807, %806 : vector<2x13x13xf32>
    %809 = arith.addf %804, %808 : vector<2x13x13xf32>
    %c40_83 = arith.constant 40 : index
    %810 = memref.load %arg5[%c40_83] : memref<81xf32, #tpu.memory_space<smem>>
    %811 = vector.extract_strided_slice %599 {offsets = [0, 4, 4], sizes = [2, 13, 13], strides = [1, 1, 1]} : vector<2x21x21xf32> to vector<2x13x13xf32>
    %812 = vector.broadcast %810 : f32 to vector<2x13x13xf32>
    %813 = arith.mulf %812, %811 : vector<2x13x13xf32>
    %814 = arith.addf %809, %813 : vector<2x13x13xf32>
    %c41_84 = arith.constant 41 : index
    %815 = memref.load %arg5[%c41_84] : memref<81xf32, #tpu.memory_space<smem>>
    %816 = vector.extract_strided_slice %599 {offsets = [0, 4, 8], sizes = [2, 13, 13], strides = [1, 1, 1]} : vector<2x21x21xf32> to vector<2x13x13xf32>
    %817 = vector.broadcast %815 : f32 to vector<2x13x13xf32>
    %818 = arith.mulf %817, %816 : vector<2x13x13xf32>
    %819 = arith.addf %814, %818 : vector<2x13x13xf32>
    %c42_85 = arith.constant 42 : index
    %820 = memref.load %arg5[%c42_85] : memref<81xf32, #tpu.memory_space<smem>>
    %821 = vector.extract_strided_slice %599 {offsets = [0, 8, 0], sizes = [2, 13, 13], strides = [1, 1, 1]} : vector<2x21x21xf32> to vector<2x13x13xf32>
    %822 = vector.broadcast %820 : f32 to vector<2x13x13xf32>
    %823 = arith.mulf %822, %821 : vector<2x13x13xf32>
    %824 = arith.addf %819, %823 : vector<2x13x13xf32>
    %c43_86 = arith.constant 43 : index
    %825 = memref.load %arg5[%c43_86] : memref<81xf32, #tpu.memory_space<smem>>
    %826 = vector.extract_strided_slice %599 {offsets = [0, 8, 4], sizes = [2, 13, 13], strides = [1, 1, 1]} : vector<2x21x21xf32> to vector<2x13x13xf32>
    %827 = vector.broadcast %825 : f32 to vector<2x13x13xf32>
    %828 = arith.mulf %827, %826 : vector<2x13x13xf32>
    %829 = arith.addf %824, %828 : vector<2x13x13xf32>
    %c44_87 = arith.constant 44 : index
    %830 = memref.load %arg5[%c44_87] : memref<81xf32, #tpu.memory_space<smem>>
    %831 = vector.extract_strided_slice %599 {offsets = [0, 8, 8], sizes = [2, 13, 13], strides = [1, 1, 1]} : vector<2x21x21xf32> to vector<2x13x13xf32>
    %832 = vector.broadcast %830 : f32 to vector<2x13x13xf32>
    %833 = arith.mulf %832, %831 : vector<2x13x13xf32>
    %834 = arith.addf %829, %833 : vector<2x13x13xf32>
    %c45_88 = arith.constant 45 : index
    %835 = memref.load %arg5[%c45_88] : memref<81xf32, #tpu.memory_space<smem>>
    %836 = vector.extract_strided_slice %606 {offsets = [0, 0, 0], sizes = [2, 13, 13], strides = [1, 1, 1]} : vector<2x21x21xf32> to vector<2x13x13xf32>
    %837 = vector.broadcast %835 : f32 to vector<2x13x13xf32>
    %838 = arith.mulf %837, %836 : vector<2x13x13xf32>
    %839 = arith.addf %834, %838 : vector<2x13x13xf32>
    %c46_89 = arith.constant 46 : index
    %840 = memref.load %arg5[%c46_89] : memref<81xf32, #tpu.memory_space<smem>>
    %841 = vector.extract_strided_slice %606 {offsets = [0, 0, 4], sizes = [2, 13, 13], strides = [1, 1, 1]} : vector<2x21x21xf32> to vector<2x13x13xf32>
    %842 = vector.broadcast %840 : f32 to vector<2x13x13xf32>
    %843 = arith.mulf %842, %841 : vector<2x13x13xf32>
    %844 = arith.addf %839, %843 : vector<2x13x13xf32>
    %c47_90 = arith.constant 47 : index
    %845 = memref.load %arg5[%c47_90] : memref<81xf32, #tpu.memory_space<smem>>
    %846 = vector.extract_strided_slice %606 {offsets = [0, 0, 8], sizes = [2, 13, 13], strides = [1, 1, 1]} : vector<2x21x21xf32> to vector<2x13x13xf32>
    %847 = vector.broadcast %845 : f32 to vector<2x13x13xf32>
    %848 = arith.mulf %847, %846 : vector<2x13x13xf32>
    %849 = arith.addf %844, %848 : vector<2x13x13xf32>
    %c48_91 = arith.constant 48 : index
    %850 = memref.load %arg5[%c48_91] : memref<81xf32, #tpu.memory_space<smem>>
    %851 = vector.extract_strided_slice %606 {offsets = [0, 4, 0], sizes = [2, 13, 13], strides = [1, 1, 1]} : vector<2x21x21xf32> to vector<2x13x13xf32>
    %852 = vector.broadcast %850 : f32 to vector<2x13x13xf32>
    %853 = arith.mulf %852, %851 : vector<2x13x13xf32>
    %854 = arith.addf %849, %853 : vector<2x13x13xf32>
    %c49_92 = arith.constant 49 : index
    %855 = memref.load %arg5[%c49_92] : memref<81xf32, #tpu.memory_space<smem>>
    %856 = vector.extract_strided_slice %606 {offsets = [0, 4, 4], sizes = [2, 13, 13], strides = [1, 1, 1]} : vector<2x21x21xf32> to vector<2x13x13xf32>
    %857 = vector.broadcast %855 : f32 to vector<2x13x13xf32>
    %858 = arith.mulf %857, %856 : vector<2x13x13xf32>
    %859 = arith.addf %854, %858 : vector<2x13x13xf32>
    %c50_93 = arith.constant 50 : index
    %860 = memref.load %arg5[%c50_93] : memref<81xf32, #tpu.memory_space<smem>>
    %861 = vector.extract_strided_slice %606 {offsets = [0, 4, 8], sizes = [2, 13, 13], strides = [1, 1, 1]} : vector<2x21x21xf32> to vector<2x13x13xf32>
    %862 = vector.broadcast %860 : f32 to vector<2x13x13xf32>
    %863 = arith.mulf %862, %861 : vector<2x13x13xf32>
    %864 = arith.addf %859, %863 : vector<2x13x13xf32>
    %c51_94 = arith.constant 51 : index
    %865 = memref.load %arg5[%c51_94] : memref<81xf32, #tpu.memory_space<smem>>
    %866 = vector.extract_strided_slice %606 {offsets = [0, 8, 0], sizes = [2, 13, 13], strides = [1, 1, 1]} : vector<2x21x21xf32> to vector<2x13x13xf32>
    %867 = vector.broadcast %865 : f32 to vector<2x13x13xf32>
    %868 = arith.mulf %867, %866 : vector<2x13x13xf32>
    %869 = arith.addf %864, %868 : vector<2x13x13xf32>
    %c52_95 = arith.constant 52 : index
    %870 = memref.load %arg5[%c52_95] : memref<81xf32, #tpu.memory_space<smem>>
    %871 = vector.extract_strided_slice %606 {offsets = [0, 8, 4], sizes = [2, 13, 13], strides = [1, 1, 1]} : vector<2x21x21xf32> to vector<2x13x13xf32>
    %872 = vector.broadcast %870 : f32 to vector<2x13x13xf32>
    %873 = arith.mulf %872, %871 : vector<2x13x13xf32>
    %874 = arith.addf %869, %873 : vector<2x13x13xf32>
    %c53_96 = arith.constant 53 : index
    %875 = memref.load %arg5[%c53_96] : memref<81xf32, #tpu.memory_space<smem>>
    %876 = vector.extract_strided_slice %606 {offsets = [0, 8, 8], sizes = [2, 13, 13], strides = [1, 1, 1]} : vector<2x21x21xf32> to vector<2x13x13xf32>
    %877 = vector.broadcast %875 : f32 to vector<2x13x13xf32>
    %878 = arith.mulf %877, %876 : vector<2x13x13xf32>
    %879 = arith.addf %874, %878 : vector<2x13x13xf32>
    %c1_97 = arith.constant 1 : index
    %880 = memref.load %arg6[%c1_97] : memref<3xf32, #tpu.memory_space<smem>>
    %881 = vector.broadcast %880 : f32 to vector<2x13x13xf32>
    %882 = arith.addf %879, %881 : vector<2x13x13xf32>
    %cst_98 = arith.constant 0.000000e+00 : f32
    %883 = vector.broadcast %cst_98 : f32 to vector<2x13x13xf32>
    %884 = arith.maximumf %882, %883 : vector<2x13x13xf32>
    %c54_99 = arith.constant 54 : index
    %885 = memref.load %arg5[%c54_99] : memref<81xf32, #tpu.memory_space<smem>>
    %886 = vector.extract_strided_slice %592 {offsets = [0, 0, 0], sizes = [2, 13, 13], strides = [1, 1, 1]} : vector<2x21x21xf32> to vector<2x13x13xf32>
    %887 = vector.broadcast %885 : f32 to vector<2x13x13xf32>
    %888 = arith.mulf %887, %886 : vector<2x13x13xf32>
    %c55_100 = arith.constant 55 : index
    %889 = memref.load %arg5[%c55_100] : memref<81xf32, #tpu.memory_space<smem>>
    %890 = vector.extract_strided_slice %592 {offsets = [0, 0, 4], sizes = [2, 13, 13], strides = [1, 1, 1]} : vector<2x21x21xf32> to vector<2x13x13xf32>
    %891 = vector.broadcast %889 : f32 to vector<2x13x13xf32>
    %892 = arith.mulf %891, %890 : vector<2x13x13xf32>
    %893 = arith.addf %888, %892 : vector<2x13x13xf32>
    %c56_101 = arith.constant 56 : index
    %894 = memref.load %arg5[%c56_101] : memref<81xf32, #tpu.memory_space<smem>>
    %895 = vector.extract_strided_slice %592 {offsets = [0, 0, 8], sizes = [2, 13, 13], strides = [1, 1, 1]} : vector<2x21x21xf32> to vector<2x13x13xf32>
    %896 = vector.broadcast %894 : f32 to vector<2x13x13xf32>
    %897 = arith.mulf %896, %895 : vector<2x13x13xf32>
    %898 = arith.addf %893, %897 : vector<2x13x13xf32>
    %c57_102 = arith.constant 57 : index
    %899 = memref.load %arg5[%c57_102] : memref<81xf32, #tpu.memory_space<smem>>
    %900 = vector.extract_strided_slice %592 {offsets = [0, 4, 0], sizes = [2, 13, 13], strides = [1, 1, 1]} : vector<2x21x21xf32> to vector<2x13x13xf32>
    %901 = vector.broadcast %899 : f32 to vector<2x13x13xf32>
    %902 = arith.mulf %901, %900 : vector<2x13x13xf32>
    %903 = arith.addf %898, %902 : vector<2x13x13xf32>
    %c58_103 = arith.constant 58 : index
    %904 = memref.load %arg5[%c58_103] : memref<81xf32, #tpu.memory_space<smem>>
    %905 = vector.extract_strided_slice %592 {offsets = [0, 4, 4], sizes = [2, 13, 13], strides = [1, 1, 1]} : vector<2x21x21xf32> to vector<2x13x13xf32>
    %906 = vector.broadcast %904 : f32 to vector<2x13x13xf32>
    %907 = arith.mulf %906, %905 : vector<2x13x13xf32>
    %908 = arith.addf %903, %907 : vector<2x13x13xf32>
    %c59_104 = arith.constant 59 : index
    %909 = memref.load %arg5[%c59_104] : memref<81xf32, #tpu.memory_space<smem>>
    %910 = vector.extract_strided_slice %592 {offsets = [0, 4, 8], sizes = [2, 13, 13], strides = [1, 1, 1]} : vector<2x21x21xf32> to vector<2x13x13xf32>
    %911 = vector.broadcast %909 : f32 to vector<2x13x13xf32>
    %912 = arith.mulf %911, %910 : vector<2x13x13xf32>
    %913 = arith.addf %908, %912 : vector<2x13x13xf32>
    %c60_105 = arith.constant 60 : index
    %914 = memref.load %arg5[%c60_105] : memref<81xf32, #tpu.memory_space<smem>>
    %915 = vector.extract_strided_slice %592 {offsets = [0, 8, 0], sizes = [2, 13, 13], strides = [1, 1, 1]} : vector<2x21x21xf32> to vector<2x13x13xf32>
    %916 = vector.broadcast %914 : f32 to vector<2x13x13xf32>
    %917 = arith.mulf %916, %915 : vector<2x13x13xf32>
    %918 = arith.addf %913, %917 : vector<2x13x13xf32>
    %c61_106 = arith.constant 61 : index
    %919 = memref.load %arg5[%c61_106] : memref<81xf32, #tpu.memory_space<smem>>
    %920 = vector.extract_strided_slice %592 {offsets = [0, 8, 4], sizes = [2, 13, 13], strides = [1, 1, 1]} : vector<2x21x21xf32> to vector<2x13x13xf32>
    %921 = vector.broadcast %919 : f32 to vector<2x13x13xf32>
    %922 = arith.mulf %921, %920 : vector<2x13x13xf32>
    %923 = arith.addf %918, %922 : vector<2x13x13xf32>
    %c62_107 = arith.constant 62 : index
    %924 = memref.load %arg5[%c62_107] : memref<81xf32, #tpu.memory_space<smem>>
    %925 = vector.extract_strided_slice %592 {offsets = [0, 8, 8], sizes = [2, 13, 13], strides = [1, 1, 1]} : vector<2x21x21xf32> to vector<2x13x13xf32>
    %926 = vector.broadcast %924 : f32 to vector<2x13x13xf32>
    %927 = arith.mulf %926, %925 : vector<2x13x13xf32>
    %928 = arith.addf %923, %927 : vector<2x13x13xf32>
    %c63_108 = arith.constant 63 : index
    %929 = memref.load %arg5[%c63_108] : memref<81xf32, #tpu.memory_space<smem>>
    %930 = vector.extract_strided_slice %599 {offsets = [0, 0, 0], sizes = [2, 13, 13], strides = [1, 1, 1]} : vector<2x21x21xf32> to vector<2x13x13xf32>
    %931 = vector.broadcast %929 : f32 to vector<2x13x13xf32>
    %932 = arith.mulf %931, %930 : vector<2x13x13xf32>
    %933 = arith.addf %928, %932 : vector<2x13x13xf32>
    %c64_109 = arith.constant 64 : index
    %934 = memref.load %arg5[%c64_109] : memref<81xf32, #tpu.memory_space<smem>>
    %935 = vector.extract_strided_slice %599 {offsets = [0, 0, 4], sizes = [2, 13, 13], strides = [1, 1, 1]} : vector<2x21x21xf32> to vector<2x13x13xf32>
    %936 = vector.broadcast %934 : f32 to vector<2x13x13xf32>
    %937 = arith.mulf %936, %935 : vector<2x13x13xf32>
    %938 = arith.addf %933, %937 : vector<2x13x13xf32>
    %c65_110 = arith.constant 65 : index
    %939 = memref.load %arg5[%c65_110] : memref<81xf32, #tpu.memory_space<smem>>
    %940 = vector.extract_strided_slice %599 {offsets = [0, 0, 8], sizes = [2, 13, 13], strides = [1, 1, 1]} : vector<2x21x21xf32> to vector<2x13x13xf32>
    %941 = vector.broadcast %939 : f32 to vector<2x13x13xf32>
    %942 = arith.mulf %941, %940 : vector<2x13x13xf32>
    %943 = arith.addf %938, %942 : vector<2x13x13xf32>
    %c66_111 = arith.constant 66 : index
    %944 = memref.load %arg5[%c66_111] : memref<81xf32, #tpu.memory_space<smem>>
    %945 = vector.extract_strided_slice %599 {offsets = [0, 4, 0], sizes = [2, 13, 13], strides = [1, 1, 1]} : vector<2x21x21xf32> to vector<2x13x13xf32>
    %946 = vector.broadcast %944 : f32 to vector<2x13x13xf32>
    %947 = arith.mulf %946, %945 : vector<2x13x13xf32>
    %948 = arith.addf %943, %947 : vector<2x13x13xf32>
    %c67_112 = arith.constant 67 : index
    %949 = memref.load %arg5[%c67_112] : memref<81xf32, #tpu.memory_space<smem>>
    %950 = vector.extract_strided_slice %599 {offsets = [0, 4, 4], sizes = [2, 13, 13], strides = [1, 1, 1]} : vector<2x21x21xf32> to vector<2x13x13xf32>
    %951 = vector.broadcast %949 : f32 to vector<2x13x13xf32>
    %952 = arith.mulf %951, %950 : vector<2x13x13xf32>
    %953 = arith.addf %948, %952 : vector<2x13x13xf32>
    %c68_113 = arith.constant 68 : index
    %954 = memref.load %arg5[%c68_113] : memref<81xf32, #tpu.memory_space<smem>>
    %955 = vector.extract_strided_slice %599 {offsets = [0, 4, 8], sizes = [2, 13, 13], strides = [1, 1, 1]} : vector<2x21x21xf32> to vector<2x13x13xf32>
    %956 = vector.broadcast %954 : f32 to vector<2x13x13xf32>
    %957 = arith.mulf %956, %955 : vector<2x13x13xf32>
    %958 = arith.addf %953, %957 : vector<2x13x13xf32>
    %c69_114 = arith.constant 69 : index
    %959 = memref.load %arg5[%c69_114] : memref<81xf32, #tpu.memory_space<smem>>
    %960 = vector.extract_strided_slice %599 {offsets = [0, 8, 0], sizes = [2, 13, 13], strides = [1, 1, 1]} : vector<2x21x21xf32> to vector<2x13x13xf32>
    %961 = vector.broadcast %959 : f32 to vector<2x13x13xf32>
    %962 = arith.mulf %961, %960 : vector<2x13x13xf32>
    %963 = arith.addf %958, %962 : vector<2x13x13xf32>
    %c70_115 = arith.constant 70 : index
    %964 = memref.load %arg5[%c70_115] : memref<81xf32, #tpu.memory_space<smem>>
    %965 = vector.extract_strided_slice %599 {offsets = [0, 8, 4], sizes = [2, 13, 13], strides = [1, 1, 1]} : vector<2x21x21xf32> to vector<2x13x13xf32>
    %966 = vector.broadcast %964 : f32 to vector<2x13x13xf32>
    %967 = arith.mulf %966, %965 : vector<2x13x13xf32>
    %968 = arith.addf %963, %967 : vector<2x13x13xf32>
    %c71_116 = arith.constant 71 : index
    %969 = memref.load %arg5[%c71_116] : memref<81xf32, #tpu.memory_space<smem>>
    %970 = vector.extract_strided_slice %599 {offsets = [0, 8, 8], sizes = [2, 13, 13], strides = [1, 1, 1]} : vector<2x21x21xf32> to vector<2x13x13xf32>
    %971 = vector.broadcast %969 : f32 to vector<2x13x13xf32>
    %972 = arith.mulf %971, %970 : vector<2x13x13xf32>
    %973 = arith.addf %968, %972 : vector<2x13x13xf32>
    %c72_117 = arith.constant 72 : index
    %974 = memref.load %arg5[%c72_117] : memref<81xf32, #tpu.memory_space<smem>>
    %975 = vector.extract_strided_slice %606 {offsets = [0, 0, 0], sizes = [2, 13, 13], strides = [1, 1, 1]} : vector<2x21x21xf32> to vector<2x13x13xf32>
    %976 = vector.broadcast %974 : f32 to vector<2x13x13xf32>
    %977 = arith.mulf %976, %975 : vector<2x13x13xf32>
    %978 = arith.addf %973, %977 : vector<2x13x13xf32>
    %c73_118 = arith.constant 73 : index
    %979 = memref.load %arg5[%c73_118] : memref<81xf32, #tpu.memory_space<smem>>
    %980 = vector.extract_strided_slice %606 {offsets = [0, 0, 4], sizes = [2, 13, 13], strides = [1, 1, 1]} : vector<2x21x21xf32> to vector<2x13x13xf32>
    %981 = vector.broadcast %979 : f32 to vector<2x13x13xf32>
    %982 = arith.mulf %981, %980 : vector<2x13x13xf32>
    %983 = arith.addf %978, %982 : vector<2x13x13xf32>
    %c74_119 = arith.constant 74 : index
    %984 = memref.load %arg5[%c74_119] : memref<81xf32, #tpu.memory_space<smem>>
    %985 = vector.extract_strided_slice %606 {offsets = [0, 0, 8], sizes = [2, 13, 13], strides = [1, 1, 1]} : vector<2x21x21xf32> to vector<2x13x13xf32>
    %986 = vector.broadcast %984 : f32 to vector<2x13x13xf32>
    %987 = arith.mulf %986, %985 : vector<2x13x13xf32>
    %988 = arith.addf %983, %987 : vector<2x13x13xf32>
    %c75_120 = arith.constant 75 : index
    %989 = memref.load %arg5[%c75_120] : memref<81xf32, #tpu.memory_space<smem>>
    %990 = vector.extract_strided_slice %606 {offsets = [0, 4, 0], sizes = [2, 13, 13], strides = [1, 1, 1]} : vector<2x21x21xf32> to vector<2x13x13xf32>
    %991 = vector.broadcast %989 : f32 to vector<2x13x13xf32>
    %992 = arith.mulf %991, %990 : vector<2x13x13xf32>
    %993 = arith.addf %988, %992 : vector<2x13x13xf32>
    %c76_121 = arith.constant 76 : index
    %994 = memref.load %arg5[%c76_121] : memref<81xf32, #tpu.memory_space<smem>>
    %995 = vector.extract_strided_slice %606 {offsets = [0, 4, 4], sizes = [2, 13, 13], strides = [1, 1, 1]} : vector<2x21x21xf32> to vector<2x13x13xf32>
    %996 = vector.broadcast %994 : f32 to vector<2x13x13xf32>
    %997 = arith.mulf %996, %995 : vector<2x13x13xf32>
    %998 = arith.addf %993, %997 : vector<2x13x13xf32>
    %c77_122 = arith.constant 77 : index
    %999 = memref.load %arg5[%c77_122] : memref<81xf32, #tpu.memory_space<smem>>
    %1000 = vector.extract_strided_slice %606 {offsets = [0, 4, 8], sizes = [2, 13, 13], strides = [1, 1, 1]} : vector<2x21x21xf32> to vector<2x13x13xf32>
    %1001 = vector.broadcast %999 : f32 to vector<2x13x13xf32>
    %1002 = arith.mulf %1001, %1000 : vector<2x13x13xf32>
    %1003 = arith.addf %998, %1002 : vector<2x13x13xf32>
    %c78_123 = arith.constant 78 : index
    %1004 = memref.load %arg5[%c78_123] : memref<81xf32, #tpu.memory_space<smem>>
    %1005 = vector.extract_strided_slice %606 {offsets = [0, 8, 0], sizes = [2, 13, 13], strides = [1, 1, 1]} : vector<2x21x21xf32> to vector<2x13x13xf32>
    %1006 = vector.broadcast %1004 : f32 to vector<2x13x13xf32>
    %1007 = arith.mulf %1006, %1005 : vector<2x13x13xf32>
    %1008 = arith.addf %1003, %1007 : vector<2x13x13xf32>
    %c79_124 = arith.constant 79 : index
    %1009 = memref.load %arg5[%c79_124] : memref<81xf32, #tpu.memory_space<smem>>
    %1010 = vector.extract_strided_slice %606 {offsets = [0, 8, 4], sizes = [2, 13, 13], strides = [1, 1, 1]} : vector<2x21x21xf32> to vector<2x13x13xf32>
    %1011 = vector.broadcast %1009 : f32 to vector<2x13x13xf32>
    %1012 = arith.mulf %1011, %1010 : vector<2x13x13xf32>
    %1013 = arith.addf %1008, %1012 : vector<2x13x13xf32>
    %c80_125 = arith.constant 80 : index
    %1014 = memref.load %arg5[%c80_125] : memref<81xf32, #tpu.memory_space<smem>>
    %1015 = vector.extract_strided_slice %606 {offsets = [0, 8, 8], sizes = [2, 13, 13], strides = [1, 1, 1]} : vector<2x21x21xf32> to vector<2x13x13xf32>
    %1016 = vector.broadcast %1014 : f32 to vector<2x13x13xf32>
    %1017 = arith.mulf %1016, %1015 : vector<2x13x13xf32>
    %1018 = arith.addf %1013, %1017 : vector<2x13x13xf32>
    %c2_126 = arith.constant 2 : index
    %1019 = memref.load %arg6[%c2_126] : memref<3xf32, #tpu.memory_space<smem>>
    %1020 = vector.broadcast %1019 : f32 to vector<2x13x13xf32>
    %1021 = arith.addf %1018, %1020 : vector<2x13x13xf32>
    %cst_127 = arith.constant 0.000000e+00 : f32
    %1022 = vector.broadcast %cst_127 : f32 to vector<2x13x13xf32>
    %1023 = arith.maximumf %1021, %1022 : vector<2x13x13xf32>
    %c0_128 = arith.constant 0 : index
    %1024 = memref.load %arg7[%c0_128] : memref<81xf32, #tpu.memory_space<smem>>
    %1025 = vector.extract_strided_slice %745 {offsets = [0, 0, 0], sizes = [2, 5, 5], strides = [1, 1, 1]} : vector<2x13x13xf32> to vector<2x5x5xf32>
    %1026 = vector.broadcast %1024 : f32 to vector<2x5x5xf32>
    %1027 = arith.mulf %1026, %1025 : vector<2x5x5xf32>
    %c1_129 = arith.constant 1 : index
    %1028 = memref.load %arg7[%c1_129] : memref<81xf32, #tpu.memory_space<smem>>
    %1029 = vector.extract_strided_slice %745 {offsets = [0, 0, 4], sizes = [2, 5, 5], strides = [1, 1, 1]} : vector<2x13x13xf32> to vector<2x5x5xf32>
    %1030 = vector.broadcast %1028 : f32 to vector<2x5x5xf32>
    %1031 = arith.mulf %1030, %1029 : vector<2x5x5xf32>
    %1032 = arith.addf %1027, %1031 : vector<2x5x5xf32>
    %c2_130 = arith.constant 2 : index
    %1033 = memref.load %arg7[%c2_130] : memref<81xf32, #tpu.memory_space<smem>>
    %1034 = vector.extract_strided_slice %745 {offsets = [0, 0, 8], sizes = [2, 5, 5], strides = [1, 1, 1]} : vector<2x13x13xf32> to vector<2x5x5xf32>
    %1035 = vector.broadcast %1033 : f32 to vector<2x5x5xf32>
    %1036 = arith.mulf %1035, %1034 : vector<2x5x5xf32>
    %1037 = arith.addf %1032, %1036 : vector<2x5x5xf32>
    %c3_131 = arith.constant 3 : index
    %1038 = memref.load %arg7[%c3_131] : memref<81xf32, #tpu.memory_space<smem>>
    %1039 = vector.extract_strided_slice %745 {offsets = [0, 4, 0], sizes = [2, 5, 5], strides = [1, 1, 1]} : vector<2x13x13xf32> to vector<2x5x5xf32>
    %1040 = vector.broadcast %1038 : f32 to vector<2x5x5xf32>
    %1041 = arith.mulf %1040, %1039 : vector<2x5x5xf32>
    %1042 = arith.addf %1037, %1041 : vector<2x5x5xf32>
    %c4_132 = arith.constant 4 : index
    %1043 = memref.load %arg7[%c4_132] : memref<81xf32, #tpu.memory_space<smem>>
    %1044 = vector.extract_strided_slice %745 {offsets = [0, 4, 4], sizes = [2, 5, 5], strides = [1, 1, 1]} : vector<2x13x13xf32> to vector<2x5x5xf32>
    %1045 = vector.broadcast %1043 : f32 to vector<2x5x5xf32>
    %1046 = arith.mulf %1045, %1044 : vector<2x5x5xf32>
    %1047 = arith.addf %1042, %1046 : vector<2x5x5xf32>
    %c5_133 = arith.constant 5 : index
    %1048 = memref.load %arg7[%c5_133] : memref<81xf32, #tpu.memory_space<smem>>
    %1049 = vector.extract_strided_slice %745 {offsets = [0, 4, 8], sizes = [2, 5, 5], strides = [1, 1, 1]} : vector<2x13x13xf32> to vector<2x5x5xf32>
    %1050 = vector.broadcast %1048 : f32 to vector<2x5x5xf32>
    %1051 = arith.mulf %1050, %1049 : vector<2x5x5xf32>
    %1052 = arith.addf %1047, %1051 : vector<2x5x5xf32>
    %c6_134 = arith.constant 6 : index
    %1053 = memref.load %arg7[%c6_134] : memref<81xf32, #tpu.memory_space<smem>>
    %1054 = vector.extract_strided_slice %745 {offsets = [0, 8, 0], sizes = [2, 5, 5], strides = [1, 1, 1]} : vector<2x13x13xf32> to vector<2x5x5xf32>
    %1055 = vector.broadcast %1053 : f32 to vector<2x5x5xf32>
    %1056 = arith.mulf %1055, %1054 : vector<2x5x5xf32>
    %1057 = arith.addf %1052, %1056 : vector<2x5x5xf32>
    %c7_135 = arith.constant 7 : index
    %1058 = memref.load %arg7[%c7_135] : memref<81xf32, #tpu.memory_space<smem>>
    %1059 = vector.extract_strided_slice %745 {offsets = [0, 8, 4], sizes = [2, 5, 5], strides = [1, 1, 1]} : vector<2x13x13xf32> to vector<2x5x5xf32>
    %1060 = vector.broadcast %1058 : f32 to vector<2x5x5xf32>
    %1061 = arith.mulf %1060, %1059 : vector<2x5x5xf32>
    %1062 = arith.addf %1057, %1061 : vector<2x5x5xf32>
    %c8_136 = arith.constant 8 : index
    %1063 = memref.load %arg7[%c8_136] : memref<81xf32, #tpu.memory_space<smem>>
    %1064 = vector.extract_strided_slice %745 {offsets = [0, 8, 8], sizes = [2, 5, 5], strides = [1, 1, 1]} : vector<2x13x13xf32> to vector<2x5x5xf32>
    %1065 = vector.broadcast %1063 : f32 to vector<2x5x5xf32>
    %1066 = arith.mulf %1065, %1064 : vector<2x5x5xf32>
    %1067 = arith.addf %1062, %1066 : vector<2x5x5xf32>
    %c9_137 = arith.constant 9 : index
    %1068 = memref.load %arg7[%c9_137] : memref<81xf32, #tpu.memory_space<smem>>
    %1069 = vector.extract_strided_slice %884 {offsets = [0, 0, 0], sizes = [2, 5, 5], strides = [1, 1, 1]} : vector<2x13x13xf32> to vector<2x5x5xf32>
    %1070 = vector.broadcast %1068 : f32 to vector<2x5x5xf32>
    %1071 = arith.mulf %1070, %1069 : vector<2x5x5xf32>
    %1072 = arith.addf %1067, %1071 : vector<2x5x5xf32>
    %c10_138 = arith.constant 10 : index
    %1073 = memref.load %arg7[%c10_138] : memref<81xf32, #tpu.memory_space<smem>>
    %1074 = vector.extract_strided_slice %884 {offsets = [0, 0, 4], sizes = [2, 5, 5], strides = [1, 1, 1]} : vector<2x13x13xf32> to vector<2x5x5xf32>
    %1075 = vector.broadcast %1073 : f32 to vector<2x5x5xf32>
    %1076 = arith.mulf %1075, %1074 : vector<2x5x5xf32>
    %1077 = arith.addf %1072, %1076 : vector<2x5x5xf32>
    %c11_139 = arith.constant 11 : index
    %1078 = memref.load %arg7[%c11_139] : memref<81xf32, #tpu.memory_space<smem>>
    %1079 = vector.extract_strided_slice %884 {offsets = [0, 0, 8], sizes = [2, 5, 5], strides = [1, 1, 1]} : vector<2x13x13xf32> to vector<2x5x5xf32>
    %1080 = vector.broadcast %1078 : f32 to vector<2x5x5xf32>
    %1081 = arith.mulf %1080, %1079 : vector<2x5x5xf32>
    %1082 = arith.addf %1077, %1081 : vector<2x5x5xf32>
    %c12_140 = arith.constant 12 : index
    %1083 = memref.load %arg7[%c12_140] : memref<81xf32, #tpu.memory_space<smem>>
    %1084 = vector.extract_strided_slice %884 {offsets = [0, 4, 0], sizes = [2, 5, 5], strides = [1, 1, 1]} : vector<2x13x13xf32> to vector<2x5x5xf32>
    %1085 = vector.broadcast %1083 : f32 to vector<2x5x5xf32>
    %1086 = arith.mulf %1085, %1084 : vector<2x5x5xf32>
    %1087 = arith.addf %1082, %1086 : vector<2x5x5xf32>
    %c13_141 = arith.constant 13 : index
    %1088 = memref.load %arg7[%c13_141] : memref<81xf32, #tpu.memory_space<smem>>
    %1089 = vector.extract_strided_slice %884 {offsets = [0, 4, 4], sizes = [2, 5, 5], strides = [1, 1, 1]} : vector<2x13x13xf32> to vector<2x5x5xf32>
    %1090 = vector.broadcast %1088 : f32 to vector<2x5x5xf32>
    %1091 = arith.mulf %1090, %1089 : vector<2x5x5xf32>
    %1092 = arith.addf %1087, %1091 : vector<2x5x5xf32>
    %c14_142 = arith.constant 14 : index
    %1093 = memref.load %arg7[%c14_142] : memref<81xf32, #tpu.memory_space<smem>>
    %1094 = vector.extract_strided_slice %884 {offsets = [0, 4, 8], sizes = [2, 5, 5], strides = [1, 1, 1]} : vector<2x13x13xf32> to vector<2x5x5xf32>
    %1095 = vector.broadcast %1093 : f32 to vector<2x5x5xf32>
    %1096 = arith.mulf %1095, %1094 : vector<2x5x5xf32>
    %1097 = arith.addf %1092, %1096 : vector<2x5x5xf32>
    %c15_143 = arith.constant 15 : index
    %1098 = memref.load %arg7[%c15_143] : memref<81xf32, #tpu.memory_space<smem>>
    %1099 = vector.extract_strided_slice %884 {offsets = [0, 8, 0], sizes = [2, 5, 5], strides = [1, 1, 1]} : vector<2x13x13xf32> to vector<2x5x5xf32>
    %1100 = vector.broadcast %1098 : f32 to vector<2x5x5xf32>
    %1101 = arith.mulf %1100, %1099 : vector<2x5x5xf32>
    %1102 = arith.addf %1097, %1101 : vector<2x5x5xf32>
    %c16_144 = arith.constant 16 : index
    %1103 = memref.load %arg7[%c16_144] : memref<81xf32, #tpu.memory_space<smem>>
    %1104 = vector.extract_strided_slice %884 {offsets = [0, 8, 4], sizes = [2, 5, 5], strides = [1, 1, 1]} : vector<2x13x13xf32> to vector<2x5x5xf32>
    %1105 = vector.broadcast %1103 : f32 to vector<2x5x5xf32>
    %1106 = arith.mulf %1105, %1104 : vector<2x5x5xf32>
    %1107 = arith.addf %1102, %1106 : vector<2x5x5xf32>
    %c17_145 = arith.constant 17 : index
    %1108 = memref.load %arg7[%c17_145] : memref<81xf32, #tpu.memory_space<smem>>
    %1109 = vector.extract_strided_slice %884 {offsets = [0, 8, 8], sizes = [2, 5, 5], strides = [1, 1, 1]} : vector<2x13x13xf32> to vector<2x5x5xf32>
    %1110 = vector.broadcast %1108 : f32 to vector<2x5x5xf32>
    %1111 = arith.mulf %1110, %1109 : vector<2x5x5xf32>
    %1112 = arith.addf %1107, %1111 : vector<2x5x5xf32>
    %c18_146 = arith.constant 18 : index
    %1113 = memref.load %arg7[%c18_146] : memref<81xf32, #tpu.memory_space<smem>>
    %1114 = vector.extract_strided_slice %1023 {offsets = [0, 0, 0], sizes = [2, 5, 5], strides = [1, 1, 1]} : vector<2x13x13xf32> to vector<2x5x5xf32>
    %1115 = vector.broadcast %1113 : f32 to vector<2x5x5xf32>
    %1116 = arith.mulf %1115, %1114 : vector<2x5x5xf32>
    %1117 = arith.addf %1112, %1116 : vector<2x5x5xf32>
    %c19_147 = arith.constant 19 : index
    %1118 = memref.load %arg7[%c19_147] : memref<81xf32, #tpu.memory_space<smem>>
    %1119 = vector.extract_strided_slice %1023 {offsets = [0, 0, 4], sizes = [2, 5, 5], strides = [1, 1, 1]} : vector<2x13x13xf32> to vector<2x5x5xf32>
    %1120 = vector.broadcast %1118 : f32 to vector<2x5x5xf32>
    %1121 = arith.mulf %1120, %1119 : vector<2x5x5xf32>
    %1122 = arith.addf %1117, %1121 : vector<2x5x5xf32>
    %c20_148 = arith.constant 20 : index
    %1123 = memref.load %arg7[%c20_148] : memref<81xf32, #tpu.memory_space<smem>>
    %1124 = vector.extract_strided_slice %1023 {offsets = [0, 0, 8], sizes = [2, 5, 5], strides = [1, 1, 1]} : vector<2x13x13xf32> to vector<2x5x5xf32>
    %1125 = vector.broadcast %1123 : f32 to vector<2x5x5xf32>
    %1126 = arith.mulf %1125, %1124 : vector<2x5x5xf32>
    %1127 = arith.addf %1122, %1126 : vector<2x5x5xf32>
    %c21_149 = arith.constant 21 : index
    %1128 = memref.load %arg7[%c21_149] : memref<81xf32, #tpu.memory_space<smem>>
    %1129 = vector.extract_strided_slice %1023 {offsets = [0, 4, 0], sizes = [2, 5, 5], strides = [1, 1, 1]} : vector<2x13x13xf32> to vector<2x5x5xf32>
    %1130 = vector.broadcast %1128 : f32 to vector<2x5x5xf32>
    %1131 = arith.mulf %1130, %1129 : vector<2x5x5xf32>
    %1132 = arith.addf %1127, %1131 : vector<2x5x5xf32>
    %c22_150 = arith.constant 22 : index
    %1133 = memref.load %arg7[%c22_150] : memref<81xf32, #tpu.memory_space<smem>>
    %1134 = vector.extract_strided_slice %1023 {offsets = [0, 4, 4], sizes = [2, 5, 5], strides = [1, 1, 1]} : vector<2x13x13xf32> to vector<2x5x5xf32>
    %1135 = vector.broadcast %1133 : f32 to vector<2x5x5xf32>
    %1136 = arith.mulf %1135, %1134 : vector<2x5x5xf32>
    %1137 = arith.addf %1132, %1136 : vector<2x5x5xf32>
    %c23_151 = arith.constant 23 : index
    %1138 = memref.load %arg7[%c23_151] : memref<81xf32, #tpu.memory_space<smem>>
    %1139 = vector.extract_strided_slice %1023 {offsets = [0, 4, 8], sizes = [2, 5, 5], strides = [1, 1, 1]} : vector<2x13x13xf32> to vector<2x5x5xf32>
    %1140 = vector.broadcast %1138 : f32 to vector<2x5x5xf32>
    %1141 = arith.mulf %1140, %1139 : vector<2x5x5xf32>
    %1142 = arith.addf %1137, %1141 : vector<2x5x5xf32>
    %c24_152 = arith.constant 24 : index
    %1143 = memref.load %arg7[%c24_152] : memref<81xf32, #tpu.memory_space<smem>>
    %1144 = vector.extract_strided_slice %1023 {offsets = [0, 8, 0], sizes = [2, 5, 5], strides = [1, 1, 1]} : vector<2x13x13xf32> to vector<2x5x5xf32>
    %1145 = vector.broadcast %1143 : f32 to vector<2x5x5xf32>
    %1146 = arith.mulf %1145, %1144 : vector<2x5x5xf32>
    %1147 = arith.addf %1142, %1146 : vector<2x5x5xf32>
    %c25_153 = arith.constant 25 : index
    %1148 = memref.load %arg7[%c25_153] : memref<81xf32, #tpu.memory_space<smem>>
    %1149 = vector.extract_strided_slice %1023 {offsets = [0, 8, 4], sizes = [2, 5, 5], strides = [1, 1, 1]} : vector<2x13x13xf32> to vector<2x5x5xf32>
    %1150 = vector.broadcast %1148 : f32 to vector<2x5x5xf32>
    %1151 = arith.mulf %1150, %1149 : vector<2x5x5xf32>
    %1152 = arith.addf %1147, %1151 : vector<2x5x5xf32>
    %c26_154 = arith.constant 26 : index
    %1153 = memref.load %arg7[%c26_154] : memref<81xf32, #tpu.memory_space<smem>>
    %1154 = vector.extract_strided_slice %1023 {offsets = [0, 8, 8], sizes = [2, 5, 5], strides = [1, 1, 1]} : vector<2x13x13xf32> to vector<2x5x5xf32>
    %1155 = vector.broadcast %1153 : f32 to vector<2x5x5xf32>
    %1156 = arith.mulf %1155, %1154 : vector<2x5x5xf32>
    %1157 = arith.addf %1152, %1156 : vector<2x5x5xf32>
    %c0_155 = arith.constant 0 : index
    %1158 = memref.load %arg8[%c0_155] : memref<3xf32, #tpu.memory_space<smem>>
    %1159 = vector.broadcast %1158 : f32 to vector<2x5x5xf32>
    %1160 = arith.addf %1157, %1159 : vector<2x5x5xf32>
    %cst_156 = arith.constant 0.000000e+00 : f32
    %1161 = vector.broadcast %cst_156 : f32 to vector<2x5x5xf32>
    %1162 = arith.maximumf %1160, %1161 : vector<2x5x5xf32>
    %c27_157 = arith.constant 27 : index
    %1163 = memref.load %arg7[%c27_157] : memref<81xf32, #tpu.memory_space<smem>>
    %1164 = vector.extract_strided_slice %745 {offsets = [0, 0, 0], sizes = [2, 5, 5], strides = [1, 1, 1]} : vector<2x13x13xf32> to vector<2x5x5xf32>
    %1165 = vector.broadcast %1163 : f32 to vector<2x5x5xf32>
    %1166 = arith.mulf %1165, %1164 : vector<2x5x5xf32>
    %c28_158 = arith.constant 28 : index
    %1167 = memref.load %arg7[%c28_158] : memref<81xf32, #tpu.memory_space<smem>>
    %1168 = vector.extract_strided_slice %745 {offsets = [0, 0, 4], sizes = [2, 5, 5], strides = [1, 1, 1]} : vector<2x13x13xf32> to vector<2x5x5xf32>
    %1169 = vector.broadcast %1167 : f32 to vector<2x5x5xf32>
    %1170 = arith.mulf %1169, %1168 : vector<2x5x5xf32>
    %1171 = arith.addf %1166, %1170 : vector<2x5x5xf32>
    %c29_159 = arith.constant 29 : index
    %1172 = memref.load %arg7[%c29_159] : memref<81xf32, #tpu.memory_space<smem>>
    %1173 = vector.extract_strided_slice %745 {offsets = [0, 0, 8], sizes = [2, 5, 5], strides = [1, 1, 1]} : vector<2x13x13xf32> to vector<2x5x5xf32>
    %1174 = vector.broadcast %1172 : f32 to vector<2x5x5xf32>
    %1175 = arith.mulf %1174, %1173 : vector<2x5x5xf32>
    %1176 = arith.addf %1171, %1175 : vector<2x5x5xf32>
    %c30_160 = arith.constant 30 : index
    %1177 = memref.load %arg7[%c30_160] : memref<81xf32, #tpu.memory_space<smem>>
    %1178 = vector.extract_strided_slice %745 {offsets = [0, 4, 0], sizes = [2, 5, 5], strides = [1, 1, 1]} : vector<2x13x13xf32> to vector<2x5x5xf32>
    %1179 = vector.broadcast %1177 : f32 to vector<2x5x5xf32>
    %1180 = arith.mulf %1179, %1178 : vector<2x5x5xf32>
    %1181 = arith.addf %1176, %1180 : vector<2x5x5xf32>
    %c31_161 = arith.constant 31 : index
    %1182 = memref.load %arg7[%c31_161] : memref<81xf32, #tpu.memory_space<smem>>
    %1183 = vector.extract_strided_slice %745 {offsets = [0, 4, 4], sizes = [2, 5, 5], strides = [1, 1, 1]} : vector<2x13x13xf32> to vector<2x5x5xf32>
    %1184 = vector.broadcast %1182 : f32 to vector<2x5x5xf32>
    %1185 = arith.mulf %1184, %1183 : vector<2x5x5xf32>
    %1186 = arith.addf %1181, %1185 : vector<2x5x5xf32>
    %c32_162 = arith.constant 32 : index
    %1187 = memref.load %arg7[%c32_162] : memref<81xf32, #tpu.memory_space<smem>>
    %1188 = vector.extract_strided_slice %745 {offsets = [0, 4, 8], sizes = [2, 5, 5], strides = [1, 1, 1]} : vector<2x13x13xf32> to vector<2x5x5xf32>
    %1189 = vector.broadcast %1187 : f32 to vector<2x5x5xf32>
    %1190 = arith.mulf %1189, %1188 : vector<2x5x5xf32>
    %1191 = arith.addf %1186, %1190 : vector<2x5x5xf32>
    %c33_163 = arith.constant 33 : index
    %1192 = memref.load %arg7[%c33_163] : memref<81xf32, #tpu.memory_space<smem>>
    %1193 = vector.extract_strided_slice %745 {offsets = [0, 8, 0], sizes = [2, 5, 5], strides = [1, 1, 1]} : vector<2x13x13xf32> to vector<2x5x5xf32>
    %1194 = vector.broadcast %1192 : f32 to vector<2x5x5xf32>
    %1195 = arith.mulf %1194, %1193 : vector<2x5x5xf32>
    %1196 = arith.addf %1191, %1195 : vector<2x5x5xf32>
    %c34_164 = arith.constant 34 : index
    %1197 = memref.load %arg7[%c34_164] : memref<81xf32, #tpu.memory_space<smem>>
    %1198 = vector.extract_strided_slice %745 {offsets = [0, 8, 4], sizes = [2, 5, 5], strides = [1, 1, 1]} : vector<2x13x13xf32> to vector<2x5x5xf32>
    %1199 = vector.broadcast %1197 : f32 to vector<2x5x5xf32>
    %1200 = arith.mulf %1199, %1198 : vector<2x5x5xf32>
    %1201 = arith.addf %1196, %1200 : vector<2x5x5xf32>
    %c35_165 = arith.constant 35 : index
    %1202 = memref.load %arg7[%c35_165] : memref<81xf32, #tpu.memory_space<smem>>
    %1203 = vector.extract_strided_slice %745 {offsets = [0, 8, 8], sizes = [2, 5, 5], strides = [1, 1, 1]} : vector<2x13x13xf32> to vector<2x5x5xf32>
    %1204 = vector.broadcast %1202 : f32 to vector<2x5x5xf32>
    %1205 = arith.mulf %1204, %1203 : vector<2x5x5xf32>
    %1206 = arith.addf %1201, %1205 : vector<2x5x5xf32>
    %c36_166 = arith.constant 36 : index
    %1207 = memref.load %arg7[%c36_166] : memref<81xf32, #tpu.memory_space<smem>>
    %1208 = vector.extract_strided_slice %884 {offsets = [0, 0, 0], sizes = [2, 5, 5], strides = [1, 1, 1]} : vector<2x13x13xf32> to vector<2x5x5xf32>
    %1209 = vector.broadcast %1207 : f32 to vector<2x5x5xf32>
    %1210 = arith.mulf %1209, %1208 : vector<2x5x5xf32>
    %1211 = arith.addf %1206, %1210 : vector<2x5x5xf32>
    %c37_167 = arith.constant 37 : index
    %1212 = memref.load %arg7[%c37_167] : memref<81xf32, #tpu.memory_space<smem>>
    %1213 = vector.extract_strided_slice %884 {offsets = [0, 0, 4], sizes = [2, 5, 5], strides = [1, 1, 1]} : vector<2x13x13xf32> to vector<2x5x5xf32>
    %1214 = vector.broadcast %1212 : f32 to vector<2x5x5xf32>
    %1215 = arith.mulf %1214, %1213 : vector<2x5x5xf32>
    %1216 = arith.addf %1211, %1215 : vector<2x5x5xf32>
    %c38_168 = arith.constant 38 : index
    %1217 = memref.load %arg7[%c38_168] : memref<81xf32, #tpu.memory_space<smem>>
    %1218 = vector.extract_strided_slice %884 {offsets = [0, 0, 8], sizes = [2, 5, 5], strides = [1, 1, 1]} : vector<2x13x13xf32> to vector<2x5x5xf32>
    %1219 = vector.broadcast %1217 : f32 to vector<2x5x5xf32>
    %1220 = arith.mulf %1219, %1218 : vector<2x5x5xf32>
    %1221 = arith.addf %1216, %1220 : vector<2x5x5xf32>
    %c39_169 = arith.constant 39 : index
    %1222 = memref.load %arg7[%c39_169] : memref<81xf32, #tpu.memory_space<smem>>
    %1223 = vector.extract_strided_slice %884 {offsets = [0, 4, 0], sizes = [2, 5, 5], strides = [1, 1, 1]} : vector<2x13x13xf32> to vector<2x5x5xf32>
    %1224 = vector.broadcast %1222 : f32 to vector<2x5x5xf32>
    %1225 = arith.mulf %1224, %1223 : vector<2x5x5xf32>
    %1226 = arith.addf %1221, %1225 : vector<2x5x5xf32>
    %c40_170 = arith.constant 40 : index
    %1227 = memref.load %arg7[%c40_170] : memref<81xf32, #tpu.memory_space<smem>>
    %1228 = vector.extract_strided_slice %884 {offsets = [0, 4, 4], sizes = [2, 5, 5], strides = [1, 1, 1]} : vector<2x13x13xf32> to vector<2x5x5xf32>
    %1229 = vector.broadcast %1227 : f32 to vector<2x5x5xf32>
    %1230 = arith.mulf %1229, %1228 : vector<2x5x5xf32>
    %1231 = arith.addf %1226, %1230 : vector<2x5x5xf32>
    %c41_171 = arith.constant 41 : index
    %1232 = memref.load %arg7[%c41_171] : memref<81xf32, #tpu.memory_space<smem>>
    %1233 = vector.extract_strided_slice %884 {offsets = [0, 4, 8], sizes = [2, 5, 5], strides = [1, 1, 1]} : vector<2x13x13xf32> to vector<2x5x5xf32>
    %1234 = vector.broadcast %1232 : f32 to vector<2x5x5xf32>
    %1235 = arith.mulf %1234, %1233 : vector<2x5x5xf32>
    %1236 = arith.addf %1231, %1235 : vector<2x5x5xf32>
    %c42_172 = arith.constant 42 : index
    %1237 = memref.load %arg7[%c42_172] : memref<81xf32, #tpu.memory_space<smem>>
    %1238 = vector.extract_strided_slice %884 {offsets = [0, 8, 0], sizes = [2, 5, 5], strides = [1, 1, 1]} : vector<2x13x13xf32> to vector<2x5x5xf32>
    %1239 = vector.broadcast %1237 : f32 to vector<2x5x5xf32>
    %1240 = arith.mulf %1239, %1238 : vector<2x5x5xf32>
    %1241 = arith.addf %1236, %1240 : vector<2x5x5xf32>
    %c43_173 = arith.constant 43 : index
    %1242 = memref.load %arg7[%c43_173] : memref<81xf32, #tpu.memory_space<smem>>
    %1243 = vector.extract_strided_slice %884 {offsets = [0, 8, 4], sizes = [2, 5, 5], strides = [1, 1, 1]} : vector<2x13x13xf32> to vector<2x5x5xf32>
    %1244 = vector.broadcast %1242 : f32 to vector<2x5x5xf32>
    %1245 = arith.mulf %1244, %1243 : vector<2x5x5xf32>
    %1246 = arith.addf %1241, %1245 : vector<2x5x5xf32>
    %c44_174 = arith.constant 44 : index
    %1247 = memref.load %arg7[%c44_174] : memref<81xf32, #tpu.memory_space<smem>>
    %1248 = vector.extract_strided_slice %884 {offsets = [0, 8, 8], sizes = [2, 5, 5], strides = [1, 1, 1]} : vector<2x13x13xf32> to vector<2x5x5xf32>
    %1249 = vector.broadcast %1247 : f32 to vector<2x5x5xf32>
    %1250 = arith.mulf %1249, %1248 : vector<2x5x5xf32>
    %1251 = arith.addf %1246, %1250 : vector<2x5x5xf32>
    %c45_175 = arith.constant 45 : index
    %1252 = memref.load %arg7[%c45_175] : memref<81xf32, #tpu.memory_space<smem>>
    %1253 = vector.extract_strided_slice %1023 {offsets = [0, 0, 0], sizes = [2, 5, 5], strides = [1, 1, 1]} : vector<2x13x13xf32> to vector<2x5x5xf32>
    %1254 = vector.broadcast %1252 : f32 to vector<2x5x5xf32>
    %1255 = arith.mulf %1254, %1253 : vector<2x5x5xf32>
    %1256 = arith.addf %1251, %1255 : vector<2x5x5xf32>
    %c46_176 = arith.constant 46 : index
    %1257 = memref.load %arg7[%c46_176] : memref<81xf32, #tpu.memory_space<smem>>
    %1258 = vector.extract_strided_slice %1023 {offsets = [0, 0, 4], sizes = [2, 5, 5], strides = [1, 1, 1]} : vector<2x13x13xf32> to vector<2x5x5xf32>
    %1259 = vector.broadcast %1257 : f32 to vector<2x5x5xf32>
    %1260 = arith.mulf %1259, %1258 : vector<2x5x5xf32>
    %1261 = arith.addf %1256, %1260 : vector<2x5x5xf32>
    %c47_177 = arith.constant 47 : index
    %1262 = memref.load %arg7[%c47_177] : memref<81xf32, #tpu.memory_space<smem>>
    %1263 = vector.extract_strided_slice %1023 {offsets = [0, 0, 8], sizes = [2, 5, 5], strides = [1, 1, 1]} : vector<2x13x13xf32> to vector<2x5x5xf32>
    %1264 = vector.broadcast %1262 : f32 to vector<2x5x5xf32>
    %1265 = arith.mulf %1264, %1263 : vector<2x5x5xf32>
    %1266 = arith.addf %1261, %1265 : vector<2x5x5xf32>
    %c48_178 = arith.constant 48 : index
    %1267 = memref.load %arg7[%c48_178] : memref<81xf32, #tpu.memory_space<smem>>
    %1268 = vector.extract_strided_slice %1023 {offsets = [0, 4, 0], sizes = [2, 5, 5], strides = [1, 1, 1]} : vector<2x13x13xf32> to vector<2x5x5xf32>
    %1269 = vector.broadcast %1267 : f32 to vector<2x5x5xf32>
    %1270 = arith.mulf %1269, %1268 : vector<2x5x5xf32>
    %1271 = arith.addf %1266, %1270 : vector<2x5x5xf32>
    %c49_179 = arith.constant 49 : index
    %1272 = memref.load %arg7[%c49_179] : memref<81xf32, #tpu.memory_space<smem>>
    %1273 = vector.extract_strided_slice %1023 {offsets = [0, 4, 4], sizes = [2, 5, 5], strides = [1, 1, 1]} : vector<2x13x13xf32> to vector<2x5x5xf32>
    %1274 = vector.broadcast %1272 : f32 to vector<2x5x5xf32>
    %1275 = arith.mulf %1274, %1273 : vector<2x5x5xf32>
    %1276 = arith.addf %1271, %1275 : vector<2x5x5xf32>
    %c50_180 = arith.constant 50 : index
    %1277 = memref.load %arg7[%c50_180] : memref<81xf32, #tpu.memory_space<smem>>
    %1278 = vector.extract_strided_slice %1023 {offsets = [0, 4, 8], sizes = [2, 5, 5], strides = [1, 1, 1]} : vector<2x13x13xf32> to vector<2x5x5xf32>
    %1279 = vector.broadcast %1277 : f32 to vector<2x5x5xf32>
    %1280 = arith.mulf %1279, %1278 : vector<2x5x5xf32>
    %1281 = arith.addf %1276, %1280 : vector<2x5x5xf32>
    %c51_181 = arith.constant 51 : index
    %1282 = memref.load %arg7[%c51_181] : memref<81xf32, #tpu.memory_space<smem>>
    %1283 = vector.extract_strided_slice %1023 {offsets = [0, 8, 0], sizes = [2, 5, 5], strides = [1, 1, 1]} : vector<2x13x13xf32> to vector<2x5x5xf32>
    %1284 = vector.broadcast %1282 : f32 to vector<2x5x5xf32>
    %1285 = arith.mulf %1284, %1283 : vector<2x5x5xf32>
    %1286 = arith.addf %1281, %1285 : vector<2x5x5xf32>
    %c52_182 = arith.constant 52 : index
    %1287 = memref.load %arg7[%c52_182] : memref<81xf32, #tpu.memory_space<smem>>
    %1288 = vector.extract_strided_slice %1023 {offsets = [0, 8, 4], sizes = [2, 5, 5], strides = [1, 1, 1]} : vector<2x13x13xf32> to vector<2x5x5xf32>
    %1289 = vector.broadcast %1287 : f32 to vector<2x5x5xf32>
    %1290 = arith.mulf %1289, %1288 : vector<2x5x5xf32>
    %1291 = arith.addf %1286, %1290 : vector<2x5x5xf32>
    %c53_183 = arith.constant 53 : index
    %1292 = memref.load %arg7[%c53_183] : memref<81xf32, #tpu.memory_space<smem>>
    %1293 = vector.extract_strided_slice %1023 {offsets = [0, 8, 8], sizes = [2, 5, 5], strides = [1, 1, 1]} : vector<2x13x13xf32> to vector<2x5x5xf32>
    %1294 = vector.broadcast %1292 : f32 to vector<2x5x5xf32>
    %1295 = arith.mulf %1294, %1293 : vector<2x5x5xf32>
    %1296 = arith.addf %1291, %1295 : vector<2x5x5xf32>
    %c1_184 = arith.constant 1 : index
    %1297 = memref.load %arg8[%c1_184] : memref<3xf32, #tpu.memory_space<smem>>
    %1298 = vector.broadcast %1297 : f32 to vector<2x5x5xf32>
    %1299 = arith.addf %1296, %1298 : vector<2x5x5xf32>
    %cst_185 = arith.constant 0.000000e+00 : f32
    %1300 = vector.broadcast %cst_185 : f32 to vector<2x5x5xf32>
    %1301 = arith.maximumf %1299, %1300 : vector<2x5x5xf32>
    %c54_186 = arith.constant 54 : index
    %1302 = memref.load %arg7[%c54_186] : memref<81xf32, #tpu.memory_space<smem>>
    %1303 = vector.extract_strided_slice %745 {offsets = [0, 0, 0], sizes = [2, 5, 5], strides = [1, 1, 1]} : vector<2x13x13xf32> to vector<2x5x5xf32>
    %1304 = vector.broadcast %1302 : f32 to vector<2x5x5xf32>
    %1305 = arith.mulf %1304, %1303 : vector<2x5x5xf32>
    %c55_187 = arith.constant 55 : index
    %1306 = memref.load %arg7[%c55_187] : memref<81xf32, #tpu.memory_space<smem>>
    %1307 = vector.extract_strided_slice %745 {offsets = [0, 0, 4], sizes = [2, 5, 5], strides = [1, 1, 1]} : vector<2x13x13xf32> to vector<2x5x5xf32>
    %1308 = vector.broadcast %1306 : f32 to vector<2x5x5xf32>
    %1309 = arith.mulf %1308, %1307 : vector<2x5x5xf32>
    %1310 = arith.addf %1305, %1309 : vector<2x5x5xf32>
    %c56_188 = arith.constant 56 : index
    %1311 = memref.load %arg7[%c56_188] : memref<81xf32, #tpu.memory_space<smem>>
    %1312 = vector.extract_strided_slice %745 {offsets = [0, 0, 8], sizes = [2, 5, 5], strides = [1, 1, 1]} : vector<2x13x13xf32> to vector<2x5x5xf32>
    %1313 = vector.broadcast %1311 : f32 to vector<2x5x5xf32>
    %1314 = arith.mulf %1313, %1312 : vector<2x5x5xf32>
    %1315 = arith.addf %1310, %1314 : vector<2x5x5xf32>
    %c57_189 = arith.constant 57 : index
    %1316 = memref.load %arg7[%c57_189] : memref<81xf32, #tpu.memory_space<smem>>
    %1317 = vector.extract_strided_slice %745 {offsets = [0, 4, 0], sizes = [2, 5, 5], strides = [1, 1, 1]} : vector<2x13x13xf32> to vector<2x5x5xf32>
    %1318 = vector.broadcast %1316 : f32 to vector<2x5x5xf32>
    %1319 = arith.mulf %1318, %1317 : vector<2x5x5xf32>
    %1320 = arith.addf %1315, %1319 : vector<2x5x5xf32>
    %c58_190 = arith.constant 58 : index
    %1321 = memref.load %arg7[%c58_190] : memref<81xf32, #tpu.memory_space<smem>>
    %1322 = vector.extract_strided_slice %745 {offsets = [0, 4, 4], sizes = [2, 5, 5], strides = [1, 1, 1]} : vector<2x13x13xf32> to vector<2x5x5xf32>
    %1323 = vector.broadcast %1321 : f32 to vector<2x5x5xf32>
    %1324 = arith.mulf %1323, %1322 : vector<2x5x5xf32>
    %1325 = arith.addf %1320, %1324 : vector<2x5x5xf32>
    %c59_191 = arith.constant 59 : index
    %1326 = memref.load %arg7[%c59_191] : memref<81xf32, #tpu.memory_space<smem>>
    %1327 = vector.extract_strided_slice %745 {offsets = [0, 4, 8], sizes = [2, 5, 5], strides = [1, 1, 1]} : vector<2x13x13xf32> to vector<2x5x5xf32>
    %1328 = vector.broadcast %1326 : f32 to vector<2x5x5xf32>
    %1329 = arith.mulf %1328, %1327 : vector<2x5x5xf32>
    %1330 = arith.addf %1325, %1329 : vector<2x5x5xf32>
    %c60_192 = arith.constant 60 : index
    %1331 = memref.load %arg7[%c60_192] : memref<81xf32, #tpu.memory_space<smem>>
    %1332 = vector.extract_strided_slice %745 {offsets = [0, 8, 0], sizes = [2, 5, 5], strides = [1, 1, 1]} : vector<2x13x13xf32> to vector<2x5x5xf32>
    %1333 = vector.broadcast %1331 : f32 to vector<2x5x5xf32>
    %1334 = arith.mulf %1333, %1332 : vector<2x5x5xf32>
    %1335 = arith.addf %1330, %1334 : vector<2x5x5xf32>
    %c61_193 = arith.constant 61 : index
    %1336 = memref.load %arg7[%c61_193] : memref<81xf32, #tpu.memory_space<smem>>
    %1337 = vector.extract_strided_slice %745 {offsets = [0, 8, 4], sizes = [2, 5, 5], strides = [1, 1, 1]} : vector<2x13x13xf32> to vector<2x5x5xf32>
    %1338 = vector.broadcast %1336 : f32 to vector<2x5x5xf32>
    %1339 = arith.mulf %1338, %1337 : vector<2x5x5xf32>
    %1340 = arith.addf %1335, %1339 : vector<2x5x5xf32>
    %c62_194 = arith.constant 62 : index
    %1341 = memref.load %arg7[%c62_194] : memref<81xf32, #tpu.memory_space<smem>>
    %1342 = vector.extract_strided_slice %745 {offsets = [0, 8, 8], sizes = [2, 5, 5], strides = [1, 1, 1]} : vector<2x13x13xf32> to vector<2x5x5xf32>
    %1343 = vector.broadcast %1341 : f32 to vector<2x5x5xf32>
    %1344 = arith.mulf %1343, %1342 : vector<2x5x5xf32>
    %1345 = arith.addf %1340, %1344 : vector<2x5x5xf32>
    %c63_195 = arith.constant 63 : index
    %1346 = memref.load %arg7[%c63_195] : memref<81xf32, #tpu.memory_space<smem>>
    %1347 = vector.extract_strided_slice %884 {offsets = [0, 0, 0], sizes = [2, 5, 5], strides = [1, 1, 1]} : vector<2x13x13xf32> to vector<2x5x5xf32>
    %1348 = vector.broadcast %1346 : f32 to vector<2x5x5xf32>
    %1349 = arith.mulf %1348, %1347 : vector<2x5x5xf32>
    %1350 = arith.addf %1345, %1349 : vector<2x5x5xf32>
    %c64_196 = arith.constant 64 : index
    %1351 = memref.load %arg7[%c64_196] : memref<81xf32, #tpu.memory_space<smem>>
    %1352 = vector.extract_strided_slice %884 {offsets = [0, 0, 4], sizes = [2, 5, 5], strides = [1, 1, 1]} : vector<2x13x13xf32> to vector<2x5x5xf32>
    %1353 = vector.broadcast %1351 : f32 to vector<2x5x5xf32>
    %1354 = arith.mulf %1353, %1352 : vector<2x5x5xf32>
    %1355 = arith.addf %1350, %1354 : vector<2x5x5xf32>
    %c65_197 = arith.constant 65 : index
    %1356 = memref.load %arg7[%c65_197] : memref<81xf32, #tpu.memory_space<smem>>
    %1357 = vector.extract_strided_slice %884 {offsets = [0, 0, 8], sizes = [2, 5, 5], strides = [1, 1, 1]} : vector<2x13x13xf32> to vector<2x5x5xf32>
    %1358 = vector.broadcast %1356 : f32 to vector<2x5x5xf32>
    %1359 = arith.mulf %1358, %1357 : vector<2x5x5xf32>
    %1360 = arith.addf %1355, %1359 : vector<2x5x5xf32>
    %c66_198 = arith.constant 66 : index
    %1361 = memref.load %arg7[%c66_198] : memref<81xf32, #tpu.memory_space<smem>>
    %1362 = vector.extract_strided_slice %884 {offsets = [0, 4, 0], sizes = [2, 5, 5], strides = [1, 1, 1]} : vector<2x13x13xf32> to vector<2x5x5xf32>
    %1363 = vector.broadcast %1361 : f32 to vector<2x5x5xf32>
    %1364 = arith.mulf %1363, %1362 : vector<2x5x5xf32>
    %1365 = arith.addf %1360, %1364 : vector<2x5x5xf32>
    %c67_199 = arith.constant 67 : index
    %1366 = memref.load %arg7[%c67_199] : memref<81xf32, #tpu.memory_space<smem>>
    %1367 = vector.extract_strided_slice %884 {offsets = [0, 4, 4], sizes = [2, 5, 5], strides = [1, 1, 1]} : vector<2x13x13xf32> to vector<2x5x5xf32>
    %1368 = vector.broadcast %1366 : f32 to vector<2x5x5xf32>
    %1369 = arith.mulf %1368, %1367 : vector<2x5x5xf32>
    %1370 = arith.addf %1365, %1369 : vector<2x5x5xf32>
    %c68_200 = arith.constant 68 : index
    %1371 = memref.load %arg7[%c68_200] : memref<81xf32, #tpu.memory_space<smem>>
    %1372 = vector.extract_strided_slice %884 {offsets = [0, 4, 8], sizes = [2, 5, 5], strides = [1, 1, 1]} : vector<2x13x13xf32> to vector<2x5x5xf32>
    %1373 = vector.broadcast %1371 : f32 to vector<2x5x5xf32>
    %1374 = arith.mulf %1373, %1372 : vector<2x5x5xf32>
    %1375 = arith.addf %1370, %1374 : vector<2x5x5xf32>
    %c69_201 = arith.constant 69 : index
    %1376 = memref.load %arg7[%c69_201] : memref<81xf32, #tpu.memory_space<smem>>
    %1377 = vector.extract_strided_slice %884 {offsets = [0, 8, 0], sizes = [2, 5, 5], strides = [1, 1, 1]} : vector<2x13x13xf32> to vector<2x5x5xf32>
    %1378 = vector.broadcast %1376 : f32 to vector<2x5x5xf32>
    %1379 = arith.mulf %1378, %1377 : vector<2x5x5xf32>
    %1380 = arith.addf %1375, %1379 : vector<2x5x5xf32>
    %c70_202 = arith.constant 70 : index
    %1381 = memref.load %arg7[%c70_202] : memref<81xf32, #tpu.memory_space<smem>>
    %1382 = vector.extract_strided_slice %884 {offsets = [0, 8, 4], sizes = [2, 5, 5], strides = [1, 1, 1]} : vector<2x13x13xf32> to vector<2x5x5xf32>
    %1383 = vector.broadcast %1381 : f32 to vector<2x5x5xf32>
    %1384 = arith.mulf %1383, %1382 : vector<2x5x5xf32>
    %1385 = arith.addf %1380, %1384 : vector<2x5x5xf32>
    %c71_203 = arith.constant 71 : index
    %1386 = memref.load %arg7[%c71_203] : memref<81xf32, #tpu.memory_space<smem>>
    %1387 = vector.extract_strided_slice %884 {offsets = [0, 8, 8], sizes = [2, 5, 5], strides = [1, 1, 1]} : vector<2x13x13xf32> to vector<2x5x5xf32>
    %1388 = vector.broadcast %1386 : f32 to vector<2x5x5xf32>
    %1389 = arith.mulf %1388, %1387 : vector<2x5x5xf32>
    %1390 = arith.addf %1385, %1389 : vector<2x5x5xf32>
    %c72_204 = arith.constant 72 : index
    %1391 = memref.load %arg7[%c72_204] : memref<81xf32, #tpu.memory_space<smem>>
    %1392 = vector.extract_strided_slice %1023 {offsets = [0, 0, 0], sizes = [2, 5, 5], strides = [1, 1, 1]} : vector<2x13x13xf32> to vector<2x5x5xf32>
    %1393 = vector.broadcast %1391 : f32 to vector<2x5x5xf32>
    %1394 = arith.mulf %1393, %1392 : vector<2x5x5xf32>
    %1395 = arith.addf %1390, %1394 : vector<2x5x5xf32>
    %c73_205 = arith.constant 73 : index
    %1396 = memref.load %arg7[%c73_205] : memref<81xf32, #tpu.memory_space<smem>>
    %1397 = vector.extract_strided_slice %1023 {offsets = [0, 0, 4], sizes = [2, 5, 5], strides = [1, 1, 1]} : vector<2x13x13xf32> to vector<2x5x5xf32>
    %1398 = vector.broadcast %1396 : f32 to vector<2x5x5xf32>
    %1399 = arith.mulf %1398, %1397 : vector<2x5x5xf32>
    %1400 = arith.addf %1395, %1399 : vector<2x5x5xf32>
    %c74_206 = arith.constant 74 : index
    %1401 = memref.load %arg7[%c74_206] : memref<81xf32, #tpu.memory_space<smem>>
    %1402 = vector.extract_strided_slice %1023 {offsets = [0, 0, 8], sizes = [2, 5, 5], strides = [1, 1, 1]} : vector<2x13x13xf32> to vector<2x5x5xf32>
    %1403 = vector.broadcast %1401 : f32 to vector<2x5x5xf32>
    %1404 = arith.mulf %1403, %1402 : vector<2x5x5xf32>
    %1405 = arith.addf %1400, %1404 : vector<2x5x5xf32>
    %c75_207 = arith.constant 75 : index
    %1406 = memref.load %arg7[%c75_207] : memref<81xf32, #tpu.memory_space<smem>>
    %1407 = vector.extract_strided_slice %1023 {offsets = [0, 4, 0], sizes = [2, 5, 5], strides = [1, 1, 1]} : vector<2x13x13xf32> to vector<2x5x5xf32>
    %1408 = vector.broadcast %1406 : f32 to vector<2x5x5xf32>
    %1409 = arith.mulf %1408, %1407 : vector<2x5x5xf32>
    %1410 = arith.addf %1405, %1409 : vector<2x5x5xf32>
    %c76_208 = arith.constant 76 : index
    %1411 = memref.load %arg7[%c76_208] : memref<81xf32, #tpu.memory_space<smem>>
    %1412 = vector.extract_strided_slice %1023 {offsets = [0, 4, 4], sizes = [2, 5, 5], strides = [1, 1, 1]} : vector<2x13x13xf32> to vector<2x5x5xf32>
    %1413 = vector.broadcast %1411 : f32 to vector<2x5x5xf32>
    %1414 = arith.mulf %1413, %1412 : vector<2x5x5xf32>
    %1415 = arith.addf %1410, %1414 : vector<2x5x5xf32>
    %c77_209 = arith.constant 77 : index
    %1416 = memref.load %arg7[%c77_209] : memref<81xf32, #tpu.memory_space<smem>>
    %1417 = vector.extract_strided_slice %1023 {offsets = [0, 4, 8], sizes = [2, 5, 5], strides = [1, 1, 1]} : vector<2x13x13xf32> to vector<2x5x5xf32>
    %1418 = vector.broadcast %1416 : f32 to vector<2x5x5xf32>
    %1419 = arith.mulf %1418, %1417 : vector<2x5x5xf32>
    %1420 = arith.addf %1415, %1419 : vector<2x5x5xf32>
    %c78_210 = arith.constant 78 : index
    %1421 = memref.load %arg7[%c78_210] : memref<81xf32, #tpu.memory_space<smem>>
    %1422 = vector.extract_strided_slice %1023 {offsets = [0, 8, 0], sizes = [2, 5, 5], strides = [1, 1, 1]} : vector<2x13x13xf32> to vector<2x5x5xf32>
    %1423 = vector.broadcast %1421 : f32 to vector<2x5x5xf32>
    %1424 = arith.mulf %1423, %1422 : vector<2x5x5xf32>
    %1425 = arith.addf %1420, %1424 : vector<2x5x5xf32>
    %c79_211 = arith.constant 79 : index
    %1426 = memref.load %arg7[%c79_211] : memref<81xf32, #tpu.memory_space<smem>>
    %1427 = vector.extract_strided_slice %1023 {offsets = [0, 8, 4], sizes = [2, 5, 5], strides = [1, 1, 1]} : vector<2x13x13xf32> to vector<2x5x5xf32>
    %1428 = vector.broadcast %1426 : f32 to vector<2x5x5xf32>
    %1429 = arith.mulf %1428, %1427 : vector<2x5x5xf32>
    %1430 = arith.addf %1425, %1429 : vector<2x5x5xf32>
    %c80_212 = arith.constant 80 : index
    %1431 = memref.load %arg7[%c80_212] : memref<81xf32, #tpu.memory_space<smem>>
    %1432 = vector.extract_strided_slice %1023 {offsets = [0, 8, 8], sizes = [2, 5, 5], strides = [1, 1, 1]} : vector<2x13x13xf32> to vector<2x5x5xf32>
    %1433 = vector.broadcast %1431 : f32 to vector<2x5x5xf32>
    %1434 = arith.mulf %1433, %1432 : vector<2x5x5xf32>
    %1435 = arith.addf %1430, %1434 : vector<2x5x5xf32>
    %c2_213 = arith.constant 2 : index
    %1436 = memref.load %arg8[%c2_213] : memref<3xf32, #tpu.memory_space<smem>>
    %1437 = vector.broadcast %1436 : f32 to vector<2x5x5xf32>
    %1438 = arith.addf %1435, %1437 : vector<2x5x5xf32>
    %cst_214 = arith.constant 0.000000e+00 : f32
    %1439 = vector.broadcast %cst_214 : f32 to vector<2x5x5xf32>
    %1440 = arith.maximumf %1438, %1439 : vector<2x5x5xf32>
    %c0_215 = arith.constant 0 : index
    %c0_216 = arith.constant 0 : index
    %1441 = vector.load %arg9[%c0_215, %c0_216] : memref<12x10xf32, #tpu.memory_space<vmem>>, vector<12x10xf32>
    %1442 = vector.extract_strided_slice %1162 {offsets = [0, 0, 0], sizes = [2, 1, 1], strides = [1, 1, 1]} : vector<2x5x5xf32> to vector<2x1x1xf32>
    %1443 = vector.extract_strided_slice %1441 {offsets = [0, 0], sizes = [1, 10], strides = [1, 1]} : vector<12x10xf32> to vector<1x10xf32>
    %1444 = vector.shape_cast %1443 : vector<1x10xf32> to vector<1x1x10xf32>
    %1445 = vector.broadcast %1442 : vector<2x1x1xf32> to vector<2x1x10xf32>
    %1446 = vector.broadcast %1444 : vector<1x1x10xf32> to vector<2x1x10xf32>
    %1447 = arith.mulf %1445, %1446 : vector<2x1x10xf32>
    %1448 = vector.extract_strided_slice %1162 {offsets = [0, 0, 4], sizes = [2, 1, 1], strides = [1, 1, 1]} : vector<2x5x5xf32> to vector<2x1x1xf32>
    %1449 = vector.extract_strided_slice %1441 {offsets = [1, 0], sizes = [1, 10], strides = [1, 1]} : vector<12x10xf32> to vector<1x10xf32>
    %1450 = vector.shape_cast %1449 : vector<1x10xf32> to vector<1x1x10xf32>
    %1451 = vector.broadcast %1448 : vector<2x1x1xf32> to vector<2x1x10xf32>
    %1452 = vector.broadcast %1450 : vector<1x1x10xf32> to vector<2x1x10xf32>
    %1453 = arith.mulf %1451, %1452 : vector<2x1x10xf32>
    %1454 = arith.addf %1447, %1453 : vector<2x1x10xf32>
    %1455 = vector.extract_strided_slice %1162 {offsets = [0, 4, 0], sizes = [2, 1, 1], strides = [1, 1, 1]} : vector<2x5x5xf32> to vector<2x1x1xf32>
    %1456 = vector.extract_strided_slice %1441 {offsets = [2, 0], sizes = [1, 10], strides = [1, 1]} : vector<12x10xf32> to vector<1x10xf32>
    %1457 = vector.shape_cast %1456 : vector<1x10xf32> to vector<1x1x10xf32>
    %1458 = vector.broadcast %1455 : vector<2x1x1xf32> to vector<2x1x10xf32>
    %1459 = vector.broadcast %1457 : vector<1x1x10xf32> to vector<2x1x10xf32>
    %1460 = arith.mulf %1458, %1459 : vector<2x1x10xf32>
    %1461 = arith.addf %1454, %1460 : vector<2x1x10xf32>
    %1462 = vector.extract_strided_slice %1162 {offsets = [0, 4, 4], sizes = [2, 1, 1], strides = [1, 1, 1]} : vector<2x5x5xf32> to vector<2x1x1xf32>
    %1463 = vector.extract_strided_slice %1441 {offsets = [3, 0], sizes = [1, 10], strides = [1, 1]} : vector<12x10xf32> to vector<1x10xf32>
    %1464 = vector.shape_cast %1463 : vector<1x10xf32> to vector<1x1x10xf32>
    %1465 = vector.broadcast %1462 : vector<2x1x1xf32> to vector<2x1x10xf32>
    %1466 = vector.broadcast %1464 : vector<1x1x10xf32> to vector<2x1x10xf32>
    %1467 = arith.mulf %1465, %1466 : vector<2x1x10xf32>
    %1468 = arith.addf %1461, %1467 : vector<2x1x10xf32>
    %1469 = vector.extract_strided_slice %1301 {offsets = [0, 0, 0], sizes = [2, 1, 1], strides = [1, 1, 1]} : vector<2x5x5xf32> to vector<2x1x1xf32>
    %1470 = vector.extract_strided_slice %1441 {offsets = [4, 0], sizes = [1, 10], strides = [1, 1]} : vector<12x10xf32> to vector<1x10xf32>
    %1471 = vector.shape_cast %1470 : vector<1x10xf32> to vector<1x1x10xf32>
    %1472 = vector.broadcast %1469 : vector<2x1x1xf32> to vector<2x1x10xf32>
    %1473 = vector.broadcast %1471 : vector<1x1x10xf32> to vector<2x1x10xf32>
    %1474 = arith.mulf %1472, %1473 : vector<2x1x10xf32>
    %1475 = arith.addf %1468, %1474 : vector<2x1x10xf32>
    %1476 = vector.extract_strided_slice %1301 {offsets = [0, 0, 4], sizes = [2, 1, 1], strides = [1, 1, 1]} : vector<2x5x5xf32> to vector<2x1x1xf32>
    %1477 = vector.extract_strided_slice %1441 {offsets = [5, 0], sizes = [1, 10], strides = [1, 1]} : vector<12x10xf32> to vector<1x10xf32>
    %1478 = vector.shape_cast %1477 : vector<1x10xf32> to vector<1x1x10xf32>
    %1479 = vector.broadcast %1476 : vector<2x1x1xf32> to vector<2x1x10xf32>
    %1480 = vector.broadcast %1478 : vector<1x1x10xf32> to vector<2x1x10xf32>
    %1481 = arith.mulf %1479, %1480 : vector<2x1x10xf32>
    %1482 = arith.addf %1475, %1481 : vector<2x1x10xf32>
    %1483 = vector.extract_strided_slice %1301 {offsets = [0, 4, 0], sizes = [2, 1, 1], strides = [1, 1, 1]} : vector<2x5x5xf32> to vector<2x1x1xf32>
    %1484 = vector.extract_strided_slice %1441 {offsets = [6, 0], sizes = [1, 10], strides = [1, 1]} : vector<12x10xf32> to vector<1x10xf32>
    %1485 = vector.shape_cast %1484 : vector<1x10xf32> to vector<1x1x10xf32>
    %1486 = vector.broadcast %1483 : vector<2x1x1xf32> to vector<2x1x10xf32>
    %1487 = vector.broadcast %1485 : vector<1x1x10xf32> to vector<2x1x10xf32>
    %1488 = arith.mulf %1486, %1487 : vector<2x1x10xf32>
    %1489 = arith.addf %1482, %1488 : vector<2x1x10xf32>
    %1490 = vector.extract_strided_slice %1301 {offsets = [0, 4, 4], sizes = [2, 1, 1], strides = [1, 1, 1]} : vector<2x5x5xf32> to vector<2x1x1xf32>
    %1491 = vector.extract_strided_slice %1441 {offsets = [7, 0], sizes = [1, 10], strides = [1, 1]} : vector<12x10xf32> to vector<1x10xf32>
    %1492 = vector.shape_cast %1491 : vector<1x10xf32> to vector<1x1x10xf32>
    %1493 = vector.broadcast %1490 : vector<2x1x1xf32> to vector<2x1x10xf32>
    %1494 = vector.broadcast %1492 : vector<1x1x10xf32> to vector<2x1x10xf32>
    %1495 = arith.mulf %1493, %1494 : vector<2x1x10xf32>
    %1496 = arith.addf %1489, %1495 : vector<2x1x10xf32>
    %1497 = vector.extract_strided_slice %1440 {offsets = [0, 0, 0], sizes = [2, 1, 1], strides = [1, 1, 1]} : vector<2x5x5xf32> to vector<2x1x1xf32>
    %1498 = vector.extract_strided_slice %1441 {offsets = [8, 0], sizes = [1, 10], strides = [1, 1]} : vector<12x10xf32> to vector<1x10xf32>
    %1499 = vector.shape_cast %1498 : vector<1x10xf32> to vector<1x1x10xf32>
    %1500 = vector.broadcast %1497 : vector<2x1x1xf32> to vector<2x1x10xf32>
    %1501 = vector.broadcast %1499 : vector<1x1x10xf32> to vector<2x1x10xf32>
    %1502 = arith.mulf %1500, %1501 : vector<2x1x10xf32>
    %1503 = arith.addf %1496, %1502 : vector<2x1x10xf32>
    %1504 = vector.extract_strided_slice %1440 {offsets = [0, 0, 4], sizes = [2, 1, 1], strides = [1, 1, 1]} : vector<2x5x5xf32> to vector<2x1x1xf32>
    %1505 = vector.extract_strided_slice %1441 {offsets = [9, 0], sizes = [1, 10], strides = [1, 1]} : vector<12x10xf32> to vector<1x10xf32>
    %1506 = vector.shape_cast %1505 : vector<1x10xf32> to vector<1x1x10xf32>
    %1507 = vector.broadcast %1504 : vector<2x1x1xf32> to vector<2x1x10xf32>
    %1508 = vector.broadcast %1506 : vector<1x1x10xf32> to vector<2x1x10xf32>
    %1509 = arith.mulf %1507, %1508 : vector<2x1x10xf32>
    %1510 = arith.addf %1503, %1509 : vector<2x1x10xf32>
    %1511 = vector.extract_strided_slice %1440 {offsets = [0, 4, 0], sizes = [2, 1, 1], strides = [1, 1, 1]} : vector<2x5x5xf32> to vector<2x1x1xf32>
    %1512 = vector.extract_strided_slice %1441 {offsets = [10, 0], sizes = [1, 10], strides = [1, 1]} : vector<12x10xf32> to vector<1x10xf32>
    %1513 = vector.shape_cast %1512 : vector<1x10xf32> to vector<1x1x10xf32>
    %1514 = vector.broadcast %1511 : vector<2x1x1xf32> to vector<2x1x10xf32>
    %1515 = vector.broadcast %1513 : vector<1x1x10xf32> to vector<2x1x10xf32>
    %1516 = arith.mulf %1514, %1515 : vector<2x1x10xf32>
    %1517 = arith.addf %1510, %1516 : vector<2x1x10xf32>
    %1518 = vector.extract_strided_slice %1440 {offsets = [0, 4, 4], sizes = [2, 1, 1], strides = [1, 1, 1]} : vector<2x5x5xf32> to vector<2x1x1xf32>
    %1519 = vector.extract_strided_slice %1441 {offsets = [11, 0], sizes = [1, 10], strides = [1, 1]} : vector<12x10xf32> to vector<1x10xf32>
    %1520 = vector.shape_cast %1519 : vector<1x10xf32> to vector<1x1x10xf32>
    %1521 = vector.broadcast %1518 : vector<2x1x1xf32> to vector<2x1x10xf32>
    %1522 = vector.broadcast %1520 : vector<1x1x10xf32> to vector<2x1x10xf32>
    %1523 = arith.mulf %1521, %1522 : vector<2x1x10xf32>
    %1524 = arith.addf %1517, %1523 : vector<2x1x10xf32>
    %c0_217 = arith.constant 0 : index
    %c0_218 = arith.constant 0 : index
    %1525 = vector.load %arg10[%c0_217, %c0_218] : memref<1x10xf32, #tpu.memory_space<vmem>>, vector<1x10xf32>
    %1526 = vector.shape_cast %1525 : vector<1x10xf32> to vector<1x1x10xf32>
    %1527 = vector.broadcast %1526 : vector<1x1x10xf32> to vector<2x1x10xf32>
    %1528 = arith.addf %1524, %1527 : vector<2x1x10xf32>
    %c0_219 = arith.constant 0 : index
    %c0_220 = arith.constant 0 : index
    %c0_221 = arith.constant 0 : index
    %1529 = vector.load %arg11[%c0_219, %c0_220, %c0_221] : memref<2x1x10xf32, #tpu.memory_space<vmem>>, vector<2x1x10xf32>
    tpu.vector_store %arg11[%c0_219, %c0_220, %c0_221], %1528 {strides = array<i32>} : memref<2x1x10xf32, #tpu.memory_space<vmem>>, vector<2x1x10xf32>,
    return
  }
}

</mosaic_0001>

<llo_original>
// kernel: sample_cnn_forward.1
$region0: #{sample_cnn_forward.1}
  #allocation0 [shape = 'u32[]', space=smem, size = 0x4, offset = 0x4, fixed_abs, tag = 'smem constant byte address 0x4 - core index']
  #allocation1 [shape = 'u32[72,128]{1,0:T(1,128)}', space=vmem, size = 0x9000, scoped, tag = 'internal scratch']
  %s0 = inlined_call_operand.vmem [shape: f32[2,30,30], index: 0, kind: input, shape index: {}]
  %s1 = inlined_call_operand.vmem [shape: f32[27], index: 1, kind: input, shape index: {}]
  %s2 = inlined_call_operand.vmem [shape: f32[3], index: 2, kind: input, shape index: {}]
  %s3 = inlined_call_operand.vmem [shape: f32[81], index: 3, kind: input, shape index: {}]
  %s4 = inlined_call_operand.vmem [shape: f32[3], index: 4, kind: input, shape index: {}]
  %s5 = inlined_call_operand.vmem [shape: f32[81], index: 5, kind: input, shape index: {}]
  %s6 = inlined_call_operand.vmem [shape: f32[3], index: 6, kind: input, shape index: {}]
  %s7 = inlined_call_operand.vmem [shape: f32[81], index: 7, kind: input, shape index: {}]
  %s8 = inlined_call_operand.vmem [shape: f32[3], index: 8, kind: input, shape index: {}]
  %s9 = inlined_call_operand.vmem [shape: f32[12,10], index: 9, kind: input, shape index: {}]
  %s10 = inlined_call_operand.vmem [shape: f32[1,10], index: 10, kind: input, shape index: {}]
  %s11 = inlined_call_operand.hbm [shape: f32[2,1,10], index: 11, kind: output, shape index: {}]
  %s12 = sld [smem:[#allocation0]]
  $region86: #{sample_cnn_forward.1} parent=0
    _
  %s14 = ssub.s32 1, %s12
  %s15 = scalar_select 0, %s14, %s12
  $region1: #{sample_cnn_forward.1} parent=0
    #allocation2 [shape = 'u8[512]{0}', space=smem, size = 0x200, scoped, tag = 'input window, operand 1, single buffered']
    #allocation3 [shape = 's32[1]{0}', space=sflag, size = 0x4, scoped, tag = 'scoped memory for sample_cnn_forward.1']
    #allocation4 [shape = 's32[1]{0}', space=sflag, size = 0x4, scoped, tag = 'scoped memory for sample_cnn_forward.1']
    #allocation5 [shape = 'u8[512]{0}', space=smem, size = 0x200, scoped, tag = 'input window, operand 2, single buffered']
    #allocation6 [shape = 's32[1]{0}', space=sflag, size = 0x4, scoped, tag = 'scoped memory for sample_cnn_forward.1']
    #allocation7 [shape = 'u8[512]{0}', space=smem, size = 0x200, scoped, tag = 'input window, operand 3, single buffered']
    #allocation8 [shape = 'u8[512]{0}', space=smem, size = 0x200, scoped, tag = 'input window, operand 4, single buffered']
    #allocation9 [shape = 's32[1]{0}', space=sflag, size = 0x4, scoped, tag = 'scoped memory for sample_cnn_forward.1']
    #allocation10 [shape = 'u8[512]{0}', space=smem, size = 0x200, scoped, tag = 'input window, operand 5, single buffered']
    #allocation11 [shape = 'u8[512]{0}', space=smem, size = 0x200, scoped, tag = 'input window, operand 6, single buffered']
    #allocation12 [shape = 's32[1]{0}', space=sflag, size = 0x4, scoped, tag = 'scoped memory for sample_cnn_forward.1']
    #allocation13 [shape = 'u8[512]{0}', space=smem, size = 0x200, scoped, tag = 'input window, operand 7, single buffered']
    #allocation14 [shape = 'u8[512]{0}', space=smem, size = 0x200, scoped, tag = 'input window, operand 8, single buffered']
    #allocation15 [shape = 's32[1]{0}', space=sflag, size = 0x4, scoped, tag = 'scoped memory for sample_cnn_forward.1']
    #allocation16 [shape = 'u8[1024]{0}', space=vmem, size = 0x400, scoped, tag = 'output window, operand 0, single buffered']
    %16 = vsyncpa [#allocation4], 0
    %17 = vsyncpa [#allocation6], 0
    %18 = vsyncpa [#allocation9], 0
    %19 = vsyncpa [#allocation12], 0
    %20 = vsyncpa [#allocation15], 0
    %21 = vsyncpa [#allocation3], 0
    // Predicated region
    $region2: #{sample_cnn_forward.1} parent=1 // pred_check
      _
    $region3: #{sample_cnn_forward.1} parent=1 // pred_check_branch
      %23 = sbr.rel (0) target = $region5
    $region4: #{sample_cnn_forward.1} parent=1 // pred_region
      _
    $region5: #{sample_cnn_forward.1} parent=1 // pred_fallthru
      _
    // Predicated region
    $region6: #{sample_cnn_forward.1} parent=1 // pred_check
      _
    $region7: #{sample_cnn_forward.1} parent=1 // pred_check_branch
      %25 = sbr.rel (0) target = $region9
    $region8: #{sample_cnn_forward.1} parent=1 // pred_region
      %27 = vsyncadd [#allocation4], 0
      %s29 = sshll.u32 %s1, 4
      %s30 = int_to_ptr.vmem [resolvable:$true] %s29
      %32 = dma.vmem_to_smem %s30, 16, [#allocation2], [#allocation4]
    $region9: #{sample_cnn_forward.1} parent=1 // pred_fallthru
      _
    // Predicated region
    $region10: #{sample_cnn_forward.1} parent=1 // pred_check
      _
    $region11: #{sample_cnn_forward.1} parent=1 // pred_check_branch
      %34 = sbr.rel (0) target = $region13
    $region12: #{sample_cnn_forward.1} parent=1 // pred_region
      %36 = vsyncadd [#allocation6], 0
      %s38 = sshll.u32 %s2, 4
      %s39 = int_to_ptr.vmem [resolvable:$true] %s38
      %41 = dma.vmem_to_smem %s39, 16, [#allocation5], [#allocation6]
    $region13: #{sample_cnn_forward.1} parent=1 // pred_fallthru
      _
    // Predicated region
    $region14: #{sample_cnn_forward.1} parent=1 // pred_check
      _
    $region15: #{sample_cnn_forward.1} parent=1 // pred_check_branch
      %43 = sbr.rel (0) target = $region17
    $region16: #{sample_cnn_forward.1} parent=1 // pred_region
      %45 = vsyncadd [#allocation6], 0
      %s47 = sshll.u32 %s3, 4
      %s48 = int_to_ptr.vmem [resolvable:$true] %s47
      %50 = dma.vmem_to_smem %s48, 16, [#allocation7], [#allocation6]
    $region17: #{sample_cnn_forward.1} parent=1 // pred_fallthru
      _
    // Predicated region
    $region18: #{sample_cnn_forward.1} parent=1 // pred_check
      _
    $region19: #{sample_cnn_forward.1} parent=1 // pred_check_branch
      %52 = sbr.rel (0) target = $region21
    $region20: #{sample_cnn_forward.1} parent=1 // pred_region
      %54 = vsyncadd [#allocation9], 0
      %s56 = sshll.u32 %s4, 4
      %s57 = int_to_ptr.vmem [resolvable:$true] %s56
      %59 = dma.vmem_to_smem %s57, 16, [#allocation8], [#allocation9]
    $region21: #{sample_cnn_forward.1} parent=1 // pred_fallthru
      _
    // Predicated region
    $region22: #{sample_cnn_forward.1} parent=1 // pred_check
      _
    $region23: #{sample_cnn_forward.1} parent=1 // pred_check_branch
      %61 = sbr.rel (0) target = $region25
    $region24: #{sample_cnn_forward.1} parent=1 // pred_region
      %63 = vsyncadd [#allocation9], 0
      %s65 = sshll.u32 %s5, 4
      %s66 = int_to_ptr.vmem [resolvable:$true] %s65
      %68 = dma.vmem_to_smem %s66, 16, [#allocation10], [#allocation9]
    $region25: #{sample_cnn_forward.1} parent=1 // pred_fallthru
      _
    // Predicated region
    $region26: #{sample_cnn_forward.1} parent=1 // pred_check
      _
    $region27: #{sample_cnn_forward.1} parent=1 // pred_check_branch
      %70 = sbr.rel (0) target = $region29
    $region28: #{sample_cnn_forward.1} parent=1 // pred_region
      %72 = vsyncadd [#allocation12], 0
      %s74 = sshll.u32 %s6, 4
      %s75 = int_to_ptr.vmem [resolvable:$true] %s74
      %77 = dma.vmem_to_smem %s75, 16, [#allocation11], [#allocation12]
    $region29: #{sample_cnn_forward.1} parent=1 // pred_fallthru
      _
    // Predicated region
    $region30: #{sample_cnn_forward.1} parent=1 // pred_check
      _
    $region31: #{sample_cnn_forward.1} parent=1 // pred_check_branch
      %79 = sbr.rel (0) target = $region33
    $region32: #{sample_cnn_forward.1} parent=1 // pred_region
      %81 = vsyncadd [#allocation12], 0
      %s83 = sshll.u32 %s7, 4
      %s84 = int_to_ptr.vmem [resolvable:$true] %s83
      %86 = dma.vmem_to_smem %s84, 16, [#allocation13], [#allocation12]
    $region33: #{sample_cnn_forward.1} parent=1 // pred_fallthru
      _
    // Predicated region
    $region34: #{sample_cnn_forward.1} parent=1 // pred_check
      _
    $region35: #{sample_cnn_forward.1} parent=1 // pred_check_branch
      %88 = sbr.rel (0) target = $region37
    $region36: #{sample_cnn_forward.1} parent=1 // pred_region
      %90 = vsyncadd [#allocation15], 0
      %s92 = sshll.u32 %s8, 4
      %s93 = int_to_ptr.vmem [resolvable:$true] %s92
      %95 = dma.vmem_to_smem %s93, 16, [#allocation14], [#allocation15]
    $region37: #{sample_cnn_forward.1} parent=1 // pred_fallthru
      _
    // Predicated region
    $region38: #{sample_cnn_forward.1} parent=1 // pred_check
      _
    $region39: #{sample_cnn_forward.1} parent=1 // pred_check_branch
      %97 = sbr.rel (0) target = $region41
    $region40: #{sample_cnn_forward.1} parent=1 // pred_region
      _
    $region41: #{sample_cnn_forward.1} parent=1 // pred_fallthru
      _
    // Predicated region
    $region42: #{sample_cnn_forward.1} parent=1 // pred_check
      _
    $region43: #{sample_cnn_forward.1} parent=1 // pred_check_branch
      %99 = sbr.rel (0) target = $region45
    $region44: #{sample_cnn_forward.1} parent=1 // pred_region
      _
    $region45: #{sample_cnn_forward.1} parent=1 // pred_fallthru
      _
    // Predicated region
    $region46: #{sample_cnn_forward.1} parent=1 // pred_check
      _
    $region47: #{sample_cnn_forward.1} parent=1 // pred_check_branch
      %101 = sbr.rel (0) target = $region49
    $region48: #{sample_cnn_forward.1} parent=1 // pred_region
      %103 = dma.done [#allocation4], 16
    $region49: #{sample_cnn_forward.1} parent=1 // pred_fallthru
      _
    // Predicated region
    $region50: #{sample_cnn_forward.1} parent=1 // pred_check
      _
    $region51: #{sample_cnn_forward.1} parent=1 // pred_check_branch
      %105 = sbr.rel (0) target = $region53
    $region52: #{sample_cnn_forward.1} parent=1 // pred_region
      %107 = dma.done [#allocation6], 16
    $region53: #{sample_cnn_forward.1} parent=1 // pred_fallthru
      _
    // Predicated region
    $region54: #{sample_cnn_forward.1} parent=1 // pred_check
      _
    $region55: #{sample_cnn_forward.1} parent=1 // pred_check_branch
      %109 = sbr.rel (0) target = $region57
    $region56: #{sample_cnn_forward.1} parent=1 // pred_region
      %111 = dma.done [#allocation6], 16
    $region57: #{sample_cnn_forward.1} parent=1 // pred_fallthru
      _
    // Predicated region
    $region58: #{sample_cnn_forward.1} parent=1 // pred_check
      _
    $region59: #{sample_cnn_forward.1} parent=1 // pred_check_branch
      %113 = sbr.rel (0) target = $region61
    $region60: #{sample_cnn_forward.1} parent=1 // pred_region
      %115 = dma.done [#allocation9], 16
    $region61: #{sample_cnn_forward.1} parent=1 // pred_fallthru
      _
    // Predicated region
    $region62: #{sample_cnn_forward.1} parent=1 // pred_check
      _
    $region63: #{sample_cnn_forward.1} parent=1 // pred_check_branch
      %117 = sbr.rel (0) target = $region65
    $region64: #{sample_cnn_forward.1} parent=1 // pred_region
      %119 = dma.done [#allocation9], 16
    $region65: #{sample_cnn_forward.1} parent=1 // pred_fallthru
      _
    // Predicated region
    $region66: #{sample_cnn_forward.1} parent=1 // pred_check
      _
    $region67: #{sample_cnn_forward.1} parent=1 // pred_check_branch
      %121 = sbr.rel (0) target = $region69
    $region68: #{sample_cnn_forward.1} parent=1 // pred_region
      %123 = dma.done [#allocation12], 16
    $region69: #{sample_cnn_forward.1} parent=1 // pred_fallthru
      _
    // Predicated region
    $region70: #{sample_cnn_forward.1} parent=1 // pred_check
      _
    $region71: #{sample_cnn_forward.1} parent=1 // pred_check_branch
      %125 = sbr.rel (0) target = $region73
    $region72: #{sample_cnn_forward.1} parent=1 // pred_region
      %127 = dma.done [#allocation12], 16
    $region73: #{sample_cnn_forward.1} parent=1 // pred_fallthru
      _
    // Predicated region
    $region74: #{sample_cnn_forward.1} parent=1 // pred_check
      _
    $region75: #{sample_cnn_forward.1} parent=1 // pred_check_branch
      %129 = sbr.rel (0) target = $region77
    $region76: #{sample_cnn_forward.1} parent=1 // pred_region
      %131 = dma.done [#allocation15], 16
    $region77: #{sample_cnn_forward.1} parent=1 // pred_fallthru
      _
    %132 = sfence
    %v133 = vld [vmem:[%s0] sm:$0xff]
    %v134 = vld [vmem:[%s0 + $0x8] sm:$0xff]
    %v135 = vld [vmem:[%s0 + $0x10] sm:$0xff]
    %v136 = vld [vmem:[%s0 + $0x18] sm:$0x3f]
    %v137 = vld [vmem:[%s0 + $0x20] sm:$0xff]
    %v138 = vld [vmem:[%s0 + $0x28] sm:$0xff]
    %v139 = vld [vmem:[%s0 + $0x30] sm:$0xff]
    %v140 = vld [vmem:[%s0 + $0x38] sm:$0x3f]
    %s141 = sld [smem:[#allocation2]]
    %v142 = vstv %s141
    %v143 = vmul.f32 %v142, %v133
    %v144 = vmul.f32 %v142, %v134
    %v145 = vmul.f32 %v142, %v135
    %v146 = vmul.f32 %v142, %v136
    %v147 = vmul.f32 %v142, %v137
    %v148 = vmul.f32 %v142, %v138
    %v149 = vmul.f32 %v142, %v139
    %v150 = vmul.f32 %v142, %v140
    %s151 = sld [smem:[#allocation2 + $0x1]]
    %v152 = vstv %s151
    %v153 = vmul.f32 %v152, %v133
    %v154 = vmul.f32 %v152, %v134
    %v155 = vmul.f32 %v152, %v135
    %v156 = vmul.f32 %v152, %v136
    %v157 = vmul.f32 %v152, %v137
    %v158 = vmul.f32 %v152, %v138
    %v159 = vmul.f32 %v152, %v139
    %v160 = vmul.f32 %v152, %v140
    %169 = vrot.lane.b32.xlu0 %v153, 127
    %v170 = vpop.permute.xlu0 %169
    %171 = vrot.lane.b32.xlu0 %v154, 127
    %v172 = vpop.permute.xlu0 %171
    %173 = vrot.lane.b32.xlu0 %v155, 127
    %v174 = vpop.permute.xlu0 %173
    %175 = vrot.lane.b32.xlu0 %v156, 127
    %v176 = vpop.permute.xlu0 %175
    %177 = vrot.lane.b32.xlu0 %v157, 127
    %v178 = vpop.permute.xlu0 %177
    %179 = vrot.lane.b32.xlu0 %v158, 127
    %v180 = vpop.permute.xlu0 %179
    %181 = vrot.lane.b32.xlu0 %v159, 127
    %v182 = vpop.permute.xlu0 %181
    %183 = vrot.lane.b32.xlu0 %v160, 127
    %v184 = vpop.permute.xlu0 %183
    %v193 = vadd.f32 %v143, %v170
    %v194 = vadd.f32 %v144, %v172
    %v195 = vadd.f32 %v145, %v174
    %v196 = vadd.f32 %v146, %v176
    %v197 = vadd.f32 %v147, %v178
    %v198 = vadd.f32 %v148, %v180
    %v199 = vadd.f32 %v149, %v182
    %v200 = vadd.f32 %v150, %v184
    %s201 = sld [smem:[#allocation2 + $0x2]]
    %v202 = vstv %s201
    %v203 = vmul.f32 %v202, %v133
    %v204 = vmul.f32 %v202, %v134
    %v205 = vmul.f32 %v202, %v135
    %v206 = vmul.f32 %v202, %v136
    %v207 = vmul.f32 %v202, %v137
    %v208 = vmul.f32 %v202, %v138
    %v209 = vmul.f32 %v202, %v139
    %v210 = vmul.f32 %v202, %v140
    %219 = vrot.lane.b32.xlu0 %v203, 126
    %v220 = vpop.permute.xlu0 %219
    %221 = vrot.lane.b32.xlu0 %v204, 126
    %v222 = vpop.permute.xlu0 %221
    %223 = vrot.lane.b32.xlu0 %v205, 126
    %v224 = vpop.permute.xlu0 %223
    %225 = vrot.lane.b32.xlu0 %v206, 126
    %v226 = vpop.permute.xlu0 %225
    %227 = vrot.lane.b32.xlu0 %v207, 126
    %v228 = vpop.permute.xlu0 %227
    %229 = vrot.lane.b32.xlu0 %v208, 126
    %v230 = vpop.permute.xlu0 %229
    %231 = vrot.lane.b32.xlu0 %v209, 126
    %v232 = vpop.permute.xlu0 %231
    %233 = vrot.lane.b32.xlu0 %v210, 126
    %v234 = vpop.permute.xlu0 %233
    %v243 = vadd.f32 %v193, %v220
    %v244 = vadd.f32 %v194, %v222
    %v245 = vadd.f32 %v195, %v224
    %v246 = vadd.f32 %v196, %v226
    %v247 = vadd.f32 %v197, %v228
    %v248 = vadd.f32 %v198, %v230
    %v249 = vadd.f32 %v199, %v232
    %v250 = vadd.f32 %v200, %v234
    %s251 = sld [smem:[#allocation2 + $0x3]]
    %v252 = vstv %s251
    %v253 = vmul.f32 %v252, %v133
    %v254 = vmul.f32 %v252, %v134
    %v255 = vmul.f32 %v252, %v135
    %v256 = vmul.f32 %v252, %v136
    %v257 = vmul.f32 %v252, %v137
    %v258 = vmul.f32 %v252, %v138
    %v259 = vmul.f32 %v252, %v139
    %v260 = vmul.f32 %v252, %v140
    %vm269 = vcmask 1046528
    %v270 = vrot.slane %v253, 1
    %v271 = vrot.slane %v254, 1
    %v272 = vsel %vm269, %v270, %v271
    %v273 = vrot.slane %v255, 1
    %v274 = vsel %vm269, %v271, %v273
    %v275 = vrot.slane %v256, 1
    %v276 = vsel %vm269, %v273, %v275
    %v277 = vrot.slane %v257, 1
    %v278 = vrot.slane %v258, 1
    %v279 = vsel %vm269, %v277, %v278
    %v280 = vrot.slane %v259, 1
    %v281 = vsel %vm269, %v278, %v280
    %v282 = vrot.slane %v260, 1
    %v283 = vsel %vm269, %v280, %v282
    %v292 = vadd.f32 %v243, %v272
    %v293 = vadd.f32 %v244, %v274
    %v294 = vadd.f32 %v245, %v276
    %v295 = vadd.f32 %v246, %v275
    %v296 = vadd.f32 %v247, %v279
    %v297 = vadd.f32 %v248, %v281
    %v298 = vadd.f32 %v249, %v283
    %v299 = vadd.f32 %v250, %v282
    %s300 = sld [smem:[#allocation2 + $0x4]]
    %v301 = vstv %s300
    %v302 = vmul.f32 %v301, %v133
    %v303 = vmul.f32 %v301, %v134
    %v304 = vmul.f32 %v301, %v135
    %v305 = vmul.f32 %v301, %v136
    %v306 = vmul.f32 %v301, %v137
    %v307 = vmul.f32 %v301, %v138
    %v308 = vmul.f32 %v301, %v139
    %v309 = vmul.f32 %v301, %v140
    %v318 = vrot.slane %v302, 1
    %v319 = vrot.slane %v303, 1
    %v320 = vsel %vm269, %v318, %v319
    %v321 = vrot.slane %v304, 1
    %v322 = vsel %vm269, %v319, %v321
    %v323 = vrot.slane %v305, 1
    %v324 = vsel %vm269, %v321, %v323
    %v325 = vrot.slane %v306, 1
    %v326 = vrot.slane %v307, 1
    %v327 = vsel %vm269, %v325, %v326
    %v328 = vrot.slane %v308, 1
    %v329 = vsel %vm269, %v326, %v328
    %v330 = vrot.slane %v309, 1
    %v331 = vsel %vm269, %v328, %v330
    %332 = vrot.lane.b32.xlu0 %v320, 127
    %v333 = vpop.permute.xlu0 %332
    %334 = vrot.lane.b32.xlu0 %v322, 127
    %v335 = vpop.permute.xlu0 %334
    %336 = vrot.lane.b32.xlu0 %v324, 127
    %v337 = vpop.permute.xlu0 %336
    %338 = vrot.lane.b32.xlu0 %v323, 127
    %v339 = vpop.permute.xlu0 %338
    %340 = vrot.lane.b32.xlu0 %v327, 127
    %v341 = vpop.permute.xlu0 %340
    %342 = vrot.lane.b32.xlu0 %v329, 127
    %v343 = vpop.permute.xlu0 %342
    %344 = vrot.lane.b32.xlu0 %v331, 127
    %v345 = vpop.permute.xlu0 %344
    %346 = vrot.lane.b32.xlu0 %v330, 127
    %v347 = vpop.permute.xlu0 %346
    %v356 = vadd.f32 %v292, %v333
    %v357 = vadd.f32 %v293, %v335
    %v358 = vadd.f32 %v294, %v337
    %v359 = vadd.f32 %v295, %v339
    %v360 = vadd.f32 %v296, %v341
    %v361 = vadd.f32 %v297, %v343
    %v362 = vadd.f32 %v298, %v345
    %v363 = vadd.f32 %v299, %v347
    %s364 = sld [smem:[#allocation2 + $0x5]]
    %v365 = vstv %s364
    %v366 = vmul.f32 %v365, %v133
    %v367 = vmul.f32 %v365, %v134
    %v368 = vmul.f32 %v365, %v135
    %v369 = vmul.f32 %v365, %v136
    %v370 = vmul.f32 %v365, %v137
    %v371 = vmul.f32 %v365, %v138
    %v372 = vmul.f32 %v365, %v139
    %v373 = vmul.f32 %v365, %v140
    %v382 = vrot.slane %v366, 1
    %v383 = vrot.slane %v367, 1
    %v384 = vsel %vm269, %v382, %v383
    %v385 = vrot.slane %v368, 1
    %v386 = vsel %vm269, %v383, %v385
    %v387 = vrot.slane %v369, 1
    %v388 = vsel %vm269, %v385, %v387
    %v389 = vrot.slane %v370, 1
    %v390 = vrot.slane %v371, 1
    %v391 = vsel %vm269, %v389, %v390
    %v392 = vrot.slane %v372, 1
    %v393 = vsel %vm269, %v390, %v392
    %v394 = vrot.slane %v373, 1
    %v395 = vsel %vm269, %v392, %v394
    %396 = vrot.lane.b32.xlu0 %v384, 126
    %v397 = vpop.permute.xlu0 %396
    %398 = vrot.lane.b32.xlu0 %v386, 126
    %v399 = vpop.permute.xlu0 %398
    %400 = vrot.lane.b32.xlu0 %v388, 126
    %v401 = vpop.permute.xlu0 %400
    %402 = vrot.lane.b32.xlu0 %v387, 126
    %v403 = vpop.permute.xlu0 %402
    %404 = vrot.lane.b32.xlu0 %v391, 126
    %v405 = vpop.permute.xlu0 %404
    %406 = vrot.lane.b32.xlu0 %v393, 126
    %v407 = vpop.permute.xlu0 %406
    %408 = vrot.lane.b32.xlu0 %v395, 126
    %v409 = vpop.permute.xlu0 %408
    %410 = vrot.lane.b32.xlu0 %v394, 126
    %v411 = vpop.permute.xlu0 %410
    %v420 = vadd.f32 %v356, %v397
    %v421 = vadd.f32 %v357, %v399
    %v422 = vadd.f32 %v358, %v401
    %v423 = vadd.f32 %v359, %v403
    %v424 = vadd.f32 %v360, %v405
    %v425 = vadd.f32 %v361, %v407
    %v426 = vadd.f32 %v362, %v409
    %v427 = vadd.f32 %v363, %v411
    %s428 = sld [smem:[#allocation2 + $0x6]]
    %v429 = vstv %s428
    %v430 = vmul.f32 %v429, %v133
    %v431 = vmul.f32 %v429, %v134
    %v432 = vmul.f32 %v429, %v135
    %v433 = vmul.f32 %v429, %v136
    %v434 = vmul.f32 %v429, %v137
    %v435 = vmul.f32 %v429, %v138
    %v436 = vmul.f32 %v429, %v139
    %v437 = vmul.f32 %v429, %v140
    %vm446 = vcmask 1045504
    %v447 = vrot.slane %v430, 2
    %v448 = vrot.slane %v431, 2
    %v449 = vsel %vm446, %v447, %v448
    %v450 = vrot.slane %v432, 2
    %v451 = vsel %vm446, %v448, %v450
    %v452 = vrot.slane %v433, 2
    %v453 = vsel %vm446, %v450, %v452
    %v454 = vrot.slane %v434, 2
    %v455 = vrot.slane %v435, 2
    %v456 = vsel %vm446, %v454, %v455
    %v457 = vrot.slane %v436, 2
    %v458 = vsel %vm446, %v455, %v457
    %v459 = vrot.slane %v437, 2
    %v460 = vsel %vm446, %v457, %v459
    %v469 = vadd.f32 %v420, %v449
    %v470 = vadd.f32 %v421, %v451
    %v471 = vadd.f32 %v422, %v453
    %v472 = vadd.f32 %v423, %v452
    %v473 = vadd.f32 %v424, %v456
    %v474 = vadd.f32 %v425, %v458
    %v475 = vadd.f32 %v426, %v460
    %v476 = vadd.f32 %v427, %v459
    %s477 = sld [smem:[#allocation2 + $0x7]]
    %v478 = vstv %s477
    %v479 = vmul.f32 %v478, %v133
    %v480 = vmul.f32 %v478, %v134
    %v481 = vmul.f32 %v478, %v135
    %v482 = vmul.f32 %v478, %v136
    %v483 = vmul.f32 %v478, %v137
    %v484 = vmul.f32 %v478, %v138
    %v485 = vmul.f32 %v478, %v139
    %v486 = vmul.f32 %v478, %v140
    %v495 = vrot.slane %v479, 2
    %v496 = vrot.slane %v480, 2
    %v497 = vsel %vm446, %v495, %v496
    %v498 = vrot.slane %v481, 2
    %v499 = vsel %vm446, %v496, %v498
    %v500 = vrot.slane %v482, 2
    %v501 = vsel %vm446, %v498, %v500
    %v502 = vrot.slane %v483, 2
    %v503 = vrot.slane %v484, 2
    %v504 = vsel %vm446, %v502, %v503
    %v505 = vrot.slane %v485, 2
    %v506 = vsel %vm446, %v503, %v505
    %v507 = vrot.slane %v486, 2
    %v508 = vsel %vm446, %v505, %v507
    %509 = vrot.lane.b32.xlu0 %v497, 127
    %v510 = vpop.permute.xlu0 %509
    %511 = vrot.lane.b32.xlu0 %v499, 127
    %v512 = vpop.permute.xlu0 %511
    %513 = vrot.lane.b32.xlu0 %v501, 127
    %v514 = vpop.permute.xlu0 %513
    %515 = vrot.lane.b32.xlu0 %v500, 127
    %v516 = vpop.permute.xlu0 %515
    %517 = vrot.lane.b32.xlu0 %v504, 127
    %v518 = vpop.permute.xlu0 %517
    %519 = vrot.lane.b32.xlu0 %v506, 127
    %v520 = vpop.permute.xlu0 %519
    %521 = vrot.lane.b32.xlu0 %v508, 127
    %v522 = vpop.permute.xlu0 %521
    %523 = vrot.lane.b32.xlu0 %v507, 127
    %v524 = vpop.permute.xlu0 %523
    %v533 = vadd.f32 %v469, %v510
    %v534 = vadd.f32 %v470, %v512
    %v535 = vadd.f32 %v471, %v514
    %v536 = vadd.f32 %v472, %v516
    %v537 = vadd.f32 %v473, %v518
    %v538 = vadd.f32 %v474, %v520
    %v539 = vadd.f32 %v475, %v522
    %v540 = vadd.f32 %v476, %v524
    %s541 = sld [smem:[#allocation2 + $0x8]]
    %v542 = vstv %s541
    %v543 = vmul.f32 %v542, %v133
    %v544 = vmul.f32 %v542, %v134
    %v545 = vmul.f32 %v542, %v135
    %v546 = vmul.f32 %v542, %v136
    %v547 = vmul.f32 %v542, %v137
    %v548 = vmul.f32 %v542, %v138
    %v549 = vmul.f32 %v542, %v139
    %v550 = vmul.f32 %v542, %v140
    %v559 = vrot.slane %v543, 2
    %v560 = vrot.slane %v544, 2
    %v561 = vsel %vm446, %v559, %v560
    %v562 = vrot.slane %v545, 2
    %v563 = vsel %vm446, %v560, %v562
    %v564 = vrot.slane %v546, 2
    %v565 = vsel %vm446, %v562, %v564
    %v566 = vrot.slane %v547, 2
    %v567 = vrot.slane %v548, 2
    %v568 = vsel %vm446, %v566, %v567
    %v569 = vrot.slane %v549, 2
    %v570 = vsel %vm446, %v567, %v569
    %v571 = vrot.slane %v550, 2
    %v572 = vsel %vm446, %v569, %v571
    %573 = vrot.lane.b32.xlu0 %v561, 126
    %v574 = vpop.permute.xlu0 %573
    %575 = vrot.lane.b32.xlu0 %v563, 126
    %v576 = vpop.permute.xlu0 %575
    %577 = vrot.lane.b32.xlu0 %v565, 126
    %v578 = vpop.permute.xlu0 %577
    %579 = vrot.lane.b32.xlu0 %v564, 126
    %v580 = vpop.permute.xlu0 %579
    %581 = vrot.lane.b32.xlu0 %v568, 126
    %v582 = vpop.permute.xlu0 %581
    %583 = vrot.lane.b32.xlu0 %v570, 126
    %v584 = vpop.permute.xlu0 %583
    %585 = vrot.lane.b32.xlu0 %v572, 126
    %v586 = vpop.permute.xlu0 %585
    %587 = vrot.lane.b32.xlu0 %v571, 126
    %v588 = vpop.permute.xlu0 %587
    %v597 = vadd.f32 %v533, %v574
    %v598 = vadd.f32 %v534, %v576
    %v599 = vadd.f32 %v535, %v578
    %v600 = vadd.f32 %v536, %v580
    %v601 = vadd.f32 %v537, %v582
    %v602 = vadd.f32 %v538, %v584
    %v603 = vadd.f32 %v539, %v586
    %v604 = vadd.f32 %v540, %v588
    %s605 = sld [smem:[#allocation5]]
    %v606 = vstv %s605
    %v607 = vadd.f32 %v597, %v606
    %v608 = vadd.f32 %v598, %v606
    %v609 = vadd.f32 %v599, %v606
    %v610 = vadd.f32 %v600, %v606
    %v611 = vadd.f32 %v601, %v606
    %v612 = vadd.f32 %v602, %v606
    %v613 = vadd.f32 %v603, %v606
    %v614 = vadd.f32 %v604, %v606
    %v615 = vmax.f32 %v607, 0.0
    %v616 = vmax.f32 %v608, 0.0
    %v617 = vmax.f32 %v609, 0.0
    %v618 = vmax.f32 %v610, 0.0
    %v619 = vmax.f32 %v611, 0.0
    %v620 = vmax.f32 %v612, 0.0
    %v621 = vmax.f32 %v613, 0.0
    %v622 = vmax.f32 %v614, 0.0
    %s623 = sld [smem:[#allocation2 + $0x9]]
    %v624 = vstv %s623
    %v625 = vmul.f32 %v624, %v133
    %v626 = vmul.f32 %v624, %v134
    %v627 = vmul.f32 %v624, %v135
    %v628 = vmul.f32 %v624, %v136
    %v629 = vmul.f32 %v624, %v137
    %v630 = vmul.f32 %v624, %v138
    %v631 = vmul.f32 %v624, %v139
    %v632 = vmul.f32 %v624, %v140
    %s633 = sld [smem:[#allocation2 + $0xa]]
    %v634 = vstv %s633
    %v635 = vmul.f32 %v634, %v133
    %v636 = vmul.f32 %v634, %v134
    %v637 = vmul.f32 %v634, %v135
    %v638 = vmul.f32 %v634, %v136
    %v639 = vmul.f32 %v634, %v137
    %v640 = vmul.f32 %v634, %v138
    %v641 = vmul.f32 %v634, %v139
    %v642 = vmul.f32 %v634, %v140
    %651 = vrot.lane.b32.xlu0 %v635, 127
    %v652 = vpop.permute.xlu0 %651
    %653 = vrot.lane.b32.xlu0 %v636, 127
    %v654 = vpop.permute.xlu0 %653
    %655 = vrot.lane.b32.xlu0 %v637, 127
    %v656 = vpop.permute.xlu0 %655
    %657 = vrot.lane.b32.xlu0 %v638, 127
    %v658 = vpop.permute.xlu0 %657
    %659 = vrot.lane.b32.xlu0 %v639, 127
    %v660 = vpop.permute.xlu0 %659
    %661 = vrot.lane.b32.xlu0 %v640, 127
    %v662 = vpop.permute.xlu0 %661
    %663 = vrot.lane.b32.xlu0 %v641, 127
    %v664 = vpop.permute.xlu0 %663
    %665 = vrot.lane.b32.xlu0 %v642, 127
    %v666 = vpop.permute.xlu0 %665
    %v675 = vadd.f32 %v625, %v652
    %v676 = vadd.f32 %v626, %v654
    %v677 = vadd.f32 %v627, %v656
    %v678 = vadd.f32 %v628, %v658
    %v679 = vadd.f32 %v629, %v660
    %v680 = vadd.f32 %v630, %v662
    %v681 = vadd.f32 %v631, %v664
    %v682 = vadd.f32 %v632, %v666
    %s683 = sld [smem:[#allocation2 + $0xb]]
    %v684 = vstv %s683
    %v685 = vmul.f32 %v684, %v133
    %v686 = vmul.f32 %v684, %v134
    %v687 = vmul.f32 %v684, %v135
    %v688 = vmul.f32 %v684, %v136
    %v689 = vmul.f32 %v684, %v137
    %v690 = vmul.f32 %v684, %v138
    %v691 = vmul.f32 %v684, %v139
    %v692 = vmul.f32 %v684, %v140
    %701 = vrot.lane.b32.xlu0 %v685, 126
    %v702 = vpop.permute.xlu0 %701
    %703 = vrot.lane.b32.xlu0 %v686, 126
    %v704 = vpop.permute.xlu0 %703
    %705 = vrot.lane.b32.xlu0 %v687, 126
    %v706 = vpop.permute.xlu0 %705
    %707 = vrot.lane.b32.xlu0 %v688, 126
    %v708 = vpop.permute.xlu0 %707
    %709 = vrot.lane.b32.xlu0 %v689, 126
    %v710 = vpop.permute.xlu0 %709
    %711 = vrot.lane.b32.xlu0 %v690, 126
    %v712 = vpop.permute.xlu0 %711
    %713 = vrot.lane.b32.xlu0 %v691, 126
    %v714 = vpop.permute.xlu0 %713
    %715 = vrot.lane.b32.xlu0 %v692, 126
    %v716 = vpop.permute.xlu0 %715
    %v725 = vadd.f32 %v675, %v702
    %v726 = vadd.f32 %v676, %v704
    %v727 = vadd.f32 %v677, %v706
    %v728 = vadd.f32 %v678, %v708
    %v729 = vadd.f32 %v679, %v710
    %v730 = vadd.f32 %v680, %v712
    %v731 = vadd.f32 %v681, %v714
    %v732 = vadd.f32 %v682, %v716
    %s733 = sld [smem:[#allocation2 + $0xc]]
    %v734 = vstv %s733
    %v735 = vmul.f32 %v734, %v133
    %v736 = vmul.f32 %v734, %v134
    %v737 = vmul.f32 %v734, %v135
    %v738 = vmul.f32 %v734, %v136
    %v739 = vmul.f32 %v734, %v137
    %v740 = vmul.f32 %v734, %v138
    %v741 = vmul.f32 %v734, %v139
    %v742 = vmul.f32 %v734, %v140
    %v751 = vrot.slane %v735, 1
    %v752 = vrot.slane %v736, 1
    %v753 = vsel %vm269, %v751, %v752
    %v754 = vrot.slane %v737, 1
    %v755 = vsel %vm269, %v752, %v754
    %v756 = vrot.slane %v738, 1
    %v757 = vsel %vm269, %v754, %v756
    %v758 = vrot.slane %v739, 1
    %v759 = vrot.slane %v740, 1
    %v760 = vsel %vm269, %v758, %v759
    %v761 = vrot.slane %v741, 1
    %v762 = vsel %vm269, %v759, %v761
    %v763 = vrot.slane %v742, 1
    %v764 = vsel %vm269, %v761, %v763
    %v773 = vadd.f32 %v725, %v753
    %v774 = vadd.f32 %v726, %v755
    %v775 = vadd.f32 %v727, %v757
    %v776 = vadd.f32 %v728, %v756
    %v777 = vadd.f32 %v729, %v760
    %v778 = vadd.f32 %v730, %v762
    %v779 = vadd.f32 %v731, %v764
    %v780 = vadd.f32 %v732, %v763
    %s781 = sld [smem:[#allocation2 + $0xd]]
    %v782 = vstv %s781
    %v783 = vmul.f32 %v782, %v133
    %v784 = vmul.f32 %v782, %v134
    %v785 = vmul.f32 %v782, %v135
    %v786 = vmul.f32 %v782, %v136
    %v787 = vmul.f32 %v782, %v137
    %v788 = vmul.f32 %v782, %v138
    %v789 = vmul.f32 %v782, %v139
    %v790 = vmul.f32 %v782, %v140
    %v799 = vrot.slane %v783, 1
    %v800 = vrot.slane %v784, 1
    %v801 = vsel %vm269, %v799, %v800
    %v802 = vrot.slane %v785, 1
    %v803 = vsel %vm269, %v800, %v802
    %v804 = vrot.slane %v786, 1
    %v805 = vsel %vm269, %v802, %v804
    %v806 = vrot.slane %v787, 1
    %v807 = vrot.slane %v788, 1
    %v808 = vsel %vm269, %v806, %v807
    %v809 = vrot.slane %v789, 1
    %v810 = vsel %vm269, %v807, %v809
    %v811 = vrot.slane %v790, 1
    %v812 = vsel %vm269, %v809, %v811
    %813 = vrot.lane.b32.xlu0 %v801, 127
    %v814 = vpop.permute.xlu0 %813
    %815 = vrot.lane.b32.xlu0 %v803, 127
    %v816 = vpop.permute.xlu0 %815
    %817 = vrot.lane.b32.xlu0 %v805, 127
    %v818 = vpop.permute.xlu0 %817
    %819 = vrot.lane.b32.xlu0 %v804, 127
    %v820 = vpop.permute.xlu0 %819
    %821 = vrot.lane.b32.xlu0 %v808, 127
    %v822 = vpop.permute.xlu0 %821
    %823 = vrot.lane.b32.xlu0 %v810, 127
    %v824 = vpop.permute.xlu0 %823
    %825 = vrot.lane.b32.xlu0 %v812, 127
    %v826 = vpop.permute.xlu0 %825
    %827 = vrot.lane.b32.xlu0 %v811, 127
    %v828 = vpop.permute.xlu0 %827
    %v837 = vadd.f32 %v773, %v814
    %v838 = vadd.f32 %v774, %v816
    %v839 = vadd.f32 %v775, %v818
    %v840 = vadd.f32 %v776, %v820
    %v841 = vadd.f32 %v777, %v822
    %v842 = vadd.f32 %v778, %v824
    %v843 = vadd.f32 %v779, %v826
    %v844 = vadd.f32 %v780, %v828
    %s845 = sld [smem:[#allocation2 + $0xe]]
    %v846 = vstv %s845
    %v847 = vmul.f32 %v846, %v133
    %v848 = vmul.f32 %v846, %v134
    %v849 = vmul.f32 %v846, %v135
    %v850 = vmul.f32 %v846, %v136
    %v851 = vmul.f32 %v846, %v137
    %v852 = vmul.f32 %v846, %v138
    %v853 = vmul.f32 %v846, %v139
    %v854 = vmul.f32 %v846, %v140
    %v863 = vrot.slane %v847, 1
    %v864 = vrot.slane %v848, 1
    %v865 = vsel %vm269, %v863, %v864
    %v866 = vrot.slane %v849, 1
    %v867 = vsel %vm269, %v864, %v866
    %v868 = vrot.slane %v850, 1
    %v869 = vsel %vm269, %v866, %v868
    %v870 = vrot.slane %v851, 1
    %v871 = vrot.slane %v852, 1
    %v872 = vsel %vm269, %v870, %v871
    %v873 = vrot.slane %v853, 1
    %v874 = vsel %vm269, %v871, %v873
    %v875 = vrot.slane %v854, 1
    %v876 = vsel %vm269, %v873, %v875
    %877 = vrot.lane.b32.xlu0 %v865, 126
    %v878 = vpop.permute.xlu0 %877
    %879 = vrot.lane.b32.xlu0 %v867, 126
    %v880 = vpop.permute.xlu0 %879
    %881 = vrot.lane.b32.xlu0 %v869, 126
    %v882 = vpop.permute.xlu0 %881
    %883 = vrot.lane.b32.xlu0 %v868, 126
    %v884 = vpop.permute.xlu0 %883
    %885 = vrot.lane.b32.xlu0 %v872, 126
    %v886 = vpop.permute.xlu0 %885
    %887 = vrot.lane.b32.xlu0 %v874, 126
    %v888 = vpop.permute.xlu0 %887
    %889 = vrot.lane.b32.xlu0 %v876, 126
    %v890 = vpop.permute.xlu0 %889
    %891 = vrot.lane.b32.xlu0 %v875, 126
    %v892 = vpop.permute.xlu0 %891
    %v901 = vadd.f32 %v837, %v878
    %v902 = vadd.f32 %v838, %v880
    %v903 = vadd.f32 %v839, %v882
    %v904 = vadd.f32 %v840, %v884
    %v905 = vadd.f32 %v841, %v886
    %v906 = vadd.f32 %v842, %v888
    %v907 = vadd.f32 %v843, %v890
    %v908 = vadd.f32 %v844, %v892
    %s909 = sld [smem:[#allocation2 + $0xf]]
    %v910 = vstv %s909
    %v911 = vmul.f32 %v910, %v133
    %v912 = vmul.f32 %v910, %v134
    %v913 = vmul.f32 %v910, %v135
    %v914 = vmul.f32 %v910, %v136
    %v915 = vmul.f32 %v910, %v137
    %v916 = vmul.f32 %v910, %v138
    %v917 = vmul.f32 %v910, %v139
    %v918 = vmul.f32 %v910, %v140
    %v927 = vrot.slane %v911, 2
    %v928 = vrot.slane %v912, 2
    %v929 = vsel %vm446, %v927, %v928
    %v930 = vrot.slane %v913, 2
    %v931 = vsel %vm446, %v928, %v930
    %v932 = vrot.slane %v914, 2
    %v933 = vsel %vm446, %v930, %v932
    %v934 = vrot.slane %v915, 2
    %v935 = vrot.slane %v916, 2
    %v936 = vsel %vm446, %v934, %v935
    %v937 = vrot.slane %v917, 2
    %v938 = vsel %vm446, %v935, %v937
    %v939 = vrot.slane %v918, 2
    %v940 = vsel %vm446, %v937, %v939
    %v949 = vadd.f32 %v901, %v929
    %v950 = vadd.f32 %v902, %v931
    %v951 = vadd.f32 %v903, %v933
    %v952 = vadd.f32 %v904, %v932
    %v953 = vadd.f32 %v905, %v936
    %v954 = vadd.f32 %v906, %v938
    %v955 = vadd.f32 %v907, %v940
    %v956 = vadd.f32 %v908, %v939
    %s957 = sld [smem:[#allocation2 + $0x10]]
    %v958 = vstv %s957
    %v959 = vmul.f32 %v958, %v133
    %v960 = vmul.f32 %v958, %v134
    %v961 = vmul.f32 %v958, %v135
    %v962 = vmul.f32 %v958, %v136
    %v963 = vmul.f32 %v958, %v137
    %v964 = vmul.f32 %v958, %v138
    %v965 = vmul.f32 %v958, %v139
    %v966 = vmul.f32 %v958, %v140
    %v975 = vrot.slane %v959, 2
    %v976 = vrot.slane %v960, 2
    %v977 = vsel %vm446, %v975, %v976
    %v978 = vrot.slane %v961, 2
    %v979 = vsel %vm446, %v976, %v978
    %v980 = vrot.slane %v962, 2
    %v981 = vsel %vm446, %v978, %v980
    %v982 = vrot.slane %v963, 2
    %v983 = vrot.slane %v964, 2
    %v984 = vsel %vm446, %v982, %v983
    %v985 = vrot.slane %v965, 2
    %v986 = vsel %vm446, %v983, %v985
    %v987 = vrot.slane %v966, 2
    %v988 = vsel %vm446, %v985, %v987
    %989 = vrot.lane.b32.xlu0 %v977, 127
    %v990 = vpop.permute.xlu0 %989
    %991 = vrot.lane.b32.xlu0 %v979, 127
    %v992 = vpop.permute.xlu0 %991
    %993 = vrot.lane.b32.xlu0 %v981, 127
    %v994 = vpop.permute.xlu0 %993
    %995 = vrot.lane.b32.xlu0 %v980, 127
    %v996 = vpop.permute.xlu0 %995
    %997 = vrot.lane.b32.xlu0 %v984, 127
    %v998 = vpop.permute.xlu0 %997
    %999 = vrot.lane.b32.xlu0 %v986, 127
    %v1000 = vpop.permute.xlu0 %999
    %1001 = vrot.lane.b32.xlu0 %v988, 127
    %v1002 = vpop.permute.xlu0 %1001
    %1003 = vrot.lane.b32.xlu0 %v987, 127
    %v1004 = vpop.permute.xlu0 %1003
    %v1013 = vadd.f32 %v949, %v990
    %v1014 = vadd.f32 %v950, %v992
    %v1015 = vadd.f32 %v951, %v994
    %v1016 = vadd.f32 %v952, %v996
    %v1017 = vadd.f32 %v953, %v998
    %v1018 = vadd.f32 %v954, %v1000
    %v1019 = vadd.f32 %v955, %v1002
    %v1020 = vadd.f32 %v956, %v1004
    %s1021 = sld [smem:[#allocation2 + $0x11]]
    %v1022 = vstv %s1021
    %v1023 = vmul.f32 %v1022, %v133
    %v1024 = vmul.f32 %v1022, %v134
    %v1025 = vmul.f32 %v1022, %v135
    %v1026 = vmul.f32 %v1022, %v136
    %v1027 = vmul.f32 %v1022, %v137
    %v1028 = vmul.f32 %v1022, %v138
    %v1029 = vmul.f32 %v1022, %v139
    %v1030 = vmul.f32 %v1022, %v140
    %v1039 = vrot.slane %v1023, 2
    %v1040 = vrot.slane %v1024, 2
    %v1041 = vsel %vm446, %v1039, %v1040
    %v1042 = vrot.slane %v1025, 2
    %v1043 = vsel %vm446, %v1040, %v1042
    %v1044 = vrot.slane %v1026, 2
    %v1045 = vsel %vm446, %v1042, %v1044
    %v1046 = vrot.slane %v1027, 2
    %v1047 = vrot.slane %v1028, 2
    %v1048 = vsel %vm446, %v1046, %v1047
    %v1049 = vrot.slane %v1029, 2
    %v1050 = vsel %vm446, %v1047, %v1049
    %v1051 = vrot.slane %v1030, 2
    %v1052 = vsel %vm446, %v1049, %v1051
    %1053 = vrot.lane.b32.xlu0 %v1041, 126
    %v1054 = vpop.permute.xlu0 %1053
    %1055 = vrot.lane.b32.xlu0 %v1043, 126
    %v1056 = vpop.permute.xlu0 %1055
    %1057 = vrot.lane.b32.xlu0 %v1045, 126
    %v1058 = vpop.permute.xlu0 %1057
    %1059 = vrot.lane.b32.xlu0 %v1044, 126
    %v1060 = vpop.permute.xlu0 %1059
    %1061 = vrot.lane.b32.xlu0 %v1048, 126
    %v1062 = vpop.permute.xlu0 %1061
    %1063 = vrot.lane.b32.xlu0 %v1050, 126
    %v1064 = vpop.permute.xlu0 %1063
    %1065 = vrot.lane.b32.xlu0 %v1052, 126
    %v1066 = vpop.permute.xlu0 %1065
    %1067 = vrot.lane.b32.xlu0 %v1051, 126
    %v1068 = vpop.permute.xlu0 %1067
    %v1077 = vadd.f32 %v1013, %v1054
    %v1078 = vadd.f32 %v1014, %v1056
    %v1079 = vadd.f32 %v1015, %v1058
    %v1080 = vadd.f32 %v1016, %v1060
    %v1081 = vadd.f32 %v1017, %v1062
    %v1082 = vadd.f32 %v1018, %v1064
    %v1083 = vadd.f32 %v1019, %v1066
    %v1084 = vadd.f32 %v1020, %v1068
    %s1085 = sld [smem:[#allocation5 + $0x1]]
    %v1086 = vstv %s1085
    %v1087 = vadd.f32 %v1077, %v1086
    %v1088 = vadd.f32 %v1078, %v1086
    %v1089 = vadd.f32 %v1079, %v1086
    %v1090 = vadd.f32 %v1080, %v1086
    %v1091 = vadd.f32 %v1081, %v1086
    %v1092 = vadd.f32 %v1082, %v1086
    %v1093 = vadd.f32 %v1083, %v1086
    %v1094 = vadd.f32 %v1084, %v1086
    %v1095 = vmax.f32 %v1087, 0.0
    %v1096 = vmax.f32 %v1088, 0.0
    %v1097 = vmax.f32 %v1089, 0.0
    %v1098 = vmax.f32 %v1090, 0.0
    %v1099 = vmax.f32 %v1091, 0.0
    %v1100 = vmax.f32 %v1092, 0.0
    %v1101 = vmax.f32 %v1093, 0.0
    %v1102 = vmax.f32 %v1094, 0.0
    %s1103 = sld [smem:[#allocation2 + $0x12]]
    %v1104 = vstv %s1103
    %v1105 = vmul.f32 %v1104, %v133
    %v1106 = vmul.f32 %v1104, %v134
    %v1107 = vmul.f32 %v1104, %v135
    %v1108 = vmul.f32 %v1104, %v136
    %v1109 = vmul.f32 %v1104, %v137
    %v1110 = vmul.f32 %v1104, %v138
    %v1111 = vmul.f32 %v1104, %v139
    %v1112 = vmul.f32 %v1104, %v140
    %s1113 = sld [smem:[#allocation2 + $0x13]]
    %v1114 = vstv %s1113
    %v1115 = vmul.f32 %v1114, %v133
    %v1116 = vmul.f32 %v1114, %v134
    %v1117 = vmul.f32 %v1114, %v135
    %v1118 = vmul.f32 %v1114, %v136
    %v1119 = vmul.f32 %v1114, %v137
    %v1120 = vmul.f32 %v1114, %v138
    %v1121 = vmul.f32 %v1114, %v139
    %v1122 = vmul.f32 %v1114, %v140
    %1131 = vrot.lane.b32.xlu0 %v1115, 127
    %v1132 = vpop.permute.xlu0 %1131
    %1133 = vrot.lane.b32.xlu0 %v1116, 127
    %v1134 = vpop.permute.xlu0 %1133
    %1135 = vrot.lane.b32.xlu0 %v1117, 127
    %v1136 = vpop.permute.xlu0 %1135
    %1137 = vrot.lane.b32.xlu0 %v1118, 127
    %v1138 = vpop.permute.xlu0 %1137
    %1139 = vrot.lane.b32.xlu0 %v1119, 127
    %v1140 = vpop.permute.xlu0 %1139
    %1141 = vrot.lane.b32.xlu0 %v1120, 127
    %v1142 = vpop.permute.xlu0 %1141
    %1143 = vrot.lane.b32.xlu0 %v1121, 127
    %v1144 = vpop.permute.xlu0 %1143
    %1145 = vrot.lane.b32.xlu0 %v1122, 127
    %v1146 = vpop.permute.xlu0 %1145
    %v1155 = vadd.f32 %v1105, %v1132
    %v1156 = vadd.f32 %v1106, %v1134
    %v1157 = vadd.f32 %v1107, %v1136
    %v1158 = vadd.f32 %v1108, %v1138
    %v1159 = vadd.f32 %v1109, %v1140
    %v1160 = vadd.f32 %v1110, %v1142
    %v1161 = vadd.f32 %v1111, %v1144
    %v1162 = vadd.f32 %v1112, %v1146
    %s1163 = sld [smem:[#allocation2 + $0x14]]
    %v1164 = vstv %s1163
    %v1165 = vmul.f32 %v1164, %v133
    %v1166 = vmul.f32 %v1164, %v134
    %v1167 = vmul.f32 %v1164, %v135
    %v1168 = vmul.f32 %v1164, %v136
    %v1169 = vmul.f32 %v1164, %v137
    %v1170 = vmul.f32 %v1164, %v138
    %v1171 = vmul.f32 %v1164, %v139
    %v1172 = vmul.f32 %v1164, %v140
    %1181 = vrot.lane.b32.xlu0 %v1165, 126
    %v1182 = vpop.permute.xlu0 %1181
    %1183 = vrot.lane.b32.xlu0 %v1166, 126
    %v1184 = vpop.permute.xlu0 %1183
    %1185 = vrot.lane.b32.xlu0 %v1167, 126
    %v1186 = vpop.permute.xlu0 %1185
    %1187 = vrot.lane.b32.xlu0 %v1168, 126
    %v1188 = vpop.permute.xlu0 %1187
    %1189 = vrot.lane.b32.xlu0 %v1169, 126
    %v1190 = vpop.permute.xlu0 %1189
    %1191 = vrot.lane.b32.xlu0 %v1170, 126
    %v1192 = vpop.permute.xlu0 %1191
    %1193 = vrot.lane.b32.xlu0 %v1171, 126
    %v1194 = vpop.permute.xlu0 %1193
    %1195 = vrot.lane.b32.xlu0 %v1172, 126
    %v1196 = vpop.permute.xlu0 %1195
    %v1205 = vadd.f32 %v1155, %v1182
    %v1206 = vadd.f32 %v1156, %v1184
    %v1207 = vadd.f32 %v1157, %v1186
    %v1208 = vadd.f32 %v1158, %v1188
    %v1209 = vadd.f32 %v1159, %v1190
    %v1210 = vadd.f32 %v1160, %v1192
    %v1211 = vadd.f32 %v1161, %v1194
    %v1212 = vadd.f32 %v1162, %v1196
    %s1213 = sld [smem:[#allocation2 + $0x15]]
    %v1214 = vstv %s1213
    %v1215 = vmul.f32 %v1214, %v133
    %v1216 = vmul.f32 %v1214, %v134
    %v1217 = vmul.f32 %v1214, %v135
    %v1218 = vmul.f32 %v1214, %v136
    %v1219 = vmul.f32 %v1214, %v137
    %v1220 = vmul.f32 %v1214, %v138
    %v1221 = vmul.f32 %v1214, %v139
    %v1222 = vmul.f32 %v1214, %v140
    %v1231 = vrot.slane %v1215, 1
    %v1232 = vrot.slane %v1216, 1
    %v1233 = vsel %vm269, %v1231, %v1232
    %v1234 = vrot.slane %v1217, 1
    %v1235 = vsel %vm269, %v1232, %v1234
    %v1236 = vrot.slane %v1218, 1
    %v1237 = vsel %vm269, %v1234, %v1236
    %v1238 = vrot.slane %v1219, 1
    %v1239 = vrot.slane %v1220, 1
    %v1240 = vsel %vm269, %v1238, %v1239
    %v1241 = vrot.slane %v1221, 1
    %v1242 = vsel %vm269, %v1239, %v1241
    %v1243 = vrot.slane %v1222, 1
    %v1244 = vsel %vm269, %v1241, %v1243
    %v1253 = vadd.f32 %v1205, %v1233
    %v1254 = vadd.f32 %v1206, %v1235
    %v1255 = vadd.f32 %v1207, %v1237
    %v1256 = vadd.f32 %v1208, %v1236
    %v1257 = vadd.f32 %v1209, %v1240
    %v1258 = vadd.f32 %v1210, %v1242
    %v1259 = vadd.f32 %v1211, %v1244
    %v1260 = vadd.f32 %v1212, %v1243
    %s1261 = sld [smem:[#allocation2 + $0x16]]
    %v1262 = vstv %s1261
    %v1263 = vmul.f32 %v1262, %v133
    %v1264 = vmul.f32 %v1262, %v134
    %v1265 = vmul.f32 %v1262, %v135
    %v1266 = vmul.f32 %v1262, %v136
    %v1267 = vmul.f32 %v1262, %v137
    %v1268 = vmul.f32 %v1262, %v138
    %v1269 = vmul.f32 %v1262, %v139
    %v1270 = vmul.f32 %v1262, %v140
    %v1279 = vrot.slane %v1263, 1
    %v1280 = vrot.slane %v1264, 1
    %v1281 = vsel %vm269, %v1279, %v1280
    %v1282 = vrot.slane %v1265, 1
    %v1283 = vsel %vm269, %v1280, %v1282
    %v1284 = vrot.slane %v1266, 1
    %v1285 = vsel %vm269, %v1282, %v1284
    %v1286 = vrot.slane %v1267, 1
    %v1287 = vrot.slane %v1268, 1
    %v1288 = vsel %vm269, %v1286, %v1287
    %v1289 = vrot.slane %v1269, 1
    %v1290 = vsel %vm269, %v1287, %v1289
    %v1291 = vrot.slane %v1270, 1
    %v1292 = vsel %vm269, %v1289, %v1291
    %1293 = vrot.lane.b32.xlu0 %v1281, 127
    %v1294 = vpop.permute.xlu0 %1293
    %1295 = vrot.lane.b32.xlu0 %v1283, 127
    %v1296 = vpop.permute.xlu0 %1295
    %1297 = vrot.lane.b32.xlu0 %v1285, 127
    %v1298 = vpop.permute.xlu0 %1297
    %1299 = vrot.lane.b32.xlu0 %v1284, 127
    %v1300 = vpop.permute.xlu0 %1299
    %1301 = vrot.lane.b32.xlu0 %v1288, 127
    %v1302 = vpop.permute.xlu0 %1301
    %1303 = vrot.lane.b32.xlu0 %v1290, 127
    %v1304 = vpop.permute.xlu0 %1303
    %1305 = vrot.lane.b32.xlu0 %v1292, 127
    %v1306 = vpop.permute.xlu0 %1305
    %1307 = vrot.lane.b32.xlu0 %v1291, 127
    %v1308 = vpop.permute.xlu0 %1307
    %v1317 = vadd.f32 %v1253, %v1294
    %v1318 = vadd.f32 %v1254, %v1296
    %v1319 = vadd.f32 %v1255, %v1298
    %v1320 = vadd.f32 %v1256, %v1300
    %v1321 = vadd.f32 %v1257, %v1302
    %v1322 = vadd.f32 %v1258, %v1304
    %v1323 = vadd.f32 %v1259, %v1306
    %v1324 = vadd.f32 %v1260, %v1308
    %s1325 = sld [smem:[#allocation2 + $0x17]]
    %v1326 = vstv %s1325
    %v1327 = vmul.f32 %v1326, %v133
    %v1328 = vmul.f32 %v1326, %v134
    %v1329 = vmul.f32 %v1326, %v135
    %v1330 = vmul.f32 %v1326, %v136
    %v1331 = vmul.f32 %v1326, %v137
    %v1332 = vmul.f32 %v1326, %v138
    %v1333 = vmul.f32 %v1326, %v139
    %v1334 = vmul.f32 %v1326, %v140
    %v1343 = vrot.slane %v1327, 1
    %v1344 = vrot.slane %v1328, 1
    %v1345 = vsel %vm269, %v1343, %v1344
    %v1346 = vrot.slane %v1329, 1
    %v1347 = vsel %vm269, %v1344, %v1346
    %v1348 = vrot.slane %v1330, 1
    %v1349 = vsel %vm269, %v1346, %v1348
    %v1350 = vrot.slane %v1331, 1
    %v1351 = vrot.slane %v1332, 1
    %v1352 = vsel %vm269, %v1350, %v1351
    %v1353 = vrot.slane %v1333, 1
    %v1354 = vsel %vm269, %v1351, %v1353
    %v1355 = vrot.slane %v1334, 1
    %v1356 = vsel %vm269, %v1353, %v1355
    %1357 = vrot.lane.b32.xlu0 %v1345, 126
    %v1358 = vpop.permute.xlu0 %1357
    %1359 = vrot.lane.b32.xlu0 %v1347, 126
    %v1360 = vpop.permute.xlu0 %1359
    %1361 = vrot.lane.b32.xlu0 %v1349, 126
    %v1362 = vpop.permute.xlu0 %1361
    %1363 = vrot.lane.b32.xlu0 %v1348, 126
    %v1364 = vpop.permute.xlu0 %1363
    %1365 = vrot.lane.b32.xlu0 %v1352, 126
    %v1366 = vpop.permute.xlu0 %1365
    %1367 = vrot.lane.b32.xlu0 %v1354, 126
    %v1368 = vpop.permute.xlu0 %1367
    %1369 = vrot.lane.b32.xlu0 %v1356, 126
    %v1370 = vpop.permute.xlu0 %1369
    %1371 = vrot.lane.b32.xlu0 %v1355, 126
    %v1372 = vpop.permute.xlu0 %1371
    %v1381 = vadd.f32 %v1317, %v1358
    %v1382 = vadd.f32 %v1318, %v1360
    %v1383 = vadd.f32 %v1319, %v1362
    %v1384 = vadd.f32 %v1320, %v1364
    %v1385 = vadd.f32 %v1321, %v1366
    %v1386 = vadd.f32 %v1322, %v1368
    %v1387 = vadd.f32 %v1323, %v1370
    %v1388 = vadd.f32 %v1324, %v1372
    %s1389 = sld [smem:[#allocation2 + $0x18]]
    %v1390 = vstv %s1389
    %v1391 = vmul.f32 %v1390, %v133
    %v1392 = vmul.f32 %v1390, %v134
    %v1393 = vmul.f32 %v1390, %v135
    %v1394 = vmul.f32 %v1390, %v136
    %v1395 = vmul.f32 %v1390, %v137
    %v1396 = vmul.f32 %v1390, %v138
    %v1397 = vmul.f32 %v1390, %v139
    %v1398 = vmul.f32 %v1390, %v140
    %v1407 = vrot.slane %v1391, 2
    %v1408 = vrot.slane %v1392, 2
    %v1409 = vsel %vm446, %v1407, %v1408
    %v1410 = vrot.slane %v1393, 2
    %v1411 = vsel %vm446, %v1408, %v1410
    %v1412 = vrot.slane %v1394, 2
    %v1413 = vsel %vm446, %v1410, %v1412
    %v1414 = vrot.slane %v1395, 2
    %v1415 = vrot.slane %v1396, 2
    %v1416 = vsel %vm446, %v1414, %v1415
    %v1417 = vrot.slane %v1397, 2
    %v1418 = vsel %vm446, %v1415, %v1417
    %v1419 = vrot.slane %v1398, 2
    %v1420 = vsel %vm446, %v1417, %v1419
    %v1429 = vadd.f32 %v1381, %v1409
    %v1430 = vadd.f32 %v1382, %v1411
    %v1431 = vadd.f32 %v1383, %v1413
    %v1432 = vadd.f32 %v1384, %v1412
    %v1433 = vadd.f32 %v1385, %v1416
    %v1434 = vadd.f32 %v1386, %v1418
    %v1435 = vadd.f32 %v1387, %v1420
    %v1436 = vadd.f32 %v1388, %v1419
    %s1437 = sld [smem:[#allocation2 + $0x19]]
    %v1438 = vstv %s1437
    %v1439 = vmul.f32 %v1438, %v133
    %v1440 = vmul.f32 %v1438, %v134
    %v1441 = vmul.f32 %v1438, %v135
    %v1442 = vmul.f32 %v1438, %v136
    %v1443 = vmul.f32 %v1438, %v137
    %v1444 = vmul.f32 %v1438, %v138
    %v1445 = vmul.f32 %v1438, %v139
    %v1446 = vmul.f32 %v1438, %v140
    %v1455 = vrot.slane %v1439, 2
    %v1456 = vrot.slane %v1440, 2
    %v1457 = vsel %vm446, %v1455, %v1456
    %v1458 = vrot.slane %v1441, 2
    %v1459 = vsel %vm446, %v1456, %v1458
    %v1460 = vrot.slane %v1442, 2
    %v1461 = vsel %vm446, %v1458, %v1460
    %v1462 = vrot.slane %v1443, 2
    %v1463 = vrot.slane %v1444, 2
    %v1464 = vsel %vm446, %v1462, %v1463
    %v1465 = vrot.slane %v1445, 2
    %v1466 = vsel %vm446, %v1463, %v1465
    %v1467 = vrot.slane %v1446, 2
    %v1468 = vsel %vm446, %v1465, %v1467
    %1469 = vrot.lane.b32.xlu0 %v1457, 127
    %v1470 = vpop.permute.xlu0 %1469
    %1471 = vrot.lane.b32.xlu0 %v1459, 127
    %v1472 = vpop.permute.xlu0 %1471
    %1473 = vrot.lane.b32.xlu0 %v1461, 127
    %v1474 = vpop.permute.xlu0 %1473
    %1475 = vrot.lane.b32.xlu0 %v1460, 127
    %v1476 = vpop.permute.xlu0 %1475
    %1477 = vrot.lane.b32.xlu0 %v1464, 127
    %v1478 = vpop.permute.xlu0 %1477
    %1479 = vrot.lane.b32.xlu0 %v1466, 127
    %v1480 = vpop.permute.xlu0 %1479
    %1481 = vrot.lane.b32.xlu0 %v1468, 127
    %v1482 = vpop.permute.xlu0 %1481
    %1483 = vrot.lane.b32.xlu0 %v1467, 127
    %v1484 = vpop.permute.xlu0 %1483
    %v1493 = vadd.f32 %v1429, %v1470
    %v1494 = vadd.f32 %v1430, %v1472
    %v1495 = vadd.f32 %v1431, %v1474
    %v1496 = vadd.f32 %v1432, %v1476
    %v1497 = vadd.f32 %v1433, %v1478
    %v1498 = vadd.f32 %v1434, %v1480
    %v1499 = vadd.f32 %v1435, %v1482
    %v1500 = vadd.f32 %v1436, %v1484
    %s1501 = sld [smem:[#allocation2 + $0x1a]]
    %v1502 = vstv %s1501
    %v1503 = vmul.f32 %v1502, %v133
    %v1504 = vmul.f32 %v1502, %v134
    %v1505 = vmul.f32 %v1502, %v135
    %v1506 = vmul.f32 %v1502, %v136
    %v1507 = vmul.f32 %v1502, %v137
    %v1508 = vmul.f32 %v1502, %v138
    %v1509 = vmul.f32 %v1502, %v139
    %v1510 = vmul.f32 %v1502, %v140
    %v1519 = vrot.slane %v1503, 2
    %v1520 = vrot.slane %v1504, 2
    %v1521 = vsel %vm446, %v1519, %v1520
    %v1522 = vrot.slane %v1505, 2
    %v1523 = vsel %vm446, %v1520, %v1522
    %v1524 = vrot.slane %v1506, 2
    %v1525 = vsel %vm446, %v1522, %v1524
    %v1526 = vrot.slane %v1507, 2
    %v1527 = vrot.slane %v1508, 2
    %v1528 = vsel %vm446, %v1526, %v1527
    %v1529 = vrot.slane %v1509, 2
    %v1530 = vsel %vm446, %v1527, %v1529
    %v1531 = vrot.slane %v1510, 2
    %v1532 = vsel %vm446, %v1529, %v1531
    %1533 = vrot.lane.b32.xlu0 %v1521, 126
    %v1534 = vpop.permute.xlu0 %1533
    %1535 = vrot.lane.b32.xlu0 %v1523, 126
    %v1536 = vpop.permute.xlu0 %1535
    %1537 = vrot.lane.b32.xlu0 %v1525, 126
    %v1538 = vpop.permute.xlu0 %1537
    %1539 = vrot.lane.b32.xlu0 %v1524, 126
    %v1540 = vpop.permute.xlu0 %1539
    %1541 = vrot.lane.b32.xlu0 %v1528, 126
    %v1542 = vpop.permute.xlu0 %1541
    %1543 = vrot.lane.b32.xlu0 %v1530, 126
    %v1544 = vpop.permute.xlu0 %1543
    %1545 = vrot.lane.b32.xlu0 %v1532, 126
    %v1546 = vpop.permute.xlu0 %1545
    %1547 = vrot.lane.b32.xlu0 %v1531, 126
    %v1548 = vpop.permute.xlu0 %1547
    %v1557 = vadd.f32 %v1493, %v1534
    %v1558 = vadd.f32 %v1494, %v1536
    %v1559 = vadd.f32 %v1495, %v1538
    %v1560 = vadd.f32 %v1496, %v1540
    %v1561 = vadd.f32 %v1497, %v1542
    %v1562 = vadd.f32 %v1498, %v1544
    %v1563 = vadd.f32 %v1499, %v1546
    %v1564 = vadd.f32 %v1500, %v1548
    %s1565 = sld [smem:[#allocation5 + $0x2]]
    %v1566 = vstv %s1565
    %v1567 = vadd.f32 %v1557, %v1566
    %v1568 = vadd.f32 %v1558, %v1566
    %v1569 = vadd.f32 %v1559, %v1566
    %v1570 = vadd.f32 %v1560, %v1566
    %v1571 = vadd.f32 %v1561, %v1566
    %v1572 = vadd.f32 %v1562, %v1566
    %v1573 = vadd.f32 %v1563, %v1566
    %v1574 = vadd.f32 %v1564, %v1566
    %v1575 = vmax.f32 %v1567, 0.0
    %v1576 = vmax.f32 %v1568, 0.0
    %v1577 = vmax.f32 %v1569, 0.0
    %v1578 = vmax.f32 %v1570, 0.0
    %v1579 = vmax.f32 %v1571, 0.0
    %v1580 = vmax.f32 %v1572, 0.0
    %v1581 = vmax.f32 %v1573, 0.0
    %v1582 = vmax.f32 %v1574, 0.0
    %1591 = vrot.lane.b32.xlu0 %v615, 127
    %v1592 = vpop.permute.xlu0 %1591
    %1593 = vrot.lane.b32.xlu0 %v616, 127
    %v1594 = vpop.permute.xlu0 %1593
    %1595 = vrot.lane.b32.xlu0 %v617, 127
    %v1596 = vpop.permute.xlu0 %1595
    %1597 = vrot.lane.b32.xlu0 %v618, 127
    %v1598 = vpop.permute.xlu0 %1597
    %1599 = vrot.lane.b32.xlu0 %v619, 127
    %v1600 = vpop.permute.xlu0 %1599
    %1601 = vrot.lane.b32.xlu0 %v620, 127
    %v1602 = vpop.permute.xlu0 %1601
    %1603 = vrot.lane.b32.xlu0 %v621, 127
    %v1604 = vpop.permute.xlu0 %1603
    %1605 = vrot.lane.b32.xlu0 %v622, 127
    %v1606 = vpop.permute.xlu0 %1605
    %v1615 = vmax.f32 %v615, %v1592
    %v1616 = vmax.f32 %v616, %v1594
    %v1617 = vmax.f32 %v617, %v1596
    %v1618 = vmax.f32 %v618, %v1598
    %v1619 = vmax.f32 %v619, %v1600
    %v1620 = vmax.f32 %v620, %v1602
    %v1621 = vmax.f32 %v621, %v1604
    %v1622 = vmax.f32 %v622, %v1606
    %v1631 = vrot.slane %v1615, 1
    %v1632 = vrot.slane %v1616, 1
    %v1633 = vsel %vm269, %v1631, %v1632
    %v1634 = vrot.slane %v1617, 1
    %v1635 = vsel %vm269, %v1632, %v1634
    %v1636 = vrot.slane %v1618, 1
    %v1637 = vsel %vm269, %v1634, %v1636
    %v1638 = vrot.slane %v1619, 1
    %v1639 = vrot.slane %v1620, 1
    %v1640 = vsel %vm269, %v1638, %v1639
    %v1641 = vrot.slane %v1621, 1
    %v1642 = vsel %vm269, %v1639, %v1641
    %v1643 = vrot.slane %v1622, 1
    %v1644 = vsel %vm269, %v1641, %v1643
    %v1653 = vmax.f32 %v1615, %v1633
    %v1654 = vmax.f32 %v1616, %v1635
    %v1655 = vmax.f32 %v1617, %v1637
    %v1656 = vmax.f32 %v1618, %v1636
    %v1657 = vmax.f32 %v1619, %v1640
    %v1658 = vmax.f32 %v1620, %v1642
    %v1659 = vmax.f32 %v1621, %v1644
    %v1660 = vmax.f32 %v1622, %v1643
    %1669 = vrot.lane.b32.xlu0 %v1095, 127
    %v1670 = vpop.permute.xlu0 %1669
    %1671 = vrot.lane.b32.xlu0 %v1096, 127
    %v1672 = vpop.permute.xlu0 %1671
    %1673 = vrot.lane.b32.xlu0 %v1097, 127
    %v1674 = vpop.permute.xlu0 %1673
    %1675 = vrot.lane.b32.xlu0 %v1098, 127
    %v1676 = vpop.permute.xlu0 %1675
    %1677 = vrot.lane.b32.xlu0 %v1099, 127
    %v1678 = vpop.permute.xlu0 %1677
    %1679 = vrot.lane.b32.xlu0 %v1100, 127
    %v1680 = vpop.permute.xlu0 %1679
    %1681 = vrot.lane.b32.xlu0 %v1101, 127
    %v1682 = vpop.permute.xlu0 %1681
    %1683 = vrot.lane.b32.xlu0 %v1102, 127
    %v1684 = vpop.permute.xlu0 %1683
    %v1693 = vmax.f32 %v1095, %v1670
    %v1694 = vmax.f32 %v1096, %v1672
    %v1695 = vmax.f32 %v1097, %v1674
    %v1696 = vmax.f32 %v1098, %v1676
    %v1697 = vmax.f32 %v1099, %v1678
    %v1698 = vmax.f32 %v1100, %v1680
    %v1699 = vmax.f32 %v1101, %v1682
    %v1700 = vmax.f32 %v1102, %v1684
    %v1709 = vrot.slane %v1693, 1
    %v1710 = vrot.slane %v1694, 1
    %v1711 = vsel %vm269, %v1709, %v1710
    %v1712 = vrot.slane %v1695, 1
    %v1713 = vsel %vm269, %v1710, %v1712
    %v1714 = vrot.slane %v1696, 1
    %v1715 = vsel %vm269, %v1712, %v1714
    %v1716 = vrot.slane %v1697, 1
    %v1717 = vrot.slane %v1698, 1
    %v1718 = vsel %vm269, %v1716, %v1717
    %v1719 = vrot.slane %v1699, 1
    %v1720 = vsel %vm269, %v1717, %v1719
    %v1721 = vrot.slane %v1700, 1
    %v1722 = vsel %vm269, %v1719, %v1721
    %v1731 = vmax.f32 %v1693, %v1711
    %v1732 = vmax.f32 %v1694, %v1713
    %v1733 = vmax.f32 %v1695, %v1715
    %v1734 = vmax.f32 %v1696, %v1714
    %v1735 = vmax.f32 %v1697, %v1718
    %v1736 = vmax.f32 %v1698, %v1720
    %v1737 = vmax.f32 %v1699, %v1722
    %v1738 = vmax.f32 %v1700, %v1721
    %1747 = vrot.lane.b32.xlu0 %v1575, 127
    %v1748 = vpop.permute.xlu0 %1747
    %1749 = vrot.lane.b32.xlu0 %v1576, 127
    %v1750 = vpop.permute.xlu0 %1749
    %1751 = vrot.lane.b32.xlu0 %v1577, 127
    %v1752 = vpop.permute.xlu0 %1751
    %1753 = vrot.lane.b32.xlu0 %v1578, 127
    %v1754 = vpop.permute.xlu0 %1753
    %1755 = vrot.lane.b32.xlu0 %v1579, 127
    %v1756 = vpop.permute.xlu0 %1755
    %1757 = vrot.lane.b32.xlu0 %v1580, 127
    %v1758 = vpop.permute.xlu0 %1757
    %1759 = vrot.lane.b32.xlu0 %v1581, 127
    %v1760 = vpop.permute.xlu0 %1759
    %1761 = vrot.lane.b32.xlu0 %v1582, 127
    %v1762 = vpop.permute.xlu0 %1761
    %v1771 = vmax.f32 %v1575, %v1748
    %v1772 = vmax.f32 %v1576, %v1750
    %v1773 = vmax.f32 %v1577, %v1752
    %v1774 = vmax.f32 %v1578, %v1754
    %v1775 = vmax.f32 %v1579, %v1756
    %v1776 = vmax.f32 %v1580, %v1758
    %v1777 = vmax.f32 %v1581, %v1760
    %v1778 = vmax.f32 %v1582, %v1762
    %v1787 = vrot.slane %v1771, 1
    %v1788 = vrot.slane %v1772, 1
    %v1789 = vsel %vm269, %v1787, %v1788
    %v1790 = vrot.slane %v1773, 1
    %v1791 = vsel %vm269, %v1788, %v1790
    %v1792 = vrot.slane %v1774, 1
    %v1793 = vsel %vm269, %v1790, %v1792
    %v1794 = vrot.slane %v1775, 1
    %v1795 = vrot.slane %v1776, 1
    %v1796 = vsel %vm269, %v1794, %v1795
    %v1797 = vrot.slane %v1777, 1
    %v1798 = vsel %vm269, %v1795, %v1797
    %v1799 = vrot.slane %v1778, 1
    %v1800 = vsel %vm269, %v1797, %v1799
    %v1809 = vmax.f32 %v1771, %v1789
    %v1810 = vmax.f32 %v1772, %v1791
    %v1811 = vmax.f32 %v1773, %v1793
    %v1812 = vmax.f32 %v1774, %v1792
    %v1813 = vmax.f32 %v1775, %v1796
    %v1814 = vmax.f32 %v1776, %v1798
    %v1815 = vmax.f32 %v1777, %v1800
    %v1816 = vmax.f32 %v1778, %v1799
    %s1817 = sld [smem:[#allocation7]]
    %v1818 = vstv %s1817
    %v1819 = vmul.f32 %v1818, %v1653
    %v1820 = vmul.f32 %v1818, %v1654
    %v1821 = vmul.f32 %v1818, %v1655
    %v1822 = vmul.f32 %v1818, %v1657
    %v1823 = vmul.f32 %v1818, %v1658
    %v1824 = vmul.f32 %v1818, %v1659
    %s1825 = sld [smem:[#allocation7 + $0x1]]
    %v1826 = vstv %s1825
    %v1827 = vmul.f32 %v1826, %v1653
    %v1828 = vmul.f32 %v1826, %v1654
    %v1829 = vmul.f32 %v1826, %v1655
    %v1830 = vmul.f32 %v1826, %v1657
    %v1831 = vmul.f32 %v1826, %v1658
    %v1832 = vmul.f32 %v1826, %v1659
    %1839 = vrot.lane.b32.xlu0 %v1827, 126
    %v1840 = vpop.permute.xlu0 %1839
    %1841 = vrot.lane.b32.xlu0 %v1828, 126
    %v1842 = vpop.permute.xlu0 %1841
    %1843 = vrot.lane.b32.xlu0 %v1829, 126
    %v1844 = vpop.permute.xlu0 %1843
    %1845 = vrot.lane.b32.xlu0 %v1830, 126
    %v1846 = vpop.permute.xlu0 %1845
    %1847 = vrot.lane.b32.xlu0 %v1831, 126
    %v1848 = vpop.permute.xlu0 %1847
    %1849 = vrot.lane.b32.xlu0 %v1832, 126
    %v1850 = vpop.permute.xlu0 %1849
    %v1857 = vadd.f32 %v1819, %v1840
    %v1858 = vadd.f32 %v1820, %v1842
    %v1859 = vadd.f32 %v1821, %v1844
    %v1860 = vadd.f32 %v1822, %v1846
    %v1861 = vadd.f32 %v1823, %v1848
    %v1862 = vadd.f32 %v1824, %v1850
    %s1863 = sld [smem:[#allocation7 + $0x2]]
    %v1864 = vstv %s1863
    %v1865 = vmul.f32 %v1864, %v1653
    %v1866 = vmul.f32 %v1864, %v1654
    %v1867 = vmul.f32 %v1864, %v1655
    %v1868 = vmul.f32 %v1864, %v1657
    %v1869 = vmul.f32 %v1864, %v1658
    %v1870 = vmul.f32 %v1864, %v1659
    %1877 = vrot.lane.b32.xlu0 %v1865, 124
    %v1878 = vpop.permute.xlu0 %1877
    %1879 = vrot.lane.b32.xlu0 %v1866, 124
    %v1880 = vpop.permute.xlu0 %1879
    %1881 = vrot.lane.b32.xlu0 %v1867, 124
    %v1882 = vpop.permute.xlu0 %1881
    %1883 = vrot.lane.b32.xlu0 %v1868, 124
    %v1884 = vpop.permute.xlu0 %1883
    %1885 = vrot.lane.b32.xlu0 %v1869, 124
    %v1886 = vpop.permute.xlu0 %1885
    %1887 = vrot.lane.b32.xlu0 %v1870, 124
    %v1888 = vpop.permute.xlu0 %1887
    %v1895 = vadd.f32 %v1857, %v1878
    %v1896 = vadd.f32 %v1858, %v1880
    %v1897 = vadd.f32 %v1859, %v1882
    %v1898 = vadd.f32 %v1860, %v1884
    %v1899 = vadd.f32 %v1861, %v1886
    %v1900 = vadd.f32 %v1862, %v1888
    %s1901 = sld [smem:[#allocation7 + $0x3]]
    %v1902 = vstv %s1901
    %v1903 = vmul.f32 %v1902, %v1653
    %v1904 = vmul.f32 %v1902, %v1654
    %v1905 = vmul.f32 %v1902, %v1655
    %v1906 = vmul.f32 %v1902, %v1656
    %v1907 = vmul.f32 %v1902, %v1657
    %v1908 = vmul.f32 %v1902, %v1658
    %v1909 = vmul.f32 %v1902, %v1659
    %v1910 = vmul.f32 %v1902, %v1660
    %v1919 = vrot.slane %v1903, 2
    %v1920 = vrot.slane %v1904, 2
    %v1921 = vsel %vm446, %v1919, %v1920
    %v1922 = vrot.slane %v1905, 2
    %v1923 = vsel %vm446, %v1920, %v1922
    %v1924 = vrot.slane %v1906, 2
    %v1925 = vsel %vm446, %v1922, %v1924
    %v1926 = vrot.slane %v1907, 2
    %v1927 = vrot.slane %v1908, 2
    %v1928 = vsel %vm446, %v1926, %v1927
    %v1929 = vrot.slane %v1909, 2
    %v1930 = vsel %vm446, %v1927, %v1929
    %v1931 = vrot.slane %v1910, 2
    %v1932 = vsel %vm446, %v1929, %v1931
    %v1939 = vadd.f32 %v1895, %v1921
    %v1940 = vadd.f32 %v1896, %v1923
    %v1941 = vadd.f32 %v1897, %v1925
    %v1942 = vadd.f32 %v1898, %v1928
    %v1943 = vadd.f32 %v1899, %v1930
    %v1944 = vadd.f32 %v1900, %v1932
    %s1945 = sld [smem:[#allocation7 + $0x4]]
    %v1946 = vstv %s1945
    %v1947 = vmul.f32 %v1946, %v1653
    %v1948 = vmul.f32 %v1946, %v1654
    %v1949 = vmul.f32 %v1946, %v1655
    %v1950 = vmul.f32 %v1946, %v1656
    %v1951 = vmul.f32 %v1946, %v1657
    %v1952 = vmul.f32 %v1946, %v1658
    %v1953 = vmul.f32 %v1946, %v1659
    %v1954 = vmul.f32 %v1946, %v1660
    %v1963 = vrot.slane %v1947, 2
    %v1964 = vrot.slane %v1948, 2
    %v1965 = vsel %vm446, %v1963, %v1964
    %v1966 = vrot.slane %v1949, 2
    %v1967 = vsel %vm446, %v1964, %v1966
    %v1968 = vrot.slane %v1950, 2
    %v1969 = vsel %vm446, %v1966, %v1968
    %v1970 = vrot.slane %v1951, 2
    %v1971 = vrot.slane %v1952, 2
    %v1972 = vsel %vm446, %v1970, %v1971
    %v1973 = vrot.slane %v1953, 2
    %v1974 = vsel %vm446, %v1971, %v1973
    %v1975 = vrot.slane %v1954, 2
    %v1976 = vsel %vm446, %v1973, %v1975
    %1977 = vrot.lane.b32.xlu0 %v1965, 126
    %v1978 = vpop.permute.xlu0 %1977
    %1979 = vrot.lane.b32.xlu0 %v1967, 126
    %v1980 = vpop.permute.xlu0 %1979
    %1981 = vrot.lane.b32.xlu0 %v1969, 126
    %v1982 = vpop.permute.xlu0 %1981
    %1983 = vrot.lane.b32.xlu0 %v1972, 126
    %v1984 = vpop.permute.xlu0 %1983
    %1985 = vrot.lane.b32.xlu0 %v1974, 126
    %v1986 = vpop.permute.xlu0 %1985
    %1987 = vrot.lane.b32.xlu0 %v1976, 126
    %v1988 = vpop.permute.xlu0 %1987
    %v1995 = vadd.f32 %v1939, %v1978
    %v1996 = vadd.f32 %v1940, %v1980
    %v1997 = vadd.f32 %v1941, %v1982
    %v1998 = vadd.f32 %v1942, %v1984
    %v1999 = vadd.f32 %v1943, %v1986
    %v2000 = vadd.f32 %v1944, %v1988
    %s2001 = sld [smem:[#allocation7 + $0x5]]
    %v2002 = vstv %s2001
    %v2003 = vmul.f32 %v2002, %v1653
    %v2004 = vmul.f32 %v2002, %v1654
    %v2005 = vmul.f32 %v2002, %v1655
    %v2006 = vmul.f32 %v2002, %v1656
    %v2007 = vmul.f32 %v2002, %v1657
    %v2008 = vmul.f32 %v2002, %v1658
    %v2009 = vmul.f32 %v2002, %v1659
    %v2010 = vmul.f32 %v2002, %v1660
    %v2019 = vrot.slane %v2003, 2
    %v2020 = vrot.slane %v2004, 2
    %v2021 = vsel %vm446, %v2019, %v2020
    %v2022 = vrot.slane %v2005, 2
    %v2023 = vsel %vm446, %v2020, %v2022
    %v2024 = vrot.slane %v2006, 2
    %v2025 = vsel %vm446, %v2022, %v2024
    %v2026 = vrot.slane %v2007, 2
    %v2027 = vrot.slane %v2008, 2
    %v2028 = vsel %vm446, %v2026, %v2027
    %v2029 = vrot.slane %v2009, 2
    %v2030 = vsel %vm446, %v2027, %v2029
    %v2031 = vrot.slane %v2010, 2
    %v2032 = vsel %vm446, %v2029, %v2031
    %2033 = vrot.lane.b32.xlu0 %v2021, 124
    %v2034 = vpop.permute.xlu0 %2033
    %2035 = vrot.lane.b32.xlu0 %v2023, 124
    %v2036 = vpop.permute.xlu0 %2035
    %2037 = vrot.lane.b32.xlu0 %v2025, 124
    %v2038 = vpop.permute.xlu0 %2037
    %2039 = vrot.lane.b32.xlu0 %v2028, 124
    %v2040 = vpop.permute.xlu0 %2039
    %2041 = vrot.lane.b32.xlu0 %v2030, 124
    %v2042 = vpop.permute.xlu0 %2041
    %2043 = vrot.lane.b32.xlu0 %v2032, 124
    %v2044 = vpop.permute.xlu0 %2043
    %v2051 = vadd.f32 %v1995, %v2034
    %v2052 = vadd.f32 %v1996, %v2036
    %v2053 = vadd.f32 %v1997, %v2038
    %v2054 = vadd.f32 %v1998, %v2040
    %v2055 = vadd.f32 %v1999, %v2042
    %v2056 = vadd.f32 %v2000, %v2044
    %s2057 = sld [smem:[#allocation7 + $0x6]]
    %v2058 = vstv %s2057
    %v2059 = vmul.f32 %v2058, %v1653
    %v2060 = vmul.f32 %v2058, %v1654
    %v2061 = vmul.f32 %v2058, %v1655
    %v2062 = vmul.f32 %v2058, %v1656
    %v2063 = vmul.f32 %v2058, %v1657
    %v2064 = vmul.f32 %v2058, %v1658
    %v2065 = vmul.f32 %v2058, %v1659
    %v2066 = vmul.f32 %v2058, %v1660
    %vm2075 = vcmask 1043456
    %v2076 = vrot.slane %v2059, 4
    %v2077 = vrot.slane %v2060, 4
    %v2078 = vsel %vm2075, %v2076, %v2077
    %v2079 = vrot.slane %v2061, 4
    %v2080 = vsel %vm2075, %v2077, %v2079
    %v2081 = vrot.slane %v2062, 4
    %v2082 = vsel %vm2075, %v2079, %v2081
    %v2083 = vrot.slane %v2063, 4
    %v2084 = vrot.slane %v2064, 4
    %v2085 = vsel %vm2075, %v2083, %v2084
    %v2086 = vrot.slane %v2065, 4
    %v2087 = vsel %vm2075, %v2084, %v2086
    %v2088 = vrot.slane %v2066, 4
    %v2089 = vsel %vm2075, %v2086, %v2088
    %v2096 = vadd.f32 %v2051, %v2078
    %v2097 = vadd.f32 %v2052, %v2080
    %v2098 = vadd.f32 %v2053, %v2082
    %v2099 = vadd.f32 %v2054, %v2085
    %v2100 = vadd.f32 %v2055, %v2087
    %v2101 = vadd.f32 %v2056, %v2089
    %s2102 = sld [smem:[#allocation7 + $0x7]]
    %v2103 = vstv %s2102
    %v2104 = vmul.f32 %v2103, %v1653
    %v2105 = vmul.f32 %v2103, %v1654
    %v2106 = vmul.f32 %v2103, %v1655
    %v2107 = vmul.f32 %v2103, %v1656
    %v2108 = vmul.f32 %v2103, %v1657
    %v2109 = vmul.f32 %v2103, %v1658
    %v2110 = vmul.f32 %v2103, %v1659
    %v2111 = vmul.f32 %v2103, %v1660
    %v2120 = vrot.slane %v2104, 4
    %v2121 = vrot.slane %v2105, 4
    %v2122 = vsel %vm2075, %v2120, %v2121
    %v2123 = vrot.slane %v2106, 4
    %v2124 = vsel %vm2075, %v2121, %v2123
    %v2125 = vrot.slane %v2107, 4
    %v2126 = vsel %vm2075, %v2123, %v2125
    %v2127 = vrot.slane %v2108, 4
    %v2128 = vrot.slane %v2109, 4
    %v2129 = vsel %vm2075, %v2127, %v2128
    %v2130 = vrot.slane %v2110, 4
    %v2131 = vsel %vm2075, %v2128, %v2130
    %v2132 = vrot.slane %v2111, 4
    %v2133 = vsel %vm2075, %v2130, %v2132
    %2134 = vrot.lane.b32.xlu0 %v2122, 126
    %v2135 = vpop.permute.xlu0 %2134
    %2136 = vrot.lane.b32.xlu0 %v2124, 126
    %v2137 = vpop.permute.xlu0 %2136
    %2138 = vrot.lane.b32.xlu0 %v2126, 126
    %v2139 = vpop.permute.xlu0 %2138
    %2140 = vrot.lane.b32.xlu0 %v2129, 126
    %v2141 = vpop.permute.xlu0 %2140
    %2142 = vrot.lane.b32.xlu0 %v2131, 126
    %v2143 = vpop.permute.xlu0 %2142
    %2144 = vrot.lane.b32.xlu0 %v2133, 126
    %v2145 = vpop.permute.xlu0 %2144
    %v2152 = vadd.f32 %v2096, %v2135
    %v2153 = vadd.f32 %v2097, %v2137
    %v2154 = vadd.f32 %v2098, %v2139
    %v2155 = vadd.f32 %v2099, %v2141
    %v2156 = vadd.f32 %v2100, %v2143
    %v2157 = vadd.f32 %v2101, %v2145
    %s2158 = sld [smem:[#allocation7 + $0x8]]
    %v2159 = vstv %s2158
    %v2160 = vmul.f32 %v2159, %v1653
    %v2161 = vmul.f32 %v2159, %v1654
    %v2162 = vmul.f32 %v2159, %v1655
    %v2163 = vmul.f32 %v2159, %v1656
    %v2164 = vmul.f32 %v2159, %v1657
    %v2165 = vmul.f32 %v2159, %v1658
    %v2166 = vmul.f32 %v2159, %v1659
    %v2167 = vmul.f32 %v2159, %v1660
    %v2176 = vrot.slane %v2160, 4
    %v2177 = vrot.slane %v2161, 4
    %v2178 = vsel %vm2075, %v2176, %v2177
    %v2179 = vrot.slane %v2162, 4
    %v2180 = vsel %vm2075, %v2177, %v2179
    %v2181 = vrot.slane %v2163, 4
    %v2182 = vsel %vm2075, %v2179, %v2181
    %v2183 = vrot.slane %v2164, 4
    %v2184 = vrot.slane %v2165, 4
    %v2185 = vsel %vm2075, %v2183, %v2184
    %v2186 = vrot.slane %v2166, 4
    %v2187 = vsel %vm2075, %v2184, %v2186
    %v2188 = vrot.slane %v2167, 4
    %v2189 = vsel %vm2075, %v2186, %v2188
    %2190 = vrot.lane.b32.xlu0 %v2178, 124
    %v2191 = vpop.permute.xlu0 %2190
    %2192 = vrot.lane.b32.xlu0 %v2180, 124
    %v2193 = vpop.permute.xlu0 %2192
    %2194 = vrot.lane.b32.xlu0 %v2182, 124
    %v2195 = vpop.permute.xlu0 %2194
    %2196 = vrot.lane.b32.xlu0 %v2185, 124
    %v2197 = vpop.permute.xlu0 %2196
    %2198 = vrot.lane.b32.xlu0 %v2187, 124
    %v2199 = vpop.permute.xlu0 %2198
    %2200 = vrot.lane.b32.xlu0 %v2189, 124
    %v2201 = vpop.permute.xlu0 %2200
    %v2208 = vadd.f32 %v2152, %v2191
    %v2209 = vadd.f32 %v2153, %v2193
    %v2210 = vadd.f32 %v2154, %v2195
    %v2211 = vadd.f32 %v2155, %v2197
    %v2212 = vadd.f32 %v2156, %v2199
    %v2213 = vadd.f32 %v2157, %v2201
    %s2214 = sld [smem:[#allocation7 + $0x9]]
    %v2215 = vstv %s2214
    %v2216 = vmul.f32 %v2215, %v1731
    %v2217 = vmul.f32 %v2215, %v1732
    %v2218 = vmul.f32 %v2215, %v1733
    %v2219 = vmul.f32 %v2215, %v1735
    %v2220 = vmul.f32 %v2215, %v1736
    %v2221 = vmul.f32 %v2215, %v1737
    %v2222 = vadd.f32 %v2208, %v2216
    %v2223 = vadd.f32 %v2209, %v2217
    %v2224 = vadd.f32 %v2210, %v2218
    %v2225 = vadd.f32 %v2211, %v2219
    %v2226 = vadd.f32 %v2212, %v2220
    %v2227 = vadd.f32 %v2213, %v2221
    %s2228 = sld [smem:[#allocation7 + $0xa]]
    %v2229 = vstv %s2228
    %v2230 = vmul.f32 %v2229, %v1731
    %v2231 = vmul.f32 %v2229, %v1732
    %v2232 = vmul.f32 %v2229, %v1733
    %v2233 = vmul.f32 %v2229, %v1735
    %v2234 = vmul.f32 %v2229, %v1736
    %v2235 = vmul.f32 %v2229, %v1737
    %2242 = vrot.lane.b32.xlu0 %v2230, 126
    %v2243 = vpop.permute.xlu0 %2242
    %2244 = vrot.lane.b32.xlu0 %v2231, 126
    %v2245 = vpop.permute.xlu0 %2244
    %2246 = vrot.lane.b32.xlu0 %v2232, 126
    %v2247 = vpop.permute.xlu0 %2246
    %2248 = vrot.lane.b32.xlu0 %v2233, 126
    %v2249 = vpop.permute.xlu0 %2248
    %2250 = vrot.lane.b32.xlu0 %v2234, 126
    %v2251 = vpop.permute.xlu0 %2250
    %2252 = vrot.lane.b32.xlu0 %v2235, 126
    %v2253 = vpop.permute.xlu0 %2252
    %v2260 = vadd.f32 %v2222, %v2243
    %v2261 = vadd.f32 %v2223, %v2245
    %v2262 = vadd.f32 %v2224, %v2247
    %v2263 = vadd.f32 %v2225, %v2249
    %v2264 = vadd.f32 %v2226, %v2251
    %v2265 = vadd.f32 %v2227, %v2253
    %s2266 = sld [smem:[#allocation7 + $0xb]]
    %v2267 = vstv %s2266
    %v2268 = vmul.f32 %v2267, %v1731
    %v2269 = vmul.f32 %v2267, %v1732
    %v2270 = vmul.f32 %v2267, %v1733
    %v2271 = vmul.f32 %v2267, %v1735
    %v2272 = vmul.f32 %v2267, %v1736
    %v2273 = vmul.f32 %v2267, %v1737
    %2280 = vrot.lane.b32.xlu0 %v2268, 124
    %v2281 = vpop.permute.xlu0 %2280
    %2282 = vrot.lane.b32.xlu0 %v2269, 124
    %v2283 = vpop.permute.xlu0 %2282
    %2284 = vrot.lane.b32.xlu0 %v2270, 124
    %v2285 = vpop.permute.xlu0 %2284
    %2286 = vrot.lane.b32.xlu0 %v2271, 124
    %v2287 = vpop.permute.xlu0 %2286
    %2288 = vrot.lane.b32.xlu0 %v2272, 124
    %v2289 = vpop.permute.xlu0 %2288
    %2290 = vrot.lane.b32.xlu0 %v2273, 124
    %v2291 = vpop.permute.xlu0 %2290
    %v2298 = vadd.f32 %v2260, %v2281
    %v2299 = vadd.f32 %v2261, %v2283
    %v2300 = vadd.f32 %v2262, %v2285
    %v2301 = vadd.f32 %v2263, %v2287
    %v2302 = vadd.f32 %v2264, %v2289
    %v2303 = vadd.f32 %v2265, %v2291
    %s2304 = sld [smem:[#allocation7 + $0xc]]
    %v2305 = vstv %s2304
    %v2306 = vmul.f32 %v2305, %v1731
    %v2307 = vmul.f32 %v2305, %v1732
    %v2308 = vmul.f32 %v2305, %v1733
    %v2309 = vmul.f32 %v2305, %v1734
    %v2310 = vmul.f32 %v2305, %v1735
    %v2311 = vmul.f32 %v2305, %v1736
    %v2312 = vmul.f32 %v2305, %v1737
    %v2313 = vmul.f32 %v2305, %v1738
    %v2322 = vrot.slane %v2306, 2
    %v2323 = vrot.slane %v2307, 2
    %v2324 = vsel %vm446, %v2322, %v2323
    %v2325 = vrot.slane %v2308, 2
    %v2326 = vsel %vm446, %v2323, %v2325
    %v2327 = vrot.slane %v2309, 2
    %v2328 = vsel %vm446, %v2325, %v2327
    %v2329 = vrot.slane %v2310, 2
    %v2330 = vrot.slane %v2311, 2
    %v2331 = vsel %vm446, %v2329, %v2330
    %v2332 = vrot.slane %v2312, 2
    %v2333 = vsel %vm446, %v2330, %v2332
    %v2334 = vrot.slane %v2313, 2
    %v2335 = vsel %vm446, %v2332, %v2334
    %v2342 = vadd.f32 %v2298, %v2324
    %v2343 = vadd.f32 %v2299, %v2326
    %v2344 = vadd.f32 %v2300, %v2328
    %v2345 = vadd.f32 %v2301, %v2331
    %v2346 = vadd.f32 %v2302, %v2333
    %v2347 = vadd.f32 %v2303, %v2335
    %s2348 = sld [smem:[#allocation7 + $0xd]]
    %v2349 = vstv %s2348
    %v2350 = vmul.f32 %v2349, %v1731
    %v2351 = vmul.f32 %v2349, %v1732
    %v2352 = vmul.f32 %v2349, %v1733
    %v2353 = vmul.f32 %v2349, %v1734
    %v2354 = vmul.f32 %v2349, %v1735
    %v2355 = vmul.f32 %v2349, %v1736
    %v2356 = vmul.f32 %v2349, %v1737
    %v2357 = vmul.f32 %v2349, %v1738
    %v2366 = vrot.slane %v2350, 2
    %v2367 = vrot.slane %v2351, 2
    %v2368 = vsel %vm446, %v2366, %v2367
    %v2369 = vrot.slane %v2352, 2
    %v2370 = vsel %vm446, %v2367, %v2369
    %v2371 = vrot.slane %v2353, 2
    %v2372 = vsel %vm446, %v2369, %v2371
    %v2373 = vrot.slane %v2354, 2
    %v2374 = vrot.slane %v2355, 2
    %v2375 = vsel %vm446, %v2373, %v2374
    %v2376 = vrot.slane %v2356, 2
    %v2377 = vsel %vm446, %v2374, %v2376
    %v2378 = vrot.slane %v2357, 2
    %v2379 = vsel %vm446, %v2376, %v2378
    %2380 = vrot.lane.b32.xlu0 %v2368, 126
    %v2381 = vpop.permute.xlu0 %2380
    %2382 = vrot.lane.b32.xlu0 %v2370, 126
    %v2383 = vpop.permute.xlu0 %2382
    %2384 = vrot.lane.b32.xlu0 %v2372, 126
    %v2385 = vpop.permute.xlu0 %2384
    %2386 = vrot.lane.b32.xlu0 %v2375, 126
    %v2387 = vpop.permute.xlu0 %2386
    %2388 = vrot.lane.b32.xlu0 %v2377, 126
    %v2389 = vpop.permute.xlu0 %2388
    %2390 = vrot.lane.b32.xlu0 %v2379, 126
    %v2391 = vpop.permute.xlu0 %2390
    %v2398 = vadd.f32 %v2342, %v2381
    %v2399 = vadd.f32 %v2343, %v2383
    %v2400 = vadd.f32 %v2344, %v2385
    %v2401 = vadd.f32 %v2345, %v2387
    %v2402 = vadd.f32 %v2346, %v2389
    %v2403 = vadd.f32 %v2347, %v2391
    %s2404 = sld [smem:[#allocation7 + $0xe]]
    %v2405 = vstv %s2404
    %v2406 = vmul.f32 %v2405, %v1731
    %v2407 = vmul.f32 %v2405, %v1732
    %v2408 = vmul.f32 %v2405, %v1733
    %v2409 = vmul.f32 %v2405, %v1734
    %v2410 = vmul.f32 %v2405, %v1735
    %v2411 = vmul.f32 %v2405, %v1736
    %v2412 = vmul.f32 %v2405, %v1737
    %v2413 = vmul.f32 %v2405, %v1738
    %v2422 = vrot.slane %v2406, 2
    %v2423 = vrot.slane %v2407, 2
    %v2424 = vsel %vm446, %v2422, %v2423
    %v2425 = vrot.slane %v2408, 2
    %v2426 = vsel %vm446, %v2423, %v2425
    %v2427 = vrot.slane %v2409, 2
    %v2428 = vsel %vm446, %v2425, %v2427
    %v2429 = vrot.slane %v2410, 2
    %v2430 = vrot.slane %v2411, 2
    %v2431 = vsel %vm446, %v2429, %v2430
    %v2432 = vrot.slane %v2412, 2
    %v2433 = vsel %vm446, %v2430, %v2432
    %v2434 = vrot.slane %v2413, 2
    %v2435 = vsel %vm446, %v2432, %v2434
    %2436 = vrot.lane.b32.xlu0 %v2424, 124
    %v2437 = vpop.permute.xlu0 %2436
    %2438 = vrot.lane.b32.xlu0 %v2426, 124
    %v2439 = vpop.permute.xlu0 %2438
    %2440 = vrot.lane.b32.xlu0 %v2428, 124
    %v2441 = vpop.permute.xlu0 %2440
    %2442 = vrot.lane.b32.xlu0 %v2431, 124
    %v2443 = vpop.permute.xlu0 %2442
    %2444 = vrot.lane.b32.xlu0 %v2433, 124
    %v2445 = vpop.permute.xlu0 %2444
    %2446 = vrot.lane.b32.xlu0 %v2435, 124
    %v2447 = vpop.permute.xlu0 %2446
    %v2454 = vadd.f32 %v2398, %v2437
    %v2455 = vadd.f32 %v2399, %v2439
    %v2456 = vadd.f32 %v2400, %v2441
    %v2457 = vadd.f32 %v2401, %v2443
    %v2458 = vadd.f32 %v2402, %v2445
    %v2459 = vadd.f32 %v2403, %v2447
    %s2460 = sld [smem:[#allocation7 + $0xf]]
    %v2461 = vstv %s2460
    %v2462 = vmul.f32 %v2461, %v1731
    %v2463 = vmul.f32 %v2461, %v1732
    %v2464 = vmul.f32 %v2461, %v1733
    %v2465 = vmul.f32 %v2461, %v1734
    %v2466 = vmul.f32 %v2461, %v1735
    %v2467 = vmul.f32 %v2461, %v1736
    %v2468 = vmul.f32 %v2461, %v1737
    %v2469 = vmul.f32 %v2461, %v1738
    %v2478 = vrot.slane %v2462, 4
    %v2479 = vrot.slane %v2463, 4
    %v2480 = vsel %vm2075, %v2478, %v2479
    %v2481 = vrot.slane %v2464, 4
    %v2482 = vsel %vm2075, %v2479, %v2481
    %v2483 = vrot.slane %v2465, 4
    %v2484 = vsel %vm2075, %v2481, %v2483
    %v2485 = vrot.slane %v2466, 4
    %v2486 = vrot.slane %v2467, 4
    %v2487 = vsel %vm2075, %v2485, %v2486
    %v2488 = vrot.slane %v2468, 4
    %v2489 = vsel %vm2075, %v2486, %v2488
    %v2490 = vrot.slane %v2469, 4
    %v2491 = vsel %vm2075, %v2488, %v2490
    %v2498 = vadd.f32 %v2454, %v2480
    %v2499 = vadd.f32 %v2455, %v2482
    %v2500 = vadd.f32 %v2456, %v2484
    %v2501 = vadd.f32 %v2457, %v2487
    %v2502 = vadd.f32 %v2458, %v2489
    %v2503 = vadd.f32 %v2459, %v2491
    %s2504 = sld [smem:[#allocation7 + $0x10]]
    %v2505 = vstv %s2504
    %v2506 = vmul.f32 %v2505, %v1731
    %v2507 = vmul.f32 %v2505, %v1732
    %v2508 = vmul.f32 %v2505, %v1733
    %v2509 = vmul.f32 %v2505, %v1734
    %v2510 = vmul.f32 %v2505, %v1735
    %v2511 = vmul.f32 %v2505, %v1736
    %v2512 = vmul.f32 %v2505, %v1737
    %v2513 = vmul.f32 %v2505, %v1738
    %v2522 = vrot.slane %v2506, 4
    %v2523 = vrot.slane %v2507, 4
    %v2524 = vsel %vm2075, %v2522, %v2523
    %v2525 = vrot.slane %v2508, 4
    %v2526 = vsel %vm2075, %v2523, %v2525
    %v2527 = vrot.slane %v2509, 4
    %v2528 = vsel %vm2075, %v2525, %v2527
    %v2529 = vrot.slane %v2510, 4
    %v2530 = vrot.slane %v2511, 4
    %v2531 = vsel %vm2075, %v2529, %v2530
    %v2532 = vrot.slane %v2512, 4
    %v2533 = vsel %vm2075, %v2530, %v2532
    %v2534 = vrot.slane %v2513, 4
    %v2535 = vsel %vm2075, %v2532, %v2534
    %2536 = vrot.lane.b32.xlu0 %v2524, 126
    %v2537 = vpop.permute.xlu0 %2536
    %2538 = vrot.lane.b32.xlu0 %v2526, 126
    %v2539 = vpop.permute.xlu0 %2538
    %2540 = vrot.lane.b32.xlu0 %v2528, 126
    %v2541 = vpop.permute.xlu0 %2540
    %2542 = vrot.lane.b32.xlu0 %v2531, 126
    %v2543 = vpop.permute.xlu0 %2542
    %2544 = vrot.lane.b32.xlu0 %v2533, 126
    %v2545 = vpop.permute.xlu0 %2544
    %2546 = vrot.lane.b32.xlu0 %v2535, 126
    %v2547 = vpop.permute.xlu0 %2546
    %v2554 = vadd.f32 %v2498, %v2537
    %v2555 = vadd.f32 %v2499, %v2539
    %v2556 = vadd.f32 %v2500, %v2541
    %v2557 = vadd.f32 %v2501, %v2543
    %v2558 = vadd.f32 %v2502, %v2545
    %v2559 = vadd.f32 %v2503, %v2547
    %s2560 = sld [smem:[#allocation7 + $0x11]]
    %v2561 = vstv %s2560
    %v2562 = vmul.f32 %v2561, %v1731
    %v2563 = vmul.f32 %v2561, %v1732
    %v2564 = vmul.f32 %v2561, %v1733
    %v2565 = vmul.f32 %v2561, %v1734
    %v2566 = vmul.f32 %v2561, %v1735
    %v2567 = vmul.f32 %v2561, %v1736
    %v2568 = vmul.f32 %v2561, %v1737
    %v2569 = vmul.f32 %v2561, %v1738
    %v2578 = vrot.slane %v2562, 4
    %v2579 = vrot.slane %v2563, 4
    %v2580 = vsel %vm2075, %v2578, %v2579
    %v2581 = vrot.slane %v2564, 4
    %v2582 = vsel %vm2075, %v2579, %v2581
    %v2583 = vrot.slane %v2565, 4
    %v2584 = vsel %vm2075, %v2581, %v2583
    %v2585 = vrot.slane %v2566, 4
    %v2586 = vrot.slane %v2567, 4
    %v2587 = vsel %vm2075, %v2585, %v2586
    %v2588 = vrot.slane %v2568, 4
    %v2589 = vsel %vm2075, %v2586, %v2588
    %v2590 = vrot.slane %v2569, 4
    %v2591 = vsel %vm2075, %v2588, %v2590
    %2592 = vrot.lane.b32.xlu0 %v2580, 124
    %v2593 = vpop.permute.xlu0 %2592
    %2594 = vrot.lane.b32.xlu0 %v2582, 124
    %v2595 = vpop.permute.xlu0 %2594
    %2596 = vrot.lane.b32.xlu0 %v2584, 124
    %v2597 = vpop.permute.xlu0 %2596
    %2598 = vrot.lane.b32.xlu0 %v2587, 124
    %v2599 = vpop.permute.xlu0 %2598
    %2600 = vrot.lane.b32.xlu0 %v2589, 124
    %v2601 = vpop.permute.xlu0 %2600
    %2602 = vrot.lane.b32.xlu0 %v2591, 124
    %v2603 = vpop.permute.xlu0 %2602
    %v2610 = vadd.f32 %v2554, %v2593
    %v2611 = vadd.f32 %v2555, %v2595
    %v2612 = vadd.f32 %v2556, %v2597
    %v2613 = vadd.f32 %v2557, %v2599
    %v2614 = vadd.f32 %v2558, %v2601
    %v2615 = vadd.f32 %v2559, %v2603
    %s2616 = sld [smem:[#allocation7 + $0x12]]
    %v2617 = vstv %s2616
    %v2618 = vmul.f32 %v2617, %v1809
    %v2619 = vmul.f32 %v2617, %v1810
    %v2620 = vmul.f32 %v2617, %v1811
    %v2621 = vmul.f32 %v2617, %v1813
    %v2622 = vmul.f32 %v2617, %v1814
    %v2623 = vmul.f32 %v2617, %v1815
    %v2624 = vadd.f32 %v2610, %v2618
    %v2625 = vadd.f32 %v2611, %v2619
    %v2626 = vadd.f32 %v2612, %v2620
    %v2627 = vadd.f32 %v2613, %v2621
    %v2628 = vadd.f32 %v2614, %v2622
    %v2629 = vadd.f32 %v2615, %v2623
    %s2630 = sld [smem:[#allocation7 + $0x13]]
    %v2631 = vstv %s2630
    %v2632 = vmul.f32 %v2631, %v1809
    %v2633 = vmul.f32 %v2631, %v1810
    %v2634 = vmul.f32 %v2631, %v1811
    %v2635 = vmul.f32 %v2631, %v1813
    %v2636 = vmul.f32 %v2631, %v1814
    %v2637 = vmul.f32 %v2631, %v1815
    %2644 = vrot.lane.b32.xlu0 %v2632, 126
    %v2645 = vpop.permute.xlu0 %2644
    %2646 = vrot.lane.b32.xlu0 %v2633, 126
    %v2647 = vpop.permute.xlu0 %2646
    %2648 = vrot.lane.b32.xlu0 %v2634, 126
    %v2649 = vpop.permute.xlu0 %2648
    %2650 = vrot.lane.b32.xlu0 %v2635, 126
    %v2651 = vpop.permute.xlu0 %2650
    %2652 = vrot.lane.b32.xlu0 %v2636, 126
    %v2653 = vpop.permute.xlu0 %2652
    %2654 = vrot.lane.b32.xlu0 %v2637, 126
    %v2655 = vpop.permute.xlu0 %2654
    %v2662 = vadd.f32 %v2624, %v2645
    %v2663 = vadd.f32 %v2625, %v2647
    %v2664 = vadd.f32 %v2626, %v2649
    %v2665 = vadd.f32 %v2627, %v2651
    %v2666 = vadd.f32 %v2628, %v2653
    %v2667 = vadd.f32 %v2629, %v2655
    %s2668 = sld [smem:[#allocation7 + $0x14]]
    %v2669 = vstv %s2668
    %v2670 = vmul.f32 %v2669, %v1809
    %v2671 = vmul.f32 %v2669, %v1810
    %v2672 = vmul.f32 %v2669, %v1811
    %v2673 = vmul.f32 %v2669, %v1813
    %v2674 = vmul.f32 %v2669, %v1814
    %v2675 = vmul.f32 %v2669, %v1815
    %2682 = vrot.lane.b32.xlu0 %v2670, 124
    %v2683 = vpop.permute.xlu0 %2682
    %2684 = vrot.lane.b32.xlu0 %v2671, 124
    %v2685 = vpop.permute.xlu0 %2684
    %2686 = vrot.lane.b32.xlu0 %v2672, 124
    %v2687 = vpop.permute.xlu0 %2686
    %2688 = vrot.lane.b32.xlu0 %v2673, 124
    %v2689 = vpop.permute.xlu0 %2688
    %2690 = vrot.lane.b32.xlu0 %v2674, 124
    %v2691 = vpop.permute.xlu0 %2690
    %2692 = vrot.lane.b32.xlu0 %v2675, 124
    %v2693 = vpop.permute.xlu0 %2692
    %v2700 = vadd.f32 %v2662, %v2683
    %v2701 = vadd.f32 %v2663, %v2685
    %v2702 = vadd.f32 %v2664, %v2687
    %v2703 = vadd.f32 %v2665, %v2689
    %v2704 = vadd.f32 %v2666, %v2691
    %v2705 = vadd.f32 %v2667, %v2693
    %s2706 = sld [smem:[#allocation7 + $0x15]]
    %v2707 = vstv %s2706
    %v2708 = vmul.f32 %v2707, %v1809
    %v2709 = vmul.f32 %v2707, %v1810
    %v2710 = vmul.f32 %v2707, %v1811
    %v2711 = vmul.f32 %v2707, %v1812
    %v2712 = vmul.f32 %v2707, %v1813
    %v2713 = vmul.f32 %v2707, %v1814
    %v2714 = vmul.f32 %v2707, %v1815
    %v2715 = vmul.f32 %v2707, %v1816
    %v2724 = vrot.slane %v2708, 2
    %v2725 = vrot.slane %v2709, 2
    %v2726 = vsel %vm446, %v2724, %v2725
    %v2727 = vrot.slane %v2710, 2
    %v2728 = vsel %vm446, %v2725, %v2727
    %v2729 = vrot.slane %v2711, 2
    %v2730 = vsel %vm446, %v2727, %v2729
    %v2731 = vrot.slane %v2712, 2
    %v2732 = vrot.slane %v2713, 2
    %v2733 = vsel %vm446, %v2731, %v2732
    %v2734 = vrot.slane %v2714, 2
    %v2735 = vsel %vm446, %v2732, %v2734
    %v2736 = vrot.slane %v2715, 2
    %v2737 = vsel %vm446, %v2734, %v2736
    %v2744 = vadd.f32 %v2700, %v2726
    %v2745 = vadd.f32 %v2701, %v2728
    %v2746 = vadd.f32 %v2702, %v2730
    %v2747 = vadd.f32 %v2703, %v2733
    %v2748 = vadd.f32 %v2704, %v2735
    %v2749 = vadd.f32 %v2705, %v2737
    %s2750 = sld [smem:[#allocation7 + $0x16]]
    %v2751 = vstv %s2750
    %v2752 = vmul.f32 %v2751, %v1809
    %v2753 = vmul.f32 %v2751, %v1810
    %v2754 = vmul.f32 %v2751, %v1811
    %v2755 = vmul.f32 %v2751, %v1812
    %v2756 = vmul.f32 %v2751, %v1813
    %v2757 = vmul.f32 %v2751, %v1814
    %v2758 = vmul.f32 %v2751, %v1815
    %v2759 = vmul.f32 %v2751, %v1816
    %v2768 = vrot.slane %v2752, 2
    %v2769 = vrot.slane %v2753, 2
    %v2770 = vsel %vm446, %v2768, %v2769
    %v2771 = vrot.slane %v2754, 2
    %v2772 = vsel %vm446, %v2769, %v2771
    %v2773 = vrot.slane %v2755, 2
    %v2774 = vsel %vm446, %v2771, %v2773
    %v2775 = vrot.slane %v2756, 2
    %v2776 = vrot.slane %v2757, 2
    %v2777 = vsel %vm446, %v2775, %v2776
    %v2778 = vrot.slane %v2758, 2
    %v2779 = vsel %vm446, %v2776, %v2778
    %v2780 = vrot.slane %v2759, 2
    %v2781 = vsel %vm446, %v2778, %v2780
    %2782 = vrot.lane.b32.xlu0 %v2770, 126
    %v2783 = vpop.permute.xlu0 %2782
    %2784 = vrot.lane.b32.xlu0 %v2772, 126
    %v2785 = vpop.permute.xlu0 %2784
    %2786 = vrot.lane.b32.xlu0 %v2774, 126
    %v2787 = vpop.permute.xlu0 %2786
    %2788 = vrot.lane.b32.xlu0 %v2777, 126
    %v2789 = vpop.permute.xlu0 %2788
    %2790 = vrot.lane.b32.xlu0 %v2779, 126
    %v2791 = vpop.permute.xlu0 %2790
    %2792 = vrot.lane.b32.xlu0 %v2781, 126
    %v2793 = vpop.permute.xlu0 %2792
    %v2800 = vadd.f32 %v2744, %v2783
    %v2801 = vadd.f32 %v2745, %v2785
    %v2802 = vadd.f32 %v2746, %v2787
    %v2803 = vadd.f32 %v2747, %v2789
    %v2804 = vadd.f32 %v2748, %v2791
    %v2805 = vadd.f32 %v2749, %v2793
    %s2806 = sld [smem:[#allocation7 + $0x17]]
    %v2807 = vstv %s2806
    %v2808 = vmul.f32 %v2807, %v1809
    %v2809 = vmul.f32 %v2807, %v1810
    %v2810 = vmul.f32 %v2807, %v1811
    %v2811 = vmul.f32 %v2807, %v1812
    %v2812 = vmul.f32 %v2807, %v1813
    %v2813 = vmul.f32 %v2807, %v1814
    %v2814 = vmul.f32 %v2807, %v1815
    %v2815 = vmul.f32 %v2807, %v1816
    %v2824 = vrot.slane %v2808, 2
    %v2825 = vrot.slane %v2809, 2
    %v2826 = vsel %vm446, %v2824, %v2825
    %v2827 = vrot.slane %v2810, 2
    %v2828 = vsel %vm446, %v2825, %v2827
    %v2829 = vrot.slane %v2811, 2
    %v2830 = vsel %vm446, %v2827, %v2829
    %v2831 = vrot.slane %v2812, 2
    %v2832 = vrot.slane %v2813, 2
    %v2833 = vsel %vm446, %v2831, %v2832
    %v2834 = vrot.slane %v2814, 2
    %v2835 = vsel %vm446, %v2832, %v2834
    %v2836 = vrot.slane %v2815, 2
    %v2837 = vsel %vm446, %v2834, %v2836
    %2838 = vrot.lane.b32.xlu0 %v2826, 124
    %v2839 = vpop.permute.xlu0 %2838
    %2840 = vrot.lane.b32.xlu0 %v2828, 124
    %v2841 = vpop.permute.xlu0 %2840
    %2842 = vrot.lane.b32.xlu0 %v2830, 124
    %v2843 = vpop.permute.xlu0 %2842
    %2844 = vrot.lane.b32.xlu0 %v2833, 124
    %v2845 = vpop.permute.xlu0 %2844
    %2846 = vrot.lane.b32.xlu0 %v2835, 124
    %v2847 = vpop.permute.xlu0 %2846
    %2848 = vrot.lane.b32.xlu0 %v2837, 124
    %v2849 = vpop.permute.xlu0 %2848
    %v2856 = vadd.f32 %v2800, %v2839
    %v2857 = vadd.f32 %v2801, %v2841
    %v2858 = vadd.f32 %v2802, %v2843
    %v2859 = vadd.f32 %v2803, %v2845
    %v2860 = vadd.f32 %v2804, %v2847
    %v2861 = vadd.f32 %v2805, %v2849
    %s2862 = sld [smem:[#allocation7 + $0x18]]
    %v2863 = vstv %s2862
    %v2864 = vmul.f32 %v2863, %v1809
    %v2865 = vmul.f32 %v2863, %v1810
    %v2866 = vmul.f32 %v2863, %v1811
    %v2867 = vmul.f32 %v2863, %v1812
    %v2868 = vmul.f32 %v2863, %v1813
    %v2869 = vmul.f32 %v2863, %v1814
    %v2870 = vmul.f32 %v2863, %v1815
    %v2871 = vmul.f32 %v2863, %v1816
    %v2880 = vrot.slane %v2864, 4
    %v2881 = vrot.slane %v2865, 4
    %v2882 = vsel %vm2075, %v2880, %v2881
    %v2883 = vrot.slane %v2866, 4
    %v2884 = vsel %vm2075, %v2881, %v2883
    %v2885 = vrot.slane %v2867, 4
    %v2886 = vsel %vm2075, %v2883, %v2885
    %v2887 = vrot.slane %v2868, 4
    %v2888 = vrot.slane %v2869, 4
    %v2889 = vsel %vm2075, %v2887, %v2888
    %v2890 = vrot.slane %v2870, 4
    %v2891 = vsel %vm2075, %v2888, %v2890
    %v2892 = vrot.slane %v2871, 4
    %v2893 = vsel %vm2075, %v2890, %v2892
    %v2900 = vadd.f32 %v2856, %v2882
    %v2901 = vadd.f32 %v2857, %v2884
    %v2902 = vadd.f32 %v2858, %v2886
    %v2903 = vadd.f32 %v2859, %v2889
    %v2904 = vadd.f32 %v2860, %v2891
    %v2905 = vadd.f32 %v2861, %v2893
    %s2906 = sld [smem:[#allocation7 + $0x19]]
    %v2907 = vstv %s2906
    %v2908 = vmul.f32 %v2907, %v1809
    %v2909 = vmul.f32 %v2907, %v1810
    %v2910 = vmul.f32 %v2907, %v1811
    %v2911 = vmul.f32 %v2907, %v1812
    %v2912 = vmul.f32 %v2907, %v1813
    %v2913 = vmul.f32 %v2907, %v1814
    %v2914 = vmul.f32 %v2907, %v1815
    %v2915 = vmul.f32 %v2907, %v1816
    %v2924 = vrot.slane %v2908, 4
    %v2925 = vrot.slane %v2909, 4
    %v2926 = vsel %vm2075, %v2924, %v2925
    %v2927 = vrot.slane %v2910, 4
    %v2928 = vsel %vm2075, %v2925, %v2927
    %v2929 = vrot.slane %v2911, 4
    %v2930 = vsel %vm2075, %v2927, %v2929
    %v2931 = vrot.slane %v2912, 4
    %v2932 = vrot.slane %v2913, 4
    %v2933 = vsel %vm2075, %v2931, %v2932
    %v2934 = vrot.slane %v2914, 4
    %v2935 = vsel %vm2075, %v2932, %v2934
    %v2936 = vrot.slane %v2915, 4
    %v2937 = vsel %vm2075, %v2934, %v2936
    %2938 = vrot.lane.b32.xlu0 %v2926, 126
    %v2939 = vpop.permute.xlu0 %2938
    %2940 = vrot.lane.b32.xlu0 %v2928, 126
    %v2941 = vpop.permute.xlu0 %2940
    %2942 = vrot.lane.b32.xlu0 %v2930, 126
    %v2943 = vpop.permute.xlu0 %2942
    %2944 = vrot.lane.b32.xlu0 %v2933, 126
    %v2945 = vpop.permute.xlu0 %2944
    %2946 = vrot.lane.b32.xlu0 %v2935, 126
    %v2947 = vpop.permute.xlu0 %2946
    %2948 = vrot.lane.b32.xlu0 %v2937, 126
    %v2949 = vpop.permute.xlu0 %2948
    %v2956 = vadd.f32 %v2900, %v2939
    %v2957 = vadd.f32 %v2901, %v2941
    %v2958 = vadd.f32 %v2902, %v2943
    %v2959 = vadd.f32 %v2903, %v2945
    %v2960 = vadd.f32 %v2904, %v2947
    %v2961 = vadd.f32 %v2905, %v2949
    %s2962 = sld [smem:[#allocation7 + $0x1a]]
    %v2963 = vstv %s2962
    %v2964 = vmul.f32 %v2963, %v1809
    %v2965 = vmul.f32 %v2963, %v1810
    %v2966 = vmul.f32 %v2963, %v1811
    %v2967 = vmul.f32 %v2963, %v1812
    %v2968 = vmul.f32 %v2963, %v1813
    %v2969 = vmul.f32 %v2963, %v1814
    %v2970 = vmul.f32 %v2963, %v1815
    %v2971 = vmul.f32 %v2963, %v1816
    %v2980 = vrot.slane %v2964, 4
    %v2981 = vrot.slane %v2965, 4
    %v2982 = vsel %vm2075, %v2980, %v2981
    %v2983 = vrot.slane %v2966, 4
    %v2984 = vsel %vm2075, %v2981, %v2983
    %v2985 = vrot.slane %v2967, 4
    %v2986 = vsel %vm2075, %v2983, %v2985
    %v2987 = vrot.slane %v2968, 4
    %v2988 = vrot.slane %v2969, 4
    %v2989 = vsel %vm2075, %v2987, %v2988
    %v2990 = vrot.slane %v2970, 4
    %v2991 = vsel %vm2075, %v2988, %v2990
    %v2992 = vrot.slane %v2971, 4
    %v2993 = vsel %vm2075, %v2990, %v2992
    %2994 = vrot.lane.b32.xlu0 %v2982, 124
    %v2995 = vpop.permute.xlu0 %2994
    %2996 = vrot.lane.b32.xlu0 %v2984, 124
    %v2997 = vpop.permute.xlu0 %2996
    %2998 = vrot.lane.b32.xlu0 %v2986, 124
    %v2999 = vpop.permute.xlu0 %2998
    %3000 = vrot.lane.b32.xlu0 %v2989, 124
    %v3001 = vpop.permute.xlu0 %3000
    %3002 = vrot.lane.b32.xlu0 %v2991, 124
    %v3003 = vpop.permute.xlu0 %3002
    %3004 = vrot.lane.b32.xlu0 %v2993, 124
    %v3005 = vpop.permute.xlu0 %3004
    %v3012 = vadd.f32 %v2956, %v2995
    %v3013 = vadd.f32 %v2957, %v2997
    %v3014 = vadd.f32 %v2958, %v2999
    %v3015 = vadd.f32 %v2959, %v3001
    %v3016 = vadd.f32 %v2960, %v3003
    %v3017 = vadd.f32 %v2961, %v3005
    %s3018 = sld [smem:[#allocation8]]
    %v3019 = vstv %s3018
    %v3020 = vadd.f32 %v3012, %v3019
    %v3021 = vadd.f32 %v3013, %v3019
    %v3022 = vadd.f32 %v3014, %v3019
    %v3023 = vadd.f32 %v3015, %v3019
    %v3024 = vadd.f32 %v3016, %v3019
    %v3025 = vadd.f32 %v3017, %v3019
    %v3026 = vmax.f32 %v3020, 0.0
    %v3027 = vmax.f32 %v3021, 0.0
    %v3028 = vmax.f32 %v3022, 0.0
    %v3029 = vmax.f32 %v3023, 0.0
    %v3030 = vmax.f32 %v3024, 0.0
    %v3031 = vmax.f32 %v3025, 0.0
    %s3032 = sld [smem:[#allocation7 + $0x1b]]
    %v3033 = vstv %s3032
    %v3034 = vmul.f32 %v3033, %v1653
    %v3035 = vmul.f32 %v3033, %v1654
    %v3036 = vmul.f32 %v3033, %v1655
    %v3037 = vmul.f32 %v3033, %v1657
    %v3038 = vmul.f32 %v3033, %v1658
    %v3039 = vmul.f32 %v3033, %v1659
    %s3040 = sld [smem:[#allocation7 + $0x1c]]
    %v3041 = vstv %s3040
    %v3042 = vmul.f32 %v3041, %v1653
    %v3043 = vmul.f32 %v3041, %v1654
    %v3044 = vmul.f32 %v3041, %v1655
    %v3045 = vmul.f32 %v3041, %v1657
    %v3046 = vmul.f32 %v3041, %v1658
    %v3047 = vmul.f32 %v3041, %v1659
    %3054 = vrot.lane.b32.xlu0 %v3042, 126
    %v3055 = vpop.permute.xlu0 %3054
    %3056 = vrot.lane.b32.xlu0 %v3043, 126
    %v3057 = vpop.permute.xlu0 %3056
    %3058 = vrot.lane.b32.xlu0 %v3044, 126
    %v3059 = vpop.permute.xlu0 %3058
    %3060 = vrot.lane.b32.xlu0 %v3045, 126
    %v3061 = vpop.permute.xlu0 %3060
    %3062 = vrot.lane.b32.xlu0 %v3046, 126
    %v3063 = vpop.permute.xlu0 %3062
    %3064 = vrot.lane.b32.xlu0 %v3047, 126
    %v3065 = vpop.permute.xlu0 %3064
    %v3072 = vadd.f32 %v3034, %v3055
    %v3073 = vadd.f32 %v3035, %v3057
    %v3074 = vadd.f32 %v3036, %v3059
    %v3075 = vadd.f32 %v3037, %v3061
    %v3076 = vadd.f32 %v3038, %v3063
    %v3077 = vadd.f32 %v3039, %v3065
    %s3078 = sld [smem:[#allocation7 + $0x1d]]
    %v3079 = vstv %s3078
    %v3080 = vmul.f32 %v3079, %v1653
    %v3081 = vmul.f32 %v3079, %v1654
    %v3082 = vmul.f32 %v3079, %v1655
    %v3083 = vmul.f32 %v3079, %v1657
    %v3084 = vmul.f32 %v3079, %v1658
    %v3085 = vmul.f32 %v3079, %v1659
    %3092 = vrot.lane.b32.xlu0 %v3080, 124
    %v3093 = vpop.permute.xlu0 %3092
    %3094 = vrot.lane.b32.xlu0 %v3081, 124
    %v3095 = vpop.permute.xlu0 %3094
    %3096 = vrot.lane.b32.xlu0 %v3082, 124
    %v3097 = vpop.permute.xlu0 %3096
    %3098 = vrot.lane.b32.xlu0 %v3083, 124
    %v3099 = vpop.permute.xlu0 %3098
    %3100 = vrot.lane.b32.xlu0 %v3084, 124
    %v3101 = vpop.permute.xlu0 %3100
    %3102 = vrot.lane.b32.xlu0 %v3085, 124
    %v3103 = vpop.permute.xlu0 %3102
    %v3110 = vadd.f32 %v3072, %v3093
    %v3111 = vadd.f32 %v3073, %v3095
    %v3112 = vadd.f32 %v3074, %v3097
    %v3113 = vadd.f32 %v3075, %v3099
    %v3114 = vadd.f32 %v3076, %v3101
    %v3115 = vadd.f32 %v3077, %v3103
    %s3116 = sld [smem:[#allocation7 + $0x1e]]
    %v3117 = vstv %s3116
    %v3118 = vmul.f32 %v3117, %v1653
    %v3119 = vmul.f32 %v3117, %v1654
    %v3120 = vmul.f32 %v3117, %v1655
    %v3121 = vmul.f32 %v3117, %v1656
    %v3122 = vmul.f32 %v3117, %v1657
    %v3123 = vmul.f32 %v3117, %v1658
    %v3124 = vmul.f32 %v3117, %v1659
    %v3125 = vmul.f32 %v3117, %v1660
    %v3134 = vrot.slane %v3118, 2
    %v3135 = vrot.slane %v3119, 2
    %v3136 = vsel %vm446, %v3134, %v3135
    %v3137 = vrot.slane %v3120, 2
    %v3138 = vsel %vm446, %v3135, %v3137
    %v3139 = vrot.slane %v3121, 2
    %v3140 = vsel %vm446, %v3137, %v3139
    %v3141 = vrot.slane %v3122, 2
    %v3142 = vrot.slane %v3123, 2
    %v3143 = vsel %vm446, %v3141, %v3142
    %v3144 = vrot.slane %v3124, 2
    %v3145 = vsel %vm446, %v3142, %v3144
    %v3146 = vrot.slane %v3125, 2
    %v3147 = vsel %vm446, %v3144, %v3146
    %v3154 = vadd.f32 %v3110, %v3136
    %v3155 = vadd.f32 %v3111, %v3138
    %v3156 = vadd.f32 %v3112, %v3140
    %v3157 = vadd.f32 %v3113, %v3143
    %v3158 = vadd.f32 %v3114, %v3145
    %v3159 = vadd.f32 %v3115, %v3147
    %s3160 = sld [smem:[#allocation7 + $0x1f]]
    %v3161 = vstv %s3160
    %v3162 = vmul.f32 %v3161, %v1653
    %v3163 = vmul.f32 %v3161, %v1654
    %v3164 = vmul.f32 %v3161, %v1655
    %v3165 = vmul.f32 %v3161, %v1656
    %v3166 = vmul.f32 %v3161, %v1657
    %v3167 = vmul.f32 %v3161, %v1658
    %v3168 = vmul.f32 %v3161, %v1659
    %v3169 = vmul.f32 %v3161, %v1660
    %v3178 = vrot.slane %v3162, 2
    %v3179 = vrot.slane %v3163, 2
    %v3180 = vsel %vm446, %v3178, %v3179
    %v3181 = vrot.slane %v3164, 2
    %v3182 = vsel %vm446, %v3179, %v3181
    %v3183 = vrot.slane %v3165, 2
    %v3184 = vsel %vm446, %v3181, %v3183
    %v3185 = vrot.slane %v3166, 2
    %v3186 = vrot.slane %v3167, 2
    %v3187 = vsel %vm446, %v3185, %v3186
    %v3188 = vrot.slane %v3168, 2
    %v3189 = vsel %vm446, %v3186, %v3188
    %v3190 = vrot.slane %v3169, 2
    %v3191 = vsel %vm446, %v3188, %v3190
    %3192 = vrot.lane.b32.xlu0 %v3180, 126
    %v3193 = vpop.permute.xlu0 %3192
    %3194 = vrot.lane.b32.xlu0 %v3182, 126
    %v3195 = vpop.permute.xlu0 %3194
    %3196 = vrot.lane.b32.xlu0 %v3184, 126
    %v3197 = vpop.permute.xlu0 %3196
    %3198 = vrot.lane.b32.xlu0 %v3187, 126
    %v3199 = vpop.permute.xlu0 %3198
    %3200 = vrot.lane.b32.xlu0 %v3189, 126
    %v3201 = vpop.permute.xlu0 %3200
    %3202 = vrot.lane.b32.xlu0 %v3191, 126
    %v3203 = vpop.permute.xlu0 %3202
    %v3210 = vadd.f32 %v3154, %v3193
    %v3211 = vadd.f32 %v3155, %v3195
    %v3212 = vadd.f32 %v3156, %v3197
    %v3213 = vadd.f32 %v3157, %v3199
    %v3214 = vadd.f32 %v3158, %v3201
    %v3215 = vadd.f32 %v3159, %v3203
    %s3216 = sld [smem:[#allocation7 + $0x20]]
    %v3217 = vstv %s3216
    %v3218 = vmul.f32 %v3217, %v1653
    %v3219 = vmul.f32 %v3217, %v1654
    %v3220 = vmul.f32 %v3217, %v1655
    %v3221 = vmul.f32 %v3217, %v1656
    %v3222 = vmul.f32 %v3217, %v1657
    %v3223 = vmul.f32 %v3217, %v1658
    %v3224 = vmul.f32 %v3217, %v1659
    %v3225 = vmul.f32 %v3217, %v1660
    %v3234 = vrot.slane %v3218, 2
    %v3235 = vrot.slane %v3219, 2
    %v3236 = vsel %vm446, %v3234, %v3235
    %v3237 = vrot.slane %v3220, 2
    %v3238 = vsel %vm446, %v3235, %v3237
    %v3239 = vrot.slane %v3221, 2
    %v3240 = vsel %vm446, %v3237, %v3239
    %v3241 = vrot.slane %v3222, 2
    %v3242 = vrot.slane %v3223, 2
    %v3243 = vsel %vm446, %v3241, %v3242
    %v3244 = vrot.slane %v3224, 2
    %v3245 = vsel %vm446, %v3242, %v3244
    %v3246 = vrot.slane %v3225, 2
    %v3247 = vsel %vm446, %v3244, %v3246
    %3248 = vrot.lane.b32.xlu0 %v3236, 124
    %v3249 = vpop.permute.xlu0 %3248
    %3250 = vrot.lane.b32.xlu0 %v3238, 124
    %v3251 = vpop.permute.xlu0 %3250
    %3252 = vrot.lane.b32.xlu0 %v3240, 124
    %v3253 = vpop.permute.xlu0 %3252
    %3254 = vrot.lane.b32.xlu0 %v3243, 124
    %v3255 = vpop.permute.xlu0 %3254
    %3256 = vrot.lane.b32.xlu0 %v3245, 124
    %v3257 = vpop.permute.xlu0 %3256
    %3258 = vrot.lane.b32.xlu0 %v3247, 124
    %v3259 = vpop.permute.xlu0 %3258
    %v3266 = vadd.f32 %v3210, %v3249
    %v3267 = vadd.f32 %v3211, %v3251
    %v3268 = vadd.f32 %v3212, %v3253
    %v3269 = vadd.f32 %v3213, %v3255
    %v3270 = vadd.f32 %v3214, %v3257
    %v3271 = vadd.f32 %v3215, %v3259
    %s3272 = sld [smem:[#allocation7 + $0x21]]
    %v3273 = vstv %s3272
    %v3274 = vmul.f32 %v3273, %v1653
    %v3275 = vmul.f32 %v3273, %v1654
    %v3276 = vmul.f32 %v3273, %v1655
    %v3277 = vmul.f32 %v3273, %v1656
    %v3278 = vmul.f32 %v3273, %v1657
    %v3279 = vmul.f32 %v3273, %v1658
    %v3280 = vmul.f32 %v3273, %v1659
    %v3281 = vmul.f32 %v3273, %v1660
    %v3290 = vrot.slane %v3274, 4
    %v3291 = vrot.slane %v3275, 4
    %v3292 = vsel %vm2075, %v3290, %v3291
    %v3293 = vrot.slane %v3276, 4
    %v3294 = vsel %vm2075, %v3291, %v3293
    %v3295 = vrot.slane %v3277, 4
    %v3296 = vsel %vm2075, %v3293, %v3295
    %v3297 = vrot.slane %v3278, 4
    %v3298 = vrot.slane %v3279, 4
    %v3299 = vsel %vm2075, %v3297, %v3298
    %v3300 = vrot.slane %v3280, 4
    %v3301 = vsel %vm2075, %v3298, %v3300
    %v3302 = vrot.slane %v3281, 4
    %v3303 = vsel %vm2075, %v3300, %v3302
    %v3310 = vadd.f32 %v3266, %v3292
    %v3311 = vadd.f32 %v3267, %v3294
    %v3312 = vadd.f32 %v3268, %v3296
    %v3313 = vadd.f32 %v3269, %v3299
    %v3314 = vadd.f32 %v3270, %v3301
    %v3315 = vadd.f32 %v3271, %v3303
    %s3316 = sld [smem:[#allocation7 + $0x22]]
    %v3317 = vstv %s3316
    %v3318 = vmul.f32 %v3317, %v1653
    %v3319 = vmul.f32 %v3317, %v1654
    %v3320 = vmul.f32 %v3317, %v1655
    %v3321 = vmul.f32 %v3317, %v1656
    %v3322 = vmul.f32 %v3317, %v1657
    %v3323 = vmul.f32 %v3317, %v1658
    %v3324 = vmul.f32 %v3317, %v1659
    %v3325 = vmul.f32 %v3317, %v1660
    %v3334 = vrot.slane %v3318, 4
    %v3335 = vrot.slane %v3319, 4
    %v3336 = vsel %vm2075, %v3334, %v3335
    %v3337 = vrot.slane %v3320, 4
    %v3338 = vsel %vm2075, %v3335, %v3337
    %v3339 = vrot.slane %v3321, 4
    %v3340 = vsel %vm2075, %v3337, %v3339
    %v3341 = vrot.slane %v3322, 4
    %v3342 = vrot.slane %v3323, 4
    %v3343 = vsel %vm2075, %v3341, %v3342
    %v3344 = vrot.slane %v3324, 4
    %v3345 = vsel %vm2075, %v3342, %v3344
    %v3346 = vrot.slane %v3325, 4
    %v3347 = vsel %vm2075, %v3344, %v3346
    %3348 = vrot.lane.b32.xlu0 %v3336, 126
    %v3349 = vpop.permute.xlu0 %3348
    %3350 = vrot.lane.b32.xlu0 %v3338, 126
    %v3351 = vpop.permute.xlu0 %3350
    %3352 = vrot.lane.b32.xlu0 %v3340, 126
    %v3353 = vpop.permute.xlu0 %3352
    %3354 = vrot.lane.b32.xlu0 %v3343, 126
    %v3355 = vpop.permute.xlu0 %3354
    %3356 = vrot.lane.b32.xlu0 %v3345, 126
    %v3357 = vpop.permute.xlu0 %3356
    %3358 = vrot.lane.b32.xlu0 %v3347, 126
    %v3359 = vpop.permute.xlu0 %3358
    %v3366 = vadd.f32 %v3310, %v3349
    %v3367 = vadd.f32 %v3311, %v3351
    %v3368 = vadd.f32 %v3312, %v3353
    %v3369 = vadd.f32 %v3313, %v3355
    %v3370 = vadd.f32 %v3314, %v3357
    %v3371 = vadd.f32 %v3315, %v3359
    %s3372 = sld [smem:[#allocation7 + $0x23]]
    %v3373 = vstv %s3372
    %v3374 = vmul.f32 %v3373, %v1653
    %v3375 = vmul.f32 %v3373, %v1654
    %v3376 = vmul.f32 %v3373, %v1655
    %v3377 = vmul.f32 %v3373, %v1656
    %v3378 = vmul.f32 %v3373, %v1657
    %v3379 = vmul.f32 %v3373, %v1658
    %v3380 = vmul.f32 %v3373, %v1659
    %v3381 = vmul.f32 %v3373, %v1660
    %v3390 = vrot.slane %v3374, 4
    %v3391 = vrot.slane %v3375, 4
    %v3392 = vsel %vm2075, %v3390, %v3391
    %v3393 = vrot.slane %v3376, 4
    %v3394 = vsel %vm2075, %v3391, %v3393
    %v3395 = vrot.slane %v3377, 4
    %v3396 = vsel %vm2075, %v3393, %v3395
    %v3397 = vrot.slane %v3378, 4
    %v3398 = vrot.slane %v3379, 4
    %v3399 = vsel %vm2075, %v3397, %v3398
    %v3400 = vrot.slane %v3380, 4
    %v3401 = vsel %vm2075, %v3398, %v3400
    %v3402 = vrot.slane %v3381, 4
    %v3403 = vsel %vm2075, %v3400, %v3402
    %3404 = vrot.lane.b32.xlu0 %v3392, 124
    %v3405 = vpop.permute.xlu0 %3404
    %3406 = vrot.lane.b32.xlu0 %v3394, 124
    %v3407 = vpop.permute.xlu0 %3406
    %3408 = vrot.lane.b32.xlu0 %v3396, 124
    %v3409 = vpop.permute.xlu0 %3408
    %3410 = vrot.lane.b32.xlu0 %v3399, 124
    %v3411 = vpop.permute.xlu0 %3410
    %3412 = vrot.lane.b32.xlu0 %v3401, 124
    %v3413 = vpop.permute.xlu0 %3412
    %3414 = vrot.lane.b32.xlu0 %v3403, 124
    %v3415 = vpop.permute.xlu0 %3414
    %v3422 = vadd.f32 %v3366, %v3405
    %v3423 = vadd.f32 %v3367, %v3407
    %v3424 = vadd.f32 %v3368, %v3409
    %v3425 = vadd.f32 %v3369, %v3411
    %v3426 = vadd.f32 %v3370, %v3413
    %v3427 = vadd.f32 %v3371, %v3415
    %s3428 = sld [smem:[#allocation7 + $0x24]]
    %v3429 = vstv %s3428
    %v3430 = vmul.f32 %v3429, %v1731
    %v3431 = vmul.f32 %v3429, %v1732
    %v3432 = vmul.f32 %v3429, %v1733
    %v3433 = vmul.f32 %v3429, %v1735
    %v3434 = vmul.f32 %v3429, %v1736
    %v3435 = vmul.f32 %v3429, %v1737
    %v3436 = vadd.f32 %v3422, %v3430
    %v3437 = vadd.f32 %v3423, %v3431
    %v3438 = vadd.f32 %v3424, %v3432
    %v3439 = vadd.f32 %v3425, %v3433
    %v3440 = vadd.f32 %v3426, %v3434
    %v3441 = vadd.f32 %v3427, %v3435
    %s3442 = sld [smem:[#allocation7 + $0x25]]
    %v3443 = vstv %s3442
    %v3444 = vmul.f32 %v3443, %v1731
    %v3445 = vmul.f32 %v3443, %v1732
    %v3446 = vmul.f32 %v3443, %v1733
    %v3447 = vmul.f32 %v3443, %v1735
    %v3448 = vmul.f32 %v3443, %v1736
    %v3449 = vmul.f32 %v3443, %v1737
    %3456 = vrot.lane.b32.xlu0 %v3444, 126
    %v3457 = vpop.permute.xlu0 %3456
    %3458 = vrot.lane.b32.xlu0 %v3445, 126
    %v3459 = vpop.permute.xlu0 %3458
    %3460 = vrot.lane.b32.xlu0 %v3446, 126
    %v3461 = vpop.permute.xlu0 %3460
    %3462 = vrot.lane.b32.xlu0 %v3447, 126
    %v3463 = vpop.permute.xlu0 %3462
    %3464 = vrot.lane.b32.xlu0 %v3448, 126
    %v3465 = vpop.permute.xlu0 %3464
    %3466 = vrot.lane.b32.xlu0 %v3449, 126
    %v3467 = vpop.permute.xlu0 %3466
    %v3474 = vadd.f32 %v3436, %v3457
    %v3475 = vadd.f32 %v3437, %v3459
    %v3476 = vadd.f32 %v3438, %v3461
    %v3477 = vadd.f32 %v3439, %v3463
    %v3478 = vadd.f32 %v3440, %v3465
    %v3479 = vadd.f32 %v3441, %v3467
    %s3480 = sld [smem:[#allocation7 + $0x26]]
    %v3481 = vstv %s3480
    %v3482 = vmul.f32 %v3481, %v1731
    %v3483 = vmul.f32 %v3481, %v1732
    %v3484 = vmul.f32 %v3481, %v1733
    %v3485 = vmul.f32 %v3481, %v1735
    %v3486 = vmul.f32 %v3481, %v1736
    %v3487 = vmul.f32 %v3481, %v1737
    %3494 = vrot.lane.b32.xlu0 %v3482, 124
    %v3495 = vpop.permute.xlu0 %3494
    %3496 = vrot.lane.b32.xlu0 %v3483, 124
    %v3497 = vpop.permute.xlu0 %3496
    %3498 = vrot.lane.b32.xlu0 %v3484, 124
    %v3499 = vpop.permute.xlu0 %3498
    %3500 = vrot.lane.b32.xlu0 %v3485, 124
    %v3501 = vpop.permute.xlu0 %3500
    %3502 = vrot.lane.b32.xlu0 %v3486, 124
    %v3503 = vpop.permute.xlu0 %3502
    %3504 = vrot.lane.b32.xlu0 %v3487, 124
    %v3505 = vpop.permute.xlu0 %3504
    %v3512 = vadd.f32 %v3474, %v3495
    %v3513 = vadd.f32 %v3475, %v3497
    %v3514 = vadd.f32 %v3476, %v3499
    %v3515 = vadd.f32 %v3477, %v3501
    %v3516 = vadd.f32 %v3478, %v3503
    %v3517 = vadd.f32 %v3479, %v3505
    %s3518 = sld [smem:[#allocation7 + $0x27]]
    %v3519 = vstv %s3518
    %v3520 = vmul.f32 %v3519, %v1731
    %v3521 = vmul.f32 %v3519, %v1732
    %v3522 = vmul.f32 %v3519, %v1733
    %v3523 = vmul.f32 %v3519, %v1734
    %v3524 = vmul.f32 %v3519, %v1735
    %v3525 = vmul.f32 %v3519, %v1736
    %v3526 = vmul.f32 %v3519, %v1737
    %v3527 = vmul.f32 %v3519, %v1738
    %v3536 = vrot.slane %v3520, 2
    %v3537 = vrot.slane %v3521, 2
    %v3538 = vsel %vm446, %v3536, %v3537
    %v3539 = vrot.slane %v3522, 2
    %v3540 = vsel %vm446, %v3537, %v3539
    %v3541 = vrot.slane %v3523, 2
    %v3542 = vsel %vm446, %v3539, %v3541
    %v3543 = vrot.slane %v3524, 2
    %v3544 = vrot.slane %v3525, 2
    %v3545 = vsel %vm446, %v3543, %v3544
    %v3546 = vrot.slane %v3526, 2
    %v3547 = vsel %vm446, %v3544, %v3546
    %v3548 = vrot.slane %v3527, 2
    %v3549 = vsel %vm446, %v3546, %v3548
    %v3556 = vadd.f32 %v3512, %v3538
    %v3557 = vadd.f32 %v3513, %v3540
    %v3558 = vadd.f32 %v3514, %v3542
    %v3559 = vadd.f32 %v3515, %v3545
    %v3560 = vadd.f32 %v3516, %v3547
    %v3561 = vadd.f32 %v3517, %v3549
    %s3562 = sld [smem:[#allocation7 + $0x28]]
    %v3563 = vstv %s3562
    %v3564 = vmul.f32 %v3563, %v1731
    %v3565 = vmul.f32 %v3563, %v1732
    %v3566 = vmul.f32 %v3563, %v1733
    %v3567 = vmul.f32 %v3563, %v1734
    %v3568 = vmul.f32 %v3563, %v1735
    %v3569 = vmul.f32 %v3563, %v1736
    %v3570 = vmul.f32 %v3563, %v1737
    %v3571 = vmul.f32 %v3563, %v1738
    %v3580 = vrot.slane %v3564, 2
    %v3581 = vrot.slane %v3565, 2
    %v3582 = vsel %vm446, %v3580, %v3581
    %v3583 = vrot.slane %v3566, 2
    %v3584 = vsel %vm446, %v3581, %v3583
    %v3585 = vrot.slane %v3567, 2
    %v3586 = vsel %vm446, %v3583, %v3585
    %v3587 = vrot.slane %v3568, 2
    %v3588 = vrot.slane %v3569, 2
    %v3589 = vsel %vm446, %v3587, %v3588
    %v3590 = vrot.slane %v3570, 2
    %v3591 = vsel %vm446, %v3588, %v3590
    %v3592 = vrot.slane %v3571, 2
    %v3593 = vsel %vm446, %v3590, %v3592
    %3594 = vrot.lane.b32.xlu0 %v3582, 126
    %v3595 = vpop.permute.xlu0 %3594
    %3596 = vrot.lane.b32.xlu0 %v3584, 126
    %v3597 = vpop.permute.xlu0 %3596
    %3598 = vrot.lane.b32.xlu0 %v3586, 126
    %v3599 = vpop.permute.xlu0 %3598
    %3600 = vrot.lane.b32.xlu0 %v3589, 126
    %v3601 = vpop.permute.xlu0 %3600
    %3602 = vrot.lane.b32.xlu0 %v3591, 126
    %v3603 = vpop.permute.xlu0 %3602
    %3604 = vrot.lane.b32.xlu0 %v3593, 126
    %v3605 = vpop.permute.xlu0 %3604
    %v3612 = vadd.f32 %v3556, %v3595
    %v3613 = vadd.f32 %v3557, %v3597
    %v3614 = vadd.f32 %v3558, %v3599
    %v3615 = vadd.f32 %v3559, %v3601
    %v3616 = vadd.f32 %v3560, %v3603
    %v3617 = vadd.f32 %v3561, %v3605
    %s3618 = sld [smem:[#allocation7 + $0x29]]
    %v3619 = vstv %s3618
    %v3620 = vmul.f32 %v3619, %v1731
    %v3621 = vmul.f32 %v3619, %v1732
    %v3622 = vmul.f32 %v3619, %v1733
    %v3623 = vmul.f32 %v3619, %v1734
    %v3624 = vmul.f32 %v3619, %v1735
    %v3625 = vmul.f32 %v3619, %v1736
    %v3626 = vmul.f32 %v3619, %v1737
    %v3627 = vmul.f32 %v3619, %v1738
    %v3636 = vrot.slane %v3620, 2
    %v3637 = vrot.slane %v3621, 2
    %v3638 = vsel %vm446, %v3636, %v3637
    %v3639 = vrot.slane %v3622, 2
    %v3640 = vsel %vm446, %v3637, %v3639
    %v3641 = vrot.slane %v3623, 2
    %v3642 = vsel %vm446, %v3639, %v3641
    %v3643 = vrot.slane %v3624, 2
    %v3644 = vrot.slane %v3625, 2
    %v3645 = vsel %vm446, %v3643, %v3644
    %v3646 = vrot.slane %v3626, 2
    %v3647 = vsel %vm446, %v3644, %v3646
    %v3648 = vrot.slane %v3627, 2
    %v3649 = vsel %vm446, %v3646, %v3648
    %3650 = vrot.lane.b32.xlu0 %v3638, 124
    %v3651 = vpop.permute.xlu0 %3650
    %3652 = vrot.lane.b32.xlu0 %v3640, 124
    %v3653 = vpop.permute.xlu0 %3652
    %3654 = vrot.lane.b32.xlu0 %v3642, 124
    %v3655 = vpop.permute.xlu0 %3654
    %3656 = vrot.lane.b32.xlu0 %v3645, 124
    %v3657 = vpop.permute.xlu0 %3656
    %3658 = vrot.lane.b32.xlu0 %v3647, 124
    %v3659 = vpop.permute.xlu0 %3658
    %3660 = vrot.lane.b32.xlu0 %v3649, 124
    %v3661 = vpop.permute.xlu0 %3660
    %v3668 = vadd.f32 %v3612, %v3651
    %v3669 = vadd.f32 %v3613, %v3653
    %v3670 = vadd.f32 %v3614, %v3655
    %v3671 = vadd.f32 %v3615, %v3657
    %v3672 = vadd.f32 %v3616, %v3659
    %v3673 = vadd.f32 %v3617, %v3661
    %s3674 = sld [smem:[#allocation7 + $0x2a]]
    %v3675 = vstv %s3674
    %v3676 = vmul.f32 %v3675, %v1731
    %v3677 = vmul.f32 %v3675, %v1732
    %v3678 = vmul.f32 %v3675, %v1733
    %v3679 = vmul.f32 %v3675, %v1734
    %v3680 = vmul.f32 %v3675, %v1735
    %v3681 = vmul.f32 %v3675, %v1736
    %v3682 = vmul.f32 %v3675, %v1737
    %v3683 = vmul.f32 %v3675, %v1738
    %v3692 = vrot.slane %v3676, 4
    %v3693 = vrot.slane %v3677, 4
    %v3694 = vsel %vm2075, %v3692, %v3693
    %v3695 = vrot.slane %v3678, 4
    %v3696 = vsel %vm2075, %v3693, %v3695
    %v3697 = vrot.slane %v3679, 4
    %v3698 = vsel %vm2075, %v3695, %v3697
    %v3699 = vrot.slane %v3680, 4
    %v3700 = vrot.slane %v3681, 4
    %v3701 = vsel %vm2075, %v3699, %v3700
    %v3702 = vrot.slane %v3682, 4
    %v3703 = vsel %vm2075, %v3700, %v3702
    %v3704 = vrot.slane %v3683, 4
    %v3705 = vsel %vm2075, %v3702, %v3704
    %v3712 = vadd.f32 %v3668, %v3694
    %v3713 = vadd.f32 %v3669, %v3696
    %v3714 = vadd.f32 %v3670, %v3698
    %v3715 = vadd.f32 %v3671, %v3701
    %v3716 = vadd.f32 %v3672, %v3703
    %v3717 = vadd.f32 %v3673, %v3705
    %s3718 = sld [smem:[#allocation7 + $0x2b]]
    %v3719 = vstv %s3718
    %v3720 = vmul.f32 %v3719, %v1731
    %v3721 = vmul.f32 %v3719, %v1732
    %v3722 = vmul.f32 %v3719, %v1733
    %v3723 = vmul.f32 %v3719, %v1734
    %v3724 = vmul.f32 %v3719, %v1735
    %v3725 = vmul.f32 %v3719, %v1736
    %v3726 = vmul.f32 %v3719, %v1737
    %v3727 = vmul.f32 %v3719, %v1738
    %v3736 = vrot.slane %v3720, 4
    %v3737 = vrot.slane %v3721, 4
    %v3738 = vsel %vm2075, %v3736, %v3737
    %v3739 = vrot.slane %v3722, 4
    %v3740 = vsel %vm2075, %v3737, %v3739
    %v3741 = vrot.slane %v3723, 4
    %v3742 = vsel %vm2075, %v3739, %v3741
    %v3743 = vrot.slane %v3724, 4
    %v3744 = vrot.slane %v3725, 4
    %v3745 = vsel %vm2075, %v3743, %v3744
    %v3746 = vrot.slane %v3726, 4
    %v3747 = vsel %vm2075, %v3744, %v3746
    %v3748 = vrot.slane %v3727, 4
    %v3749 = vsel %vm2075, %v3746, %v3748
    %3750 = vrot.lane.b32.xlu0 %v3738, 126
    %v3751 = vpop.permute.xlu0 %3750
    %3752 = vrot.lane.b32.xlu0 %v3740, 126
    %v3753 = vpop.permute.xlu0 %3752
    %3754 = vrot.lane.b32.xlu0 %v3742, 126
    %v3755 = vpop.permute.xlu0 %3754
    %3756 = vrot.lane.b32.xlu0 %v3745, 126
    %v3757 = vpop.permute.xlu0 %3756
    %3758 = vrot.lane.b32.xlu0 %v3747, 126
    %v3759 = vpop.permute.xlu0 %3758
    %3760 = vrot.lane.b32.xlu0 %v3749, 126
    %v3761 = vpop.permute.xlu0 %3760
    %v3768 = vadd.f32 %v3712, %v3751
    %v3769 = vadd.f32 %v3713, %v3753
    %v3770 = vadd.f32 %v3714, %v3755
    %v3771 = vadd.f32 %v3715, %v3757
    %v3772 = vadd.f32 %v3716, %v3759
    %v3773 = vadd.f32 %v3717, %v3761
    %s3774 = sld [smem:[#allocation7 + $0x2c]]
    %v3775 = vstv %s3774
    %v3776 = vmul.f32 %v3775, %v1731
    %v3777 = vmul.f32 %v3775, %v1732
    %v3778 = vmul.f32 %v3775, %v1733
    %v3779 = vmul.f32 %v3775, %v1734
    %v3780 = vmul.f32 %v3775, %v1735
    %v3781 = vmul.f32 %v3775, %v1736
    %v3782 = vmul.f32 %v3775, %v1737
    %v3783 = vmul.f32 %v3775, %v1738
    %v3792 = vrot.slane %v3776, 4
    %v3793 = vrot.slane %v3777, 4
    %v3794 = vsel %vm2075, %v3792, %v3793
    %v3795 = vrot.slane %v3778, 4
    %v3796 = vsel %vm2075, %v3793, %v3795
    %v3797 = vrot.slane %v3779, 4
    %v3798 = vsel %vm2075, %v3795, %v3797
    %v3799 = vrot.slane %v3780, 4
    %v3800 = vrot.slane %v3781, 4
    %v3801 = vsel %vm2075, %v3799, %v3800
    %v3802 = vrot.slane %v3782, 4
    %v3803 = vsel %vm2075, %v3800, %v3802
    %v3804 = vrot.slane %v3783, 4
    %v3805 = vsel %vm2075, %v3802, %v3804
    %3806 = vrot.lane.b32.xlu0 %v3794, 124
    %v3807 = vpop.permute.xlu0 %3806
    %3808 = vrot.lane.b32.xlu0 %v3796, 124
    %v3809 = vpop.permute.xlu0 %3808
    %3810 = vrot.lane.b32.xlu0 %v3798, 124
    %v3811 = vpop.permute.xlu0 %3810
    %3812 = vrot.lane.b32.xlu0 %v3801, 124
    %v3813 = vpop.permute.xlu0 %3812
    %3814 = vrot.lane.b32.xlu0 %v3803, 124
    %v3815 = vpop.permute.xlu0 %3814
    %3816 = vrot.lane.b32.xlu0 %v3805, 124
    %v3817 = vpop.permute.xlu0 %3816
    %v3824 = vadd.f32 %v3768, %v3807
    %v3825 = vadd.f32 %v3769, %v3809
    %v3826 = vadd.f32 %v3770, %v3811
    %v3827 = vadd.f32 %v3771, %v3813
    %v3828 = vadd.f32 %v3772, %v3815
    %v3829 = vadd.f32 %v3773, %v3817
    %s3830 = sld [smem:[#allocation7 + $0x2d]]
    %v3831 = vstv %s3830
    %v3832 = vmul.f32 %v3831, %v1809
    %v3833 = vmul.f32 %v3831, %v1810
    %v3834 = vmul.f32 %v3831, %v1811
    %v3835 = vmul.f32 %v3831, %v1813
    %v3836 = vmul.f32 %v3831, %v1814
    %v3837 = vmul.f32 %v3831, %v1815
    %v3838 = vadd.f32 %v3824, %v3832
    %v3839 = vadd.f32 %v3825, %v3833
    %v3840 = vadd.f32 %v3826, %v3834
    %v3841 = vadd.f32 %v3827, %v3835
    %v3842 = vadd.f32 %v3828, %v3836
    %v3843 = vadd.f32 %v3829, %v3837
    %s3844 = sld [smem:[#allocation7 + $0x2e]]
    %v3845 = vstv %s3844
    %v3846 = vmul.f32 %v3845, %v1809
    %v3847 = vmul.f32 %v3845, %v1810
    %v3848 = vmul.f32 %v3845, %v1811
    %v3849 = vmul.f32 %v3845, %v1813
    %v3850 = vmul.f32 %v3845, %v1814
    %v3851 = vmul.f32 %v3845, %v1815
    %3858 = vrot.lane.b32.xlu0 %v3846, 126
    %v3859 = vpop.permute.xlu0 %3858
    %3860 = vrot.lane.b32.xlu0 %v3847, 126
    %v3861 = vpop.permute.xlu0 %3860
    %3862 = vrot.lane.b32.xlu0 %v3848, 126
    %v3863 = vpop.permute.xlu0 %3862
    %3864 = vrot.lane.b32.xlu0 %v3849, 126
    %v3865 = vpop.permute.xlu0 %3864
    %3866 = vrot.lane.b32.xlu0 %v3850, 126
    %v3867 = vpop.permute.xlu0 %3866
    %3868 = vrot.lane.b32.xlu0 %v3851, 126
    %v3869 = vpop.permute.xlu0 %3868
    %v3876 = vadd.f32 %v3838, %v3859
    %v3877 = vadd.f32 %v3839, %v3861
    %v3878 = vadd.f32 %v3840, %v3863
    %v3879 = vadd.f32 %v3841, %v3865
    %v3880 = vadd.f32 %v3842, %v3867
    %v3881 = vadd.f32 %v3843, %v3869
    %s3882 = sld [smem:[#allocation7 + $0x2f]]
    %v3883 = vstv %s3882
    %v3884 = vmul.f32 %v3883, %v1809
    %v3885 = vmul.f32 %v3883, %v1810
    %v3886 = vmul.f32 %v3883, %v1811
    %v3887 = vmul.f32 %v3883, %v1813
    %v3888 = vmul.f32 %v3883, %v1814
    %v3889 = vmul.f32 %v3883, %v1815
    %3896 = vrot.lane.b32.xlu0 %v3884, 124
    %v3897 = vpop.permute.xlu0 %3896
    %3898 = vrot.lane.b32.xlu0 %v3885, 124
    %v3899 = vpop.permute.xlu0 %3898
    %3900 = vrot.lane.b32.xlu0 %v3886, 124
    %v3901 = vpop.permute.xlu0 %3900
    %3902 = vrot.lane.b32.xlu0 %v3887, 124
    %v3903 = vpop.permute.xlu0 %3902
    %3904 = vrot.lane.b32.xlu0 %v3888, 124
    %v3905 = vpop.permute.xlu0 %3904
    %3906 = vrot.lane.b32.xlu0 %v3889, 124
    %v3907 = vpop.permute.xlu0 %3906
    %v3914 = vadd.f32 %v3876, %v3897
    %v3915 = vadd.f32 %v3877, %v3899
    %v3916 = vadd.f32 %v3878, %v3901
    %v3917 = vadd.f32 %v3879, %v3903
    %v3918 = vadd.f32 %v3880, %v3905
    %v3919 = vadd.f32 %v3881, %v3907
    %s3920 = sld [smem:[#allocation7 + $0x30]]
    %v3921 = vstv %s3920
    %v3922 = vmul.f32 %v3921, %v1809
    %v3923 = vmul.f32 %v3921, %v1810
    %v3924 = vmul.f32 %v3921, %v1811
    %v3925 = vmul.f32 %v3921, %v1812
    %v3926 = vmul.f32 %v3921, %v1813
    %v3927 = vmul.f32 %v3921, %v1814
    %v3928 = vmul.f32 %v3921, %v1815
    %v3929 = vmul.f32 %v3921, %v1816
    %v3938 = vrot.slane %v3922, 2
    %v3939 = vrot.slane %v3923, 2
    %v3940 = vsel %vm446, %v3938, %v3939
    %v3941 = vrot.slane %v3924, 2
    %v3942 = vsel %vm446, %v3939, %v3941
    %v3943 = vrot.slane %v3925, 2
    %v3944 = vsel %vm446, %v3941, %v3943
    %v3945 = vrot.slane %v3926, 2
    %v3946 = vrot.slane %v3927, 2
    %v3947 = vsel %vm446, %v3945, %v3946
    %v3948 = vrot.slane %v3928, 2
    %v3949 = vsel %vm446, %v3946, %v3948
    %v3950 = vrot.slane %v3929, 2
    %v3951 = vsel %vm446, %v3948, %v3950
    %v3958 = vadd.f32 %v3914, %v3940
    %v3959 = vadd.f32 %v3915, %v3942
    %v3960 = vadd.f32 %v3916, %v3944
    %v3961 = vadd.f32 %v3917, %v3947
    %v3962 = vadd.f32 %v3918, %v3949
    %v3963 = vadd.f32 %v3919, %v3951
    %s3964 = sld [smem:[#allocation7 + $0x31]]
    %v3965 = vstv %s3964
    %v3966 = vmul.f32 %v3965, %v1809
    %v3967 = vmul.f32 %v3965, %v1810
    %v3968 = vmul.f32 %v3965, %v1811
    %v3969 = vmul.f32 %v3965, %v1812
    %v3970 = vmul.f32 %v3965, %v1813
    %v3971 = vmul.f32 %v3965, %v1814
    %v3972 = vmul.f32 %v3965, %v1815
    %v3973 = vmul.f32 %v3965, %v1816
    %v3982 = vrot.slane %v3966, 2
    %v3983 = vrot.slane %v3967, 2
    %v3984 = vsel %vm446, %v3982, %v3983
    %v3985 = vrot.slane %v3968, 2
    %v3986 = vsel %vm446, %v3983, %v3985
    %v3987 = vrot.slane %v3969, 2
    %v3988 = vsel %vm446, %v3985, %v3987
    %v3989 = vrot.slane %v3970, 2
    %v3990 = vrot.slane %v3971, 2
    %v3991 = vsel %vm446, %v3989, %v3990
    %v3992 = vrot.slane %v3972, 2
    %v3993 = vsel %vm446, %v3990, %v3992
    %v3994 = vrot.slane %v3973, 2
    %v3995 = vsel %vm446, %v3992, %v3994
    %3996 = vrot.lane.b32.xlu0 %v3984, 126
    %v3997 = vpop.permute.xlu0 %3996
    %3998 = vrot.lane.b32.xlu0 %v3986, 126
    %v3999 = vpop.permute.xlu0 %3998
    %4000 = vrot.lane.b32.xlu0 %v3988, 126
    %v4001 = vpop.permute.xlu0 %4000
    %4002 = vrot.lane.b32.xlu0 %v3991, 126
    %v4003 = vpop.permute.xlu0 %4002
    %4004 = vrot.lane.b32.xlu0 %v3993, 126
    %v4005 = vpop.permute.xlu0 %4004
    %4006 = vrot.lane.b32.xlu0 %v3995, 126
    %v4007 = vpop.permute.xlu0 %4006
    %v4014 = vadd.f32 %v3958, %v3997
    %v4015 = vadd.f32 %v3959, %v3999
    %v4016 = vadd.f32 %v3960, %v4001
    %v4017 = vadd.f32 %v3961, %v4003
    %v4018 = vadd.f32 %v3962, %v4005
    %v4019 = vadd.f32 %v3963, %v4007
    %s4020 = sld [smem:[#allocation7 + $0x32]]
    %v4021 = vstv %s4020
    %v4022 = vmul.f32 %v4021, %v1809
    %v4023 = vmul.f32 %v4021, %v1810
    %v4024 = vmul.f32 %v4021, %v1811
    %v4025 = vmul.f32 %v4021, %v1812
    %v4026 = vmul.f32 %v4021, %v1813
    %v4027 = vmul.f32 %v4021, %v1814
    %v4028 = vmul.f32 %v4021, %v1815
    %v4029 = vmul.f32 %v4021, %v1816
    %v4038 = vrot.slane %v4022, 2
    %v4039 = vrot.slane %v4023, 2
    %v4040 = vsel %vm446, %v4038, %v4039
    %v4041 = vrot.slane %v4024, 2
    %v4042 = vsel %vm446, %v4039, %v4041
    %v4043 = vrot.slane %v4025, 2
    %v4044 = vsel %vm446, %v4041, %v4043
    %v4045 = vrot.slane %v4026, 2
    %v4046 = vrot.slane %v4027, 2
    %v4047 = vsel %vm446, %v4045, %v4046
    %v4048 = vrot.slane %v4028, 2
    %v4049 = vsel %vm446, %v4046, %v4048
    %v4050 = vrot.slane %v4029, 2
    %v4051 = vsel %vm446, %v4048, %v4050
    %4052 = vrot.lane.b32.xlu0 %v4040, 124
    %v4053 = vpop.permute.xlu0 %4052
    %4054 = vrot.lane.b32.xlu0 %v4042, 124
    %v4055 = vpop.permute.xlu0 %4054
    %4056 = vrot.lane.b32.xlu0 %v4044, 124
    %v4057 = vpop.permute.xlu0 %4056
    %4058 = vrot.lane.b32.xlu0 %v4047, 124
    %v4059 = vpop.permute.xlu0 %4058
    %4060 = vrot.lane.b32.xlu0 %v4049, 124
    %v4061 = vpop.permute.xlu0 %4060
    %4062 = vrot.lane.b32.xlu0 %v4051, 124
    %v4063 = vpop.permute.xlu0 %4062
    %v4070 = vadd.f32 %v4014, %v4053
    %v4071 = vadd.f32 %v4015, %v4055
    %v4072 = vadd.f32 %v4016, %v4057
    %v4073 = vadd.f32 %v4017, %v4059
    %v4074 = vadd.f32 %v4018, %v4061
    %v4075 = vadd.f32 %v4019, %v4063
    %s4076 = sld [smem:[#allocation7 + $0x33]]
    %v4077 = vstv %s4076
    %v4078 = vmul.f32 %v4077, %v1809
    %v4079 = vmul.f32 %v4077, %v1810
    %v4080 = vmul.f32 %v4077, %v1811
    %v4081 = vmul.f32 %v4077, %v1812
    %v4082 = vmul.f32 %v4077, %v1813
    %v4083 = vmul.f32 %v4077, %v1814
    %v4084 = vmul.f32 %v4077, %v1815
    %v4085 = vmul.f32 %v4077, %v1816
    %v4094 = vrot.slane %v4078, 4
    %v4095 = vrot.slane %v4079, 4
    %v4096 = vsel %vm2075, %v4094, %v4095
    %v4097 = vrot.slane %v4080, 4
    %v4098 = vsel %vm2075, %v4095, %v4097
    %v4099 = vrot.slane %v4081, 4
    %v4100 = vsel %vm2075, %v4097, %v4099
    %v4101 = vrot.slane %v4082, 4
    %v4102 = vrot.slane %v4083, 4
    %v4103 = vsel %vm2075, %v4101, %v4102
    %v4104 = vrot.slane %v4084, 4
    %v4105 = vsel %vm2075, %v4102, %v4104
    %v4106 = vrot.slane %v4085, 4
    %v4107 = vsel %vm2075, %v4104, %v4106
    %v4114 = vadd.f32 %v4070, %v4096
    %v4115 = vadd.f32 %v4071, %v4098
    %v4116 = vadd.f32 %v4072, %v4100
    %v4117 = vadd.f32 %v4073, %v4103
    %v4118 = vadd.f32 %v4074, %v4105
    %v4119 = vadd.f32 %v4075, %v4107
    %s4120 = sld [smem:[#allocation7 + $0x34]]
    %v4121 = vstv %s4120
    %v4122 = vmul.f32 %v4121, %v1809
    %v4123 = vmul.f32 %v4121, %v1810
    %v4124 = vmul.f32 %v4121, %v1811
    %v4125 = vmul.f32 %v4121, %v1812
    %v4126 = vmul.f32 %v4121, %v1813
    %v4127 = vmul.f32 %v4121, %v1814
    %v4128 = vmul.f32 %v4121, %v1815
    %v4129 = vmul.f32 %v4121, %v1816
    %v4138 = vrot.slane %v4122, 4
    %v4139 = vrot.slane %v4123, 4
    %v4140 = vsel %vm2075, %v4138, %v4139
    %v4141 = vrot.slane %v4124, 4
    %v4142 = vsel %vm2075, %v4139, %v4141
    %v4143 = vrot.slane %v4125, 4
    %v4144 = vsel %vm2075, %v4141, %v4143
    %v4145 = vrot.slane %v4126, 4
    %v4146 = vrot.slane %v4127, 4
    %v4147 = vsel %vm2075, %v4145, %v4146
    %v4148 = vrot.slane %v4128, 4
    %v4149 = vsel %vm2075, %v4146, %v4148
    %v4150 = vrot.slane %v4129, 4
    %v4151 = vsel %vm2075, %v4148, %v4150
    %4152 = vrot.lane.b32.xlu0 %v4140, 126
    %v4153 = vpop.permute.xlu0 %4152
    %4154 = vrot.lane.b32.xlu0 %v4142, 126
    %v4155 = vpop.permute.xlu0 %4154
    %4156 = vrot.lane.b32.xlu0 %v4144, 126
    %v4157 = vpop.permute.xlu0 %4156
    %4158 = vrot.lane.b32.xlu0 %v4147, 126
    %v4159 = vpop.permute.xlu0 %4158
    %4160 = vrot.lane.b32.xlu0 %v4149, 126
    %v4161 = vpop.permute.xlu0 %4160
    %4162 = vrot.lane.b32.xlu0 %v4151, 126
    %v4163 = vpop.permute.xlu0 %4162
    %v4170 = vadd.f32 %v4114, %v4153
    %v4171 = vadd.f32 %v4115, %v4155
    %v4172 = vadd.f32 %v4116, %v4157
    %v4173 = vadd.f32 %v4117, %v4159
    %v4174 = vadd.f32 %v4118, %v4161
    %v4175 = vadd.f32 %v4119, %v4163
    %s4176 = sld [smem:[#allocation7 + $0x35]]
    %v4177 = vstv %s4176
    %v4178 = vmul.f32 %v4177, %v1809
    %v4179 = vmul.f32 %v4177, %v1810
    %v4180 = vmul.f32 %v4177, %v1811
    %v4181 = vmul.f32 %v4177, %v1812
    %v4182 = vmul.f32 %v4177, %v1813
    %v4183 = vmul.f32 %v4177, %v1814
    %v4184 = vmul.f32 %v4177, %v1815
    %v4185 = vmul.f32 %v4177, %v1816
    %v4194 = vrot.slane %v4178, 4
    %v4195 = vrot.slane %v4179, 4
    %v4196 = vsel %vm2075, %v4194, %v4195
    %v4197 = vrot.slane %v4180, 4
    %v4198 = vsel %vm2075, %v4195, %v4197
    %v4199 = vrot.slane %v4181, 4
    %v4200 = vsel %vm2075, %v4197, %v4199
    %v4201 = vrot.slane %v4182, 4
    %v4202 = vrot.slane %v4183, 4
    %v4203 = vsel %vm2075, %v4201, %v4202
    %v4204 = vrot.slane %v4184, 4
    %v4205 = vsel %vm2075, %v4202, %v4204
    %v4206 = vrot.slane %v4185, 4
    %v4207 = vsel %vm2075, %v4204, %v4206
    %4208 = vrot.lane.b32.xlu0 %v4196, 124
    %v4209 = vpop.permute.xlu0 %4208
    %4210 = vrot.lane.b32.xlu0 %v4198, 124
    %v4211 = vpop.permute.xlu0 %4210
    %4212 = vrot.lane.b32.xlu0 %v4200, 124
    %v4213 = vpop.permute.xlu0 %4212
    %4214 = vrot.lane.b32.xlu0 %v4203, 124
    %v4215 = vpop.permute.xlu0 %4214
    %4216 = vrot.lane.b32.xlu0 %v4205, 124
    %v4217 = vpop.permute.xlu0 %4216
    %4218 = vrot.lane.b32.xlu0 %v4207, 124
    %v4219 = vpop.permute.xlu0 %4218
    %v4226 = vadd.f32 %v4170, %v4209
    %v4227 = vadd.f32 %v4171, %v4211
    %v4228 = vadd.f32 %v4172, %v4213
    %v4229 = vadd.f32 %v4173, %v4215
    %v4230 = vadd.f32 %v4174, %v4217
    %v4231 = vadd.f32 %v4175, %v4219
    %s4232 = sld [smem:[#allocation8 + $0x1]]
    %v4233 = vstv %s4232
    %v4234 = vadd.f32 %v4226, %v4233
    %v4235 = vadd.f32 %v4227, %v4233
    %v4236 = vadd.f32 %v4228, %v4233
    %v4237 = vadd.f32 %v4229, %v4233
    %v4238 = vadd.f32 %v4230, %v4233
    %v4239 = vadd.f32 %v4231, %v4233
    %v4240 = vmax.f32 %v4234, 0.0
    %v4241 = vmax.f32 %v4235, 0.0
    %v4242 = vmax.f32 %v4236, 0.0
    %v4243 = vmax.f32 %v4237, 0.0
    %v4244 = vmax.f32 %v4238, 0.0
    %v4245 = vmax.f32 %v4239, 0.0
    %s4246 = sld [smem:[#allocation7 + $0x36]]
    %v4247 = vstv %s4246
    %v4248 = vmul.f32 %v4247, %v1653
    %v4249 = vmul.f32 %v4247, %v1654
    %v4250 = vmul.f32 %v4247, %v1655
    %v4251 = vmul.f32 %v4247, %v1657
    %v4252 = vmul.f32 %v4247, %v1658
    %v4253 = vmul.f32 %v4247, %v1659
    %s4254 = sld [smem:[#allocation7 + $0x37]]
    %v4255 = vstv %s4254
    %v4256 = vmul.f32 %v4255, %v1653
    %v4257 = vmul.f32 %v4255, %v1654
    %v4258 = vmul.f32 %v4255, %v1655
    %v4259 = vmul.f32 %v4255, %v1657
    %v4260 = vmul.f32 %v4255, %v1658
    %v4261 = vmul.f32 %v4255, %v1659
    %4268 = vrot.lane.b32.xlu0 %v4256, 126
    %v4269 = vpop.permute.xlu0 %4268
    %4270 = vrot.lane.b32.xlu0 %v4257, 126
    %v4271 = vpop.permute.xlu0 %4270
    %4272 = vrot.lane.b32.xlu0 %v4258, 126
    %v4273 = vpop.permute.xlu0 %4272
    %4274 = vrot.lane.b32.xlu0 %v4259, 126
    %v4275 = vpop.permute.xlu0 %4274
    %4276 = vrot.lane.b32.xlu0 %v4260, 126
    %v4277 = vpop.permute.xlu0 %4276
    %4278 = vrot.lane.b32.xlu0 %v4261, 126
    %v4279 = vpop.permute.xlu0 %4278
    %v4286 = vadd.f32 %v4248, %v4269
    %v4287 = vadd.f32 %v4249, %v4271
    %v4288 = vadd.f32 %v4250, %v4273
    %v4289 = vadd.f32 %v4251, %v4275
    %v4290 = vadd.f32 %v4252, %v4277
    %v4291 = vadd.f32 %v4253, %v4279
    %s4292 = sld [smem:[#allocation7 + $0x38]]
    %v4293 = vstv %s4292
    %v4294 = vmul.f32 %v4293, %v1653
    %v4295 = vmul.f32 %v4293, %v1654
    %v4296 = vmul.f32 %v4293, %v1655
    %v4297 = vmul.f32 %v4293, %v1657
    %v4298 = vmul.f32 %v4293, %v1658
    %v4299 = vmul.f32 %v4293, %v1659
    %4306 = vrot.lane.b32.xlu0 %v4294, 124
    %v4307 = vpop.permute.xlu0 %4306
    %4308 = vrot.lane.b32.xlu0 %v4295, 124
    %v4309 = vpop.permute.xlu0 %4308
    %4310 = vrot.lane.b32.xlu0 %v4296, 124
    %v4311 = vpop.permute.xlu0 %4310
    %4312 = vrot.lane.b32.xlu0 %v4297, 124
    %v4313 = vpop.permute.xlu0 %4312
    %4314 = vrot.lane.b32.xlu0 %v4298, 124
    %v4315 = vpop.permute.xlu0 %4314
    %4316 = vrot.lane.b32.xlu0 %v4299, 124
    %v4317 = vpop.permute.xlu0 %4316
    %v4324 = vadd.f32 %v4286, %v4307
    %v4325 = vadd.f32 %v4287, %v4309
    %v4326 = vadd.f32 %v4288, %v4311
    %v4327 = vadd.f32 %v4289, %v4313
    %v4328 = vadd.f32 %v4290, %v4315
    %v4329 = vadd.f32 %v4291, %v4317
    %s4330 = sld [smem:[#allocation7 + $0x39]]
    %v4331 = vstv %s4330
    %v4332 = vmul.f32 %v4331, %v1653
    %v4333 = vmul.f32 %v4331, %v1654
    %v4334 = vmul.f32 %v4331, %v1655
    %v4335 = vmul.f32 %v4331, %v1656
    %v4336 = vmul.f32 %v4331, %v1657
    %v4337 = vmul.f32 %v4331, %v1658
    %v4338 = vmul.f32 %v4331, %v1659
    %v4339 = vmul.f32 %v4331, %v1660
    %v4348 = vrot.slane %v4332, 2
    %v4349 = vrot.slane %v4333, 2
    %v4350 = vsel %vm446, %v4348, %v4349
    %v4351 = vrot.slane %v4334, 2
    %v4352 = vsel %vm446, %v4349, %v4351
    %v4353 = vrot.slane %v4335, 2
    %v4354 = vsel %vm446, %v4351, %v4353
    %v4355 = vrot.slane %v4336, 2
    %v4356 = vrot.slane %v4337, 2
    %v4357 = vsel %vm446, %v4355, %v4356
    %v4358 = vrot.slane %v4338, 2
    %v4359 = vsel %vm446, %v4356, %v4358
    %v4360 = vrot.slane %v4339, 2
    %v4361 = vsel %vm446, %v4358, %v4360
    %v4368 = vadd.f32 %v4324, %v4350
    %v4369 = vadd.f32 %v4325, %v4352
    %v4370 = vadd.f32 %v4326, %v4354
    %v4371 = vadd.f32 %v4327, %v4357
    %v4372 = vadd.f32 %v4328, %v4359
    %v4373 = vadd.f32 %v4329, %v4361
    %s4374 = sld [smem:[#allocation7 + $0x3a]]
    %v4375 = vstv %s4374
    %v4376 = vmul.f32 %v4375, %v1653
    %v4377 = vmul.f32 %v4375, %v1654
    %v4378 = vmul.f32 %v4375, %v1655
    %v4379 = vmul.f32 %v4375, %v1656
    %v4380 = vmul.f32 %v4375, %v1657
    %v4381 = vmul.f32 %v4375, %v1658
    %v4382 = vmul.f32 %v4375, %v1659
    %v4383 = vmul.f32 %v4375, %v1660
    %v4392 = vrot.slane %v4376, 2
    %v4393 = vrot.slane %v4377, 2
    %v4394 = vsel %vm446, %v4392, %v4393
    %v4395 = vrot.slane %v4378, 2
    %v4396 = vsel %vm446, %v4393, %v4395
    %v4397 = vrot.slane %v4379, 2
    %v4398 = vsel %vm446, %v4395, %v4397
    %v4399 = vrot.slane %v4380, 2
    %v4400 = vrot.slane %v4381, 2
    %v4401 = vsel %vm446, %v4399, %v4400
    %v4402 = vrot.slane %v4382, 2
    %v4403 = vsel %vm446, %v4400, %v4402
    %v4404 = vrot.slane %v4383, 2
    %v4405 = vsel %vm446, %v4402, %v4404
    %4406 = vrot.lane.b32.xlu0 %v4394, 126
    %v4407 = vpop.permute.xlu0 %4406
    %4408 = vrot.lane.b32.xlu0 %v4396, 126
    %v4409 = vpop.permute.xlu0 %4408
    %4410 = vrot.lane.b32.xlu0 %v4398, 126
    %v4411 = vpop.permute.xlu0 %4410
    %4412 = vrot.lane.b32.xlu0 %v4401, 126
    %v4413 = vpop.permute.xlu0 %4412
    %4414 = vrot.lane.b32.xlu0 %v4403, 126
    %v4415 = vpop.permute.xlu0 %4414
    %4416 = vrot.lane.b32.xlu0 %v4405, 126
    %v4417 = vpop.permute.xlu0 %4416
    %v4424 = vadd.f32 %v4368, %v4407
    %v4425 = vadd.f32 %v4369, %v4409
    %v4426 = vadd.f32 %v4370, %v4411
    %v4427 = vadd.f32 %v4371, %v4413
    %v4428 = vadd.f32 %v4372, %v4415
    %v4429 = vadd.f32 %v4373, %v4417
    %s4430 = sld [smem:[#allocation7 + $0x3b]]
    %v4431 = vstv %s4430
    %v4432 = vmul.f32 %v4431, %v1653
    %v4433 = vmul.f32 %v4431, %v1654
    %v4434 = vmul.f32 %v4431, %v1655
    %v4435 = vmul.f32 %v4431, %v1656
    %v4436 = vmul.f32 %v4431, %v1657
    %v4437 = vmul.f32 %v4431, %v1658
    %v4438 = vmul.f32 %v4431, %v1659
    %v4439 = vmul.f32 %v4431, %v1660
    %v4448 = vrot.slane %v4432, 2
    %v4449 = vrot.slane %v4433, 2
    %v4450 = vsel %vm446, %v4448, %v4449
    %v4451 = vrot.slane %v4434, 2
    %v4452 = vsel %vm446, %v4449, %v4451
    %v4453 = vrot.slane %v4435, 2
    %v4454 = vsel %vm446, %v4451, %v4453
    %v4455 = vrot.slane %v4436, 2
    %v4456 = vrot.slane %v4437, 2
    %v4457 = vsel %vm446, %v4455, %v4456
    %v4458 = vrot.slane %v4438, 2
    %v4459 = vsel %vm446, %v4456, %v4458
    %v4460 = vrot.slane %v4439, 2
    %v4461 = vsel %vm446, %v4458, %v4460
    %4462 = vrot.lane.b32.xlu0 %v4450, 124
    %v4463 = vpop.permute.xlu0 %4462
    %4464 = vrot.lane.b32.xlu0 %v4452, 124
    %v4465 = vpop.permute.xlu0 %4464
    %4466 = vrot.lane.b32.xlu0 %v4454, 124
    %v4467 = vpop.permute.xlu0 %4466
    %4468 = vrot.lane.b32.xlu0 %v4457, 124
    %v4469 = vpop.permute.xlu0 %4468
    %4470 = vrot.lane.b32.xlu0 %v4459, 124
    %v4471 = vpop.permute.xlu0 %4470
    %4472 = vrot.lane.b32.xlu0 %v4461, 124
    %v4473 = vpop.permute.xlu0 %4472
    %v4480 = vadd.f32 %v4424, %v4463
    %v4481 = vadd.f32 %v4425, %v4465
    %v4482 = vadd.f32 %v4426, %v4467
    %v4483 = vadd.f32 %v4427, %v4469
    %v4484 = vadd.f32 %v4428, %v4471
    %v4485 = vadd.f32 %v4429, %v4473
    %s4486 = sld [smem:[#allocation7 + $0x3c]]
    %v4487 = vstv %s4486
    %v4488 = vmul.f32 %v4487, %v1653
    %v4489 = vmul.f32 %v4487, %v1654
    %v4490 = vmul.f32 %v4487, %v1655
    %v4491 = vmul.f32 %v4487, %v1656
    %v4492 = vmul.f32 %v4487, %v1657
    %v4493 = vmul.f32 %v4487, %v1658
    %v4494 = vmul.f32 %v4487, %v1659
    %v4495 = vmul.f32 %v4487, %v1660
    %v4504 = vrot.slane %v4488, 4
    %v4505 = vrot.slane %v4489, 4
    %v4506 = vsel %vm2075, %v4504, %v4505
    %v4507 = vrot.slane %v4490, 4
    %v4508 = vsel %vm2075, %v4505, %v4507
    %v4509 = vrot.slane %v4491, 4
    %v4510 = vsel %vm2075, %v4507, %v4509
    %v4511 = vrot.slane %v4492, 4
    %v4512 = vrot.slane %v4493, 4
    %v4513 = vsel %vm2075, %v4511, %v4512
    %v4514 = vrot.slane %v4494, 4
    %v4515 = vsel %vm2075, %v4512, %v4514
    %v4516 = vrot.slane %v4495, 4
    %v4517 = vsel %vm2075, %v4514, %v4516
    %v4524 = vadd.f32 %v4480, %v4506
    %v4525 = vadd.f32 %v4481, %v4508
    %v4526 = vadd.f32 %v4482, %v4510
    %v4527 = vadd.f32 %v4483, %v4513
    %v4528 = vadd.f32 %v4484, %v4515
    %v4529 = vadd.f32 %v4485, %v4517
    %s4530 = sld [smem:[#allocation7 + $0x3d]]
    %v4531 = vstv %s4530
    %v4532 = vmul.f32 %v4531, %v1653
    %v4533 = vmul.f32 %v4531, %v1654
    %v4534 = vmul.f32 %v4531, %v1655
    %v4535 = vmul.f32 %v4531, %v1656
    %v4536 = vmul.f32 %v4531, %v1657
    %v4537 = vmul.f32 %v4531, %v1658
    %v4538 = vmul.f32 %v4531, %v1659
    %v4539 = vmul.f32 %v4531, %v1660
    %v4548 = vrot.slane %v4532, 4
    %v4549 = vrot.slane %v4533, 4
    %v4550 = vsel %vm2075, %v4548, %v4549
    %v4551 = vrot.slane %v4534, 4
    %v4552 = vsel %vm2075, %v4549, %v4551
    %v4553 = vrot.slane %v4535, 4
    %v4554 = vsel %vm2075, %v4551, %v4553
    %v4555 = vrot.slane %v4536, 4
    %v4556 = vrot.slane %v4537, 4
    %v4557 = vsel %vm2075, %v4555, %v4556
    %v4558 = vrot.slane %v4538, 4
    %v4559 = vsel %vm2075, %v4556, %v4558
    %v4560 = vrot.slane %v4539, 4
    %v4561 = vsel %vm2075, %v4558, %v4560
    %4562 = vrot.lane.b32.xlu0 %v4550, 126
    %v4563 = vpop.permute.xlu0 %4562
    %4564 = vrot.lane.b32.xlu0 %v4552, 126
    %v4565 = vpop.permute.xlu0 %4564
    %4566 = vrot.lane.b32.xlu0 %v4554, 126
    %v4567 = vpop.permute.xlu0 %4566
    %4568 = vrot.lane.b32.xlu0 %v4557, 126
    %v4569 = vpop.permute.xlu0 %4568
    %4570 = vrot.lane.b32.xlu0 %v4559, 126
    %v4571 = vpop.permute.xlu0 %4570
    %4572 = vrot.lane.b32.xlu0 %v4561, 126
    %v4573 = vpop.permute.xlu0 %4572
    %v4580 = vadd.f32 %v4524, %v4563
    %v4581 = vadd.f32 %v4525, %v4565
    %v4582 = vadd.f32 %v4526, %v4567
    %v4583 = vadd.f32 %v4527, %v4569
    %v4584 = vadd.f32 %v4528, %v4571
    %v4585 = vadd.f32 %v4529, %v4573
    %s4586 = sld [smem:[#allocation7 + $0x3e]]
    %v4587 = vstv %s4586
    %v4588 = vmul.f32 %v4587, %v1653
    %v4589 = vmul.f32 %v4587, %v1654
    %v4590 = vmul.f32 %v4587, %v1655
    %v4591 = vmul.f32 %v4587, %v1656
    %v4592 = vmul.f32 %v4587, %v1657
    %v4593 = vmul.f32 %v4587, %v1658
    %v4594 = vmul.f32 %v4587, %v1659
    %v4595 = vmul.f32 %v4587, %v1660
    %v4604 = vrot.slane %v4588, 4
    %v4605 = vrot.slane %v4589, 4
    %v4606 = vsel %vm2075, %v4604, %v4605
    %v4607 = vrot.slane %v4590, 4
    %v4608 = vsel %vm2075, %v4605, %v4607
    %v4609 = vrot.slane %v4591, 4
    %v4610 = vsel %vm2075, %v4607, %v4609
    %v4611 = vrot.slane %v4592, 4
    %v4612 = vrot.slane %v4593, 4
    %v4613 = vsel %vm2075, %v4611, %v4612
    %v4614 = vrot.slane %v4594, 4
    %v4615 = vsel %vm2075, %v4612, %v4614
    %v4616 = vrot.slane %v4595, 4
    %v4617 = vsel %vm2075, %v4614, %v4616
    %4618 = vrot.lane.b32.xlu0 %v4606, 124
    %v4619 = vpop.permute.xlu0 %4618
    %4620 = vrot.lane.b32.xlu0 %v4608, 124
    %v4621 = vpop.permute.xlu0 %4620
    %4622 = vrot.lane.b32.xlu0 %v4610, 124
    %v4623 = vpop.permute.xlu0 %4622
    %4624 = vrot.lane.b32.xlu0 %v4613, 124
    %v4625 = vpop.permute.xlu0 %4624
    %4626 = vrot.lane.b32.xlu0 %v4615, 124
    %v4627 = vpop.permute.xlu0 %4626
    %4628 = vrot.lane.b32.xlu0 %v4617, 124
    %v4629 = vpop.permute.xlu0 %4628
    %v4636 = vadd.f32 %v4580, %v4619
    %v4637 = vadd.f32 %v4581, %v4621
    %v4638 = vadd.f32 %v4582, %v4623
    %v4639 = vadd.f32 %v4583, %v4625
    %v4640 = vadd.f32 %v4584, %v4627
    %v4641 = vadd.f32 %v4585, %v4629
    %s4642 = sld [smem:[#allocation7 + $0x3f]]
    %v4643 = vstv %s4642
    %v4644 = vmul.f32 %v4643, %v1731
    %v4645 = vmul.f32 %v4643, %v1732
    %v4646 = vmul.f32 %v4643, %v1733
    %v4647 = vmul.f32 %v4643, %v1735
    %v4648 = vmul.f32 %v4643, %v1736
    %v4649 = vmul.f32 %v4643, %v1737
    %v4650 = vadd.f32 %v4636, %v4644
    %v4651 = vadd.f32 %v4637, %v4645
    %v4652 = vadd.f32 %v4638, %v4646
    %v4653 = vadd.f32 %v4639, %v4647
    %v4654 = vadd.f32 %v4640, %v4648
    %v4655 = vadd.f32 %v4641, %v4649
    %s4656 = sld [smem:[#allocation7 + $0x40]]
    %v4657 = vstv %s4656
    %v4658 = vmul.f32 %v4657, %v1731
    %v4659 = vmul.f32 %v4657, %v1732
    %v4660 = vmul.f32 %v4657, %v1733
    %v4661 = vmul.f32 %v4657, %v1735
    %v4662 = vmul.f32 %v4657, %v1736
    %v4663 = vmul.f32 %v4657, %v1737
    %4670 = vrot.lane.b32.xlu0 %v4658, 126
    %v4671 = vpop.permute.xlu0 %4670
    %4672 = vrot.lane.b32.xlu0 %v4659, 126
    %v4673 = vpop.permute.xlu0 %4672
    %4674 = vrot.lane.b32.xlu0 %v4660, 126
    %v4675 = vpop.permute.xlu0 %4674
    %4676 = vrot.lane.b32.xlu0 %v4661, 126
    %v4677 = vpop.permute.xlu0 %4676
    %4678 = vrot.lane.b32.xlu0 %v4662, 126
    %v4679 = vpop.permute.xlu0 %4678
    %4680 = vrot.lane.b32.xlu0 %v4663, 126
    %v4681 = vpop.permute.xlu0 %4680
    %v4688 = vadd.f32 %v4650, %v4671
    %v4689 = vadd.f32 %v4651, %v4673
    %v4690 = vadd.f32 %v4652, %v4675
    %v4691 = vadd.f32 %v4653, %v4677
    %v4692 = vadd.f32 %v4654, %v4679
    %v4693 = vadd.f32 %v4655, %v4681
    %s4694 = sld [smem:[#allocation7 + $0x41]]
    %v4695 = vstv %s4694
    %v4696 = vmul.f32 %v4695, %v1731
    %v4697 = vmul.f32 %v4695, %v1732
    %v4698 = vmul.f32 %v4695, %v1733
    %v4699 = vmul.f32 %v4695, %v1735
    %v4700 = vmul.f32 %v4695, %v1736
    %v4701 = vmul.f32 %v4695, %v1737
    %4708 = vrot.lane.b32.xlu0 %v4696, 124
    %v4709 = vpop.permute.xlu0 %4708
    %4710 = vrot.lane.b32.xlu0 %v4697, 124
    %v4711 = vpop.permute.xlu0 %4710
    %4712 = vrot.lane.b32.xlu0 %v4698, 124
    %v4713 = vpop.permute.xlu0 %4712
    %4714 = vrot.lane.b32.xlu0 %v4699, 124
    %v4715 = vpop.permute.xlu0 %4714
    %4716 = vrot.lane.b32.xlu0 %v4700, 124
    %v4717 = vpop.permute.xlu0 %4716
    %4718 = vrot.lane.b32.xlu0 %v4701, 124
    %v4719 = vpop.permute.xlu0 %4718
    %v4726 = vadd.f32 %v4688, %v4709
    %v4727 = vadd.f32 %v4689, %v4711
    %v4728 = vadd.f32 %v4690, %v4713
    %v4729 = vadd.f32 %v4691, %v4715
    %v4730 = vadd.f32 %v4692, %v4717
    %v4731 = vadd.f32 %v4693, %v4719
    %s4732 = sld [smem:[#allocation7 + $0x42]]
    %v4733 = vstv %s4732
    %v4734 = vmul.f32 %v4733, %v1731
    %v4735 = vmul.f32 %v4733, %v1732
    %v4736 = vmul.f32 %v4733, %v1733
    %v4737 = vmul.f32 %v4733, %v1734
    %v4738 = vmul.f32 %v4733, %v1735
    %v4739 = vmul.f32 %v4733, %v1736
    %v4740 = vmul.f32 %v4733, %v1737
    %v4741 = vmul.f32 %v4733, %v1738
    %v4750 = vrot.slane %v4734, 2
    %v4751 = vrot.slane %v4735, 2
    %v4752 = vsel %vm446, %v4750, %v4751
    %v4753 = vrot.slane %v4736, 2
    %v4754 = vsel %vm446, %v4751, %v4753
    %v4755 = vrot.slane %v4737, 2
    %v4756 = vsel %vm446, %v4753, %v4755
    %v4757 = vrot.slane %v4738, 2
    %v4758 = vrot.slane %v4739, 2
    %v4759 = vsel %vm446, %v4757, %v4758
    %v4760 = vrot.slane %v4740, 2
    %v4761 = vsel %vm446, %v4758, %v4760
    %v4762 = vrot.slane %v4741, 2
    %v4763 = vsel %vm446, %v4760, %v4762
    %v4770 = vadd.f32 %v4726, %v4752
    %v4771 = vadd.f32 %v4727, %v4754
    %v4772 = vadd.f32 %v4728, %v4756
    %v4773 = vadd.f32 %v4729, %v4759
    %v4774 = vadd.f32 %v4730, %v4761
    %v4775 = vadd.f32 %v4731, %v4763
    %s4776 = sld [smem:[#allocation7 + $0x43]]
    %v4777 = vstv %s4776
    %v4778 = vmul.f32 %v4777, %v1731
    %v4779 = vmul.f32 %v4777, %v1732
    %v4780 = vmul.f32 %v4777, %v1733
    %v4781 = vmul.f32 %v4777, %v1734
    %v4782 = vmul.f32 %v4777, %v1735
    %v4783 = vmul.f32 %v4777, %v1736
    %v4784 = vmul.f32 %v4777, %v1737
    %v4785 = vmul.f32 %v4777, %v1738
    %v4794 = vrot.slane %v4778, 2
    %v4795 = vrot.slane %v4779, 2
    %v4796 = vsel %vm446, %v4794, %v4795
    %v4797 = vrot.slane %v4780, 2
    %v4798 = vsel %vm446, %v4795, %v4797
    %v4799 = vrot.slane %v4781, 2
    %v4800 = vsel %vm446, %v4797, %v4799
    %v4801 = vrot.slane %v4782, 2
    %v4802 = vrot.slane %v4783, 2
    %v4803 = vsel %vm446, %v4801, %v4802
    %v4804 = vrot.slane %v4784, 2
    %v4805 = vsel %vm446, %v4802, %v4804
    %v4806 = vrot.slane %v4785, 2
    %v4807 = vsel %vm446, %v4804, %v4806
    %4808 = vrot.lane.b32.xlu0 %v4796, 126
    %v4809 = vpop.permute.xlu0 %4808
    %4810 = vrot.lane.b32.xlu0 %v4798, 126
    %v4811 = vpop.permute.xlu0 %4810
    %4812 = vrot.lane.b32.xlu0 %v4800, 126
    %v4813 = vpop.permute.xlu0 %4812
    %4814 = vrot.lane.b32.xlu0 %v4803, 126
    %v4815 = vpop.permute.xlu0 %4814
    %4816 = vrot.lane.b32.xlu0 %v4805, 126
    %v4817 = vpop.permute.xlu0 %4816
    %4818 = vrot.lane.b32.xlu0 %v4807, 126
    %v4819 = vpop.permute.xlu0 %4818
    %v4826 = vadd.f32 %v4770, %v4809
    %v4827 = vadd.f32 %v4771, %v4811
    %v4828 = vadd.f32 %v4772, %v4813
    %v4829 = vadd.f32 %v4773, %v4815
    %v4830 = vadd.f32 %v4774, %v4817
    %v4831 = vadd.f32 %v4775, %v4819
    %s4832 = sld [smem:[#allocation7 + $0x44]]
    %v4833 = vstv %s4832
    %v4834 = vmul.f32 %v4833, %v1731
    %v4835 = vmul.f32 %v4833, %v1732
    %v4836 = vmul.f32 %v4833, %v1733
    %v4837 = vmul.f32 %v4833, %v1734
    %v4838 = vmul.f32 %v4833, %v1735
    %v4839 = vmul.f32 %v4833, %v1736
    %v4840 = vmul.f32 %v4833, %v1737
    %v4841 = vmul.f32 %v4833, %v1738
    %v4850 = vrot.slane %v4834, 2
    %v4851 = vrot.slane %v4835, 2
    %v4852 = vsel %vm446, %v4850, %v4851
    %v4853 = vrot.slane %v4836, 2
    %v4854 = vsel %vm446, %v4851, %v4853
    %v4855 = vrot.slane %v4837, 2
    %v4856 = vsel %vm446, %v4853, %v4855
    %v4857 = vrot.slane %v4838, 2
    %v4858 = vrot.slane %v4839, 2
    %v4859 = vsel %vm446, %v4857, %v4858
    %v4860 = vrot.slane %v4840, 2
    %v4861 = vsel %vm446, %v4858, %v4860
    %v4862 = vrot.slane %v4841, 2
    %v4863 = vsel %vm446, %v4860, %v4862
    %4864 = vrot.lane.b32.xlu0 %v4852, 124
    %v4865 = vpop.permute.xlu0 %4864
    %4866 = vrot.lane.b32.xlu0 %v4854, 124
    %v4867 = vpop.permute.xlu0 %4866
    %4868 = vrot.lane.b32.xlu0 %v4856, 124
    %v4869 = vpop.permute.xlu0 %4868
    %4870 = vrot.lane.b32.xlu0 %v4859, 124
    %v4871 = vpop.permute.xlu0 %4870
    %4872 = vrot.lane.b32.xlu0 %v4861, 124
    %v4873 = vpop.permute.xlu0 %4872
    %4874 = vrot.lane.b32.xlu0 %v4863, 124
    %v4875 = vpop.permute.xlu0 %4874
    %v4882 = vadd.f32 %v4826, %v4865
    %v4883 = vadd.f32 %v4827, %v4867
    %v4884 = vadd.f32 %v4828, %v4869
    %v4885 = vadd.f32 %v4829, %v4871
    %v4886 = vadd.f32 %v4830, %v4873
    %v4887 = vadd.f32 %v4831, %v4875
    %s4888 = sld [smem:[#allocation7 + $0x45]]
    %v4889 = vstv %s4888
    %v4890 = vmul.f32 %v4889, %v1731
    %v4891 = vmul.f32 %v4889, %v1732
    %v4892 = vmul.f32 %v4889, %v1733
    %v4893 = vmul.f32 %v4889, %v1734
    %v4894 = vmul.f32 %v4889, %v1735
    %v4895 = vmul.f32 %v4889, %v1736
    %v4896 = vmul.f32 %v4889, %v1737
    %v4897 = vmul.f32 %v4889, %v1738
    %v4906 = vrot.slane %v4890, 4
    %v4907 = vrot.slane %v4891, 4
    %v4908 = vsel %vm2075, %v4906, %v4907
    %v4909 = vrot.slane %v4892, 4
    %v4910 = vsel %vm2075, %v4907, %v4909
    %v4911 = vrot.slane %v4893, 4
    %v4912 = vsel %vm2075, %v4909, %v4911
    %v4913 = vrot.slane %v4894, 4
    %v4914 = vrot.slane %v4895, 4
    %v4915 = vsel %vm2075, %v4913, %v4914
    %v4916 = vrot.slane %v4896, 4
    %v4917 = vsel %vm2075, %v4914, %v4916
    %v4918 = vrot.slane %v4897, 4
    %v4919 = vsel %vm2075, %v4916, %v4918
    %v4926 = vadd.f32 %v4882, %v4908
    %v4927 = vadd.f32 %v4883, %v4910
    %v4928 = vadd.f32 %v4884, %v4912
    %v4929 = vadd.f32 %v4885, %v4915
    %v4930 = vadd.f32 %v4886, %v4917
    %v4931 = vadd.f32 %v4887, %v4919
    %s4932 = sld [smem:[#allocation7 + $0x46]]
    %v4933 = vstv %s4932
    %v4934 = vmul.f32 %v4933, %v1731
    %v4935 = vmul.f32 %v4933, %v1732
    %v4936 = vmul.f32 %v4933, %v1733
    %v4937 = vmul.f32 %v4933, %v1734
    %v4938 = vmul.f32 %v4933, %v1735
    %v4939 = vmul.f32 %v4933, %v1736
    %v4940 = vmul.f32 %v4933, %v1737
    %v4941 = vmul.f32 %v4933, %v1738
    %v4950 = vrot.slane %v4934, 4
    %v4951 = vrot.slane %v4935, 4
    %v4952 = vsel %vm2075, %v4950, %v4951
    %v4953 = vrot.slane %v4936, 4
    %v4954 = vsel %vm2075, %v4951, %v4953
    %v4955 = vrot.slane %v4937, 4
    %v4956 = vsel %vm2075, %v4953, %v4955
    %v4957 = vrot.slane %v4938, 4
    %v4958 = vrot.slane %v4939, 4
    %v4959 = vsel %vm2075, %v4957, %v4958
    %v4960 = vrot.slane %v4940, 4
    %v4961 = vsel %vm2075, %v4958, %v4960
    %v4962 = vrot.slane %v4941, 4
    %v4963 = vsel %vm2075, %v4960, %v4962
    %4964 = vrot.lane.b32.xlu0 %v4952, 126
    %v4965 = vpop.permute.xlu0 %4964
    %4966 = vrot.lane.b32.xlu0 %v4954, 126
    %v4967 = vpop.permute.xlu0 %4966
    %4968 = vrot.lane.b32.xlu0 %v4956, 126
    %v4969 = vpop.permute.xlu0 %4968
    %4970 = vrot.lane.b32.xlu0 %v4959, 126
    %v4971 = vpop.permute.xlu0 %4970
    %4972 = vrot.lane.b32.xlu0 %v4961, 126
    %v4973 = vpop.permute.xlu0 %4972
    %4974 = vrot.lane.b32.xlu0 %v4963, 126
    %v4975 = vpop.permute.xlu0 %4974
    %v4982 = vadd.f32 %v4926, %v4965
    %v4983 = vadd.f32 %v4927, %v4967
    %v4984 = vadd.f32 %v4928, %v4969
    %v4985 = vadd.f32 %v4929, %v4971
    %v4986 = vadd.f32 %v4930, %v4973
    %v4987 = vadd.f32 %v4931, %v4975
    %s4988 = sld [smem:[#allocation7 + $0x47]]
    %v4989 = vstv %s4988
    %v4990 = vmul.f32 %v4989, %v1731
    %v4991 = vmul.f32 %v4989, %v1732
    %v4992 = vmul.f32 %v4989, %v1733
    %v4993 = vmul.f32 %v4989, %v1734
    %v4994 = vmul.f32 %v4989, %v1735
    %v4995 = vmul.f32 %v4989, %v1736
    %v4996 = vmul.f32 %v4989, %v1737
    %v4997 = vmul.f32 %v4989, %v1738
    %v5006 = vrot.slane %v4990, 4
    %v5007 = vrot.slane %v4991, 4
    %v5008 = vsel %vm2075, %v5006, %v5007
    %v5009 = vrot.slane %v4992, 4
    %v5010 = vsel %vm2075, %v5007, %v5009
    %v5011 = vrot.slane %v4993, 4
    %v5012 = vsel %vm2075, %v5009, %v5011
    %v5013 = vrot.slane %v4994, 4
    %v5014 = vrot.slane %v4995, 4
    %v5015 = vsel %vm2075, %v5013, %v5014
    %v5016 = vrot.slane %v4996, 4
    %v5017 = vsel %vm2075, %v5014, %v5016
    %v5018 = vrot.slane %v4997, 4
    %v5019 = vsel %vm2075, %v5016, %v5018
    %5020 = vrot.lane.b32.xlu0 %v5008, 124
    %v5021 = vpop.permute.xlu0 %5020
    %5022 = vrot.lane.b32.xlu0 %v5010, 124
    %v5023 = vpop.permute.xlu0 %5022
    %5024 = vrot.lane.b32.xlu0 %v5012, 124
    %v5025 = vpop.permute.xlu0 %5024
    %5026 = vrot.lane.b32.xlu0 %v5015, 124
    %v5027 = vpop.permute.xlu0 %5026
    %5028 = vrot.lane.b32.xlu0 %v5017, 124
    %v5029 = vpop.permute.xlu0 %5028
    %5030 = vrot.lane.b32.xlu0 %v5019, 124
    %v5031 = vpop.permute.xlu0 %5030
    %v5038 = vadd.f32 %v4982, %v5021
    %v5039 = vadd.f32 %v4983, %v5023
    %v5040 = vadd.f32 %v4984, %v5025
    %v5041 = vadd.f32 %v4985, %v5027
    %v5042 = vadd.f32 %v4986, %v5029
    %v5043 = vadd.f32 %v4987, %v5031
    %s5044 = sld [smem:[#allocation7 + $0x48]]
    %v5045 = vstv %s5044
    %v5046 = vmul.f32 %v5045, %v1809
    %v5047 = vmul.f32 %v5045, %v1810
    %v5048 = vmul.f32 %v5045, %v1811
    %v5049 = vmul.f32 %v5045, %v1813
    %v5050 = vmul.f32 %v5045, %v1814
    %v5051 = vmul.f32 %v5045, %v1815
    %v5052 = vadd.f32 %v5038, %v5046
    %v5053 = vadd.f32 %v5039, %v5047
    %v5054 = vadd.f32 %v5040, %v5048
    %v5055 = vadd.f32 %v5041, %v5049
    %v5056 = vadd.f32 %v5042, %v5050
    %v5057 = vadd.f32 %v5043, %v5051
    %s5058 = sld [smem:[#allocation7 + $0x49]]
    %v5059 = vstv %s5058
    %v5060 = vmul.f32 %v5059, %v1809
    %v5061 = vmul.f32 %v5059, %v1810
    %v5062 = vmul.f32 %v5059, %v1811
    %v5063 = vmul.f32 %v5059, %v1813
    %v5064 = vmul.f32 %v5059, %v1814
    %v5065 = vmul.f32 %v5059, %v1815
    %5072 = vrot.lane.b32.xlu0 %v5060, 126
    %v5073 = vpop.permute.xlu0 %5072
    %5074 = vrot.lane.b32.xlu0 %v5061, 126
    %v5075 = vpop.permute.xlu0 %5074
    %5076 = vrot.lane.b32.xlu0 %v5062, 126
    %v5077 = vpop.permute.xlu0 %5076
    %5078 = vrot.lane.b32.xlu0 %v5063, 126
    %v5079 = vpop.permute.xlu0 %5078
    %5080 = vrot.lane.b32.xlu0 %v5064, 126
    %v5081 = vpop.permute.xlu0 %5080
    %5082 = vrot.lane.b32.xlu0 %v5065, 126
    %v5083 = vpop.permute.xlu0 %5082
    %v5090 = vadd.f32 %v5052, %v5073
    %v5091 = vadd.f32 %v5053, %v5075
    %v5092 = vadd.f32 %v5054, %v5077
    %v5093 = vadd.f32 %v5055, %v5079
    %v5094 = vadd.f32 %v5056, %v5081
    %v5095 = vadd.f32 %v5057, %v5083
    %s5096 = sld [smem:[#allocation7 + $0x4a]]
    %v5097 = vstv %s5096
    %v5098 = vmul.f32 %v5097, %v1809
    %v5099 = vmul.f32 %v5097, %v1810
    %v5100 = vmul.f32 %v5097, %v1811
    %v5101 = vmul.f32 %v5097, %v1813
    %v5102 = vmul.f32 %v5097, %v1814
    %v5103 = vmul.f32 %v5097, %v1815
    %5110 = vrot.lane.b32.xlu0 %v5098, 124
    %v5111 = vpop.permute.xlu0 %5110
    %5112 = vrot.lane.b32.xlu0 %v5099, 124
    %v5113 = vpop.permute.xlu0 %5112
    %5114 = vrot.lane.b32.xlu0 %v5100, 124
    %v5115 = vpop.permute.xlu0 %5114
    %5116 = vrot.lane.b32.xlu0 %v5101, 124
    %v5117 = vpop.permute.xlu0 %5116
    %5118 = vrot.lane.b32.xlu0 %v5102, 124
    %v5119 = vpop.permute.xlu0 %5118
    %5120 = vrot.lane.b32.xlu0 %v5103, 124
    %v5121 = vpop.permute.xlu0 %5120
    %v5128 = vadd.f32 %v5090, %v5111
    %v5129 = vadd.f32 %v5091, %v5113
    %v5130 = vadd.f32 %v5092, %v5115
    %v5131 = vadd.f32 %v5093, %v5117
    %v5132 = vadd.f32 %v5094, %v5119
    %v5133 = vadd.f32 %v5095, %v5121
    %s5134 = sld [smem:[#allocation7 + $0x4b]]
    %v5135 = vstv %s5134
    %v5136 = vmul.f32 %v5135, %v1809
    %v5137 = vmul.f32 %v5135, %v1810
    %v5138 = vmul.f32 %v5135, %v1811
    %v5139 = vmul.f32 %v5135, %v1812
    %v5140 = vmul.f32 %v5135, %v1813
    %v5141 = vmul.f32 %v5135, %v1814
    %v5142 = vmul.f32 %v5135, %v1815
    %v5143 = vmul.f32 %v5135, %v1816
    %v5152 = vrot.slane %v5136, 2
    %v5153 = vrot.slane %v5137, 2
    %v5154 = vsel %vm446, %v5152, %v5153
    %v5155 = vrot.slane %v5138, 2
    %v5156 = vsel %vm446, %v5153, %v5155
    %v5157 = vrot.slane %v5139, 2
    %v5158 = vsel %vm446, %v5155, %v5157
    %v5159 = vrot.slane %v5140, 2
    %v5160 = vrot.slane %v5141, 2
    %v5161 = vsel %vm446, %v5159, %v5160
    %v5162 = vrot.slane %v5142, 2
    %v5163 = vsel %vm446, %v5160, %v5162
    %v5164 = vrot.slane %v5143, 2
    %v5165 = vsel %vm446, %v5162, %v5164
    %v5172 = vadd.f32 %v5128, %v5154
    %v5173 = vadd.f32 %v5129, %v5156
    %v5174 = vadd.f32 %v5130, %v5158
    %v5175 = vadd.f32 %v5131, %v5161
    %v5176 = vadd.f32 %v5132, %v5163
    %v5177 = vadd.f32 %v5133, %v5165
    %s5178 = sld [smem:[#allocation7 + $0x4c]]
    %v5179 = vstv %s5178
    %v5180 = vmul.f32 %v5179, %v1809
    %v5181 = vmul.f32 %v5179, %v1810
    %v5182 = vmul.f32 %v5179, %v1811
    %v5183 = vmul.f32 %v5179, %v1812
    %v5184 = vmul.f32 %v5179, %v1813
    %v5185 = vmul.f32 %v5179, %v1814
    %v5186 = vmul.f32 %v5179, %v1815
    %v5187 = vmul.f32 %v5179, %v1816
    %v5196 = vrot.slane %v5180, 2
    %v5197 = vrot.slane %v5181, 2
    %v5198 = vsel %vm446, %v5196, %v5197
    %v5199 = vrot.slane %v5182, 2
    %v5200 = vsel %vm446, %v5197, %v5199
    %v5201 = vrot.slane %v5183, 2
    %v5202 = vsel %vm446, %v5199, %v5201
    %v5203 = vrot.slane %v5184, 2
    %v5204 = vrot.slane %v5185, 2
    %v5205 = vsel %vm446, %v5203, %v5204
    %v5206 = vrot.slane %v5186, 2
    %v5207 = vsel %vm446, %v5204, %v5206
    %v5208 = vrot.slane %v5187, 2
    %v5209 = vsel %vm446, %v5206, %v5208
    %5210 = vrot.lane.b32.xlu0 %v5198, 126
    %v5211 = vpop.permute.xlu0 %5210
    %5212 = vrot.lane.b32.xlu0 %v5200, 126
    %v5213 = vpop.permute.xlu0 %5212
    %5214 = vrot.lane.b32.xlu0 %v5202, 126
    %v5215 = vpop.permute.xlu0 %5214
    %5216 = vrot.lane.b32.xlu0 %v5205, 126
    %v5217 = vpop.permute.xlu0 %5216
    %5218 = vrot.lane.b32.xlu0 %v5207, 126
    %v5219 = vpop.permute.xlu0 %5218
    %5220 = vrot.lane.b32.xlu0 %v5209, 126
    %v5221 = vpop.permute.xlu0 %5220
    %v5228 = vadd.f32 %v5172, %v5211
    %v5229 = vadd.f32 %v5173, %v5213
    %v5230 = vadd.f32 %v5174, %v5215
    %v5231 = vadd.f32 %v5175, %v5217
    %v5232 = vadd.f32 %v5176, %v5219
    %v5233 = vadd.f32 %v5177, %v5221
    %s5234 = sld [smem:[#allocation7 + $0x4d]]
    %v5235 = vstv %s5234
    %v5236 = vmul.f32 %v5235, %v1809
    %v5237 = vmul.f32 %v5235, %v1810
    %v5238 = vmul.f32 %v5235, %v1811
    %v5239 = vmul.f32 %v5235, %v1812
    %v5240 = vmul.f32 %v5235, %v1813
    %v5241 = vmul.f32 %v5235, %v1814
    %v5242 = vmul.f32 %v5235, %v1815
    %v5243 = vmul.f32 %v5235, %v1816
    %v5252 = vrot.slane %v5236, 2
    %v5253 = vrot.slane %v5237, 2
    %v5254 = vsel %vm446, %v5252, %v5253
    %v5255 = vrot.slane %v5238, 2
    %v5256 = vsel %vm446, %v5253, %v5255
    %v5257 = vrot.slane %v5239, 2
    %v5258 = vsel %vm446, %v5255, %v5257
    %v5259 = vrot.slane %v5240, 2
    %v5260 = vrot.slane %v5241, 2
    %v5261 = vsel %vm446, %v5259, %v5260
    %v5262 = vrot.slane %v5242, 2
    %v5263 = vsel %vm446, %v5260, %v5262
    %v5264 = vrot.slane %v5243, 2
    %v5265 = vsel %vm446, %v5262, %v5264
    %5266 = vrot.lane.b32.xlu0 %v5254, 124
    %v5267 = vpop.permute.xlu0 %5266
    %5268 = vrot.lane.b32.xlu0 %v5256, 124
    %v5269 = vpop.permute.xlu0 %5268
    %5270 = vrot.lane.b32.xlu0 %v5258, 124
    %v5271 = vpop.permute.xlu0 %5270
    %5272 = vrot.lane.b32.xlu0 %v5261, 124
    %v5273 = vpop.permute.xlu0 %5272
    %5274 = vrot.lane.b32.xlu0 %v5263, 124
    %v5275 = vpop.permute.xlu0 %5274
    %5276 = vrot.lane.b32.xlu0 %v5265, 124
    %v5277 = vpop.permute.xlu0 %5276
    %v5284 = vadd.f32 %v5228, %v5267
    %v5285 = vadd.f32 %v5229, %v5269
    %v5286 = vadd.f32 %v5230, %v5271
    %v5287 = vadd.f32 %v5231, %v5273
    %v5288 = vadd.f32 %v5232, %v5275
    %v5289 = vadd.f32 %v5233, %v5277
    %s5290 = sld [smem:[#allocation7 + $0x4e]]
    %v5291 = vstv %s5290
    %v5292 = vmul.f32 %v5291, %v1809
    %v5293 = vmul.f32 %v5291, %v1810
    %v5294 = vmul.f32 %v5291, %v1811
    %v5295 = vmul.f32 %v5291, %v1812
    %v5296 = vmul.f32 %v5291, %v1813
    %v5297 = vmul.f32 %v5291, %v1814
    %v5298 = vmul.f32 %v5291, %v1815
    %v5299 = vmul.f32 %v5291, %v1816
    %v5308 = vrot.slane %v5292, 4
    %v5309 = vrot.slane %v5293, 4
    %v5310 = vsel %vm2075, %v5308, %v5309
    %v5311 = vrot.slane %v5294, 4
    %v5312 = vsel %vm2075, %v5309, %v5311
    %v5313 = vrot.slane %v5295, 4
    %v5314 = vsel %vm2075, %v5311, %v5313
    %v5315 = vrot.slane %v5296, 4
    %v5316 = vrot.slane %v5297, 4
    %v5317 = vsel %vm2075, %v5315, %v5316
    %v5318 = vrot.slane %v5298, 4
    %v5319 = vsel %vm2075, %v5316, %v5318
    %v5320 = vrot.slane %v5299, 4
    %v5321 = vsel %vm2075, %v5318, %v5320
    %v5328 = vadd.f32 %v5284, %v5310
    %v5329 = vadd.f32 %v5285, %v5312
    %v5330 = vadd.f32 %v5286, %v5314
    %v5331 = vadd.f32 %v5287, %v5317
    %v5332 = vadd.f32 %v5288, %v5319
    %v5333 = vadd.f32 %v5289, %v5321
    %s5334 = sld [smem:[#allocation7 + $0x4f]]
    %v5335 = vstv %s5334
    %v5336 = vmul.f32 %v5335, %v1809
    %v5337 = vmul.f32 %v5335, %v1810
    %v5338 = vmul.f32 %v5335, %v1811
    %v5339 = vmul.f32 %v5335, %v1812
    %v5340 = vmul.f32 %v5335, %v1813
    %v5341 = vmul.f32 %v5335, %v1814
    %v5342 = vmul.f32 %v5335, %v1815
    %v5343 = vmul.f32 %v5335, %v1816
    %v5352 = vrot.slane %v5336, 4
    %v5353 = vrot.slane %v5337, 4
    %v5354 = vsel %vm2075, %v5352, %v5353
    %v5355 = vrot.slane %v5338, 4
    %v5356 = vsel %vm2075, %v5353, %v5355
    %v5357 = vrot.slane %v5339, 4
    %v5358 = vsel %vm2075, %v5355, %v5357
    %v5359 = vrot.slane %v5340, 4
    %v5360 = vrot.slane %v5341, 4
    %v5361 = vsel %vm2075, %v5359, %v5360
    %v5362 = vrot.slane %v5342, 4
    %v5363 = vsel %vm2075, %v5360, %v5362
    %v5364 = vrot.slane %v5343, 4
    %v5365 = vsel %vm2075, %v5362, %v5364
    %5366 = vrot.lane.b32.xlu0 %v5354, 126
    %v5367 = vpop.permute.xlu0 %5366
    %5368 = vrot.lane.b32.xlu0 %v5356, 126
    %v5369 = vpop.permute.xlu0 %5368
    %5370 = vrot.lane.b32.xlu0 %v5358, 126
    %v5371 = vpop.permute.xlu0 %5370
    %5372 = vrot.lane.b32.xlu0 %v5361, 126
    %v5373 = vpop.permute.xlu0 %5372
    %5374 = vrot.lane.b32.xlu0 %v5363, 126
    %v5375 = vpop.permute.xlu0 %5374
    %5376 = vrot.lane.b32.xlu0 %v5365, 126
    %v5377 = vpop.permute.xlu0 %5376
    %v5384 = vadd.f32 %v5328, %v5367
    %v5385 = vadd.f32 %v5329, %v5369
    %v5386 = vadd.f32 %v5330, %v5371
    %v5387 = vadd.f32 %v5331, %v5373
    %v5388 = vadd.f32 %v5332, %v5375
    %v5389 = vadd.f32 %v5333, %v5377
    %s5390 = sld [smem:[#allocation7 + $0x50]]
    %v5391 = vstv %s5390
    %v5392 = vmul.f32 %v5391, %v1809
    %v5393 = vmul.f32 %v5391, %v1810
    %v5394 = vmul.f32 %v5391, %v1811
    %v5395 = vmul.f32 %v5391, %v1812
    %v5396 = vmul.f32 %v5391, %v1813
    %v5397 = vmul.f32 %v5391, %v1814
    %v5398 = vmul.f32 %v5391, %v1815
    %v5399 = vmul.f32 %v5391, %v1816
    %v5408 = vrot.slane %v5392, 4
    %v5409 = vrot.slane %v5393, 4
    %v5410 = vsel %vm2075, %v5408, %v5409
    %v5411 = vrot.slane %v5394, 4
    %v5412 = vsel %vm2075, %v5409, %v5411
    %v5413 = vrot.slane %v5395, 4
    %v5414 = vsel %vm2075, %v5411, %v5413
    %v5415 = vrot.slane %v5396, 4
    %v5416 = vrot.slane %v5397, 4
    %v5417 = vsel %vm2075, %v5415, %v5416
    %v5418 = vrot.slane %v5398, 4
    %v5419 = vsel %vm2075, %v5416, %v5418
    %v5420 = vrot.slane %v5399, 4
    %v5421 = vsel %vm2075, %v5418, %v5420
    %5422 = vrot.lane.b32.xlu0 %v5410, 124
    %v5423 = vpop.permute.xlu0 %5422
    %5424 = vrot.lane.b32.xlu0 %v5412, 124
    %v5425 = vpop.permute.xlu0 %5424
    %5426 = vrot.lane.b32.xlu0 %v5414, 124
    %v5427 = vpop.permute.xlu0 %5426
    %5428 = vrot.lane.b32.xlu0 %v5417, 124
    %v5429 = vpop.permute.xlu0 %5428
    %5430 = vrot.lane.b32.xlu0 %v5419, 124
    %v5431 = vpop.permute.xlu0 %5430
    %5432 = vrot.lane.b32.xlu0 %v5421, 124
    %v5433 = vpop.permute.xlu0 %5432
    %v5440 = vadd.f32 %v5384, %v5423
    %v5441 = vadd.f32 %v5385, %v5425
    %v5442 = vadd.f32 %v5386, %v5427
    %v5443 = vadd.f32 %v5387, %v5429
    %v5444 = vadd.f32 %v5388, %v5431
    %v5445 = vadd.f32 %v5389, %v5433
    %s5446 = sld [smem:[#allocation8 + $0x2]]
    %v5447 = vstv %s5446
    %v5448 = vadd.f32 %v5440, %v5447
    %v5449 = vadd.f32 %v5441, %v5447
    %v5450 = vadd.f32 %v5442, %v5447
    %v5451 = vadd.f32 %v5443, %v5447
    %v5452 = vadd.f32 %v5444, %v5447
    %v5453 = vadd.f32 %v5445, %v5447
    %v5454 = vmax.f32 %v5448, 0.0
    %v5455 = vmax.f32 %v5449, 0.0
    %v5456 = vmax.f32 %v5450, 0.0
    %v5457 = vmax.f32 %v5451, 0.0
    %v5458 = vmax.f32 %v5452, 0.0
    %v5459 = vmax.f32 %v5453, 0.0
    %5466 = vrot.lane.b32.xlu0 %v3026, 126
    %v5467 = vpop.permute.xlu0 %5466
    %5468 = vrot.lane.b32.xlu0 %v3027, 126
    %v5469 = vpop.permute.xlu0 %5468
    %5470 = vrot.lane.b32.xlu0 %v3028, 126
    %v5471 = vpop.permute.xlu0 %5470
    %5472 = vrot.lane.b32.xlu0 %v3029, 126
    %v5473 = vpop.permute.xlu0 %5472
    %5474 = vrot.lane.b32.xlu0 %v3030, 126
    %v5475 = vpop.permute.xlu0 %5474
    %5476 = vrot.lane.b32.xlu0 %v3031, 126
    %v5477 = vpop.permute.xlu0 %5476
    %v5484 = vmax.f32 %v3026, %v5467
    %v5485 = vmax.f32 %v3027, %v5469
    %v5486 = vmax.f32 %v3028, %v5471
    %v5487 = vmax.f32 %v3029, %v5473
    %v5488 = vmax.f32 %v3030, %v5475
    %v5489 = vmax.f32 %v3031, %v5477
    %v5496 = vrot.slane %v5484, 2
    %v5497 = vrot.slane %v5485, 2
    %v5498 = vsel %vm446, %v5496, %v5497
    %v5499 = vrot.slane %v5486, 2
    %v5500 = vsel %vm446, %v5497, %v5499
    %v5501 = vrot.slane %v5487, 2
    %v5502 = vrot.slane %v5488, 2
    %v5503 = vsel %vm446, %v5501, %v5502
    %v5504 = vrot.slane %v5489, 2
    %v5505 = vsel %vm446, %v5502, %v5504
    %v5512 = vmax.f32 %v5484, %v5498
    %v5513 = vmax.f32 %v5485, %v5500
    %v5514 = vmax.f32 %v5486, %v5499
    %v5515 = vmax.f32 %v5487, %v5503
    %v5516 = vmax.f32 %v5488, %v5505
    %v5517 = vmax.f32 %v5489, %v5504
    %5524 = vrot.lane.b32.xlu0 %v4240, 126
    %v5525 = vpop.permute.xlu0 %5524
    %5526 = vrot.lane.b32.xlu0 %v4241, 126
    %v5527 = vpop.permute.xlu0 %5526
    %5528 = vrot.lane.b32.xlu0 %v4242, 126
    %v5529 = vpop.permute.xlu0 %5528
    %5530 = vrot.lane.b32.xlu0 %v4243, 126
    %v5531 = vpop.permute.xlu0 %5530
    %5532 = vrot.lane.b32.xlu0 %v4244, 126
    %v5533 = vpop.permute.xlu0 %5532
    %5534 = vrot.lane.b32.xlu0 %v4245, 126
    %v5535 = vpop.permute.xlu0 %5534
    %v5542 = vmax.f32 %v4240, %v5525
    %v5543 = vmax.f32 %v4241, %v5527
    %v5544 = vmax.f32 %v4242, %v5529
    %v5545 = vmax.f32 %v4243, %v5531
    %v5546 = vmax.f32 %v4244, %v5533
    %v5547 = vmax.f32 %v4245, %v5535
    %v5554 = vrot.slane %v5542, 2
    %v5555 = vrot.slane %v5543, 2
    %v5556 = vsel %vm446, %v5554, %v5555
    %v5557 = vrot.slane %v5544, 2
    %v5558 = vsel %vm446, %v5555, %v5557
    %v5559 = vrot.slane %v5545, 2
    %v5560 = vrot.slane %v5546, 2
    %v5561 = vsel %vm446, %v5559, %v5560
    %v5562 = vrot.slane %v5547, 2
    %v5563 = vsel %vm446, %v5560, %v5562
    %v5570 = vmax.f32 %v5542, %v5556
    %v5571 = vmax.f32 %v5543, %v5558
    %v5572 = vmax.f32 %v5544, %v5557
    %v5573 = vmax.f32 %v5545, %v5561
    %v5574 = vmax.f32 %v5546, %v5563
    %v5575 = vmax.f32 %v5547, %v5562
    %5582 = vrot.lane.b32.xlu0 %v5454, 126
    %v5583 = vpop.permute.xlu0 %5582
    %5584 = vrot.lane.b32.xlu0 %v5455, 126
    %v5585 = vpop.permute.xlu0 %5584
    %5586 = vrot.lane.b32.xlu0 %v5456, 126
    %v5587 = vpop.permute.xlu0 %5586
    %5588 = vrot.lane.b32.xlu0 %v5457, 126
    %v5589 = vpop.permute.xlu0 %5588
    %5590 = vrot.lane.b32.xlu0 %v5458, 126
    %v5591 = vpop.permute.xlu0 %5590
    %5592 = vrot.lane.b32.xlu0 %v5459, 126
    %v5593 = vpop.permute.xlu0 %5592
    %v5600 = vmax.f32 %v5454, %v5583
    %v5601 = vmax.f32 %v5455, %v5585
    %v5602 = vmax.f32 %v5456, %v5587
    %v5603 = vmax.f32 %v5457, %v5589
    %v5604 = vmax.f32 %v5458, %v5591
    %v5605 = vmax.f32 %v5459, %v5593
    %v5612 = vrot.slane %v5600, 2
    %v5613 = vrot.slane %v5601, 2
    %v5614 = vsel %vm446, %v5612, %v5613
    %v5615 = vrot.slane %v5602, 2
    %v5616 = vsel %vm446, %v5613, %v5615
    %v5617 = vrot.slane %v5603, 2
    %v5618 = vrot.slane %v5604, 2
    %v5619 = vsel %vm446, %v5617, %v5618
    %v5620 = vrot.slane %v5605, 2
    %v5621 = vsel %vm446, %v5618, %v5620
    %v5628 = vmax.f32 %v5600, %v5614
    %v5629 = vmax.f32 %v5601, %v5616
    %v5630 = vmax.f32 %v5602, %v5615
    %v5631 = vmax.f32 %v5603, %v5619
    %v5632 = vmax.f32 %v5604, %v5621
    %v5633 = vmax.f32 %v5605, %v5620
    %s5634 = sld [smem:[#allocation10]]
    %v5635 = vstv %s5634
    %v5636 = vmul.f32 %v5635, %v5512
    %v5637 = vmul.f32 %v5635, %v5513
    %v5638 = vmul.f32 %v5635, %v5515
    %v5639 = vmul.f32 %v5635, %v5516
    %s5640 = sld [smem:[#allocation10 + $0x1]]
    %v5641 = vstv %s5640
    %v5642 = vmul.f32 %v5641, %v5512
    %v5643 = vmul.f32 %v5641, %v5513
    %v5644 = vmul.f32 %v5641, %v5515
    %v5645 = vmul.f32 %v5641, %v5516
    %5650 = vrot.lane.b32.xlu0 %v5642, 124
    %v5651 = vpop.permute.xlu0 %5650
    %5652 = vrot.lane.b32.xlu0 %v5643, 124
    %v5653 = vpop.permute.xlu0 %5652
    %5654 = vrot.lane.b32.xlu0 %v5644, 124
    %v5655 = vpop.permute.xlu0 %5654
    %5656 = vrot.lane.b32.xlu0 %v5645, 124
    %v5657 = vpop.permute.xlu0 %5656
    %v5662 = vadd.f32 %v5636, %v5651
    %v5663 = vadd.f32 %v5637, %v5653
    %v5664 = vadd.f32 %v5638, %v5655
    %v5665 = vadd.f32 %v5639, %v5657
    %s5666 = sld [smem:[#allocation10 + $0x2]]
    %v5667 = vstv %s5666
    %v5668 = vmul.f32 %v5667, %v5512
    %v5669 = vmul.f32 %v5667, %v5513
    %v5670 = vmul.f32 %v5667, %v5515
    %v5671 = vmul.f32 %v5667, %v5516
    %5676 = vrot.lane.b32.xlu0 %v5668, 120
    %v5677 = vpop.permute.xlu0 %5676
    %5678 = vrot.lane.b32.xlu0 %v5669, 120
    %v5679 = vpop.permute.xlu0 %5678
    %5680 = vrot.lane.b32.xlu0 %v5670, 120
    %v5681 = vpop.permute.xlu0 %5680
    %5682 = vrot.lane.b32.xlu0 %v5671, 120
    %v5683 = vpop.permute.xlu0 %5682
    %v5688 = vadd.f32 %v5662, %v5677
    %v5689 = vadd.f32 %v5663, %v5679
    %v5690 = vadd.f32 %v5664, %v5681
    %v5691 = vadd.f32 %v5665, %v5683
    %s5692 = sld [smem:[#allocation10 + $0x3]]
    %v5693 = vstv %s5692
    %v5694 = vmul.f32 %v5693, %v5512
    %v5695 = vmul.f32 %v5693, %v5513
    %v5696 = vmul.f32 %v5693, %v5514
    %v5697 = vmul.f32 %v5693, %v5515
    %v5698 = vmul.f32 %v5693, %v5516
    %v5699 = vmul.f32 %v5693, %v5517
    %v5706 = vrot.slane %v5694, 4
    %v5707 = vrot.slane %v5695, 4
    %v5708 = vsel %vm2075, %v5706, %v5707
    %v5709 = vrot.slane %v5696, 4
    %v5710 = vsel %vm2075, %v5707, %v5709
    %v5711 = vrot.slane %v5697, 4
    %v5712 = vrot.slane %v5698, 4
    %v5713 = vsel %vm2075, %v5711, %v5712
    %v5714 = vrot.slane %v5699, 4
    %v5715 = vsel %vm2075, %v5712, %v5714
    %v5720 = vadd.f32 %v5688, %v5708
    %v5721 = vadd.f32 %v5689, %v5710
    %v5722 = vadd.f32 %v5690, %v5713
    %v5723 = vadd.f32 %v5691, %v5715
    %s5724 = sld [smem:[#allocation10 + $0x4]]
    %v5725 = vstv %s5724
    %v5726 = vmul.f32 %v5725, %v5512
    %v5727 = vmul.f32 %v5725, %v5513
    %v5728 = vmul.f32 %v5725, %v5514
    %v5729 = vmul.f32 %v5725, %v5515
    %v5730 = vmul.f32 %v5725, %v5516
    %v5731 = vmul.f32 %v5725, %v5517
    %v5738 = vrot.slane %v5726, 4
    %v5739 = vrot.slane %v5727, 4
    %v5740 = vsel %vm2075, %v5738, %v5739
    %v5741 = vrot.slane %v5728, 4
    %v5742 = vsel %vm2075, %v5739, %v5741
    %v5743 = vrot.slane %v5729, 4
    %v5744 = vrot.slane %v5730, 4
    %v5745 = vsel %vm2075, %v5743, %v5744
    %v5746 = vrot.slane %v5731, 4
    %v5747 = vsel %vm2075, %v5744, %v5746
    %5748 = vrot.lane.b32.xlu0 %v5740, 124
    %v5749 = vpop.permute.xlu0 %5748
    %5750 = vrot.lane.b32.xlu0 %v5742, 124
    %v5751 = vpop.permute.xlu0 %5750
    %5752 = vrot.lane.b32.xlu0 %v5745, 124
    %v5753 = vpop.permute.xlu0 %5752
    %5754 = vrot.lane.b32.xlu0 %v5747, 124
    %v5755 = vpop.permute.xlu0 %5754
    %v5760 = vadd.f32 %v5720, %v5749
    %v5761 = vadd.f32 %v5721, %v5751
    %v5762 = vadd.f32 %v5722, %v5753
    %v5763 = vadd.f32 %v5723, %v5755
    %s5764 = sld [smem:[#allocation10 + $0x5]]
    %v5765 = vstv %s5764
    %v5766 = vmul.f32 %v5765, %v5512
    %v5767 = vmul.f32 %v5765, %v5513
    %v5768 = vmul.f32 %v5765, %v5514
    %v5769 = vmul.f32 %v5765, %v5515
    %v5770 = vmul.f32 %v5765, %v5516
    %v5771 = vmul.f32 %v5765, %v5517
    %v5778 = vrot.slane %v5766, 4
    %v5779 = vrot.slane %v5767, 4
    %v5780 = vsel %vm2075, %v5778, %v5779
    %v5781 = vrot.slane %v5768, 4
    %v5782 = vsel %vm2075, %v5779, %v5781
    %v5783 = vrot.slane %v5769, 4
    %v5784 = vrot.slane %v5770, 4
    %v5785 = vsel %vm2075, %v5783, %v5784
    %v5786 = vrot.slane %v5771, 4
    %v5787 = vsel %vm2075, %v5784, %v5786
    %5788 = vrot.lane.b32.xlu0 %v5780, 120
    %v5789 = vpop.permute.xlu0 %5788
    %5790 = vrot.lane.b32.xlu0 %v5782, 120
    %v5791 = vpop.permute.xlu0 %5790
    %5792 = vrot.lane.b32.xlu0 %v5785, 120
    %v5793 = vpop.permute.xlu0 %5792
    %5794 = vrot.lane.b32.xlu0 %v5787, 120
    %v5795 = vpop.permute.xlu0 %5794
    %v5800 = vadd.f32 %v5760, %v5789
    %v5801 = vadd.f32 %v5761, %v5791
    %v5802 = vadd.f32 %v5762, %v5793
    %v5803 = vadd.f32 %v5763, %v5795
    %s5804 = sld [smem:[#allocation10 + $0x6]]
    %v5805 = vstv %s5804
    %v5806 = vmul.f32 %v5805, %v5513
    %v5807 = vmul.f32 %v5805, %v5514
    %v5808 = vmul.f32 %v5805, %v5516
    %v5809 = vmul.f32 %v5805, %v5517
    %v5810 = vadd.f32 %v5800, %v5806
    %v5811 = vadd.f32 %v5801, %v5807
    %v5812 = vadd.f32 %v5802, %v5808
    %v5813 = vadd.f32 %v5803, %v5809
    %s5814 = sld [smem:[#allocation10 + $0x7]]
    %v5815 = vstv %s5814
    %v5816 = vmul.f32 %v5815, %v5513
    %v5817 = vmul.f32 %v5815, %v5514
    %v5818 = vmul.f32 %v5815, %v5516
    %v5819 = vmul.f32 %v5815, %v5517
    %5824 = vrot.lane.b32.xlu0 %v5816, 124
    %v5825 = vpop.permute.xlu0 %5824
    %5826 = vrot.lane.b32.xlu0 %v5817, 124
    %v5827 = vpop.permute.xlu0 %5826
    %5828 = vrot.lane.b32.xlu0 %v5818, 124
    %v5829 = vpop.permute.xlu0 %5828
    %5830 = vrot.lane.b32.xlu0 %v5819, 124
    %v5831 = vpop.permute.xlu0 %5830
    %v5836 = vadd.f32 %v5810, %v5825
    %v5837 = vadd.f32 %v5811, %v5827
    %v5838 = vadd.f32 %v5812, %v5829
    %v5839 = vadd.f32 %v5813, %v5831
    %s5840 = sld [smem:[#allocation10 + $0x8]]
    %v5841 = vstv %s5840
    %v5842 = vmul.f32 %v5841, %v5513
    %v5843 = vmul.f32 %v5841, %v5514
    %v5844 = vmul.f32 %v5841, %v5516
    %v5845 = vmul.f32 %v5841, %v5517
    %5850 = vrot.lane.b32.xlu0 %v5842, 120
    %v5851 = vpop.permute.xlu0 %5850
    %5852 = vrot.lane.b32.xlu0 %v5843, 120
    %v5853 = vpop.permute.xlu0 %5852
    %5854 = vrot.lane.b32.xlu0 %v5844, 120
    %v5855 = vpop.permute.xlu0 %5854
    %5856 = vrot.lane.b32.xlu0 %v5845, 120
    %v5857 = vpop.permute.xlu0 %5856
    %v5862 = vadd.f32 %v5836, %v5851
    %v5863 = vadd.f32 %v5837, %v5853
    %v5864 = vadd.f32 %v5838, %v5855
    %v5865 = vadd.f32 %v5839, %v5857
    %s5866 = sld [smem:[#allocation10 + $0x9]]
    %v5867 = vstv %s5866
    %v5868 = vmul.f32 %v5867, %v5570
    %v5869 = vmul.f32 %v5867, %v5571
    %v5870 = vmul.f32 %v5867, %v5573
    %v5871 = vmul.f32 %v5867, %v5574
    %v5872 = vadd.f32 %v5862, %v5868
    %v5873 = vadd.f32 %v5863, %v5869
    %v5874 = vadd.f32 %v5864, %v5870
    %v5875 = vadd.f32 %v5865, %v5871
    %s5876 = sld [smem:[#allocation10 + $0xa]]
    %v5877 = vstv %s5876
    %v5878 = vmul.f32 %v5877, %v5570
    %v5879 = vmul.f32 %v5877, %v5571
    %v5880 = vmul.f32 %v5877, %v5573
    %v5881 = vmul.f32 %v5877, %v5574
    %5886 = vrot.lane.b32.xlu0 %v5878, 124
    %v5887 = vpop.permute.xlu0 %5886
    %5888 = vrot.lane.b32.xlu0 %v5879, 124
    %v5889 = vpop.permute.xlu0 %5888
    %5890 = vrot.lane.b32.xlu0 %v5880, 124
    %v5891 = vpop.permute.xlu0 %5890
    %5892 = vrot.lane.b32.xlu0 %v5881, 124
    %v5893 = vpop.permute.xlu0 %5892
    %v5898 = vadd.f32 %v5872, %v5887
    %v5899 = vadd.f32 %v5873, %v5889
    %v5900 = vadd.f32 %v5874, %v5891
    %v5901 = vadd.f32 %v5875, %v5893
    %s5902 = sld [smem:[#allocation10 + $0xb]]
    %v5903 = vstv %s5902
    %v5904 = vmul.f32 %v5903, %v5570
    %v5905 = vmul.f32 %v5903, %v5571
    %v5906 = vmul.f32 %v5903, %v5573
    %v5907 = vmul.f32 %v5903, %v5574
    %5912 = vrot.lane.b32.xlu0 %v5904, 120
    %v5913 = vpop.permute.xlu0 %5912
    %5914 = vrot.lane.b32.xlu0 %v5905, 120
    %v5915 = vpop.permute.xlu0 %5914
    %5916 = vrot.lane.b32.xlu0 %v5906, 120
    %v5917 = vpop.permute.xlu0 %5916
    %5918 = vrot.lane.b32.xlu0 %v5907, 120
    %v5919 = vpop.permute.xlu0 %5918
    %v5924 = vadd.f32 %v5898, %v5913
    %v5925 = vadd.f32 %v5899, %v5915
    %v5926 = vadd.f32 %v5900, %v5917
    %v5927 = vadd.f32 %v5901, %v5919
    %s5928 = sld [smem:[#allocation10 + $0xc]]
    %v5929 = vstv %s5928
    %v5930 = vmul.f32 %v5929, %v5570
    %v5931 = vmul.f32 %v5929, %v5571
    %v5932 = vmul.f32 %v5929, %v5572
    %v5933 = vmul.f32 %v5929, %v5573
    %v5934 = vmul.f32 %v5929, %v5574
    %v5935 = vmul.f32 %v5929, %v5575
    %v5942 = vrot.slane %v5930, 4
    %v5943 = vrot.slane %v5931, 4
    %v5944 = vsel %vm2075, %v5942, %v5943
    %v5945 = vrot.slane %v5932, 4
    %v5946 = vsel %vm2075, %v5943, %v5945
    %v5947 = vrot.slane %v5933, 4
    %v5948 = vrot.slane %v5934, 4
    %v5949 = vsel %vm2075, %v5947, %v5948
    %v5950 = vrot.slane %v5935, 4
    %v5951 = vsel %vm2075, %v5948, %v5950
    %v5956 = vadd.f32 %v5924, %v5944
    %v5957 = vadd.f32 %v5925, %v5946
    %v5958 = vadd.f32 %v5926, %v5949
    %v5959 = vadd.f32 %v5927, %v5951
    %s5960 = sld [smem:[#allocation10 + $0xd]]
    %v5961 = vstv %s5960
    %v5962 = vmul.f32 %v5961, %v5570
    %v5963 = vmul.f32 %v5961, %v5571
    %v5964 = vmul.f32 %v5961, %v5572
    %v5965 = vmul.f32 %v5961, %v5573
    %v5966 = vmul.f32 %v5961, %v5574
    %v5967 = vmul.f32 %v5961, %v5575
    %v5974 = vrot.slane %v5962, 4
    %v5975 = vrot.slane %v5963, 4
    %v5976 = vsel %vm2075, %v5974, %v5975
    %v5977 = vrot.slane %v5964, 4
    %v5978 = vsel %vm2075, %v5975, %v5977
    %v5979 = vrot.slane %v5965, 4
    %v5980 = vrot.slane %v5966, 4
    %v5981 = vsel %vm2075, %v5979, %v5980
    %v5982 = vrot.slane %v5967, 4
    %v5983 = vsel %vm2075, %v5980, %v5982
    %5984 = vrot.lane.b32.xlu0 %v5976, 124
    %v5985 = vpop.permute.xlu0 %5984
    %5986 = vrot.lane.b32.xlu0 %v5978, 124
    %v5987 = vpop.permute.xlu0 %5986
    %5988 = vrot.lane.b32.xlu0 %v5981, 124
    %v5989 = vpop.permute.xlu0 %5988
    %5990 = vrot.lane.b32.xlu0 %v5983, 124
    %v5991 = vpop.permute.xlu0 %5990
    %v5996 = vadd.f32 %v5956, %v5985
    %v5997 = vadd.f32 %v5957, %v5987
    %v5998 = vadd.f32 %v5958, %v5989
    %v5999 = vadd.f32 %v5959, %v5991
    %s6000 = sld [smem:[#allocation10 + $0xe]]
    %v6001 = vstv %s6000
    %v6002 = vmul.f32 %v6001, %v5570
    %v6003 = vmul.f32 %v6001, %v5571
    %v6004 = vmul.f32 %v6001, %v5572
    %v6005 = vmul.f32 %v6001, %v5573
    %v6006 = vmul.f32 %v6001, %v5574
    %v6007 = vmul.f32 %v6001, %v5575
    %v6014 = vrot.slane %v6002, 4
    %v6015 = vrot.slane %v6003, 4
    %v6016 = vsel %vm2075, %v6014, %v6015
    %v6017 = vrot.slane %v6004, 4
    %v6018 = vsel %vm2075, %v6015, %v6017
    %v6019 = vrot.slane %v6005, 4
    %v6020 = vrot.slane %v6006, 4
    %v6021 = vsel %vm2075, %v6019, %v6020
    %v6022 = vrot.slane %v6007, 4
    %v6023 = vsel %vm2075, %v6020, %v6022
    %6024 = vrot.lane.b32.xlu0 %v6016, 120
    %v6025 = vpop.permute.xlu0 %6024
    %6026 = vrot.lane.b32.xlu0 %v6018, 120
    %v6027 = vpop.permute.xlu0 %6026
    %6028 = vrot.lane.b32.xlu0 %v6021, 120
    %v6029 = vpop.permute.xlu0 %6028
    %6030 = vrot.lane.b32.xlu0 %v6023, 120
    %v6031 = vpop.permute.xlu0 %6030
    %v6036 = vadd.f32 %v5996, %v6025
    %v6037 = vadd.f32 %v5997, %v6027
    %v6038 = vadd.f32 %v5998, %v6029
    %v6039 = vadd.f32 %v5999, %v6031
    %s6040 = sld [smem:[#allocation10 + $0xf]]
    %v6041 = vstv %s6040
    %v6042 = vmul.f32 %v6041, %v5571
    %v6043 = vmul.f32 %v6041, %v5572
    %v6044 = vmul.f32 %v6041, %v5574
    %v6045 = vmul.f32 %v6041, %v5575
    %v6046 = vadd.f32 %v6036, %v6042
    %v6047 = vadd.f32 %v6037, %v6043
    %v6048 = vadd.f32 %v6038, %v6044
    %v6049 = vadd.f32 %v6039, %v6045
    %s6050 = sld [smem:[#allocation10 + $0x10]]
    %v6051 = vstv %s6050
    %v6052 = vmul.f32 %v6051, %v5571
    %v6053 = vmul.f32 %v6051, %v5572
    %v6054 = vmul.f32 %v6051, %v5574
    %v6055 = vmul.f32 %v6051, %v5575
    %6060 = vrot.lane.b32.xlu0 %v6052, 124
    %v6061 = vpop.permute.xlu0 %6060
    %6062 = vrot.lane.b32.xlu0 %v6053, 124
    %v6063 = vpop.permute.xlu0 %6062
    %6064 = vrot.lane.b32.xlu0 %v6054, 124
    %v6065 = vpop.permute.xlu0 %6064
    %6066 = vrot.lane.b32.xlu0 %v6055, 124
    %v6067 = vpop.permute.xlu0 %6066
    %v6072 = vadd.f32 %v6046, %v6061
    %v6073 = vadd.f32 %v6047, %v6063
    %v6074 = vadd.f32 %v6048, %v6065
    %v6075 = vadd.f32 %v6049, %v6067
    %s6076 = sld [smem:[#allocation10 + $0x11]]
    %v6077 = vstv %s6076
    %v6078 = vmul.f32 %v6077, %v5571
    %v6079 = vmul.f32 %v6077, %v5572
    %v6080 = vmul.f32 %v6077, %v5574
    %v6081 = vmul.f32 %v6077, %v5575
    %6086 = vrot.lane.b32.xlu0 %v6078, 120
    %v6087 = vpop.permute.xlu0 %6086
    %6088 = vrot.lane.b32.xlu0 %v6079, 120
    %v6089 = vpop.permute.xlu0 %6088
    %6090 = vrot.lane.b32.xlu0 %v6080, 120
    %v6091 = vpop.permute.xlu0 %6090
    %6092 = vrot.lane.b32.xlu0 %v6081, 120
    %v6093 = vpop.permute.xlu0 %6092
    %v6098 = vadd.f32 %v6072, %v6087
    %v6099 = vadd.f32 %v6073, %v6089
    %v6100 = vadd.f32 %v6074, %v6091
    %v6101 = vadd.f32 %v6075, %v6093
    %s6102 = sld [smem:[#allocation10 + $0x12]]
    %v6103 = vstv %s6102
    %v6104 = vmul.f32 %v6103, %v5628
    %v6105 = vmul.f32 %v6103, %v5629
    %v6106 = vmul.f32 %v6103, %v5631
    %v6107 = vmul.f32 %v6103, %v5632
    %v6108 = vadd.f32 %v6098, %v6104
    %v6109 = vadd.f32 %v6099, %v6105
    %v6110 = vadd.f32 %v6100, %v6106
    %v6111 = vadd.f32 %v6101, %v6107
    %s6112 = sld [smem:[#allocation10 + $0x13]]
    %v6113 = vstv %s6112
    %v6114 = vmul.f32 %v6113, %v5628
    %v6115 = vmul.f32 %v6113, %v5629
    %v6116 = vmul.f32 %v6113, %v5631
    %v6117 = vmul.f32 %v6113, %v5632
    %6122 = vrot.lane.b32.xlu0 %v6114, 124
    %v6123 = vpop.permute.xlu0 %6122
    %6124 = vrot.lane.b32.xlu0 %v6115, 124
    %v6125 = vpop.permute.xlu0 %6124
    %6126 = vrot.lane.b32.xlu0 %v6116, 124
    %v6127 = vpop.permute.xlu0 %6126
    %6128 = vrot.lane.b32.xlu0 %v6117, 124
    %v6129 = vpop.permute.xlu0 %6128
    %v6134 = vadd.f32 %v6108, %v6123
    %v6135 = vadd.f32 %v6109, %v6125
    %v6136 = vadd.f32 %v6110, %v6127
    %v6137 = vadd.f32 %v6111, %v6129
    %s6138 = sld [smem:[#allocation10 + $0x14]]
    %v6139 = vstv %s6138
    %v6140 = vmul.f32 %v6139, %v5628
    %v6141 = vmul.f32 %v6139, %v5629
    %v6142 = vmul.f32 %v6139, %v5631
    %v6143 = vmul.f32 %v6139, %v5632
    %6148 = vrot.lane.b32.xlu0 %v6140, 120
    %v6149 = vpop.permute.xlu0 %6148
    %6150 = vrot.lane.b32.xlu0 %v6141, 120
    %v6151 = vpop.permute.xlu0 %6150
    %6152 = vrot.lane.b32.xlu0 %v6142, 120
    %v6153 = vpop.permute.xlu0 %6152
    %6154 = vrot.lane.b32.xlu0 %v6143, 120
    %v6155 = vpop.permute.xlu0 %6154
    %v6160 = vadd.f32 %v6134, %v6149
    %v6161 = vadd.f32 %v6135, %v6151
    %v6162 = vadd.f32 %v6136, %v6153
    %v6163 = vadd.f32 %v6137, %v6155
    %s6164 = sld [smem:[#allocation10 + $0x15]]
    %v6165 = vstv %s6164
    %v6166 = vmul.f32 %v6165, %v5628
    %v6167 = vmul.f32 %v6165, %v5629
    %v6168 = vmul.f32 %v6165, %v5630
    %v6169 = vmul.f32 %v6165, %v5631
    %v6170 = vmul.f32 %v6165, %v5632
    %v6171 = vmul.f32 %v6165, %v5633
    %v6178 = vrot.slane %v6166, 4
    %v6179 = vrot.slane %v6167, 4
    %v6180 = vsel %vm2075, %v6178, %v6179
    %v6181 = vrot.slane %v6168, 4
    %v6182 = vsel %vm2075, %v6179, %v6181
    %v6183 = vrot.slane %v6169, 4
    %v6184 = vrot.slane %v6170, 4
    %v6185 = vsel %vm2075, %v6183, %v6184
    %v6186 = vrot.slane %v6171, 4
    %v6187 = vsel %vm2075, %v6184, %v6186
    %v6192 = vadd.f32 %v6160, %v6180
    %v6193 = vadd.f32 %v6161, %v6182
    %v6194 = vadd.f32 %v6162, %v6185
    %v6195 = vadd.f32 %v6163, %v6187
    %s6196 = sld [smem:[#allocation10 + $0x16]]
    %v6197 = vstv %s6196
    %v6198 = vmul.f32 %v6197, %v5628
    %v6199 = vmul.f32 %v6197, %v5629
    %v6200 = vmul.f32 %v6197, %v5630
    %v6201 = vmul.f32 %v6197, %v5631
    %v6202 = vmul.f32 %v6197, %v5632
    %v6203 = vmul.f32 %v6197, %v5633
    %v6210 = vrot.slane %v6198, 4
    %v6211 = vrot.slane %v6199, 4
    %v6212 = vsel %vm2075, %v6210, %v6211
    %v6213 = vrot.slane %v6200, 4
    %v6214 = vsel %vm2075, %v6211, %v6213
    %v6215 = vrot.slane %v6201, 4
    %v6216 = vrot.slane %v6202, 4
    %v6217 = vsel %vm2075, %v6215, %v6216
    %v6218 = vrot.slane %v6203, 4
    %v6219 = vsel %vm2075, %v6216, %v6218
    %6220 = vrot.lane.b32.xlu0 %v6212, 124
    %v6221 = vpop.permute.xlu0 %6220
    %6222 = vrot.lane.b32.xlu0 %v6214, 124
    %v6223 = vpop.permute.xlu0 %6222
    %6224 = vrot.lane.b32.xlu0 %v6217, 124
    %v6225 = vpop.permute.xlu0 %6224
    %6226 = vrot.lane.b32.xlu0 %v6219, 124
    %v6227 = vpop.permute.xlu0 %6226
    %v6232 = vadd.f32 %v6192, %v6221
    %v6233 = vadd.f32 %v6193, %v6223
    %v6234 = vadd.f32 %v6194, %v6225
    %v6235 = vadd.f32 %v6195, %v6227
    %s6236 = sld [smem:[#allocation10 + $0x17]]
    %v6237 = vstv %s6236
    %v6238 = vmul.f32 %v6237, %v5628
    %v6239 = vmul.f32 %v6237, %v5629
    %v6240 = vmul.f32 %v6237, %v5630
    %v6241 = vmul.f32 %v6237, %v5631
    %v6242 = vmul.f32 %v6237, %v5632
    %v6243 = vmul.f32 %v6237, %v5633
    %v6250 = vrot.slane %v6238, 4
    %v6251 = vrot.slane %v6239, 4
    %v6252 = vsel %vm2075, %v6250, %v6251
    %v6253 = vrot.slane %v6240, 4
    %v6254 = vsel %vm2075, %v6251, %v6253
    %v6255 = vrot.slane %v6241, 4
    %v6256 = vrot.slane %v6242, 4
    %v6257 = vsel %vm2075, %v6255, %v6256
    %v6258 = vrot.slane %v6243, 4
    %v6259 = vsel %vm2075, %v6256, %v6258
    %6260 = vrot.lane.b32.xlu0 %v6252, 120
    %v6261 = vpop.permute.xlu0 %6260
    %6262 = vrot.lane.b32.xlu0 %v6254, 120
    %v6263 = vpop.permute.xlu0 %6262
    %6264 = vrot.lane.b32.xlu0 %v6257, 120
    %v6265 = vpop.permute.xlu0 %6264
    %6266 = vrot.lane.b32.xlu0 %v6259, 120
    %v6267 = vpop.permute.xlu0 %6266
    %v6272 = vadd.f32 %v6232, %v6261
    %v6273 = vadd.f32 %v6233, %v6263
    %v6274 = vadd.f32 %v6234, %v6265
    %v6275 = vadd.f32 %v6235, %v6267
    %s6276 = sld [smem:[#allocation10 + $0x18]]
    %v6277 = vstv %s6276
    %v6278 = vmul.f32 %v6277, %v5629
    %v6279 = vmul.f32 %v6277, %v5630
    %v6280 = vmul.f32 %v6277, %v5632
    %v6281 = vmul.f32 %v6277, %v5633
    %v6282 = vadd.f32 %v6272, %v6278
    %v6283 = vadd.f32 %v6273, %v6279
    %v6284 = vadd.f32 %v6274, %v6280
    %v6285 = vadd.f32 %v6275, %v6281
    %s6286 = sld [smem:[#allocation10 + $0x19]]
    %v6287 = vstv %s6286
    %v6288 = vmul.f32 %v6287, %v5629
    %v6289 = vmul.f32 %v6287, %v5630
    %v6290 = vmul.f32 %v6287, %v5632
    %v6291 = vmul.f32 %v6287, %v5633
    %6296 = vrot.lane.b32.xlu0 %v6288, 124
    %v6297 = vpop.permute.xlu0 %6296
    %6298 = vrot.lane.b32.xlu0 %v6289, 124
    %v6299 = vpop.permute.xlu0 %6298
    %6300 = vrot.lane.b32.xlu0 %v6290, 124
    %v6301 = vpop.permute.xlu0 %6300
    %6302 = vrot.lane.b32.xlu0 %v6291, 124
    %v6303 = vpop.permute.xlu0 %6302
    %v6308 = vadd.f32 %v6282, %v6297
    %v6309 = vadd.f32 %v6283, %v6299
    %v6310 = vadd.f32 %v6284, %v6301
    %v6311 = vadd.f32 %v6285, %v6303
    %s6312 = sld [smem:[#allocation10 + $0x1a]]
    %v6313 = vstv %s6312
    %v6314 = vmul.f32 %v6313, %v5629
    %v6315 = vmul.f32 %v6313, %v5630
    %v6316 = vmul.f32 %v6313, %v5632
    %v6317 = vmul.f32 %v6313, %v5633
    %6322 = vrot.lane.b32.xlu0 %v6314, 120
    %v6323 = vpop.permute.xlu0 %6322
    %6324 = vrot.lane.b32.xlu0 %v6315, 120
    %v6325 = vpop.permute.xlu0 %6324
    %6326 = vrot.lane.b32.xlu0 %v6316, 120
    %v6327 = vpop.permute.xlu0 %6326
    %6328 = vrot.lane.b32.xlu0 %v6317, 120
    %v6329 = vpop.permute.xlu0 %6328
    %v6334 = vadd.f32 %v6308, %v6323
    %v6335 = vadd.f32 %v6309, %v6325
    %v6336 = vadd.f32 %v6310, %v6327
    %v6337 = vadd.f32 %v6311, %v6329
    %s6338 = sld [smem:[#allocation11]]
    %v6339 = vstv %s6338
    %v6340 = vadd.f32 %v6334, %v6339
    %v6341 = vadd.f32 %v6335, %v6339
    %v6342 = vadd.f32 %v6336, %v6339
    %v6343 = vadd.f32 %v6337, %v6339
    %v6344 = vmax.f32 %v6340, 0.0
    %v6345 = vmax.f32 %v6341, 0.0
    %v6346 = vmax.f32 %v6342, 0.0
    %v6347 = vmax.f32 %v6343, 0.0
    %s6348 = sld [smem:[#allocation10 + $0x1b]]
    %v6349 = vstv %s6348
    %v6350 = vmul.f32 %v6349, %v5512
    %v6351 = vmul.f32 %v6349, %v5513
    %v6352 = vmul.f32 %v6349, %v5515
    %v6353 = vmul.f32 %v6349, %v5516
    %s6354 = sld [smem:[#allocation10 + $0x1c]]
    %v6355 = vstv %s6354
    %v6356 = vmul.f32 %v6355, %v5512
    %v6357 = vmul.f32 %v6355, %v5513
    %v6358 = vmul.f32 %v6355, %v5515
    %v6359 = vmul.f32 %v6355, %v5516
    %6364 = vrot.lane.b32.xlu0 %v6356, 124
    %v6365 = vpop.permute.xlu0 %6364
    %6366 = vrot.lane.b32.xlu0 %v6357, 124
    %v6367 = vpop.permute.xlu0 %6366
    %6368 = vrot.lane.b32.xlu0 %v6358, 124
    %v6369 = vpop.permute.xlu0 %6368
    %6370 = vrot.lane.b32.xlu0 %v6359, 124
    %v6371 = vpop.permute.xlu0 %6370
    %v6376 = vadd.f32 %v6350, %v6365
    %v6377 = vadd.f32 %v6351, %v6367
    %v6378 = vadd.f32 %v6352, %v6369
    %v6379 = vadd.f32 %v6353, %v6371
    %s6380 = sld [smem:[#allocation10 + $0x1d]]
    %v6381 = vstv %s6380
    %v6382 = vmul.f32 %v6381, %v5512
    %v6383 = vmul.f32 %v6381, %v5513
    %v6384 = vmul.f32 %v6381, %v5515
    %v6385 = vmul.f32 %v6381, %v5516
    %6390 = vrot.lane.b32.xlu0 %v6382, 120
    %v6391 = vpop.permute.xlu0 %6390
    %6392 = vrot.lane.b32.xlu0 %v6383, 120
    %v6393 = vpop.permute.xlu0 %6392
    %6394 = vrot.lane.b32.xlu0 %v6384, 120
    %v6395 = vpop.permute.xlu0 %6394
    %6396 = vrot.lane.b32.xlu0 %v6385, 120
    %v6397 = vpop.permute.xlu0 %6396
    %v6402 = vadd.f32 %v6376, %v6391
    %v6403 = vadd.f32 %v6377, %v6393
    %v6404 = vadd.f32 %v6378, %v6395
    %v6405 = vadd.f32 %v6379, %v6397
    %s6406 = sld [smem:[#allocation10 + $0x1e]]
    %v6407 = vstv %s6406
    %v6408 = vmul.f32 %v6407, %v5512
    %v6409 = vmul.f32 %v6407, %v5513
    %v6410 = vmul.f32 %v6407, %v5514
    %v6411 = vmul.f32 %v6407, %v5515
    %v6412 = vmul.f32 %v6407, %v5516
    %v6413 = vmul.f32 %v6407, %v5517
    %v6420 = vrot.slane %v6408, 4
    %v6421 = vrot.slane %v6409, 4
    %v6422 = vsel %vm2075, %v6420, %v6421
    %v6423 = vrot.slane %v6410, 4
    %v6424 = vsel %vm2075, %v6421, %v6423
    %v6425 = vrot.slane %v6411, 4
    %v6426 = vrot.slane %v6412, 4
    %v6427 = vsel %vm2075, %v6425, %v6426
    %v6428 = vrot.slane %v6413, 4
    %v6429 = vsel %vm2075, %v6426, %v6428
    %v6434 = vadd.f32 %v6402, %v6422
    %v6435 = vadd.f32 %v6403, %v6424
    %v6436 = vadd.f32 %v6404, %v6427
    %v6437 = vadd.f32 %v6405, %v6429
    %s6438 = sld [smem:[#allocation10 + $0x1f]]
    %v6439 = vstv %s6438
    %v6440 = vmul.f32 %v6439, %v5512
    %v6441 = vmul.f32 %v6439, %v5513
    %v6442 = vmul.f32 %v6439, %v5514
    %v6443 = vmul.f32 %v6439, %v5515
    %v6444 = vmul.f32 %v6439, %v5516
    %v6445 = vmul.f32 %v6439, %v5517
    %v6452 = vrot.slane %v6440, 4
    %v6453 = vrot.slane %v6441, 4
    %v6454 = vsel %vm2075, %v6452, %v6453
    %v6455 = vrot.slane %v6442, 4
    %v6456 = vsel %vm2075, %v6453, %v6455
    %v6457 = vrot.slane %v6443, 4
    %v6458 = vrot.slane %v6444, 4
    %v6459 = vsel %vm2075, %v6457, %v6458
    %v6460 = vrot.slane %v6445, 4
    %v6461 = vsel %vm2075, %v6458, %v6460
    %6462 = vrot.lane.b32.xlu0 %v6454, 124
    %v6463 = vpop.permute.xlu0 %6462
    %6464 = vrot.lane.b32.xlu0 %v6456, 124
    %v6465 = vpop.permute.xlu0 %6464
    %6466 = vrot.lane.b32.xlu0 %v6459, 124
    %v6467 = vpop.permute.xlu0 %6466
    %6468 = vrot.lane.b32.xlu0 %v6461, 124
    %v6469 = vpop.permute.xlu0 %6468
    %v6474 = vadd.f32 %v6434, %v6463
    %v6475 = vadd.f32 %v6435, %v6465
    %v6476 = vadd.f32 %v6436, %v6467
    %v6477 = vadd.f32 %v6437, %v6469
    %s6478 = sld [smem:[#allocation10 + $0x20]]
    %v6479 = vstv %s6478
    %v6480 = vmul.f32 %v6479, %v5512
    %v6481 = vmul.f32 %v6479, %v5513
    %v6482 = vmul.f32 %v6479, %v5514
    %v6483 = vmul.f32 %v6479, %v5515
    %v6484 = vmul.f32 %v6479, %v5516
    %v6485 = vmul.f32 %v6479, %v5517
    %v6492 = vrot.slane %v6480, 4
    %v6493 = vrot.slane %v6481, 4
    %v6494 = vsel %vm2075, %v6492, %v6493
    %v6495 = vrot.slane %v6482, 4
    %v6496 = vsel %vm2075, %v6493, %v6495
    %v6497 = vrot.slane %v6483, 4
    %v6498 = vrot.slane %v6484, 4
    %v6499 = vsel %vm2075, %v6497, %v6498
    %v6500 = vrot.slane %v6485, 4
    %v6501 = vsel %vm2075, %v6498, %v6500
    %6502 = vrot.lane.b32.xlu0 %v6494, 120
    %v6503 = vpop.permute.xlu0 %6502
    %6504 = vrot.lane.b32.xlu0 %v6496, 120
    %v6505 = vpop.permute.xlu0 %6504
    %6506 = vrot.lane.b32.xlu0 %v6499, 120
    %v6507 = vpop.permute.xlu0 %6506
    %6508 = vrot.lane.b32.xlu0 %v6501, 120
    %v6509 = vpop.permute.xlu0 %6508
    %v6514 = vadd.f32 %v6474, %v6503
    %v6515 = vadd.f32 %v6475, %v6505
    %v6516 = vadd.f32 %v6476, %v6507
    %v6517 = vadd.f32 %v6477, %v6509
    %s6518 = sld [smem:[#allocation10 + $0x21]]
    %v6519 = vstv %s6518
    %v6520 = vmul.f32 %v6519, %v5513
    %v6521 = vmul.f32 %v6519, %v5514
    %v6522 = vmul.f32 %v6519, %v5516
    %v6523 = vmul.f32 %v6519, %v5517
    %v6524 = vadd.f32 %v6514, %v6520
    %v6525 = vadd.f32 %v6515, %v6521
    %v6526 = vadd.f32 %v6516, %v6522
    %v6527 = vadd.f32 %v6517, %v6523
    %s6528 = sld [smem:[#allocation10 + $0x22]]
    %v6529 = vstv %s6528
    %v6530 = vmul.f32 %v6529, %v5513
    %v6531 = vmul.f32 %v6529, %v5514
    %v6532 = vmul.f32 %v6529, %v5516
    %v6533 = vmul.f32 %v6529, %v5517
    %6538 = vrot.lane.b32.xlu0 %v6530, 124
    %v6539 = vpop.permute.xlu0 %6538
    %6540 = vrot.lane.b32.xlu0 %v6531, 124
    %v6541 = vpop.permute.xlu0 %6540
    %6542 = vrot.lane.b32.xlu0 %v6532, 124
    %v6543 = vpop.permute.xlu0 %6542
    %6544 = vrot.lane.b32.xlu0 %v6533, 124
    %v6545 = vpop.permute.xlu0 %6544
    %v6550 = vadd.f32 %v6524, %v6539
    %v6551 = vadd.f32 %v6525, %v6541
    %v6552 = vadd.f32 %v6526, %v6543
    %v6553 = vadd.f32 %v6527, %v6545
    %s6554 = sld [smem:[#allocation10 + $0x23]]
    %v6555 = vstv %s6554
    %v6556 = vmul.f32 %v6555, %v5513
    %v6557 = vmul.f32 %v6555, %v5514
    %v6558 = vmul.f32 %v6555, %v5516
    %v6559 = vmul.f32 %v6555, %v5517
    %6564 = vrot.lane.b32.xlu0 %v6556, 120
    %v6565 = vpop.permute.xlu0 %6564
    %6566 = vrot.lane.b32.xlu0 %v6557, 120
    %v6567 = vpop.permute.xlu0 %6566
    %6568 = vrot.lane.b32.xlu0 %v6558, 120
    %v6569 = vpop.permute.xlu0 %6568
    %6570 = vrot.lane.b32.xlu0 %v6559, 120
    %v6571 = vpop.permute.xlu0 %6570
    %v6576 = vadd.f32 %v6550, %v6565
    %v6577 = vadd.f32 %v6551, %v6567
    %v6578 = vadd.f32 %v6552, %v6569
    %v6579 = vadd.f32 %v6553, %v6571
    %s6580 = sld [smem:[#allocation10 + $0x24]]
    %v6581 = vstv %s6580
    %v6582 = vmul.f32 %v6581, %v5570
    %v6583 = vmul.f32 %v6581, %v5571
    %v6584 = vmul.f32 %v6581, %v5573
    %v6585 = vmul.f32 %v6581, %v5574
    %v6586 = vadd.f32 %v6576, %v6582
    %v6587 = vadd.f32 %v6577, %v6583
    %v6588 = vadd.f32 %v6578, %v6584
    %v6589 = vadd.f32 %v6579, %v6585
    %s6590 = sld [smem:[#allocation10 + $0x25]]
    %v6591 = vstv %s6590
    %v6592 = vmul.f32 %v6591, %v5570
    %v6593 = vmul.f32 %v6591, %v5571
    %v6594 = vmul.f32 %v6591, %v5573
    %v6595 = vmul.f32 %v6591, %v5574
    %6600 = vrot.lane.b32.xlu0 %v6592, 124
    %v6601 = vpop.permute.xlu0 %6600
    %6602 = vrot.lane.b32.xlu0 %v6593, 124
    %v6603 = vpop.permute.xlu0 %6602
    %6604 = vrot.lane.b32.xlu0 %v6594, 124
    %v6605 = vpop.permute.xlu0 %6604
    %6606 = vrot.lane.b32.xlu0 %v6595, 124
    %v6607 = vpop.permute.xlu0 %6606
    %v6612 = vadd.f32 %v6586, %v6601
    %v6613 = vadd.f32 %v6587, %v6603
    %v6614 = vadd.f32 %v6588, %v6605
    %v6615 = vadd.f32 %v6589, %v6607
    %s6616 = sld [smem:[#allocation10 + $0x26]]
    %v6617 = vstv %s6616
    %v6618 = vmul.f32 %v6617, %v5570
    %v6619 = vmul.f32 %v6617, %v5571
    %v6620 = vmul.f32 %v6617, %v5573
    %v6621 = vmul.f32 %v6617, %v5574
    %6626 = vrot.lane.b32.xlu0 %v6618, 120
    %v6627 = vpop.permute.xlu0 %6626
    %6628 = vrot.lane.b32.xlu0 %v6619, 120
    %v6629 = vpop.permute.xlu0 %6628
    %6630 = vrot.lane.b32.xlu0 %v6620, 120
    %v6631 = vpop.permute.xlu0 %6630
    %6632 = vrot.lane.b32.xlu0 %v6621, 120
    %v6633 = vpop.permute.xlu0 %6632
    %v6638 = vadd.f32 %v6612, %v6627
    %v6639 = vadd.f32 %v6613, %v6629
    %v6640 = vadd.f32 %v6614, %v6631
    %v6641 = vadd.f32 %v6615, %v6633
    %s6642 = sld [smem:[#allocation10 + $0x27]]
    %v6643 = vstv %s6642
    %v6644 = vmul.f32 %v6643, %v5570
    %v6645 = vmul.f32 %v6643, %v5571
    %v6646 = vmul.f32 %v6643, %v5572
    %v6647 = vmul.f32 %v6643, %v5573
    %v6648 = vmul.f32 %v6643, %v5574
    %v6649 = vmul.f32 %v6643, %v5575
    %v6656 = vrot.slane %v6644, 4
    %v6657 = vrot.slane %v6645, 4
    %v6658 = vsel %vm2075, %v6656, %v6657
    %v6659 = vrot.slane %v6646, 4
    %v6660 = vsel %vm2075, %v6657, %v6659
    %v6661 = vrot.slane %v6647, 4
    %v6662 = vrot.slane %v6648, 4
    %v6663 = vsel %vm2075, %v6661, %v6662
    %v6664 = vrot.slane %v6649, 4
    %v6665 = vsel %vm2075, %v6662, %v6664
    %v6670 = vadd.f32 %v6638, %v6658
    %v6671 = vadd.f32 %v6639, %v6660
    %v6672 = vadd.f32 %v6640, %v6663
    %v6673 = vadd.f32 %v6641, %v6665
    %s6674 = sld [smem:[#allocation10 + $0x28]]
    %v6675 = vstv %s6674
    %v6676 = vmul.f32 %v6675, %v5570
    %v6677 = vmul.f32 %v6675, %v5571
    %v6678 = vmul.f32 %v6675, %v5572
    %v6679 = vmul.f32 %v6675, %v5573
    %v6680 = vmul.f32 %v6675, %v5574
    %v6681 = vmul.f32 %v6675, %v5575
    %v6688 = vrot.slane %v6676, 4
    %v6689 = vrot.slane %v6677, 4
    %v6690 = vsel %vm2075, %v6688, %v6689
    %v6691 = vrot.slane %v6678, 4
    %v6692 = vsel %vm2075, %v6689, %v6691
    %v6693 = vrot.slane %v6679, 4
    %v6694 = vrot.slane %v6680, 4
    %v6695 = vsel %vm2075, %v6693, %v6694
    %v6696 = vrot.slane %v6681, 4
    %v6697 = vsel %vm2075, %v6694, %v6696
    %6698 = vrot.lane.b32.xlu0 %v6690, 124
    %v6699 = vpop.permute.xlu0 %6698
    %6700 = vrot.lane.b32.xlu0 %v6692, 124
    %v6701 = vpop.permute.xlu0 %6700
    %6702 = vrot.lane.b32.xlu0 %v6695, 124
    %v6703 = vpop.permute.xlu0 %6702
    %6704 = vrot.lane.b32.xlu0 %v6697, 124
    %v6705 = vpop.permute.xlu0 %6704
    %v6710 = vadd.f32 %v6670, %v6699
    %v6711 = vadd.f32 %v6671, %v6701
    %v6712 = vadd.f32 %v6672, %v6703
    %v6713 = vadd.f32 %v6673, %v6705
    %s6714 = sld [smem:[#allocation10 + $0x29]]
    %v6715 = vstv %s6714
    %v6716 = vmul.f32 %v6715, %v5570
    %v6717 = vmul.f32 %v6715, %v5571
    %v6718 = vmul.f32 %v6715, %v5572
    %v6719 = vmul.f32 %v6715, %v5573
    %v6720 = vmul.f32 %v6715, %v5574
    %v6721 = vmul.f32 %v6715, %v5575
    %v6728 = vrot.slane %v6716, 4
    %v6729 = vrot.slane %v6717, 4
    %v6730 = vsel %vm2075, %v6728, %v6729
    %v6731 = vrot.slane %v6718, 4
    %v6732 = vsel %vm2075, %v6729, %v6731
    %v6733 = vrot.slane %v6719, 4
    %v6734 = vrot.slane %v6720, 4
    %v6735 = vsel %vm2075, %v6733, %v6734
    %v6736 = vrot.slane %v6721, 4
    %v6737 = vsel %vm2075, %v6734, %v6736
    %6738 = vrot.lane.b32.xlu0 %v6730, 120
    %v6739 = vpop.permute.xlu0 %6738
    %6740 = vrot.lane.b32.xlu0 %v6732, 120
    %v6741 = vpop.permute.xlu0 %6740
    %6742 = vrot.lane.b32.xlu0 %v6735, 120
    %v6743 = vpop.permute.xlu0 %6742
    %6744 = vrot.lane.b32.xlu0 %v6737, 120
    %v6745 = vpop.permute.xlu0 %6744
    %v6750 = vadd.f32 %v6710, %v6739
    %v6751 = vadd.f32 %v6711, %v6741
    %v6752 = vadd.f32 %v6712, %v6743
    %v6753 = vadd.f32 %v6713, %v6745
    %s6754 = sld [smem:[#allocation10 + $0x2a]]
    %v6755 = vstv %s6754
    %v6756 = vmul.f32 %v6755, %v5571
    %v6757 = vmul.f32 %v6755, %v5572
    %v6758 = vmul.f32 %v6755, %v5574
    %v6759 = vmul.f32 %v6755, %v5575
    %v6760 = vadd.f32 %v6750, %v6756
    %v6761 = vadd.f32 %v6751, %v6757
    %v6762 = vadd.f32 %v6752, %v6758
    %v6763 = vadd.f32 %v6753, %v6759
    %s6764 = sld [smem:[#allocation10 + $0x2b]]
    %v6765 = vstv %s6764
    %v6766 = vmul.f32 %v6765, %v5571
    %v6767 = vmul.f32 %v6765, %v5572
    %v6768 = vmul.f32 %v6765, %v5574
    %v6769 = vmul.f32 %v6765, %v5575
    %6774 = vrot.lane.b32.xlu0 %v6766, 124
    %v6775 = vpop.permute.xlu0 %6774
    %6776 = vrot.lane.b32.xlu0 %v6767, 124
    %v6777 = vpop.permute.xlu0 %6776
    %6778 = vrot.lane.b32.xlu0 %v6768, 124
    %v6779 = vpop.permute.xlu0 %6778
    %6780 = vrot.lane.b32.xlu0 %v6769, 124
    %v6781 = vpop.permute.xlu0 %6780
    %v6786 = vadd.f32 %v6760, %v6775
    %v6787 = vadd.f32 %v6761, %v6777
    %v6788 = vadd.f32 %v6762, %v6779
    %v6789 = vadd.f32 %v6763, %v6781
    %s6790 = sld [smem:[#allocation10 + $0x2c]]
    %v6791 = vstv %s6790
    %v6792 = vmul.f32 %v6791, %v5571
    %v6793 = vmul.f32 %v6791, %v5572
    %v6794 = vmul.f32 %v6791, %v5574
    %v6795 = vmul.f32 %v6791, %v5575
    %6800 = vrot.lane.b32.xlu0 %v6792, 120
    %v6801 = vpop.permute.xlu0 %6800
    %6802 = vrot.lane.b32.xlu0 %v6793, 120
    %v6803 = vpop.permute.xlu0 %6802
    %6804 = vrot.lane.b32.xlu0 %v6794, 120
    %v6805 = vpop.permute.xlu0 %6804
    %6806 = vrot.lane.b32.xlu0 %v6795, 120
    %v6807 = vpop.permute.xlu0 %6806
    %v6812 = vadd.f32 %v6786, %v6801
    %v6813 = vadd.f32 %v6787, %v6803
    %v6814 = vadd.f32 %v6788, %v6805
    %v6815 = vadd.f32 %v6789, %v6807
    %s6816 = sld [smem:[#allocation10 + $0x2d]]
    %v6817 = vstv %s6816
    %v6818 = vmul.f32 %v6817, %v5628
    %v6819 = vmul.f32 %v6817, %v5629
    %v6820 = vmul.f32 %v6817, %v5631
    %v6821 = vmul.f32 %v6817, %v5632
    %v6822 = vadd.f32 %v6812, %v6818
    %v6823 = vadd.f32 %v6813, %v6819
    %v6824 = vadd.f32 %v6814, %v6820
    %v6825 = vadd.f32 %v6815, %v6821
    %s6826 = sld [smem:[#allocation10 + $0x2e]]
    %v6827 = vstv %s6826
    %v6828 = vmul.f32 %v6827, %v5628
    %v6829 = vmul.f32 %v6827, %v5629
    %v6830 = vmul.f32 %v6827, %v5631
    %v6831 = vmul.f32 %v6827, %v5632
    %6836 = vrot.lane.b32.xlu0 %v6828, 124
    %v6837 = vpop.permute.xlu0 %6836
    %6838 = vrot.lane.b32.xlu0 %v6829, 124
    %v6839 = vpop.permute.xlu0 %6838
    %6840 = vrot.lane.b32.xlu0 %v6830, 124
    %v6841 = vpop.permute.xlu0 %6840
    %6842 = vrot.lane.b32.xlu0 %v6831, 124
    %v6843 = vpop.permute.xlu0 %6842
    %v6848 = vadd.f32 %v6822, %v6837
    %v6849 = vadd.f32 %v6823, %v6839
    %v6850 = vadd.f32 %v6824, %v6841
    %v6851 = vadd.f32 %v6825, %v6843
    %s6852 = sld [smem:[#allocation10 + $0x2f]]
    %v6853 = vstv %s6852
    %v6854 = vmul.f32 %v6853, %v5628
    %v6855 = vmul.f32 %v6853, %v5629
    %v6856 = vmul.f32 %v6853, %v5631
    %v6857 = vmul.f32 %v6853, %v5632
    %6862 = vrot.lane.b32.xlu0 %v6854, 120
    %v6863 = vpop.permute.xlu0 %6862
    %6864 = vrot.lane.b32.xlu0 %v6855, 120
    %v6865 = vpop.permute.xlu0 %6864
    %6866 = vrot.lane.b32.xlu0 %v6856, 120
    %v6867 = vpop.permute.xlu0 %6866
    %6868 = vrot.lane.b32.xlu0 %v6857, 120
    %v6869 = vpop.permute.xlu0 %6868
    %v6874 = vadd.f32 %v6848, %v6863
    %v6875 = vadd.f32 %v6849, %v6865
    %v6876 = vadd.f32 %v6850, %v6867
    %v6877 = vadd.f32 %v6851, %v6869
    %s6878 = sld [smem:[#allocation10 + $0x30]]
    %v6879 = vstv %s6878
    %v6880 = vmul.f32 %v6879, %v5628
    %v6881 = vmul.f32 %v6879, %v5629
    %v6882 = vmul.f32 %v6879, %v5630
    %v6883 = vmul.f32 %v6879, %v5631
    %v6884 = vmul.f32 %v6879, %v5632
    %v6885 = vmul.f32 %v6879, %v5633
    %v6892 = vrot.slane %v6880, 4
    %v6893 = vrot.slane %v6881, 4
    %v6894 = vsel %vm2075, %v6892, %v6893
    %v6895 = vrot.slane %v6882, 4
    %v6896 = vsel %vm2075, %v6893, %v6895
    %v6897 = vrot.slane %v6883, 4
    %v6898 = vrot.slane %v6884, 4
    %v6899 = vsel %vm2075, %v6897, %v6898
    %v6900 = vrot.slane %v6885, 4
    %v6901 = vsel %vm2075, %v6898, %v6900
    %v6906 = vadd.f32 %v6874, %v6894
    %v6907 = vadd.f32 %v6875, %v6896
    %v6908 = vadd.f32 %v6876, %v6899
    %v6909 = vadd.f32 %v6877, %v6901
    %s6910 = sld [smem:[#allocation10 + $0x31]]
    %v6911 = vstv %s6910
    %v6912 = vmul.f32 %v6911, %v5628
    %v6913 = vmul.f32 %v6911, %v5629
    %v6914 = vmul.f32 %v6911, %v5630
    %v6915 = vmul.f32 %v6911, %v5631
    %v6916 = vmul.f32 %v6911, %v5632
    %v6917 = vmul.f32 %v6911, %v5633
    %v6924 = vrot.slane %v6912, 4
    %v6925 = vrot.slane %v6913, 4
    %v6926 = vsel %vm2075, %v6924, %v6925
    %v6927 = vrot.slane %v6914, 4
    %v6928 = vsel %vm2075, %v6925, %v6927
    %v6929 = vrot.slane %v6915, 4
    %v6930 = vrot.slane %v6916, 4
    %v6931 = vsel %vm2075, %v6929, %v6930
    %v6932 = vrot.slane %v6917, 4
    %v6933 = vsel %vm2075, %v6930, %v6932
    %6934 = vrot.lane.b32.xlu0 %v6926, 124
    %v6935 = vpop.permute.xlu0 %6934
    %6936 = vrot.lane.b32.xlu0 %v6928, 124
    %v6937 = vpop.permute.xlu0 %6936
    %6938 = vrot.lane.b32.xlu0 %v6931, 124
    %v6939 = vpop.permute.xlu0 %6938
    %6940 = vrot.lane.b32.xlu0 %v6933, 124
    %v6941 = vpop.permute.xlu0 %6940
    %v6946 = vadd.f32 %v6906, %v6935
    %v6947 = vadd.f32 %v6907, %v6937
    %v6948 = vadd.f32 %v6908, %v6939
    %v6949 = vadd.f32 %v6909, %v6941
    %s6950 = sld [smem:[#allocation10 + $0x32]]
    %v6951 = vstv %s6950
    %v6952 = vmul.f32 %v6951, %v5628
    %v6953 = vmul.f32 %v6951, %v5629
    %v6954 = vmul.f32 %v6951, %v5630
    %v6955 = vmul.f32 %v6951, %v5631
    %v6956 = vmul.f32 %v6951, %v5632
    %v6957 = vmul.f32 %v6951, %v5633
    %v6964 = vrot.slane %v6952, 4
    %v6965 = vrot.slane %v6953, 4
    %v6966 = vsel %vm2075, %v6964, %v6965
    %v6967 = vrot.slane %v6954, 4
    %v6968 = vsel %vm2075, %v6965, %v6967
    %v6969 = vrot.slane %v6955, 4
    %v6970 = vrot.slane %v6956, 4
    %v6971 = vsel %vm2075, %v6969, %v6970
    %v6972 = vrot.slane %v6957, 4
    %v6973 = vsel %vm2075, %v6970, %v6972
    %6974 = vrot.lane.b32.xlu0 %v6966, 120
    %v6975 = vpop.permute.xlu0 %6974
    %6976 = vrot.lane.b32.xlu0 %v6968, 120
    %v6977 = vpop.permute.xlu0 %6976
    %6978 = vrot.lane.b32.xlu0 %v6971, 120
    %v6979 = vpop.permute.xlu0 %6978
    %6980 = vrot.lane.b32.xlu0 %v6973, 120
    %v6981 = vpop.permute.xlu0 %6980
    %v6986 = vadd.f32 %v6946, %v6975
    %v6987 = vadd.f32 %v6947, %v6977
    %v6988 = vadd.f32 %v6948, %v6979
    %v6989 = vadd.f32 %v6949, %v6981
    %s6990 = sld [smem:[#allocation10 + $0x33]]
    %v6991 = vstv %s6990
    %v6992 = vmul.f32 %v6991, %v5629
    %v6993 = vmul.f32 %v6991, %v5630
    %v6994 = vmul.f32 %v6991, %v5632
    %v6995 = vmul.f32 %v6991, %v5633
    %v6996 = vadd.f32 %v6986, %v6992
    %v6997 = vadd.f32 %v6987, %v6993
    %v6998 = vadd.f32 %v6988, %v6994
    %v6999 = vadd.f32 %v6989, %v6995
    %s7000 = sld [smem:[#allocation10 + $0x34]]
    %v7001 = vstv %s7000
    %v7002 = vmul.f32 %v7001, %v5629
    %v7003 = vmul.f32 %v7001, %v5630
    %v7004 = vmul.f32 %v7001, %v5632
    %v7005 = vmul.f32 %v7001, %v5633
    %7010 = vrot.lane.b32.xlu0 %v7002, 124
    %v7011 = vpop.permute.xlu0 %7010
    %7012 = vrot.lane.b32.xlu0 %v7003, 124
    %v7013 = vpop.permute.xlu0 %7012
    %7014 = vrot.lane.b32.xlu0 %v7004, 124
    %v7015 = vpop.permute.xlu0 %7014
    %7016 = vrot.lane.b32.xlu0 %v7005, 124
    %v7017 = vpop.permute.xlu0 %7016
    %v7022 = vadd.f32 %v6996, %v7011
    %v7023 = vadd.f32 %v6997, %v7013
    %v7024 = vadd.f32 %v6998, %v7015
    %v7025 = vadd.f32 %v6999, %v7017
    %s7026 = sld [smem:[#allocation10 + $0x35]]
    %v7027 = vstv %s7026
    %v7028 = vmul.f32 %v7027, %v5629
    %v7029 = vmul.f32 %v7027, %v5630
    %v7030 = vmul.f32 %v7027, %v5632
    %v7031 = vmul.f32 %v7027, %v5633
    %7036 = vrot.lane.b32.xlu0 %v7028, 120
    %v7037 = vpop.permute.xlu0 %7036
    %7038 = vrot.lane.b32.xlu0 %v7029, 120
    %v7039 = vpop.permute.xlu0 %7038
    %7040 = vrot.lane.b32.xlu0 %v7030, 120
    %v7041 = vpop.permute.xlu0 %7040
    %7042 = vrot.lane.b32.xlu0 %v7031, 120
    %v7043 = vpop.permute.xlu0 %7042
    %v7048 = vadd.f32 %v7022, %v7037
    %v7049 = vadd.f32 %v7023, %v7039
    %v7050 = vadd.f32 %v7024, %v7041
    %v7051 = vadd.f32 %v7025, %v7043
    %s7052 = sld [smem:[#allocation11 + $0x1]]
    %v7053 = vstv %s7052
    %v7054 = vadd.f32 %v7048, %v7053
    %v7055 = vadd.f32 %v7049, %v7053
    %v7056 = vadd.f32 %v7050, %v7053
    %v7057 = vadd.f32 %v7051, %v7053
    %v7058 = vmax.f32 %v7054, 0.0
    %v7059 = vmax.f32 %v7055, 0.0
    %v7060 = vmax.f32 %v7056, 0.0
    %v7061 = vmax.f32 %v7057, 0.0
    %s7062 = sld [smem:[#allocation10 + $0x36]]
    %v7063 = vstv %s7062
    %v7064 = vmul.f32 %v7063, %v5512
    %v7065 = vmul.f32 %v7063, %v5513
    %v7066 = vmul.f32 %v7063, %v5515
    %v7067 = vmul.f32 %v7063, %v5516
    %s7068 = sld [smem:[#allocation10 + $0x37]]
    %v7069 = vstv %s7068
    %v7070 = vmul.f32 %v7069, %v5512
    %v7071 = vmul.f32 %v7069, %v5513
    %v7072 = vmul.f32 %v7069, %v5515
    %v7073 = vmul.f32 %v7069, %v5516
    %7078 = vrot.lane.b32.xlu0 %v7070, 124
    %v7079 = vpop.permute.xlu0 %7078
    %7080 = vrot.lane.b32.xlu0 %v7071, 124
    %v7081 = vpop.permute.xlu0 %7080
    %7082 = vrot.lane.b32.xlu0 %v7072, 124
    %v7083 = vpop.permute.xlu0 %7082
    %7084 = vrot.lane.b32.xlu0 %v7073, 124
    %v7085 = vpop.permute.xlu0 %7084
    %v7090 = vadd.f32 %v7064, %v7079
    %v7091 = vadd.f32 %v7065, %v7081
    %v7092 = vadd.f32 %v7066, %v7083
    %v7093 = vadd.f32 %v7067, %v7085
    %s7094 = sld [smem:[#allocation10 + $0x38]]
    %v7095 = vstv %s7094
    %v7096 = vmul.f32 %v7095, %v5512
    %v7097 = vmul.f32 %v7095, %v5513
    %v7098 = vmul.f32 %v7095, %v5515
    %v7099 = vmul.f32 %v7095, %v5516
    %7104 = vrot.lane.b32.xlu0 %v7096, 120
    %v7105 = vpop.permute.xlu0 %7104
    %7106 = vrot.lane.b32.xlu0 %v7097, 120
    %v7107 = vpop.permute.xlu0 %7106
    %7108 = vrot.lane.b32.xlu0 %v7098, 120
    %v7109 = vpop.permute.xlu0 %7108
    %7110 = vrot.lane.b32.xlu0 %v7099, 120
    %v7111 = vpop.permute.xlu0 %7110
    %v7116 = vadd.f32 %v7090, %v7105
    %v7117 = vadd.f32 %v7091, %v7107
    %v7118 = vadd.f32 %v7092, %v7109
    %v7119 = vadd.f32 %v7093, %v7111
    %s7120 = sld [smem:[#allocation10 + $0x39]]
    %v7121 = vstv %s7120
    %v7122 = vmul.f32 %v7121, %v5512
    %v7123 = vmul.f32 %v7121, %v5513
    %v7124 = vmul.f32 %v7121, %v5514
    %v7125 = vmul.f32 %v7121, %v5515
    %v7126 = vmul.f32 %v7121, %v5516
    %v7127 = vmul.f32 %v7121, %v5517
    %v7134 = vrot.slane %v7122, 4
    %v7135 = vrot.slane %v7123, 4
    %v7136 = vsel %vm2075, %v7134, %v7135
    %v7137 = vrot.slane %v7124, 4
    %v7138 = vsel %vm2075, %v7135, %v7137
    %v7139 = vrot.slane %v7125, 4
    %v7140 = vrot.slane %v7126, 4
    %v7141 = vsel %vm2075, %v7139, %v7140
    %v7142 = vrot.slane %v7127, 4
    %v7143 = vsel %vm2075, %v7140, %v7142
    %v7148 = vadd.f32 %v7116, %v7136
    %v7149 = vadd.f32 %v7117, %v7138
    %v7150 = vadd.f32 %v7118, %v7141
    %v7151 = vadd.f32 %v7119, %v7143
    %s7152 = sld [smem:[#allocation10 + $0x3a]]
    %v7153 = vstv %s7152
    %v7154 = vmul.f32 %v7153, %v5512
    %v7155 = vmul.f32 %v7153, %v5513
    %v7156 = vmul.f32 %v7153, %v5514
    %v7157 = vmul.f32 %v7153, %v5515
    %v7158 = vmul.f32 %v7153, %v5516
    %v7159 = vmul.f32 %v7153, %v5517
    %v7166 = vrot.slane %v7154, 4
    %v7167 = vrot.slane %v7155, 4
    %v7168 = vsel %vm2075, %v7166, %v7167
    %v7169 = vrot.slane %v7156, 4
    %v7170 = vsel %vm2075, %v7167, %v7169
    %v7171 = vrot.slane %v7157, 4
    %v7172 = vrot.slane %v7158, 4
    %v7173 = vsel %vm2075, %v7171, %v7172
    %v7174 = vrot.slane %v7159, 4
    %v7175 = vsel %vm2075, %v7172, %v7174
    %7176 = vrot.lane.b32.xlu0 %v7168, 124
    %v7177 = vpop.permute.xlu0 %7176
    %7178 = vrot.lane.b32.xlu0 %v7170, 124
    %v7179 = vpop.permute.xlu0 %7178
    %7180 = vrot.lane.b32.xlu0 %v7173, 124
    %v7181 = vpop.permute.xlu0 %7180
    %7182 = vrot.lane.b32.xlu0 %v7175, 124
    %v7183 = vpop.permute.xlu0 %7182
    %v7188 = vadd.f32 %v7148, %v7177
    %v7189 = vadd.f32 %v7149, %v7179
    %v7190 = vadd.f32 %v7150, %v7181
    %v7191 = vadd.f32 %v7151, %v7183
    %s7192 = sld [smem:[#allocation10 + $0x3b]]
    %v7193 = vstv %s7192
    %v7194 = vmul.f32 %v7193, %v5512
    %v7195 = vmul.f32 %v7193, %v5513
    %v7196 = vmul.f32 %v7193, %v5514
    %v7197 = vmul.f32 %v7193, %v5515
    %v7198 = vmul.f32 %v7193, %v5516
    %v7199 = vmul.f32 %v7193, %v5517
    %v7206 = vrot.slane %v7194, 4
    %v7207 = vrot.slane %v7195, 4
    %v7208 = vsel %vm2075, %v7206, %v7207
    %v7209 = vrot.slane %v7196, 4
    %v7210 = vsel %vm2075, %v7207, %v7209
    %v7211 = vrot.slane %v7197, 4
    %v7212 = vrot.slane %v7198, 4
    %v7213 = vsel %vm2075, %v7211, %v7212
    %v7214 = vrot.slane %v7199, 4
    %v7215 = vsel %vm2075, %v7212, %v7214
    %7216 = vrot.lane.b32.xlu0 %v7208, 120
    %v7217 = vpop.permute.xlu0 %7216
    %7218 = vrot.lane.b32.xlu0 %v7210, 120
    %v7219 = vpop.permute.xlu0 %7218
    %7220 = vrot.lane.b32.xlu0 %v7213, 120
    %v7221 = vpop.permute.xlu0 %7220
    %7222 = vrot.lane.b32.xlu0 %v7215, 120
    %v7223 = vpop.permute.xlu0 %7222
    %v7228 = vadd.f32 %v7188, %v7217
    %v7229 = vadd.f32 %v7189, %v7219
    %v7230 = vadd.f32 %v7190, %v7221
    %v7231 = vadd.f32 %v7191, %v7223
    %s7232 = sld [smem:[#allocation10 + $0x3c]]
    %v7233 = vstv %s7232
    %v7234 = vmul.f32 %v7233, %v5513
    %v7235 = vmul.f32 %v7233, %v5514
    %v7236 = vmul.f32 %v7233, %v5516
    %v7237 = vmul.f32 %v7233, %v5517
    %v7238 = vadd.f32 %v7228, %v7234
    %v7239 = vadd.f32 %v7229, %v7235
    %v7240 = vadd.f32 %v7230, %v7236
    %v7241 = vadd.f32 %v7231, %v7237
    %s7242 = sld [smem:[#allocation10 + $0x3d]]
    %v7243 = vstv %s7242
    %v7244 = vmul.f32 %v7243, %v5513
    %v7245 = vmul.f32 %v7243, %v5514
    %v7246 = vmul.f32 %v7243, %v5516
    %v7247 = vmul.f32 %v7243, %v5517
    %7252 = vrot.lane.b32.xlu0 %v7244, 124
    %v7253 = vpop.permute.xlu0 %7252
    %7254 = vrot.lane.b32.xlu0 %v7245, 124
    %v7255 = vpop.permute.xlu0 %7254
    %7256 = vrot.lane.b32.xlu0 %v7246, 124
    %v7257 = vpop.permute.xlu0 %7256
    %7258 = vrot.lane.b32.xlu0 %v7247, 124
    %v7259 = vpop.permute.xlu0 %7258
    %v7264 = vadd.f32 %v7238, %v7253
    %v7265 = vadd.f32 %v7239, %v7255
    %v7266 = vadd.f32 %v7240, %v7257
    %v7267 = vadd.f32 %v7241, %v7259
    %s7268 = sld [smem:[#allocation10 + $0x3e]]
    %v7269 = vstv %s7268
    %v7270 = vmul.f32 %v7269, %v5513
    %v7271 = vmul.f32 %v7269, %v5514
    %v7272 = vmul.f32 %v7269, %v5516
    %v7273 = vmul.f32 %v7269, %v5517
    %7278 = vrot.lane.b32.xlu0 %v7270, 120
    %v7279 = vpop.permute.xlu0 %7278
    %7280 = vrot.lane.b32.xlu0 %v7271, 120
    %v7281 = vpop.permute.xlu0 %7280
    %7282 = vrot.lane.b32.xlu0 %v7272, 120
    %v7283 = vpop.permute.xlu0 %7282
    %7284 = vrot.lane.b32.xlu0 %v7273, 120
    %v7285 = vpop.permute.xlu0 %7284
    %v7290 = vadd.f32 %v7264, %v7279
    %v7291 = vadd.f32 %v7265, %v7281
    %v7292 = vadd.f32 %v7266, %v7283
    %v7293 = vadd.f32 %v7267, %v7285
    %s7294 = sld [smem:[#allocation10 + $0x3f]]
    %v7295 = vstv %s7294
    %v7296 = vmul.f32 %v7295, %v5570
    %v7297 = vmul.f32 %v7295, %v5571
    %v7298 = vmul.f32 %v7295, %v5573
    %v7299 = vmul.f32 %v7295, %v5574
    %v7300 = vadd.f32 %v7290, %v7296
    %v7301 = vadd.f32 %v7291, %v7297
    %v7302 = vadd.f32 %v7292, %v7298
    %v7303 = vadd.f32 %v7293, %v7299
    %s7304 = sld [smem:[#allocation10 + $0x40]]
    %v7305 = vstv %s7304
    %v7306 = vmul.f32 %v7305, %v5570
    %v7307 = vmul.f32 %v7305, %v5571
    %v7308 = vmul.f32 %v7305, %v5573
    %v7309 = vmul.f32 %v7305, %v5574
    %7314 = vrot.lane.b32.xlu0 %v7306, 124
    %v7315 = vpop.permute.xlu0 %7314
    %7316 = vrot.lane.b32.xlu0 %v7307, 124
    %v7317 = vpop.permute.xlu0 %7316
    %7318 = vrot.lane.b32.xlu0 %v7308, 124
    %v7319 = vpop.permute.xlu0 %7318
    %7320 = vrot.lane.b32.xlu0 %v7309, 124
    %v7321 = vpop.permute.xlu0 %7320
    %v7326 = vadd.f32 %v7300, %v7315
    %v7327 = vadd.f32 %v7301, %v7317
    %v7328 = vadd.f32 %v7302, %v7319
    %v7329 = vadd.f32 %v7303, %v7321
    %s7330 = sld [smem:[#allocation10 + $0x41]]
    %v7331 = vstv %s7330
    %v7332 = vmul.f32 %v7331, %v5570
    %v7333 = vmul.f32 %v7331, %v5571
    %v7334 = vmul.f32 %v7331, %v5573
    %v7335 = vmul.f32 %v7331, %v5574
    %7340 = vrot.lane.b32.xlu0 %v7332, 120
    %v7341 = vpop.permute.xlu0 %7340
    %7342 = vrot.lane.b32.xlu0 %v7333, 120
    %v7343 = vpop.permute.xlu0 %7342
    %7344 = vrot.lane.b32.xlu0 %v7334, 120
    %v7345 = vpop.permute.xlu0 %7344
    %7346 = vrot.lane.b32.xlu0 %v7335, 120
    %v7347 = vpop.permute.xlu0 %7346
    %v7352 = vadd.f32 %v7326, %v7341
    %v7353 = vadd.f32 %v7327, %v7343
    %v7354 = vadd.f32 %v7328, %v7345
    %v7355 = vadd.f32 %v7329, %v7347
    %s7356 = sld [smem:[#allocation10 + $0x42]]
    %v7357 = vstv %s7356
    %v7358 = vmul.f32 %v7357, %v5570
    %v7359 = vmul.f32 %v7357, %v5571
    %v7360 = vmul.f32 %v7357, %v5572
    %v7361 = vmul.f32 %v7357, %v5573
    %v7362 = vmul.f32 %v7357, %v5574
    %v7363 = vmul.f32 %v7357, %v5575
    %v7370 = vrot.slane %v7358, 4
    %v7371 = vrot.slane %v7359, 4
    %v7372 = vsel %vm2075, %v7370, %v7371
    %v7373 = vrot.slane %v7360, 4
    %v7374 = vsel %vm2075, %v7371, %v7373
    %v7375 = vrot.slane %v7361, 4
    %v7376 = vrot.slane %v7362, 4
    %v7377 = vsel %vm2075, %v7375, %v7376
    %v7378 = vrot.slane %v7363, 4
    %v7379 = vsel %vm2075, %v7376, %v7378
    %v7384 = vadd.f32 %v7352, %v7372
    %v7385 = vadd.f32 %v7353, %v7374
    %v7386 = vadd.f32 %v7354, %v7377
    %v7387 = vadd.f32 %v7355, %v7379
    %s7388 = sld [smem:[#allocation10 + $0x43]]
    %v7389 = vstv %s7388
    %v7390 = vmul.f32 %v7389, %v5570
    %v7391 = vmul.f32 %v7389, %v5571
    %v7392 = vmul.f32 %v7389, %v5572
    %v7393 = vmul.f32 %v7389, %v5573
    %v7394 = vmul.f32 %v7389, %v5574
    %v7395 = vmul.f32 %v7389, %v5575
    %v7402 = vrot.slane %v7390, 4
    %v7403 = vrot.slane %v7391, 4
    %v7404 = vsel %vm2075, %v7402, %v7403
    %v7405 = vrot.slane %v7392, 4
    %v7406 = vsel %vm2075, %v7403, %v7405
    %v7407 = vrot.slane %v7393, 4
    %v7408 = vrot.slane %v7394, 4
    %v7409 = vsel %vm2075, %v7407, %v7408
    %v7410 = vrot.slane %v7395, 4
    %v7411 = vsel %vm2075, %v7408, %v7410
    %7412 = vrot.lane.b32.xlu0 %v7404, 124
    %v7413 = vpop.permute.xlu0 %7412
    %7414 = vrot.lane.b32.xlu0 %v7406, 124
    %v7415 = vpop.permute.xlu0 %7414
    %7416 = vrot.lane.b32.xlu0 %v7409, 124
    %v7417 = vpop.permute.xlu0 %7416
    %7418 = vrot.lane.b32.xlu0 %v7411, 124
    %v7419 = vpop.permute.xlu0 %7418
    %v7424 = vadd.f32 %v7384, %v7413
    %v7425 = vadd.f32 %v7385, %v7415
    %v7426 = vadd.f32 %v7386, %v7417
    %v7427 = vadd.f32 %v7387, %v7419
    %s7428 = sld [smem:[#allocation10 + $0x44]]
    %v7429 = vstv %s7428
    %v7430 = vmul.f32 %v7429, %v5570
    %v7431 = vmul.f32 %v7429, %v5571
    %v7432 = vmul.f32 %v7429, %v5572
    %v7433 = vmul.f32 %v7429, %v5573
    %v7434 = vmul.f32 %v7429, %v5574
    %v7435 = vmul.f32 %v7429, %v5575
    %v7442 = vrot.slane %v7430, 4
    %v7443 = vrot.slane %v7431, 4
    %v7444 = vsel %vm2075, %v7442, %v7443
    %v7445 = vrot.slane %v7432, 4
    %v7446 = vsel %vm2075, %v7443, %v7445
    %v7447 = vrot.slane %v7433, 4
    %v7448 = vrot.slane %v7434, 4
    %v7449 = vsel %vm2075, %v7447, %v7448
    %v7450 = vrot.slane %v7435, 4
    %v7451 = vsel %vm2075, %v7448, %v7450
    %7452 = vrot.lane.b32.xlu0 %v7444, 120
    %v7453 = vpop.permute.xlu0 %7452
    %7454 = vrot.lane.b32.xlu0 %v7446, 120
    %v7455 = vpop.permute.xlu0 %7454
    %7456 = vrot.lane.b32.xlu0 %v7449, 120
    %v7457 = vpop.permute.xlu0 %7456
    %7458 = vrot.lane.b32.xlu0 %v7451, 120
    %v7459 = vpop.permute.xlu0 %7458
    %v7464 = vadd.f32 %v7424, %v7453
    %v7465 = vadd.f32 %v7425, %v7455
    %v7466 = vadd.f32 %v7426, %v7457
    %v7467 = vadd.f32 %v7427, %v7459
    %s7468 = sld [smem:[#allocation10 + $0x45]]
    %v7469 = vstv %s7468
    %v7470 = vmul.f32 %v7469, %v5571
    %v7471 = vmul.f32 %v7469, %v5572
    %v7472 = vmul.f32 %v7469, %v5574
    %v7473 = vmul.f32 %v7469, %v5575
    %v7474 = vadd.f32 %v7464, %v7470
    %v7475 = vadd.f32 %v7465, %v7471
    %v7476 = vadd.f32 %v7466, %v7472
    %v7477 = vadd.f32 %v7467, %v7473
    %s7478 = sld [smem:[#allocation10 + $0x46]]
    %v7479 = vstv %s7478
    %v7480 = vmul.f32 %v7479, %v5571
    %v7481 = vmul.f32 %v7479, %v5572
    %v7482 = vmul.f32 %v7479, %v5574
    %v7483 = vmul.f32 %v7479, %v5575
    %7488 = vrot.lane.b32.xlu0 %v7480, 124
    %v7489 = vpop.permute.xlu0 %7488
    %7490 = vrot.lane.b32.xlu0 %v7481, 124
    %v7491 = vpop.permute.xlu0 %7490
    %7492 = vrot.lane.b32.xlu0 %v7482, 124
    %v7493 = vpop.permute.xlu0 %7492
    %7494 = vrot.lane.b32.xlu0 %v7483, 124
    %v7495 = vpop.permute.xlu0 %7494
    %v7500 = vadd.f32 %v7474, %v7489
    %v7501 = vadd.f32 %v7475, %v7491
    %v7502 = vadd.f32 %v7476, %v7493
    %v7503 = vadd.f32 %v7477, %v7495
    %s7504 = sld [smem:[#allocation10 + $0x47]]
    %v7505 = vstv %s7504
    %v7506 = vmul.f32 %v7505, %v5571
    %v7507 = vmul.f32 %v7505, %v5572
    %v7508 = vmul.f32 %v7505, %v5574
    %v7509 = vmul.f32 %v7505, %v5575
    %7514 = vrot.lane.b32.xlu0 %v7506, 120
    %v7515 = vpop.permute.xlu0 %7514
    %7516 = vrot.lane.b32.xlu0 %v7507, 120
    %v7517 = vpop.permute.xlu0 %7516
    %7518 = vrot.lane.b32.xlu0 %v7508, 120
    %v7519 = vpop.permute.xlu0 %7518
    %7520 = vrot.lane.b32.xlu0 %v7509, 120
    %v7521 = vpop.permute.xlu0 %7520
    %v7526 = vadd.f32 %v7500, %v7515
    %v7527 = vadd.f32 %v7501, %v7517
    %v7528 = vadd.f32 %v7502, %v7519
    %v7529 = vadd.f32 %v7503, %v7521
    %s7530 = sld [smem:[#allocation10 + $0x48]]
    %v7531 = vstv %s7530
    %v7532 = vmul.f32 %v7531, %v5628
    %v7533 = vmul.f32 %v7531, %v5629
    %v7534 = vmul.f32 %v7531, %v5631
    %v7535 = vmul.f32 %v7531, %v5632
    %v7536 = vadd.f32 %v7526, %v7532
    %v7537 = vadd.f32 %v7527, %v7533
    %v7538 = vadd.f32 %v7528, %v7534
    %v7539 = vadd.f32 %v7529, %v7535
    %s7540 = sld [smem:[#allocation10 + $0x49]]
    %v7541 = vstv %s7540
    %v7542 = vmul.f32 %v7541, %v5628
    %v7543 = vmul.f32 %v7541, %v5629
    %v7544 = vmul.f32 %v7541, %v5631
    %v7545 = vmul.f32 %v7541, %v5632
    %7550 = vrot.lane.b32.xlu0 %v7542, 124
    %v7551 = vpop.permute.xlu0 %7550
    %7552 = vrot.lane.b32.xlu0 %v7543, 124
    %v7553 = vpop.permute.xlu0 %7552
    %7554 = vrot.lane.b32.xlu0 %v7544, 124
    %v7555 = vpop.permute.xlu0 %7554
    %7556 = vrot.lane.b32.xlu0 %v7545, 124
    %v7557 = vpop.permute.xlu0 %7556
    %v7562 = vadd.f32 %v7536, %v7551
    %v7563 = vadd.f32 %v7537, %v7553
    %v7564 = vadd.f32 %v7538, %v7555
    %v7565 = vadd.f32 %v7539, %v7557
    %s7566 = sld [smem:[#allocation10 + $0x4a]]
    %v7567 = vstv %s7566
    %v7568 = vmul.f32 %v7567, %v5628
    %v7569 = vmul.f32 %v7567, %v5629
    %v7570 = vmul.f32 %v7567, %v5631
    %v7571 = vmul.f32 %v7567, %v5632
    %7576 = vrot.lane.b32.xlu0 %v7568, 120
    %v7577 = vpop.permute.xlu0 %7576
    %7578 = vrot.lane.b32.xlu0 %v7569, 120
    %v7579 = vpop.permute.xlu0 %7578
    %7580 = vrot.lane.b32.xlu0 %v7570, 120
    %v7581 = vpop.permute.xlu0 %7580
    %7582 = vrot.lane.b32.xlu0 %v7571, 120
    %v7583 = vpop.permute.xlu0 %7582
    %v7588 = vadd.f32 %v7562, %v7577
    %v7589 = vadd.f32 %v7563, %v7579
    %v7590 = vadd.f32 %v7564, %v7581
    %v7591 = vadd.f32 %v7565, %v7583
    %s7592 = sld [smem:[#allocation10 + $0x4b]]
    %v7593 = vstv %s7592
    %v7594 = vmul.f32 %v7593, %v5628
    %v7595 = vmul.f32 %v7593, %v5629
    %v7596 = vmul.f32 %v7593, %v5630
    %v7597 = vmul.f32 %v7593, %v5631
    %v7598 = vmul.f32 %v7593, %v5632
    %v7599 = vmul.f32 %v7593, %v5633
    %v7606 = vrot.slane %v7594, 4
    %v7607 = vrot.slane %v7595, 4
    %v7608 = vsel %vm2075, %v7606, %v7607
    %v7609 = vrot.slane %v7596, 4
    %v7610 = vsel %vm2075, %v7607, %v7609
    %v7611 = vrot.slane %v7597, 4
    %v7612 = vrot.slane %v7598, 4
    %v7613 = vsel %vm2075, %v7611, %v7612
    %v7614 = vrot.slane %v7599, 4
    %v7615 = vsel %vm2075, %v7612, %v7614
    %v7620 = vadd.f32 %v7588, %v7608
    %v7621 = vadd.f32 %v7589, %v7610
    %v7622 = vadd.f32 %v7590, %v7613
    %v7623 = vadd.f32 %v7591, %v7615
    %s7624 = sld [smem:[#allocation10 + $0x4c]]
    %v7625 = vstv %s7624
    %v7626 = vmul.f32 %v7625, %v5628
    %v7627 = vmul.f32 %v7625, %v5629
    %v7628 = vmul.f32 %v7625, %v5630
    %v7629 = vmul.f32 %v7625, %v5631
    %v7630 = vmul.f32 %v7625, %v5632
    %v7631 = vmul.f32 %v7625, %v5633
    %v7638 = vrot.slane %v7626, 4
    %v7639 = vrot.slane %v7627, 4
    %v7640 = vsel %vm2075, %v7638, %v7639
    %v7641 = vrot.slane %v7628, 4
    %v7642 = vsel %vm2075, %v7639, %v7641
    %v7643 = vrot.slane %v7629, 4
    %v7644 = vrot.slane %v7630, 4
    %v7645 = vsel %vm2075, %v7643, %v7644
    %v7646 = vrot.slane %v7631, 4
    %v7647 = vsel %vm2075, %v7644, %v7646
    %7648 = vrot.lane.b32.xlu0 %v7640, 124
    %v7649 = vpop.permute.xlu0 %7648
    %7650 = vrot.lane.b32.xlu0 %v7642, 124
    %v7651 = vpop.permute.xlu0 %7650
    %7652 = vrot.lane.b32.xlu0 %v7645, 124
    %v7653 = vpop.permute.xlu0 %7652
    %7654 = vrot.lane.b32.xlu0 %v7647, 124
    %v7655 = vpop.permute.xlu0 %7654
    %v7660 = vadd.f32 %v7620, %v7649
    %v7661 = vadd.f32 %v7621, %v7651
    %v7662 = vadd.f32 %v7622, %v7653
    %v7663 = vadd.f32 %v7623, %v7655
    %s7664 = sld [smem:[#allocation10 + $0x4d]]
    %v7665 = vstv %s7664
    %v7666 = vmul.f32 %v7665, %v5628
    %v7667 = vmul.f32 %v7665, %v5629
    %v7668 = vmul.f32 %v7665, %v5630
    %v7669 = vmul.f32 %v7665, %v5631
    %v7670 = vmul.f32 %v7665, %v5632
    %v7671 = vmul.f32 %v7665, %v5633
    %v7678 = vrot.slane %v7666, 4
    %v7679 = vrot.slane %v7667, 4
    %v7680 = vsel %vm2075, %v7678, %v7679
    %v7681 = vrot.slane %v7668, 4
    %v7682 = vsel %vm2075, %v7679, %v7681
    %v7683 = vrot.slane %v7669, 4
    %v7684 = vrot.slane %v7670, 4
    %v7685 = vsel %vm2075, %v7683, %v7684
    %v7686 = vrot.slane %v7671, 4
    %v7687 = vsel %vm2075, %v7684, %v7686
    %7688 = vrot.lane.b32.xlu0 %v7680, 120
    %v7689 = vpop.permute.xlu0 %7688
    %7690 = vrot.lane.b32.xlu0 %v7682, 120
    %v7691 = vpop.permute.xlu0 %7690
    %7692 = vrot.lane.b32.xlu0 %v7685, 120
    %v7693 = vpop.permute.xlu0 %7692
    %7694 = vrot.lane.b32.xlu0 %v7687, 120
    %v7695 = vpop.permute.xlu0 %7694
    %v7700 = vadd.f32 %v7660, %v7689
    %v7701 = vadd.f32 %v7661, %v7691
    %v7702 = vadd.f32 %v7662, %v7693
    %v7703 = vadd.f32 %v7663, %v7695
    %s7704 = sld [smem:[#allocation10 + $0x4e]]
    %v7705 = vstv %s7704
    %v7706 = vmul.f32 %v7705, %v5629
    %v7707 = vmul.f32 %v7705, %v5630
    %v7708 = vmul.f32 %v7705, %v5632
    %v7709 = vmul.f32 %v7705, %v5633
    %v7710 = vadd.f32 %v7700, %v7706
    %v7711 = vadd.f32 %v7701, %v7707
    %v7712 = vadd.f32 %v7702, %v7708
    %v7713 = vadd.f32 %v7703, %v7709
    %s7714 = sld [smem:[#allocation10 + $0x4f]]
    %v7715 = vstv %s7714
    %v7716 = vmul.f32 %v7715, %v5629
    %v7717 = vmul.f32 %v7715, %v5630
    %v7718 = vmul.f32 %v7715, %v5632
    %v7719 = vmul.f32 %v7715, %v5633
    %7724 = vrot.lane.b32.xlu0 %v7716, 124
    %v7725 = vpop.permute.xlu0 %7724
    %7726 = vrot.lane.b32.xlu0 %v7717, 124
    %v7727 = vpop.permute.xlu0 %7726
    %7728 = vrot.lane.b32.xlu0 %v7718, 124
    %v7729 = vpop.permute.xlu0 %7728
    %7730 = vrot.lane.b32.xlu0 %v7719, 124
    %v7731 = vpop.permute.xlu0 %7730
    %v7736 = vadd.f32 %v7710, %v7725
    %v7737 = vadd.f32 %v7711, %v7727
    %v7738 = vadd.f32 %v7712, %v7729
    %v7739 = vadd.f32 %v7713, %v7731
    %s7740 = sld [smem:[#allocation10 + $0x50]]
    %v7741 = vstv %s7740
    %v7742 = vmul.f32 %v7741, %v5629
    %v7743 = vmul.f32 %v7741, %v5630
    %v7744 = vmul.f32 %v7741, %v5632
    %v7745 = vmul.f32 %v7741, %v5633
    %7750 = vrot.lane.b32.xlu0 %v7742, 120
    %v7751 = vpop.permute.xlu0 %7750
    %7752 = vrot.lane.b32.xlu0 %v7743, 120
    %v7753 = vpop.permute.xlu0 %7752
    %7754 = vrot.lane.b32.xlu0 %v7744, 120
    %v7755 = vpop.permute.xlu0 %7754
    %7756 = vrot.lane.b32.xlu0 %v7745, 120
    %v7757 = vpop.permute.xlu0 %7756
    %v7762 = vadd.f32 %v7736, %v7751
    %v7763 = vadd.f32 %v7737, %v7753
    %v7764 = vadd.f32 %v7738, %v7755
    %v7765 = vadd.f32 %v7739, %v7757
    %s7766 = sld [smem:[#allocation11 + $0x2]]
    %v7767 = vstv %s7766
    %v7768 = vadd.f32 %v7762, %v7767
    %v7769 = vadd.f32 %v7763, %v7767
    %v7770 = vadd.f32 %v7764, %v7767
    %v7771 = vadd.f32 %v7765, %v7767
    %v7772 = vmax.f32 %v7768, 0.0
    %v7773 = vmax.f32 %v7769, 0.0
    %v7774 = vmax.f32 %v7770, 0.0
    %v7775 = vmax.f32 %v7771, 0.0
    %s7776 = sld [smem:[#allocation13]]
    %v7777 = vstv %s7776
    %v7778 = vmul.f32 %v7777, %v6344
    %v7779 = vmul.f32 %v7777, %v6346
    %s7780 = sld [smem:[#allocation13 + $0x1]]
    %v7781 = vstv %s7780
    %v7782 = vmul.f32 %v7781, %v6344
    %v7783 = vmul.f32 %v7781, %v6346
    %7786 = vrot.lane.b32.xlu0 %v7782, 124
    %v7787 = vpop.permute.xlu0 %7786
    %7788 = vrot.lane.b32.xlu0 %v7783, 124
    %v7789 = vpop.permute.xlu0 %7788
    %v7792 = vadd.f32 %v7778, %v7787
    %v7793 = vadd.f32 %v7779, %v7789
    %s7794 = sld [smem:[#allocation13 + $0x2]]
    %v7795 = vstv %s7794
    %v7796 = vmul.f32 %v7795, %v6344
    %v7797 = vmul.f32 %v7795, %v6346
    %7800 = vrot.lane.b32.xlu0 %v7796, 120
    %v7801 = vpop.permute.xlu0 %7800
    %7802 = vrot.lane.b32.xlu0 %v7797, 120
    %v7803 = vpop.permute.xlu0 %7802
    %v7806 = vadd.f32 %v7792, %v7801
    %v7807 = vadd.f32 %v7793, %v7803
    %s7808 = sld [smem:[#allocation13 + $0x3]]
    %v7809 = vstv %s7808
    %v7810 = vmul.f32 %v7809, %v6344
    %v7811 = vmul.f32 %v7809, %v6345
    %v7812 = vmul.f32 %v7809, %v6346
    %v7813 = vmul.f32 %v7809, %v6347
    %v7818 = vrot.slane %v7810, 4
    %v7819 = vrot.slane %v7811, 4
    %v7820 = vsel %vm2075, %v7818, %v7819
    %v7821 = vrot.slane %v7812, 4
    %v7822 = vrot.slane %v7813, 4
    %v7823 = vsel %vm2075, %v7821, %v7822
    %v7826 = vadd.f32 %v7806, %v7820
    %v7827 = vadd.f32 %v7807, %v7823
    %s7828 = sld [smem:[#allocation13 + $0x4]]
    %v7829 = vstv %s7828
    %v7830 = vmul.f32 %v7829, %v6344
    %v7831 = vmul.f32 %v7829, %v6345
    %v7832 = vmul.f32 %v7829, %v6346
    %v7833 = vmul.f32 %v7829, %v6347
    %v7838 = vrot.slane %v7830, 4
    %v7839 = vrot.slane %v7831, 4
    %v7840 = vsel %vm2075, %v7838, %v7839
    %v7841 = vrot.slane %v7832, 4
    %v7842 = vrot.slane %v7833, 4
    %v7843 = vsel %vm2075, %v7841, %v7842
    %7844 = vrot.lane.b32.xlu0 %v7840, 124
    %v7845 = vpop.permute.xlu0 %7844
    %7846 = vrot.lane.b32.xlu0 %v7843, 124
    %v7847 = vpop.permute.xlu0 %7846
    %v7850 = vadd.f32 %v7826, %v7845
    %v7851 = vadd.f32 %v7827, %v7847
    %s7852 = sld [smem:[#allocation13 + $0x5]]
    %v7853 = vstv %s7852
    %v7854 = vmul.f32 %v7853, %v6344
    %v7855 = vmul.f32 %v7853, %v6345
    %v7856 = vmul.f32 %v7853, %v6346
    %v7857 = vmul.f32 %v7853, %v6347
    %v7862 = vrot.slane %v7854, 4
    %v7863 = vrot.slane %v7855, 4
    %v7864 = vsel %vm2075, %v7862, %v7863
    %v7865 = vrot.slane %v7856, 4
    %v7866 = vrot.slane %v7857, 4
    %v7867 = vsel %vm2075, %v7865, %v7866
    %7868 = vrot.lane.b32.xlu0 %v7864, 120
    %v7869 = vpop.permute.xlu0 %7868
    %7870 = vrot.lane.b32.xlu0 %v7867, 120
    %v7871 = vpop.permute.xlu0 %7870
    %v7874 = vadd.f32 %v7850, %v7869
    %v7875 = vadd.f32 %v7851, %v7871
    %s7876 = sld [smem:[#allocation13 + $0x6]]
    %v7877 = vstv %s7876
    %v7878 = vmul.f32 %v7877, %v6345
    %v7879 = vmul.f32 %v7877, %v6347
    %v7880 = vadd.f32 %v7874, %v7878
    %v7881 = vadd.f32 %v7875, %v7879
    %s7882 = sld [smem:[#allocation13 + $0x7]]
    %v7883 = vstv %s7882
    %v7884 = vmul.f32 %v7883, %v6345
    %v7885 = vmul.f32 %v7883, %v6347
    %7888 = vrot.lane.b32.xlu0 %v7884, 124
    %v7889 = vpop.permute.xlu0 %7888
    %7890 = vrot.lane.b32.xlu0 %v7885, 124
    %v7891 = vpop.permute.xlu0 %7890
    %v7894 = vadd.f32 %v7880, %v7889
    %v7895 = vadd.f32 %v7881, %v7891
    %s7896 = sld [smem:[#allocation13 + $0x8]]
    %v7897 = vstv %s7896
    %v7898 = vmul.f32 %v7897, %v6345
    %v7899 = vmul.f32 %v7897, %v6347
    %7902 = vrot.lane.b32.xlu0 %v7898, 120
    %v7903 = vpop.permute.xlu0 %7902
    %7904 = vrot.lane.b32.xlu0 %v7899, 120
    %v7905 = vpop.permute.xlu0 %7904
    %v7908 = vadd.f32 %v7894, %v7903
    %v7909 = vadd.f32 %v7895, %v7905
    %s7910 = sld [smem:[#allocation13 + $0x9]]
    %v7911 = vstv %s7910
    %v7912 = vmul.f32 %v7911, %v7058
    %v7913 = vmul.f32 %v7911, %v7060
    %v7914 = vadd.f32 %v7908, %v7912
    %v7915 = vadd.f32 %v7909, %v7913
    %s7916 = sld [smem:[#allocation13 + $0xa]]
    %v7917 = vstv %s7916
    %v7918 = vmul.f32 %v7917, %v7058
    %v7919 = vmul.f32 %v7917, %v7060
    %7922 = vrot.lane.b32.xlu0 %v7918, 124
    %v7923 = vpop.permute.xlu0 %7922
    %7924 = vrot.lane.b32.xlu0 %v7919, 124
    %v7925 = vpop.permute.xlu0 %7924
    %v7928 = vadd.f32 %v7914, %v7923
    %v7929 = vadd.f32 %v7915, %v7925
    %s7930 = sld [smem:[#allocation13 + $0xb]]
    %v7931 = vstv %s7930
    %v7932 = vmul.f32 %v7931, %v7058
    %v7933 = vmul.f32 %v7931, %v7060
    %7936 = vrot.lane.b32.xlu0 %v7932, 120
    %v7937 = vpop.permute.xlu0 %7936
    %7938 = vrot.lane.b32.xlu0 %v7933, 120
    %v7939 = vpop.permute.xlu0 %7938
    %v7942 = vadd.f32 %v7928, %v7937
    %v7943 = vadd.f32 %v7929, %v7939
    %s7944 = sld [smem:[#allocation13 + $0xc]]
    %v7945 = vstv %s7944
    %v7946 = vmul.f32 %v7945, %v7058
    %v7947 = vmul.f32 %v7945, %v7059
    %v7948 = vmul.f32 %v7945, %v7060
    %v7949 = vmul.f32 %v7945, %v7061
    %v7954 = vrot.slane %v7946, 4
    %v7955 = vrot.slane %v7947, 4
    %v7956 = vsel %vm2075, %v7954, %v7955
    %v7957 = vrot.slane %v7948, 4
    %v7958 = vrot.slane %v7949, 4
    %v7959 = vsel %vm2075, %v7957, %v7958
    %v7962 = vadd.f32 %v7942, %v7956
    %v7963 = vadd.f32 %v7943, %v7959
    %s7964 = sld [smem:[#allocation13 + $0xd]]
    %v7965 = vstv %s7964
    %v7966 = vmul.f32 %v7965, %v7058
    %v7967 = vmul.f32 %v7965, %v7059
    %v7968 = vmul.f32 %v7965, %v7060
    %v7969 = vmul.f32 %v7965, %v7061
    %v7974 = vrot.slane %v7966, 4
    %v7975 = vrot.slane %v7967, 4
    %v7976 = vsel %vm2075, %v7974, %v7975
    %v7977 = vrot.slane %v7968, 4
    %v7978 = vrot.slane %v7969, 4
    %v7979 = vsel %vm2075, %v7977, %v7978
    %7980 = vrot.lane.b32.xlu0 %v7976, 124
    %v7981 = vpop.permute.xlu0 %7980
    %7982 = vrot.lane.b32.xlu0 %v7979, 124
    %v7983 = vpop.permute.xlu0 %7982
    %v7986 = vadd.f32 %v7962, %v7981
    %v7987 = vadd.f32 %v7963, %v7983
    %s7988 = sld [smem:[#allocation13 + $0xe]]
    %v7989 = vstv %s7988
    %v7990 = vmul.f32 %v7989, %v7058
    %v7991 = vmul.f32 %v7989, %v7059
    %v7992 = vmul.f32 %v7989, %v7060
    %v7993 = vmul.f32 %v7989, %v7061
    %v7998 = vrot.slane %v7990, 4
    %v7999 = vrot.slane %v7991, 4
    %v8000 = vsel %vm2075, %v7998, %v7999
    %v8001 = vrot.slane %v7992, 4
    %v8002 = vrot.slane %v7993, 4
    %v8003 = vsel %vm2075, %v8001, %v8002
    %8004 = vrot.lane.b32.xlu0 %v8000, 120
    %v8005 = vpop.permute.xlu0 %8004
    %8006 = vrot.lane.b32.xlu0 %v8003, 120
    %v8007 = vpop.permute.xlu0 %8006
    %v8010 = vadd.f32 %v7986, %v8005
    %v8011 = vadd.f32 %v7987, %v8007
    %s8012 = sld [smem:[#allocation13 + $0xf]]
    %v8013 = vstv %s8012
    %v8014 = vmul.f32 %v8013, %v7059
    %v8015 = vmul.f32 %v8013, %v7061
    %v8016 = vadd.f32 %v8010, %v8014
    %v8017 = vadd.f32 %v8011, %v8015
    %s8018 = sld [smem:[#allocation13 + $0x10]]
    %v8019 = vstv %s8018
    %v8020 = vmul.f32 %v8019, %v7059
    %v8021 = vmul.f32 %v8019, %v7061
    %8024 = vrot.lane.b32.xlu0 %v8020, 124
    %v8025 = vpop.permute.xlu0 %8024
    %8026 = vrot.lane.b32.xlu0 %v8021, 124
    %v8027 = vpop.permute.xlu0 %8026
    %v8030 = vadd.f32 %v8016, %v8025
    %v8031 = vadd.f32 %v8017, %v8027
    %s8032 = sld [smem:[#allocation13 + $0x11]]
    %v8033 = vstv %s8032
    %v8034 = vmul.f32 %v8033, %v7059
    %v8035 = vmul.f32 %v8033, %v7061
    %8038 = vrot.lane.b32.xlu0 %v8034, 120
    %v8039 = vpop.permute.xlu0 %8038
    %8040 = vrot.lane.b32.xlu0 %v8035, 120
    %v8041 = vpop.permute.xlu0 %8040
    %v8044 = vadd.f32 %v8030, %v8039
    %v8045 = vadd.f32 %v8031, %v8041
    %s8046 = sld [smem:[#allocation13 + $0x12]]
    %v8047 = vstv %s8046
    %v8048 = vmul.f32 %v8047, %v7772
    %v8049 = vmul.f32 %v8047, %v7774
    %v8050 = vadd.f32 %v8044, %v8048
    %v8051 = vadd.f32 %v8045, %v8049
    %s8052 = sld [smem:[#allocation13 + $0x13]]
    %v8053 = vstv %s8052
    %v8054 = vmul.f32 %v8053, %v7772
    %v8055 = vmul.f32 %v8053, %v7774
    %8058 = vrot.lane.b32.xlu0 %v8054, 124
    %v8059 = vpop.permute.xlu0 %8058
    %8060 = vrot.lane.b32.xlu0 %v8055, 124
    %v8061 = vpop.permute.xlu0 %8060
    %v8064 = vadd.f32 %v8050, %v8059
    %v8065 = vadd.f32 %v8051, %v8061
    %s8066 = sld [smem:[#allocation13 + $0x14]]
    %v8067 = vstv %s8066
    %v8068 = vmul.f32 %v8067, %v7772
    %v8069 = vmul.f32 %v8067, %v7774
    %8072 = vrot.lane.b32.xlu0 %v8068, 120
    %v8073 = vpop.permute.xlu0 %8072
    %8074 = vrot.lane.b32.xlu0 %v8069, 120
    %v8075 = vpop.permute.xlu0 %8074
    %v8078 = vadd.f32 %v8064, %v8073
    %v8079 = vadd.f32 %v8065, %v8075
    %s8080 = sld [smem:[#allocation13 + $0x15]]
    %v8081 = vstv %s8080
    %v8082 = vmul.f32 %v8081, %v7772
    %v8083 = vmul.f32 %v8081, %v7773
    %v8084 = vmul.f32 %v8081, %v7774
    %v8085 = vmul.f32 %v8081, %v7775
    %v8090 = vrot.slane %v8082, 4
    %v8091 = vrot.slane %v8083, 4
    %v8092 = vsel %vm2075, %v8090, %v8091
    %v8093 = vrot.slane %v8084, 4
    %v8094 = vrot.slane %v8085, 4
    %v8095 = vsel %vm2075, %v8093, %v8094
    %v8098 = vadd.f32 %v8078, %v8092
    %v8099 = vadd.f32 %v8079, %v8095
    %s8100 = sld [smem:[#allocation13 + $0x16]]
    %v8101 = vstv %s8100
    %v8102 = vmul.f32 %v8101, %v7772
    %v8103 = vmul.f32 %v8101, %v7773
    %v8104 = vmul.f32 %v8101, %v7774
    %v8105 = vmul.f32 %v8101, %v7775
    %v8110 = vrot.slane %v8102, 4
    %v8111 = vrot.slane %v8103, 4
    %v8112 = vsel %vm2075, %v8110, %v8111
    %v8113 = vrot.slane %v8104, 4
    %v8114 = vrot.slane %v8105, 4
    %v8115 = vsel %vm2075, %v8113, %v8114
    %8116 = vrot.lane.b32.xlu0 %v8112, 124
    %v8117 = vpop.permute.xlu0 %8116
    %8118 = vrot.lane.b32.xlu0 %v8115, 124
    %v8119 = vpop.permute.xlu0 %8118
    %v8122 = vadd.f32 %v8098, %v8117
    %v8123 = vadd.f32 %v8099, %v8119
    %s8124 = sld [smem:[#allocation13 + $0x17]]
    %v8125 = vstv %s8124
    %v8126 = vmul.f32 %v8125, %v7772
    %v8127 = vmul.f32 %v8125, %v7773
    %v8128 = vmul.f32 %v8125, %v7774
    %v8129 = vmul.f32 %v8125, %v7775
    %v8134 = vrot.slane %v8126, 4
    %v8135 = vrot.slane %v8127, 4
    %v8136 = vsel %vm2075, %v8134, %v8135
    %v8137 = vrot.slane %v8128, 4
    %v8138 = vrot.slane %v8129, 4
    %v8139 = vsel %vm2075, %v8137, %v8138
    %8140 = vrot.lane.b32.xlu0 %v8136, 120
    %v8141 = vpop.permute.xlu0 %8140
    %8142 = vrot.lane.b32.xlu0 %v8139, 120
    %v8143 = vpop.permute.xlu0 %8142
    %v8146 = vadd.f32 %v8122, %v8141
    %v8147 = vadd.f32 %v8123, %v8143
    %s8148 = sld [smem:[#allocation13 + $0x18]]
    %v8149 = vstv %s8148
    %v8150 = vmul.f32 %v8149, %v7773
    %v8151 = vmul.f32 %v8149, %v7775
    %v8152 = vadd.f32 %v8146, %v8150
    %v8153 = vadd.f32 %v8147, %v8151
    %s8154 = sld [smem:[#allocation13 + $0x19]]
    %v8155 = vstv %s8154
    %v8156 = vmul.f32 %v8155, %v7773
    %v8157 = vmul.f32 %v8155, %v7775
    %8160 = vrot.lane.b32.xlu0 %v8156, 124
    %v8161 = vpop.permute.xlu0 %8160
    %8162 = vrot.lane.b32.xlu0 %v8157, 124
    %v8163 = vpop.permute.xlu0 %8162
    %v8166 = vadd.f32 %v8152, %v8161
    %v8167 = vadd.f32 %v8153, %v8163
    %s8168 = sld [smem:[#allocation13 + $0x1a]]
    %v8169 = vstv %s8168
    %v8170 = vmul.f32 %v8169, %v7773
    %v8171 = vmul.f32 %v8169, %v7775
    %8174 = vrot.lane.b32.xlu0 %v8170, 120
    %v8175 = vpop.permute.xlu0 %8174
    %8176 = vrot.lane.b32.xlu0 %v8171, 120
    %v8177 = vpop.permute.xlu0 %8176
    %v8180 = vadd.f32 %v8166, %v8175
    %v8181 = vadd.f32 %v8167, %v8177
    %s8182 = sld [smem:[#allocation14]]
    %v8183 = vstv %s8182
    %v8184 = vadd.f32 %v8180, %v8183
    %v8185 = vadd.f32 %v8181, %v8183
    %v8186 = vmax.f32 %v8184, 0.0
    %v8187 = vmax.f32 %v8185, 0.0
    %s8188 = sld [smem:[#allocation13 + $0x1b]]
    %v8189 = vstv %s8188
    %v8190 = vmul.f32 %v8189, %v6344
    %v8191 = vmul.f32 %v8189, %v6346
    %s8192 = sld [smem:[#allocation13 + $0x1c]]
    %v8193 = vstv %s8192
    %v8194 = vmul.f32 %v8193, %v6344
    %v8195 = vmul.f32 %v8193, %v6346
    %8198 = vrot.lane.b32.xlu0 %v8194, 124
    %v8199 = vpop.permute.xlu0 %8198
    %8200 = vrot.lane.b32.xlu0 %v8195, 124
    %v8201 = vpop.permute.xlu0 %8200
    %v8204 = vadd.f32 %v8190, %v8199
    %v8205 = vadd.f32 %v8191, %v8201
    %s8206 = sld [smem:[#allocation13 + $0x1d]]
    %v8207 = vstv %s8206
    %v8208 = vmul.f32 %v8207, %v6344
    %v8209 = vmul.f32 %v8207, %v6346
    %8212 = vrot.lane.b32.xlu0 %v8208, 120
    %v8213 = vpop.permute.xlu0 %8212
    %8214 = vrot.lane.b32.xlu0 %v8209, 120
    %v8215 = vpop.permute.xlu0 %8214
    %v8218 = vadd.f32 %v8204, %v8213
    %v8219 = vadd.f32 %v8205, %v8215
    %s8220 = sld [smem:[#allocation13 + $0x1e]]
    %v8221 = vstv %s8220
    %v8222 = vmul.f32 %v8221, %v6344
    %v8223 = vmul.f32 %v8221, %v6345
    %v8224 = vmul.f32 %v8221, %v6346
    %v8225 = vmul.f32 %v8221, %v6347
    %v8230 = vrot.slane %v8222, 4
    %v8231 = vrot.slane %v8223, 4
    %v8232 = vsel %vm2075, %v8230, %v8231
    %v8233 = vrot.slane %v8224, 4
    %v8234 = vrot.slane %v8225, 4
    %v8235 = vsel %vm2075, %v8233, %v8234
    %v8238 = vadd.f32 %v8218, %v8232
    %v8239 = vadd.f32 %v8219, %v8235
    %s8240 = sld [smem:[#allocation13 + $0x1f]]
    %v8241 = vstv %s8240
    %v8242 = vmul.f32 %v8241, %v6344
    %v8243 = vmul.f32 %v8241, %v6345
    %v8244 = vmul.f32 %v8241, %v6346
    %v8245 = vmul.f32 %v8241, %v6347
    %v8250 = vrot.slane %v8242, 4
    %v8251 = vrot.slane %v8243, 4
    %v8252 = vsel %vm2075, %v8250, %v8251
    %v8253 = vrot.slane %v8244, 4
    %v8254 = vrot.slane %v8245, 4
    %v8255 = vsel %vm2075, %v8253, %v8254
    %8256 = vrot.lane.b32.xlu0 %v8252, 124
    %v8257 = vpop.permute.xlu0 %8256
    %8258 = vrot.lane.b32.xlu0 %v8255, 124
    %v8259 = vpop.permute.xlu0 %8258
    %v8262 = vadd.f32 %v8238, %v8257
    %v8263 = vadd.f32 %v8239, %v8259
    %s8264 = sld [smem:[#allocation13 + $0x20]]
    %v8265 = vstv %s8264
    %v8266 = vmul.f32 %v8265, %v6344
    %v8267 = vmul.f32 %v8265, %v6345
    %v8268 = vmul.f32 %v8265, %v6346
    %v8269 = vmul.f32 %v8265, %v6347
    %v8274 = vrot.slane %v8266, 4
    %v8275 = vrot.slane %v8267, 4
    %v8276 = vsel %vm2075, %v8274, %v8275
    %v8277 = vrot.slane %v8268, 4
    %v8278 = vrot.slane %v8269, 4
    %v8279 = vsel %vm2075, %v8277, %v8278
    %8280 = vrot.lane.b32.xlu0 %v8276, 120
    %v8281 = vpop.permute.xlu0 %8280
    %8282 = vrot.lane.b32.xlu0 %v8279, 120
    %v8283 = vpop.permute.xlu0 %8282
    %v8286 = vadd.f32 %v8262, %v8281
    %v8287 = vadd.f32 %v8263, %v8283
    %s8288 = sld [smem:[#allocation13 + $0x21]]
    %v8289 = vstv %s8288
    %v8290 = vmul.f32 %v8289, %v6345
    %v8291 = vmul.f32 %v8289, %v6347
    %v8292 = vadd.f32 %v8286, %v8290
    %v8293 = vadd.f32 %v8287, %v8291
    %s8294 = sld [smem:[#allocation13 + $0x22]]
    %v8295 = vstv %s8294
    %v8296 = vmul.f32 %v8295, %v6345
    %v8297 = vmul.f32 %v8295, %v6347
    %8300 = vrot.lane.b32.xlu0 %v8296, 124
    %v8301 = vpop.permute.xlu0 %8300
    %8302 = vrot.lane.b32.xlu0 %v8297, 124
    %v8303 = vpop.permute.xlu0 %8302
    %v8306 = vadd.f32 %v8292, %v8301
    %v8307 = vadd.f32 %v8293, %v8303
    %s8308 = sld [smem:[#allocation13 + $0x23]]
    %v8309 = vstv %s8308
    %v8310 = vmul.f32 %v8309, %v6345
    %v8311 = vmul.f32 %v8309, %v6347
    %8314 = vrot.lane.b32.xlu0 %v8310, 120
    %v8315 = vpop.permute.xlu0 %8314
    %8316 = vrot.lane.b32.xlu0 %v8311, 120
    %v8317 = vpop.permute.xlu0 %8316
    %v8320 = vadd.f32 %v8306, %v8315
    %v8321 = vadd.f32 %v8307, %v8317
    %s8322 = sld [smem:[#allocation13 + $0x24]]
    %v8323 = vstv %s8322
    %v8324 = vmul.f32 %v8323, %v7058
    %v8325 = vmul.f32 %v8323, %v7060
    %v8326 = vadd.f32 %v8320, %v8324
    %v8327 = vadd.f32 %v8321, %v8325
    %s8328 = sld [smem:[#allocation13 + $0x25]]
    %v8329 = vstv %s8328
    %v8330 = vmul.f32 %v8329, %v7058
    %v8331 = vmul.f32 %v8329, %v7060
    %8334 = vrot.lane.b32.xlu0 %v8330, 124
    %v8335 = vpop.permute.xlu0 %8334
    %8336 = vrot.lane.b32.xlu0 %v8331, 124
    %v8337 = vpop.permute.xlu0 %8336
    %v8340 = vadd.f32 %v8326, %v8335
    %v8341 = vadd.f32 %v8327, %v8337
    %s8342 = sld [smem:[#allocation13 + $0x26]]
    %v8343 = vstv %s8342
    %v8344 = vmul.f32 %v8343, %v7058
    %v8345 = vmul.f32 %v8343, %v7060
    %8348 = vrot.lane.b32.xlu0 %v8344, 120
    %v8349 = vpop.permute.xlu0 %8348
    %8350 = vrot.lane.b32.xlu0 %v8345, 120
    %v8351 = vpop.permute.xlu0 %8350
    %v8354 = vadd.f32 %v8340, %v8349
    %v8355 = vadd.f32 %v8341, %v8351
    %s8356 = sld [smem:[#allocation13 + $0x27]]
    %v8357 = vstv %s8356
    %v8358 = vmul.f32 %v8357, %v7058
    %v8359 = vmul.f32 %v8357, %v7059
    %v8360 = vmul.f32 %v8357, %v7060
    %v8361 = vmul.f32 %v8357, %v7061
    %v8366 = vrot.slane %v8358, 4
    %v8367 = vrot.slane %v8359, 4
    %v8368 = vsel %vm2075, %v8366, %v8367
    %v8369 = vrot.slane %v8360, 4
    %v8370 = vrot.slane %v8361, 4
    %v8371 = vsel %vm2075, %v8369, %v8370
    %v8374 = vadd.f32 %v8354, %v8368
    %v8375 = vadd.f32 %v8355, %v8371
    %s8376 = sld [smem:[#allocation13 + $0x28]]
    %v8377 = vstv %s8376
    %v8378 = vmul.f32 %v8377, %v7058
    %v8379 = vmul.f32 %v8377, %v7059
    %v8380 = vmul.f32 %v8377, %v7060
    %v8381 = vmul.f32 %v8377, %v7061
    %v8386 = vrot.slane %v8378, 4
    %v8387 = vrot.slane %v8379, 4
    %v8388 = vsel %vm2075, %v8386, %v8387
    %v8389 = vrot.slane %v8380, 4
    %v8390 = vrot.slane %v8381, 4
    %v8391 = vsel %vm2075, %v8389, %v8390
    %8392 = vrot.lane.b32.xlu0 %v8388, 124
    %v8393 = vpop.permute.xlu0 %8392
    %8394 = vrot.lane.b32.xlu0 %v8391, 124
    %v8395 = vpop.permute.xlu0 %8394
    %v8398 = vadd.f32 %v8374, %v8393
    %v8399 = vadd.f32 %v8375, %v8395
    %s8400 = sld [smem:[#allocation13 + $0x29]]
    %v8401 = vstv %s8400
    %v8402 = vmul.f32 %v8401, %v7058
    %v8403 = vmul.f32 %v8401, %v7059
    %v8404 = vmul.f32 %v8401, %v7060
    %v8405 = vmul.f32 %v8401, %v7061
    %v8410 = vrot.slane %v8402, 4
    %v8411 = vrot.slane %v8403, 4
    %v8412 = vsel %vm2075, %v8410, %v8411
    %v8413 = vrot.slane %v8404, 4
    %v8414 = vrot.slane %v8405, 4
    %v8415 = vsel %vm2075, %v8413, %v8414
    %8416 = vrot.lane.b32.xlu0 %v8412, 120
    %v8417 = vpop.permute.xlu0 %8416
    %8418 = vrot.lane.b32.xlu0 %v8415, 120
    %v8419 = vpop.permute.xlu0 %8418
    %v8422 = vadd.f32 %v8398, %v8417
    %v8423 = vadd.f32 %v8399, %v8419
    %s8424 = sld [smem:[#allocation13 + $0x2a]]
    %v8425 = vstv %s8424
    %v8426 = vmul.f32 %v8425, %v7059
    %v8427 = vmul.f32 %v8425, %v7061
    %v8428 = vadd.f32 %v8422, %v8426
    %v8429 = vadd.f32 %v8423, %v8427
    %s8430 = sld [smem:[#allocation13 + $0x2b]]
    %v8431 = vstv %s8430
    %v8432 = vmul.f32 %v8431, %v7059
    %v8433 = vmul.f32 %v8431, %v7061
    %8436 = vrot.lane.b32.xlu0 %v8432, 124
    %v8437 = vpop.permute.xlu0 %8436
    %8438 = vrot.lane.b32.xlu0 %v8433, 124
    %v8439 = vpop.permute.xlu0 %8438
    %v8442 = vadd.f32 %v8428, %v8437
    %v8443 = vadd.f32 %v8429, %v8439
    %s8444 = sld [smem:[#allocation13 + $0x2c]]
    %v8445 = vstv %s8444
    %v8446 = vmul.f32 %v8445, %v7059
    %v8447 = vmul.f32 %v8445, %v7061
    %8450 = vrot.lane.b32.xlu0 %v8446, 120
    %v8451 = vpop.permute.xlu0 %8450
    %8452 = vrot.lane.b32.xlu0 %v8447, 120
    %v8453 = vpop.permute.xlu0 %8452
    %v8456 = vadd.f32 %v8442, %v8451
    %v8457 = vadd.f32 %v8443, %v8453
    %s8458 = sld [smem:[#allocation13 + $0x2d]]
    %v8459 = vstv %s8458
    %v8460 = vmul.f32 %v8459, %v7772
    %v8461 = vmul.f32 %v8459, %v7774
    %v8462 = vadd.f32 %v8456, %v8460
    %v8463 = vadd.f32 %v8457, %v8461
    %s8464 = sld [smem:[#allocation13 + $0x2e]]
    %v8465 = vstv %s8464
    %v8466 = vmul.f32 %v8465, %v7772
    %v8467 = vmul.f32 %v8465, %v7774
    %8470 = vrot.lane.b32.xlu0 %v8466, 124
    %v8471 = vpop.permute.xlu0 %8470
    %8472 = vrot.lane.b32.xlu0 %v8467, 124
    %v8473 = vpop.permute.xlu0 %8472
    %v8476 = vadd.f32 %v8462, %v8471
    %v8477 = vadd.f32 %v8463, %v8473
    %s8478 = sld [smem:[#allocation13 + $0x2f]]
    %v8479 = vstv %s8478
    %v8480 = vmul.f32 %v8479, %v7772
    %v8481 = vmul.f32 %v8479, %v7774
    %8484 = vrot.lane.b32.xlu0 %v8480, 120
    %v8485 = vpop.permute.xlu0 %8484
    %8486 = vrot.lane.b32.xlu0 %v8481, 120
    %v8487 = vpop.permute.xlu0 %8486
    %v8490 = vadd.f32 %v8476, %v8485
    %v8491 = vadd.f32 %v8477, %v8487
    %s8492 = sld [smem:[#allocation13 + $0x30]]
    %v8493 = vstv %s8492
    %v8494 = vmul.f32 %v8493, %v7772
    %v8495 = vmul.f32 %v8493, %v7773
    %v8496 = vmul.f32 %v8493, %v7774
    %v8497 = vmul.f32 %v8493, %v7775
    %v8502 = vrot.slane %v8494, 4
    %v8503 = vrot.slane %v8495, 4
    %v8504 = vsel %vm2075, %v8502, %v8503
    %v8505 = vrot.slane %v8496, 4
    %v8506 = vrot.slane %v8497, 4
    %v8507 = vsel %vm2075, %v8505, %v8506
    %v8510 = vadd.f32 %v8490, %v8504
    %v8511 = vadd.f32 %v8491, %v8507
    %s8512 = sld [smem:[#allocation13 + $0x31]]
    %v8513 = vstv %s8512
    %v8514 = vmul.f32 %v8513, %v7772
    %v8515 = vmul.f32 %v8513, %v7773
    %v8516 = vmul.f32 %v8513, %v7774
    %v8517 = vmul.f32 %v8513, %v7775
    %v8522 = vrot.slane %v8514, 4
    %v8523 = vrot.slane %v8515, 4
    %v8524 = vsel %vm2075, %v8522, %v8523
    %v8525 = vrot.slane %v8516, 4
    %v8526 = vrot.slane %v8517, 4
    %v8527 = vsel %vm2075, %v8525, %v8526
    %8528 = vrot.lane.b32.xlu0 %v8524, 124
    %v8529 = vpop.permute.xlu0 %8528
    %8530 = vrot.lane.b32.xlu0 %v8527, 124
    %v8531 = vpop.permute.xlu0 %8530
    %v8534 = vadd.f32 %v8510, %v8529
    %v8535 = vadd.f32 %v8511, %v8531
    %s8536 = sld [smem:[#allocation13 + $0x32]]
    %v8537 = vstv %s8536
    %v8538 = vmul.f32 %v8537, %v7772
    %v8539 = vmul.f32 %v8537, %v7773
    %v8540 = vmul.f32 %v8537, %v7774
    %v8541 = vmul.f32 %v8537, %v7775
    %v8546 = vrot.slane %v8538, 4
    %v8547 = vrot.slane %v8539, 4
    %v8548 = vsel %vm2075, %v8546, %v8547
    %v8549 = vrot.slane %v8540, 4
    %v8550 = vrot.slane %v8541, 4
    %v8551 = vsel %vm2075, %v8549, %v8550
    %8552 = vrot.lane.b32.xlu0 %v8548, 120
    %v8553 = vpop.permute.xlu0 %8552
    %8554 = vrot.lane.b32.xlu0 %v8551, 120
    %v8555 = vpop.permute.xlu0 %8554
    %v8558 = vadd.f32 %v8534, %v8553
    %v8559 = vadd.f32 %v8535, %v8555
    %s8560 = sld [smem:[#allocation13 + $0x33]]
    %v8561 = vstv %s8560
    %v8562 = vmul.f32 %v8561, %v7773
    %v8563 = vmul.f32 %v8561, %v7775
    %v8564 = vadd.f32 %v8558, %v8562
    %v8565 = vadd.f32 %v8559, %v8563
    %s8566 = sld [smem:[#allocation13 + $0x34]]
    %v8567 = vstv %s8566
    %v8568 = vmul.f32 %v8567, %v7773
    %v8569 = vmul.f32 %v8567, %v7775
    %8572 = vrot.lane.b32.xlu0 %v8568, 124
    %v8573 = vpop.permute.xlu0 %8572
    %8574 = vrot.lane.b32.xlu0 %v8569, 124
    %v8575 = vpop.permute.xlu0 %8574
    %v8578 = vadd.f32 %v8564, %v8573
    %v8579 = vadd.f32 %v8565, %v8575
    %s8580 = sld [smem:[#allocation13 + $0x35]]
    %v8581 = vstv %s8580
    %v8582 = vmul.f32 %v8581, %v7773
    %v8583 = vmul.f32 %v8581, %v7775
    %8586 = vrot.lane.b32.xlu0 %v8582, 120
    %v8587 = vpop.permute.xlu0 %8586
    %8588 = vrot.lane.b32.xlu0 %v8583, 120
    %v8589 = vpop.permute.xlu0 %8588
    %v8592 = vadd.f32 %v8578, %v8587
    %v8593 = vadd.f32 %v8579, %v8589
    %s8594 = sld [smem:[#allocation14 + $0x1]]
    %v8595 = vstv %s8594
    %v8596 = vadd.f32 %v8592, %v8595
    %v8597 = vadd.f32 %v8593, %v8595
    %v8598 = vmax.f32 %v8596, 0.0
    %v8599 = vmax.f32 %v8597, 0.0
    %s8600 = sld [smem:[#allocation13 + $0x36]]
    %v8601 = vstv %s8600
    %v8602 = vmul.f32 %v8601, %v6344
    %v8603 = vmul.f32 %v8601, %v6346
    %s8604 = sld [smem:[#allocation13 + $0x37]]
    %v8605 = vstv %s8604
    %v8606 = vmul.f32 %v8605, %v6344
    %v8607 = vmul.f32 %v8605, %v6346
    %8610 = vrot.lane.b32.xlu0 %v8606, 124
    %v8611 = vpop.permute.xlu0 %8610
    %8612 = vrot.lane.b32.xlu0 %v8607, 124
    %v8613 = vpop.permute.xlu0 %8612
    %v8616 = vadd.f32 %v8602, %v8611
    %v8617 = vadd.f32 %v8603, %v8613
    %s8618 = sld [smem:[#allocation13 + $0x38]]
    %v8619 = vstv %s8618
    %v8620 = vmul.f32 %v8619, %v6344
    %v8621 = vmul.f32 %v8619, %v6346
    %8624 = vrot.lane.b32.xlu0 %v8620, 120
    %v8625 = vpop.permute.xlu0 %8624
    %8626 = vrot.lane.b32.xlu0 %v8621, 120
    %v8627 = vpop.permute.xlu0 %8626
    %v8630 = vadd.f32 %v8616, %v8625
    %v8631 = vadd.f32 %v8617, %v8627
    %s8632 = sld [smem:[#allocation13 + $0x39]]
    %v8633 = vstv %s8632
    %v8634 = vmul.f32 %v8633, %v6344
    %v8635 = vmul.f32 %v8633, %v6345
    %v8636 = vmul.f32 %v8633, %v6346
    %v8637 = vmul.f32 %v8633, %v6347
    %v8642 = vrot.slane %v8634, 4
    %v8643 = vrot.slane %v8635, 4
    %v8644 = vsel %vm2075, %v8642, %v8643
    %v8645 = vrot.slane %v8636, 4
    %v8646 = vrot.slane %v8637, 4
    %v8647 = vsel %vm2075, %v8645, %v8646
    %v8650 = vadd.f32 %v8630, %v8644
    %v8651 = vadd.f32 %v8631, %v8647
    %s8652 = sld [smem:[#allocation13 + $0x3a]]
    %v8653 = vstv %s8652
    %v8654 = vmul.f32 %v8653, %v6344
    %v8655 = vmul.f32 %v8653, %v6345
    %v8656 = vmul.f32 %v8653, %v6346
    %v8657 = vmul.f32 %v8653, %v6347
    %v8662 = vrot.slane %v8654, 4
    %v8663 = vrot.slane %v8655, 4
    %v8664 = vsel %vm2075, %v8662, %v8663
    %v8665 = vrot.slane %v8656, 4
    %v8666 = vrot.slane %v8657, 4
    %v8667 = vsel %vm2075, %v8665, %v8666
    %8668 = vrot.lane.b32.xlu0 %v8664, 124
    %v8669 = vpop.permute.xlu0 %8668
    %8670 = vrot.lane.b32.xlu0 %v8667, 124
    %v8671 = vpop.permute.xlu0 %8670
    %v8674 = vadd.f32 %v8650, %v8669
    %v8675 = vadd.f32 %v8651, %v8671
    %s8676 = sld [smem:[#allocation13 + $0x3b]]
    %v8677 = vstv %s8676
    %v8678 = vmul.f32 %v8677, %v6344
    %v8679 = vmul.f32 %v8677, %v6345
    %v8680 = vmul.f32 %v8677, %v6346
    %v8681 = vmul.f32 %v8677, %v6347
    %v8686 = vrot.slane %v8678, 4
    %v8687 = vrot.slane %v8679, 4
    %v8688 = vsel %vm2075, %v8686, %v8687
    %v8689 = vrot.slane %v8680, 4
    %v8690 = vrot.slane %v8681, 4
    %v8691 = vsel %vm2075, %v8689, %v8690
    %8692 = vrot.lane.b32.xlu0 %v8688, 120
    %v8693 = vpop.permute.xlu0 %8692
    %8694 = vrot.lane.b32.xlu0 %v8691, 120
    %v8695 = vpop.permute.xlu0 %8694
    %v8698 = vadd.f32 %v8674, %v8693
    %v8699 = vadd.f32 %v8675, %v8695
    %s8700 = sld [smem:[#allocation13 + $0x3c]]
    %v8701 = vstv %s8700
    %v8702 = vmul.f32 %v8701, %v6345
    %v8703 = vmul.f32 %v8701, %v6347
    %v8704 = vadd.f32 %v8698, %v8702
    %v8705 = vadd.f32 %v8699, %v8703
    %s8706 = sld [smem:[#allocation13 + $0x3d]]
    %v8707 = vstv %s8706
    %v8708 = vmul.f32 %v8707, %v6345
    %v8709 = vmul.f32 %v8707, %v6347
    %8712 = vrot.lane.b32.xlu0 %v8708, 124
    %v8713 = vpop.permute.xlu0 %8712
    %8714 = vrot.lane.b32.xlu0 %v8709, 124
    %v8715 = vpop.permute.xlu0 %8714
    %v8718 = vadd.f32 %v8704, %v8713
    %v8719 = vadd.f32 %v8705, %v8715
    %s8720 = sld [smem:[#allocation13 + $0x3e]]
    %v8721 = vstv %s8720
    %v8722 = vmul.f32 %v8721, %v6345
    %v8723 = vmul.f32 %v8721, %v6347
    %8726 = vrot.lane.b32.xlu0 %v8722, 120
    %v8727 = vpop.permute.xlu0 %8726
    %8728 = vrot.lane.b32.xlu0 %v8723, 120
    %v8729 = vpop.permute.xlu0 %8728
    %v8732 = vadd.f32 %v8718, %v8727
    %v8733 = vadd.f32 %v8719, %v8729
    %s8734 = sld [smem:[#allocation13 + $0x3f]]
    %v8735 = vstv %s8734
    %v8736 = vmul.f32 %v8735, %v7058
    %v8737 = vmul.f32 %v8735, %v7060
    %v8738 = vadd.f32 %v8732, %v8736
    %v8739 = vadd.f32 %v8733, %v8737
    %s8740 = sld [smem:[#allocation13 + $0x40]]
    %v8741 = vstv %s8740
    %v8742 = vmul.f32 %v8741, %v7058
    %v8743 = vmul.f32 %v8741, %v7060
    %8746 = vrot.lane.b32.xlu0 %v8742, 124
    %v8747 = vpop.permute.xlu0 %8746
    %8748 = vrot.lane.b32.xlu0 %v8743, 124
    %v8749 = vpop.permute.xlu0 %8748
    %v8752 = vadd.f32 %v8738, %v8747
    %v8753 = vadd.f32 %v8739, %v8749
    %s8754 = sld [smem:[#allocation13 + $0x41]]
    %v8755 = vstv %s8754
    %v8756 = vmul.f32 %v8755, %v7058
    %v8757 = vmul.f32 %v8755, %v7060
    %8760 = vrot.lane.b32.xlu0 %v8756, 120
    %v8761 = vpop.permute.xlu0 %8760
    %8762 = vrot.lane.b32.xlu0 %v8757, 120
    %v8763 = vpop.permute.xlu0 %8762
    %v8766 = vadd.f32 %v8752, %v8761
    %v8767 = vadd.f32 %v8753, %v8763
    %s8768 = sld [smem:[#allocation13 + $0x42]]
    %v8769 = vstv %s8768
    %v8770 = vmul.f32 %v8769, %v7058
    %v8771 = vmul.f32 %v8769, %v7059
    %v8772 = vmul.f32 %v8769, %v7060
    %v8773 = vmul.f32 %v8769, %v7061
    %v8778 = vrot.slane %v8770, 4
    %v8779 = vrot.slane %v8771, 4
    %v8780 = vsel %vm2075, %v8778, %v8779
    %v8781 = vrot.slane %v8772, 4
    %v8782 = vrot.slane %v8773, 4
    %v8783 = vsel %vm2075, %v8781, %v8782
    %v8786 = vadd.f32 %v8766, %v8780
    %v8787 = vadd.f32 %v8767, %v8783
    %s8788 = sld [smem:[#allocation13 + $0x43]]
    %v8789 = vstv %s8788
    %v8790 = vmul.f32 %v8789, %v7058
    %v8791 = vmul.f32 %v8789, %v7059
    %v8792 = vmul.f32 %v8789, %v7060
    %v8793 = vmul.f32 %v8789, %v7061
    %v8798 = vrot.slane %v8790, 4
    %v8799 = vrot.slane %v8791, 4
    %v8800 = vsel %vm2075, %v8798, %v8799
    %v8801 = vrot.slane %v8792, 4
    %v8802 = vrot.slane %v8793, 4
    %v8803 = vsel %vm2075, %v8801, %v8802
    %8804 = vrot.lane.b32.xlu0 %v8800, 124
    %v8805 = vpop.permute.xlu0 %8804
    %8806 = vrot.lane.b32.xlu0 %v8803, 124
    %v8807 = vpop.permute.xlu0 %8806
    %v8810 = vadd.f32 %v8786, %v8805
    %v8811 = vadd.f32 %v8787, %v8807
    %s8812 = sld [smem:[#allocation13 + $0x44]]
    %v8813 = vstv %s8812
    %v8814 = vmul.f32 %v8813, %v7058
    %v8815 = vmul.f32 %v8813, %v7059
    %v8816 = vmul.f32 %v8813, %v7060
    %v8817 = vmul.f32 %v8813, %v7061
    %v8822 = vrot.slane %v8814, 4
    %v8823 = vrot.slane %v8815, 4
    %v8824 = vsel %vm2075, %v8822, %v8823
    %v8825 = vrot.slane %v8816, 4
    %v8826 = vrot.slane %v8817, 4
    %v8827 = vsel %vm2075, %v8825, %v8826
    %8828 = vrot.lane.b32.xlu0 %v8824, 120
    %v8829 = vpop.permute.xlu0 %8828
    %8830 = vrot.lane.b32.xlu0 %v8827, 120
    %v8831 = vpop.permute.xlu0 %8830
    %v8834 = vadd.f32 %v8810, %v8829
    %v8835 = vadd.f32 %v8811, %v8831
    %s8836 = sld [smem:[#allocation13 + $0x45]]
    %v8837 = vstv %s8836
    %v8838 = vmul.f32 %v8837, %v7059
    %v8839 = vmul.f32 %v8837, %v7061
    %v8840 = vadd.f32 %v8834, %v8838
    %v8841 = vadd.f32 %v8835, %v8839
    %s8842 = sld [smem:[#allocation13 + $0x46]]
    %v8843 = vstv %s8842
    %v8844 = vmul.f32 %v8843, %v7059
    %v8845 = vmul.f32 %v8843, %v7061
    %8848 = vrot.lane.b32.xlu0 %v8844, 124
    %v8849 = vpop.permute.xlu0 %8848
    %8850 = vrot.lane.b32.xlu0 %v8845, 124
    %v8851 = vpop.permute.xlu0 %8850
    %v8854 = vadd.f32 %v8840, %v8849
    %v8855 = vadd.f32 %v8841, %v8851
    %s8856 = sld [smem:[#allocation13 + $0x47]]
    %v8857 = vstv %s8856
    %v8858 = vmul.f32 %v8857, %v7059
    %v8859 = vmul.f32 %v8857, %v7061
    %8862 = vrot.lane.b32.xlu0 %v8858, 120
    %v8863 = vpop.permute.xlu0 %8862
    %8864 = vrot.lane.b32.xlu0 %v8859, 120
    %v8865 = vpop.permute.xlu0 %8864
    %v8868 = vadd.f32 %v8854, %v8863
    %v8869 = vadd.f32 %v8855, %v8865
    %s8870 = sld [smem:[#allocation13 + $0x48]]
    %v8871 = vstv %s8870
    %v8872 = vmul.f32 %v8871, %v7772
    %v8873 = vmul.f32 %v8871, %v7774
    %v8874 = vadd.f32 %v8868, %v8872
    %v8875 = vadd.f32 %v8869, %v8873
    %s8876 = sld [smem:[#allocation13 + $0x49]]
    %v8877 = vstv %s8876
    %v8878 = vmul.f32 %v8877, %v7772
    %v8879 = vmul.f32 %v8877, %v7774
    %8882 = vrot.lane.b32.xlu0 %v8878, 124
    %v8883 = vpop.permute.xlu0 %8882
    %8884 = vrot.lane.b32.xlu0 %v8879, 124
    %v8885 = vpop.permute.xlu0 %8884
    %v8888 = vadd.f32 %v8874, %v8883
    %v8889 = vadd.f32 %v8875, %v8885
    %s8890 = sld [smem:[#allocation13 + $0x4a]]
    %v8891 = vstv %s8890
    %v8892 = vmul.f32 %v8891, %v7772
    %v8893 = vmul.f32 %v8891, %v7774
    %8896 = vrot.lane.b32.xlu0 %v8892, 120
    %v8897 = vpop.permute.xlu0 %8896
    %8898 = vrot.lane.b32.xlu0 %v8893, 120
    %v8899 = vpop.permute.xlu0 %8898
    %v8902 = vadd.f32 %v8888, %v8897
    %v8903 = vadd.f32 %v8889, %v8899
    %s8904 = sld [smem:[#allocation13 + $0x4b]]
    %v8905 = vstv %s8904
    %v8906 = vmul.f32 %v8905, %v7772
    %v8907 = vmul.f32 %v8905, %v7773
    %v8908 = vmul.f32 %v8905, %v7774
    %v8909 = vmul.f32 %v8905, %v7775
    %v8914 = vrot.slane %v8906, 4
    %v8915 = vrot.slane %v8907, 4
    %v8916 = vsel %vm2075, %v8914, %v8915
    %v8917 = vrot.slane %v8908, 4
    %v8918 = vrot.slane %v8909, 4
    %v8919 = vsel %vm2075, %v8917, %v8918
    %v8922 = vadd.f32 %v8902, %v8916
    %v8923 = vadd.f32 %v8903, %v8919
    %s8924 = sld [smem:[#allocation13 + $0x4c]]
    %v8925 = vstv %s8924
    %v8926 = vmul.f32 %v8925, %v7772
    %v8927 = vmul.f32 %v8925, %v7773
    %v8928 = vmul.f32 %v8925, %v7774
    %v8929 = vmul.f32 %v8925, %v7775
    %v8934 = vrot.slane %v8926, 4
    %v8935 = vrot.slane %v8927, 4
    %v8936 = vsel %vm2075, %v8934, %v8935
    %v8937 = vrot.slane %v8928, 4
    %v8938 = vrot.slane %v8929, 4
    %v8939 = vsel %vm2075, %v8937, %v8938
    %8940 = vrot.lane.b32.xlu0 %v8936, 124
    %v8941 = vpop.permute.xlu0 %8940
    %8942 = vrot.lane.b32.xlu0 %v8939, 124
    %v8943 = vpop.permute.xlu0 %8942
    %v8946 = vadd.f32 %v8922, %v8941
    %v8947 = vadd.f32 %v8923, %v8943
    %s8948 = sld [smem:[#allocation13 + $0x4d]]
    %v8949 = vstv %s8948
    %v8950 = vmul.f32 %v8949, %v7772
    %v8951 = vmul.f32 %v8949, %v7773
    %v8952 = vmul.f32 %v8949, %v7774
    %v8953 = vmul.f32 %v8949, %v7775
    %v8958 = vrot.slane %v8950, 4
    %v8959 = vrot.slane %v8951, 4
    %v8960 = vsel %vm2075, %v8958, %v8959
    %v8961 = vrot.slane %v8952, 4
    %v8962 = vrot.slane %v8953, 4
    %v8963 = vsel %vm2075, %v8961, %v8962
    %8964 = vrot.lane.b32.xlu0 %v8960, 120
    %v8965 = vpop.permute.xlu0 %8964
    %8966 = vrot.lane.b32.xlu0 %v8963, 120
    %v8967 = vpop.permute.xlu0 %8966
    %v8970 = vadd.f32 %v8946, %v8965
    %v8971 = vadd.f32 %v8947, %v8967
    %s8972 = sld [smem:[#allocation13 + $0x4e]]
    %v8973 = vstv %s8972
    %v8974 = vmul.f32 %v8973, %v7773
    %v8975 = vmul.f32 %v8973, %v7775
    %v8976 = vadd.f32 %v8970, %v8974
    %v8977 = vadd.f32 %v8971, %v8975
    %s8978 = sld [smem:[#allocation13 + $0x4f]]
    %v8979 = vstv %s8978
    %v8980 = vmul.f32 %v8979, %v7773
    %v8981 = vmul.f32 %v8979, %v7775
    %8984 = vrot.lane.b32.xlu0 %v8980, 124
    %v8985 = vpop.permute.xlu0 %8984
    %8986 = vrot.lane.b32.xlu0 %v8981, 124
    %v8987 = vpop.permute.xlu0 %8986
    %v8990 = vadd.f32 %v8976, %v8985
    %v8991 = vadd.f32 %v8977, %v8987
    %s8992 = sld [smem:[#allocation13 + $0x50]]
    %v8993 = vstv %s8992
    %v8994 = vmul.f32 %v8993, %v7773
    %v8995 = vmul.f32 %v8993, %v7775
    %8998 = vrot.lane.b32.xlu0 %v8994, 120
    %v8999 = vpop.permute.xlu0 %8998
    %9000 = vrot.lane.b32.xlu0 %v8995, 120
    %v9001 = vpop.permute.xlu0 %9000
    %v9004 = vadd.f32 %v8990, %v8999
    %v9005 = vadd.f32 %v8991, %v9001
    %s9006 = sld [smem:[#allocation14 + $0x2]]
    %v9007 = vstv %s9006
    %v9008 = vadd.f32 %v9004, %v9007
    %v9009 = vadd.f32 %v9005, %v9007
    %v9010 = vmax.f32 %v9008, 0.0
    %v9011 = vmax.f32 %v9009, 0.0
    %v9012 = vld [vmem:[%s9] sm:$0xff]
    %v9013 = vld [vmem:[%s9 + $0x8] sm:$0xf]
    %9015 = vset.pattern.permute.xlu0 0
    %9016 = vperm.xlu0 %9015, %v8186
    %v9017 = vpop.permute.xlu0 %9016
    %9020 = vset.pattern.permute.xlu0 0
    %9021 = vperm.xlu0 %9020, %v8187
    %v9022 = vpop.permute.xlu0 %9021
    %v9024 = vmul.f32 %v9017, %v9012
    %v9025 = vmul.f32 %v9022, %v9012
    %9026 = vset.pattern.permute.xlu0 4
    %9027 = vperm.xlu0 %9026, %v8186
    %v9028 = vpop.permute.xlu0 %9027
    %9030 = vset.pattern.permute.xlu0 4
    %9031 = vperm.xlu0 %9030, %v8187
    %v9032 = vpop.permute.xlu0 %9031
    %v9035 = vrot.slane %v9012, 1
    %v9037 = vmul.f32 %v9028, %v9035
    %v9038 = vmul.f32 %v9032, %v9035
    %v9039 = vadd.f32 %v9024, %v9037
    %v9040 = vadd.f32 %v9025, %v9038
    %v9041 = vrot.slane %v9012, 6
    %v9043 = vmul.f32 %v9017, %v9041
    %v9044 = vmul.f32 %v9022, %v9041
    %v9047 = vrot.slane %v9043, 4
    %v9048 = vrot.slane %v9044, 4
    %v9051 = vadd.f32 %v9039, %v9047
    %v9052 = vadd.f32 %v9040, %v9048
    %v9053 = vrot.slane %v9012, 7
    %v9055 = vmul.f32 %v9028, %v9053
    %v9056 = vmul.f32 %v9032, %v9053
    %v9059 = vrot.slane %v9055, 4
    %v9060 = vrot.slane %v9056, 4
    %v9063 = vadd.f32 %v9051, %v9059
    %v9064 = vadd.f32 %v9052, %v9060
    %9066 = vset.pattern.permute.xlu0 0
    %9067 = vperm.xlu0 %9066, %v8598
    %v9068 = vpop.permute.xlu0 %9067
    %9071 = vset.pattern.permute.xlu0 0
    %9072 = vperm.xlu0 %9071, %v8599
    %v9073 = vpop.permute.xlu0 %9072
    %v9075 = vrot.slane %v9012, 4
    %v9077 = vmul.f32 %v9068, %v9075
    %v9078 = vmul.f32 %v9073, %v9075
    %v9079 = vadd.f32 %v9063, %v9077
    %v9080 = vadd.f32 %v9064, %v9078
    %9081 = vset.pattern.permute.xlu0 4
    %9082 = vperm.xlu0 %9081, %v8598
    %v9083 = vpop.permute.xlu0 %9082
    %9085 = vset.pattern.permute.xlu0 4
    %9086 = vperm.xlu0 %9085, %v8599
    %v9087 = vpop.permute.xlu0 %9086
    %v9089 = vrot.slane %v9012, 5
    %v9091 = vmul.f32 %v9083, %v9089
    %v9092 = vmul.f32 %v9087, %v9089
    %v9093 = vadd.f32 %v9079, %v9091
    %v9094 = vadd.f32 %v9080, %v9092
    %v9095 = vrot.slane %v9012, 2
    %v9097 = vmul.f32 %v9068, %v9095
    %v9098 = vmul.f32 %v9073, %v9095
    %v9101 = vrot.slane %v9097, 4
    %v9102 = vrot.slane %v9098, 4
    %v9105 = vadd.f32 %v9093, %v9101
    %v9106 = vadd.f32 %v9094, %v9102
    %v9107 = vrot.slane %v9012, 3
    %v9109 = vmul.f32 %v9083, %v9107
    %v9110 = vmul.f32 %v9087, %v9107
    %v9113 = vrot.slane %v9109, 4
    %v9114 = vrot.slane %v9110, 4
    %v9117 = vadd.f32 %v9105, %v9113
    %v9118 = vadd.f32 %v9106, %v9114
    %9120 = vset.pattern.permute.xlu0 0
    %9121 = vperm.xlu0 %9120, %v9010
    %v9122 = vpop.permute.xlu0 %9121
    %9125 = vset.pattern.permute.xlu0 0
    %9126 = vperm.xlu0 %9125, %v9011
    %v9127 = vpop.permute.xlu0 %9126
    %v9129 = vmul.f32 %v9122, %v9013
    %v9130 = vmul.f32 %v9127, %v9013
    %v9131 = vadd.f32 %v9117, %v9129
    %v9132 = vadd.f32 %v9118, %v9130
    %9133 = vset.pattern.permute.xlu0 4
    %9134 = vperm.xlu0 %9133, %v9010
    %v9135 = vpop.permute.xlu0 %9134
    %9137 = vset.pattern.permute.xlu0 4
    %9138 = vperm.xlu0 %9137, %v9011
    %v9139 = vpop.permute.xlu0 %9138
    %v9142 = vrot.slane %v9013, 1
    %v9144 = vmul.f32 %v9135, %v9142
    %v9145 = vmul.f32 %v9139, %v9142
    %v9146 = vadd.f32 %v9131, %v9144
    %v9147 = vadd.f32 %v9132, %v9145
    %v9148 = vrot.slane %v9013, 6
    %v9150 = vmul.f32 %v9122, %v9148
    %v9151 = vmul.f32 %v9127, %v9148
    %v9154 = vrot.slane %v9150, 4
    %v9155 = vrot.slane %v9151, 4
    %v9158 = vadd.f32 %v9146, %v9154
    %v9159 = vadd.f32 %v9147, %v9155
    %v9160 = vrot.slane %v9013, 7
    %v9162 = vmul.f32 %v9135, %v9160
    %v9163 = vmul.f32 %v9139, %v9160
    %v9166 = vrot.slane %v9162, 4
    %v9167 = vrot.slane %v9163, 4
    %v9170 = vadd.f32 %v9158, %v9166
    %v9171 = vadd.f32 %v9159, %v9167
    %v9172 = vld [vmem:[%s10] sm:$0x1]
    %v9173 = vadd.f32 %v9170, %v9172
    %v9174 = vadd.f32 %v9171, %v9172
    %vm9175 = vcmask 73728
    %9176 = vst.msk [vmem:[#allocation16] sm:$0x1] %vm9175, %v9173
    %9177 = vst.msk [vmem:[#allocation16 + $0x1] sm:$0x1] %vm9175, %v9174
    // Predicated region
    $region78: #{sample_cnn_forward.1} parent=1 // pred_check
      _
    $region79: #{sample_cnn_forward.1} parent=1 // pred_check_branch
      %9179 = sbr.rel (0) target = $region81
    $region80: #{sample_cnn_forward.1} parent=1 // pred_region
      %9181 = vsyncadd [#allocation3], 0
      %s9182 = sshll.u32 [#allocation16], 4
      %s9183 = int_to_ptr.vmem [resolvable:$true] %s9182
      %s9184 = sshll.u32 %s11, 4
      %s9185 = int_to_ptr.hbm [resolvable:$true] %s9184
      %9190 = dma.vmem_to_hbm [thread:$0]  %s9183, 32, %s9185, [#allocation3], 16, 16, 1
    $region81: #{sample_cnn_forward.1} parent=1 // pred_fallthru
      _
    // Predicated region
    $region82: #{sample_cnn_forward.1} parent=1 // pred_check
      _
    $region83: #{sample_cnn_forward.1} parent=1 // pred_check_branch
      %9192 = sbr.rel (0) target = $region85
    $region84: #{sample_cnn_forward.1} parent=1 // pred_region
      %9194 = dma.done [#allocation3], 32
    $region85: #{sample_cnn_forward.1} parent=1 // pred_fallthru
      _
    %9195 = vsyncpa [#allocation3], 1
    %9196 = vsyncpa [#allocation4], 1
    %9197 = vsyncpa [#allocation6], 1
    %9198 = vsyncpa [#allocation9], 1
    %9199 = vsyncpa [#allocation12], 1
    %9200 = vsyncpa [#allocation15], 1

</llo_original>
